<compile_context>
chip_gen: v6e
topology: v6e:2x2x1
jax: 0.10.0
libtpu: 0.0.40
codegen_flags: <defaults>
</compile_context>

<pallas_src>
import math
from functools import partial

import jax
import jax.numpy as jnp
from jax import lax
from jax.experimental import pallas as pl
from jax.experimental.pallas import tpu as pltpu


# ----------------------------------------------------------------------------
# in-kernel math helpers
# ----------------------------------------------------------------------------
_A1, _A2, _A3, _A4, _A5 = 0.254829592, -0.284496736, 1.421413741, -1.453152027, 1.061405429
_P = 0.3275911
_INV_SQRT2 = 0.7071067811865476


def _erf(x):
    # Abramowitz & Stegun 7.1.26 polynomial approximation of erf (|err| < 1.5e-7).
    ax = jnp.abs(x)
    t = 1.0 / (1.0 + _P * ax)
    poly = ((((_A5 * t + _A4) * t + _A3) * t + _A2) * t + _A1) * t
    y = 1.0 - poly * jnp.exp(-ax * ax)
    return jnp.where(x < 0, -y, y)


def _gelu(x):
    # exact (erf-based) GELU, matching torch.nn.GELU(approximate='none')
    # TODO(synk): switch to jax.lax.erf once the Mosaic erf lowering is verified
    # on all targeted TPU generations; the polynomial is kept because it is
    # known to lower cleanly everywhere.
    return 0.5 * x * (1.0 + _erf(x * _INV_SQRT2))


def _layernorm(x, g, b, eps=1e-6):
    # one-pass LayerNorm: var = E[x^2] - E[x]^2 (clamped at 0 for safety)
    mean = jnp.mean(x, axis=-1, keepdims=True)
    var = jnp.maximum(jnp.mean(x * x, axis=-1, keepdims=True) - mean * mean, 0.0)
    return (x - mean) * lax.rsqrt(var + eps) * g + b


# ----------------------------------------------------------------------------
# fused encoder-layer kernel (one (batch_tile, layer) grid point per step)
# ----------------------------------------------------------------------------
def _vit_kernel(x_ref,
                ln1g_ref, ln1b_ref, wqkv_ref, bqkv_ref, wo_ref, bo_ref,
                ln2g_ref, ln2b_ref, w1_ref, b1_ref, w2_ref, b2_ref,
                lng_ref, lnb_ref, wproj_ref, bproj_ref,
                o_ref, xs_ref, *, num_heads, seq_len, s_out, b_tile):
    f32 = jnp.float32
    bf16 = jnp.bfloat16

    layer = pl.program_id(1)
    n_layers = pl.num_programs(1)

    s_pad = x_ref.shape[1]                 # sublane-aligned token count
    hidden = x_ref.shape[2]
    head_dim = hidden // num_heads
    bm = b_tile * s_pad                    # folded batch*token M dimension

    # ---- first layer: load the (already projected) tokens into the carry ----
    @pl.when(layer == 0)
    def _():
        xs_ref[...] = x_ref[...].reshape(bm, hidden)

    xs = xs_ref[...]                       # (bm, H) f32 residual stream

    # mask for padded keys (columns >= seq_len are alignment padding)
    cols = lax.broadcasted_iota(jnp.int32, (1, s_pad), 1)
    key_bias = jnp.where(cols < seq_len, 0.0, -1e30).astype(f32)

    # ---- self-attention block --------------------------------------------
    h1 = _layernorm(xs, ln1g_ref[0], ln1b_ref[0])
    # fused QKV projection for all folded batch rows: (bm, H) @ (H, 3H)
    # (softmax 1/sqrt(head_dim) scale is pre-folded into the Q weights/bias)
    qkv = jnp.dot(h1.astype(bf16), wqkv_ref[0],
                  preferred_element_type=f32) + bqkv_ref[0]

    # slice per-head q/k/v once over the whole folded row block
    qs, ks, vs = [], [], []
    for hh in range(num_heads):
        lo = hh * head_dim
        qs.append(qkv[:, lo:lo + head_dim].astype(bf16))
        ks.append(qkv[:, hidden + lo:hidden + lo + head_dim].astype(bf16))
        vs.append(qkv[:, 2 * hidden + lo:2 * hidden + lo + head_dim].astype(bf16))

    attn_rows = []
    for b in range(b_tile):                # attention is per batch element
        rs = slice(b * s_pad, (b + 1) * s_pad)
        acc = jnp.zeros((s_pad, hidden), f32)
        for hh in range(num_heads):
            q, k, v = qs[hh][rs], ks[hh][rs], vs[hh][rs]
            s = lax.dot_general(q, k, (((1,), (1,)), ((), ())),
                                preferred_element_type=f32) + key_bias
            s = s - jnp.max(s, axis=-1, keepdims=True)
            p = jnp.exp(s)
            p = p * pl.reciprocal(jnp.sum(p, axis=-1, keepdims=True), approx=True)
            head = jnp.dot(p.astype(bf16), v, preferred_element_type=f32)
            # accumulate the head straight into the out-projection (no concat)
            acc = acc + jnp.dot(head.astype(bf16), wo_ref[0, hh],
                                preferred_element_type=f32)
        attn_rows.append(acc)
    attn = attn_rows[0] if b_tile == 1 else jnp.concatenate(attn_rows, axis=0)
    xs = xs + attn + bo_ref[0]             # residual 1 (dropout = identity)

    # ---- MLP block ----------------------------------------------------------
    h2 = _layernorm(xs, ln2g_ref[0], ln2b_ref[0])
    m = jnp.dot(h2.astype(bf16), w1_ref[0], preferred_element_type=f32) + b1_ref[0]
    m = _gelu(m)
    m = jnp.dot(m.astype(bf16), w2_ref[0], preferred_element_type=f32) + b2_ref[0]
    xs = xs + m                            # residual 2

    xs_ref[...] = xs                       # carry to the next layer grid step

    # ---- last layer: final LayerNorm + tail projection ----------------------
    @pl.when(layer == n_layers - 1)
    def _():
        y = _layernorm(xs, lng_ref[...], lnb_ref[...])
        rows = lax.broadcasted_iota(jnp.int32, (s_pad, 1), 0)
        tail_m = (rows >= seq_len - s_out) & (rows < seq_len)
        for b in range(b_tile):
            yb = y[b * s_pad:(b + 1) * s_pad, :]
            # sum_s (x_s @ W + b) == (sum_s x_s) @ W + s_out * b
            ysum = jnp.sum(jnp.where(tail_m, yb, 0.0), axis=0, keepdims=True)
            o_ref[b] = (jnp.dot(ysum.astype(bf16), wproj_ref[...],
                                preferred_element_type=f32)
                        + float(s_out) * bproj_ref[...])


# ----------------------------------------------------------------------------
# wrapper
# ----------------------------------------------------------------------------
def vit_forward(x, params, *, num_heads, stations, future_timesteps,
                batch_tile=None):
    n, t, h, w, c = x.shape
    n_tok = t * h * w
    seq_len = n_tok + 1                               # tokens + class token
    s_pad = ((seq_len + 7) // 8) * 8                  # sublane-aligned tokens
    s_out = stations * future_timesteps
    hidden = params["w_in"].shape[1]
    mlp_dim = params["w1"].shape[2]
    proj_out = params["w_proj"].shape[1]
    num_layers = params["wqkv"].shape[0]
    head_dim = hidden // num_heads
    f32, bf16 = jnp.float32, jnp.bfloat16

    # batch folding: fold batch rows into the matmul M dim; keep >=2 grid steps
    # when possible so v7x's two TensorCores both get work.
    if batch_tile is None:
        batch_tile = n // 2 if (n > 1 and n % 2 == 0) else n
    assert n % batch_tile == 0, "batch must be divisible by batch_tile"
    n_btiles = n // batch_tile

    # ---- input projection + class token + embeddings (cheap, done in XLA) ----
    tok = x.reshape(n, n_tok, c).astype(f32) @ params["w_in"] + params["b_in"]
    cls = jnp.broadcast_to(params["class_token"].reshape(1, 1, hidden),
                           (n, 1, hidden))
    seq = jnp.concatenate([cls, tok], axis=1)                      # (n, S, H)
    seq = seq + (params["pos_embedding"] + params["time_embedding"])
    x_proj = jnp.pad(seq, ((0, 0), (0, s_pad - seq_len), (0, 0)))  # (n, s_pad, H)

    # ---- weight restructuring (scale fold, per-head out-proj, bf16) ---------
    scale = 1.0 / math.sqrt(head_dim)
    wqkv = params["wqkv"].at[:, :, :hidden].multiply(scale).astype(bf16)
    bqkv = params["bqkv"].at[:, :, :hidden].multiply(scale)
    wo = params["wo"].reshape(num_layers, num_heads, head_dim, hidden).astype(bf16)
    w1 = params["w1"].astype(bf16)
    w2 = params["w2"].astype(bf16)
    w_proj = params["w_proj"].astype(bf16)

    layer_weights = [params["ln1_g"], params["ln1_b"], wqkv, bqkv, wo,
                     params["bo"], params["ln2_g"], params["ln2_b"],
                     w1, params["b1"], w2, params["b2"]]
    const_weights = [params["ln_g"], params["ln_b"], w_proj, params["b_proj"]]

    def layer_spec(a):                     # one layer per grid step, streamed
        zeros = (0,) * (a.ndim - 1)
        return pl.BlockSpec((1,) + a.shape[1:], lambda i, l, _z=zeros: (l,) + _z)

    def const_spec(a):                     # fully resident constants
        zeros = (0,) * a.ndim
        return pl.BlockSpec(a.shape, lambda i, l, _z=zeros: _z)

    # ---- rough VMEM budget (2x double-buffered layer weights + constants +
    #      I/O blocks + carry + activation headroom), clamped to [32, 64] MiB --
    def nbytes(a):
        return int(a.size) * a.dtype.itemsize

    per_layer = sum(nbytes(a) // num_layers for a in layer_weights)
    const_b = sum(nbytes(a) for a in const_weights)
    io_b = 2 * batch_tile * s_pad * hidden * 4 + 2 * batch_tile * proj_out * 4
    act_b = 6 * batch_tile * s_pad * max(3 * hidden, mlp_dim) * 4
    carry_b = batch_tile * s_pad * hidden * 4
    est = 2 * per_layer + const_b + io_b + act_b + carry_b
    vmem_limit = int(min(max(2 * est, 32 * 2**20), 64 * 2**20))

    kern = partial(_vit_kernel, num_heads=num_heads, seq_len=seq_len,
                   s_out=s_out, b_tile=batch_tile)

    out = pl.pallas_call(
        kern,
        out_shape=jax.ShapeDtypeStruct((n, 1, proj_out), f32),
        grid_spec=pltpu.PrefetchScalarGridSpec(
            num_scalar_prefetch=0,
            grid=(n_btiles, num_layers),
            in_specs=[pl.BlockSpec((batch_tile, s_pad, hidden),
                                   lambda i, l: (i, 0, 0))]
                     + [layer_spec(a) for a in layer_weights]
                     + [const_spec(a) for a in const_weights],
            out_specs=pl.BlockSpec((batch_tile, 1, proj_out),
                                   lambda i, l: (i, 0, 0)),
            scratch_shapes=[pltpu.VMEM((batch_tile * s_pad, hidden), f32)],
        ),
        compiler_params=pltpu.CompilerParams(
            dimension_semantics=("parallel", "arbitrary"),
            vmem_limit_bytes=vmem_limit,
        ),
    )(x_proj, *layer_weights, *const_weights)

    # (n, 1, P) -> (1, n, P): identical memory order, pure reshape.
    return out.reshape(1, n, proj_out)


# ----------------------------------------------------------------------------
# deterministic parameter construction (per-layer stacked, lane-dense layouts)
# ----------------------------------------------------------------------------
def init_params(key, *, num_vars, hidden_dim, mlp_dim, num_layers,
                seq_length, proj_out):
    H = hidden_dim
    keys = list(jax.random.split(key, 16))
    kit = iter(keys)

    def nrm(shape, std):
        return (std * jax.random.normal(next(kit), shape)).astype(jnp.float32)

    return dict(
        # torchvision MLP(num_vars, [hidden]) == Linear only
        w_in=nrm((num_vars, H), 1.0 / math.sqrt(num_vars)),
        b_in=nrm((1, H), 0.02),
        class_token=nrm((1, 1, H), 0.02),
        pos_embedding=nrm((1, seq_length, H), 0.02),
        time_embedding=nrm((1, seq_length, H), 0.02),
        # per-layer stacked encoder weights
        ln1_g=jnp.ones((num_layers, 1, H), jnp.float32),
        ln1_b=jnp.zeros((num_layers, 1, H), jnp.float32),
        wqkv=nrm((num_layers, H, 3 * H), 1.0 / math.sqrt(H)),   # == in_proj_weight.T
        bqkv=nrm((num_layers, 1, 3 * H), 0.02),
        wo=nrm((num_layers, H, H), 1.0 / math.sqrt(H)),         # == out_proj.weight.T
        bo=nrm((num_layers, 1, H), 0.02),
        ln2_g=jnp.ones((num_layers, 1, H), jnp.float32),
        ln2_b=jnp.zeros((num_layers, 1, H), jnp.float32),
        w1=nrm((num_layers, H, mlp_dim), 1.0 / math.sqrt(H)),
        b1=nrm((num_layers, 1, mlp_dim), 0.02),
        w2=nrm((num_layers, mlp_dim, H), 1.0 / math.sqrt(mlp_dim)),
        b2=nrm((num_layers, 1, H), 0.02),
        # final LayerNorm + tail projection
        ln_g=jnp.ones((1, H), jnp.float32),
        ln_b=jnp.zeros((1, H), jnp.float32),
        w_proj=nrm((H, proj_out), 1.0 / math.sqrt(H)),
        b_proj=jnp.zeros((1, proj_out), jnp.float32),
    )


# ----------------------------------------------------------------------------
if __name__ == "__main__":
    # small config consistent with the module's forward
    n, t, h, w, c = 4, 2, 4, 4, 8        # batch, past_timesteps, H, W, num_vars
    hidden_dim, mlp_dim = 32, 64
    num_heads, num_layers = 4, 2
    stations, future_timesteps = 4, 2
    proj_out = 2688                       # hard-coded in the module (proj_layer)
    seq_length = t * h * w + 1            # tokens + class token

    key = jax.random.PRNGKey(0)
    kx, kp = jax.random.split(key)
    x = jax.random.normal(kx, (n, t, h, w, c), jnp.float32)
    params = init_params(kp, num_vars=c, hidden_dim=hidden_dim, mlp_dim=mlp_dim,
                         num_layers=num_layers, seq_length=seq_length,
                         proj_out=proj_out)

    fwd = jax.jit(partial(vit_forward, num_heads=num_heads,
                          stations=stations, future_timesteps=future_timesteps))
    out = jax.block_until_ready(fwd(x, params))
    assert out.shape == (1, n, proj_out), out.shape
    assert bool(jnp.all(jnp.isfinite(out)))
    print("KERNEL_OK")
</pallas_src>

<mosaic_0001>
module attributes {stable_mosaic.version = 11 : i64} {
  func.func @_vit_kernel(%arg0: i32, %arg1: i32, %arg2: memref<2x40x32xf32, #tpu.memory_space<vmem>>, %arg3: memref<1x1x32xf32, #tpu.memory_space<vmem>>, %arg4: memref<1x1x32xf32, #tpu.memory_space<vmem>>, %arg5: memref<1x32x96xbf16, #tpu.memory_space<vmem>>, %arg6: memref<1x1x96xf32, #tpu.memory_space<vmem>>, %arg7: memref<1x4x8x32xbf16, #tpu.memory_space<vmem>>, %arg8: memref<1x1x32xf32, #tpu.memory_space<vmem>>, %arg9: memref<1x1x32xf32, #tpu.memory_space<vmem>>, %arg10: memref<1x1x32xf32, #tpu.memory_space<vmem>>, %arg11: memref<1x32x64xbf16, #tpu.memory_space<vmem>>, %arg12: memref<1x1x64xf32, #tpu.memory_space<vmem>>, %arg13: memref<1x64x32xbf16, #tpu.memory_space<vmem>>, %arg14: memref<1x1x32xf32, #tpu.memory_space<vmem>>, %arg15: memref<1x32xf32, #tpu.memory_space<vmem>>, %arg16: memref<1x32xf32, #tpu.memory_space<vmem>>, %arg17: memref<32x2688xbf16, #tpu.memory_space<vmem>>, %arg18: memref<1x2688xf32, #tpu.memory_space<vmem>>, %arg19: memref<2x1x2688xf32, #tpu.memory_space<vmem>>, %arg20: memref<80x32xf32, #tpu.memory_space<vmem>>) attributes {dimension_semantics = [#tpu.dimension_semantics<parallel>, #tpu.dimension_semantics<arbitrary>], iteration_bounds = array<i64: 2, 2>, scalar_prefetch = 0 : i64, scratch_operands = 1 : i64, tpu.core_type = #tpu.core_type<tc>, window_params = [{transform_indices = @transform_0, window_bounds = array<i64: 2, 40, 32>}, {transform_indices = @transform_1, window_bounds = array<i64: 1, 1, 32>}, {transform_indices = @transform_2, window_bounds = array<i64: 1, 1, 32>}, {transform_indices = @transform_3, window_bounds = array<i64: 1, 32, 96>}, {transform_indices = @transform_4, window_bounds = array<i64: 1, 1, 96>}, {transform_indices = @transform_5, window_bounds = array<i64: 1, 4, 8, 32>}, {transform_indices = @transform_6, window_bounds = array<i64: 1, 1, 32>}, {transform_indices = @transform_7, window_bounds = array<i64: 1, 1, 32>}, {transform_indices = @transform_8, window_bounds = array<i64: 1, 1, 32>}, {transform_indices = @transform_9, window_bounds = array<i64: 1, 32, 64>}, {transform_indices = @transform_10, window_bounds = array<i64: 1, 1, 64>}, {transform_indices = @transform_11, window_bounds = array<i64: 1, 64, 32>}, {transform_indices = @transform_12, window_bounds = array<i64: 1, 1, 32>}, {pipeline_mode = #tpu.pipeline_mode<synchronous>, transform_indices = @transform_13, window_bounds = array<i64: 1, 32>}, {pipeline_mode = #tpu.pipeline_mode<synchronous>, transform_indices = @transform_14, window_bounds = array<i64: 1, 32>}, {pipeline_mode = #tpu.pipeline_mode<synchronous>, transform_indices = @transform_15, window_bounds = array<i64: 32, 2688>}, {pipeline_mode = #tpu.pipeline_mode<synchronous>, transform_indices = @transform_16, window_bounds = array<i64: 1, 2688>}, {transform_indices = @transform_17, window_bounds = array<i64: 2, 1, 2688>}]} {
    %c0_i32 = arith.constant 0 : i32
    %0 = arith.cmpi eq, %arg1, %c0_i32 : i32
    %1 = arith.extui %0 : i1 to i32
    %c0_i32_0 = arith.constant 0 : i32
    %2 = arith.cmpi ne, %1, %c0_i32_0 : i32
    scf.if %2 {
      %c0_140 = arith.constant 0 : index
      %c0_141 = arith.constant 0 : index
      %c0_142 = arith.constant 0 : index
      %351 = vector.load %arg2[%c0_140, %c0_141, %c0_142] : memref<2x40x32xf32, #tpu.memory_space<vmem>>, vector<2x40x32xf32>
      %352 = vector.shape_cast %351 : vector<2x40x32xf32> to vector<80x32xf32>
      %c0_143 = arith.constant 0 : index
      %c0_144 = arith.constant 0 : index
      %353 = vector.load %arg20[%c0_143, %c0_144] : memref<80x32xf32, #tpu.memory_space<vmem>>, vector<80x32xf32>
      tpu.vector_store %arg20[%c0_143, %c0_144], %352 {strides = array<i32>} : memref<80x32xf32, #tpu.memory_space<vmem>>, vector<80x32xf32>,
    } else {
    }
    %c0 = arith.constant 0 : index
    %c0_1 = arith.constant 0 : index
    %3 = vector.load %arg20[%c0, %c0_1] : memref<80x32xf32, #tpu.memory_space<vmem>>, vector<80x32xf32>
    %4 = tpu.iota {dimensions = array<i32: 1>} : vector<1x40xi32>
    %c33_i32 = arith.constant 33 : i32
    %5 = vector.broadcast %c33_i32 : i32 to vector<1x40xi32>
    %6 = arith.cmpi slt, %4, %5 : vector<1x40xi32>
    %cst = arith.constant 0.000000e+00 : f32
    %cst_2 = arith.constant -1.000000e+30 : f32
    %7 = vector.broadcast %cst : f32 to vector<1x40xf32>
    %8 = vector.broadcast %cst_2 : f32 to vector<1x40xf32>
    %9 = arith.select %6, %7, %8 : vector<1x40xi1>, vector<1x40xf32>
    %c0_3 = arith.constant 0 : index
    %c0_4 = arith.constant 0 : index
    %c0_5 = arith.constant 0 : index
    %10 = vector.load %arg3[%c0_3, %c0_4, %c0_5] : memref<1x1x32xf32, #tpu.memory_space<vmem>>, vector<1x1x32xf32>
    %11 = vector.shape_cast %10 : vector<1x1x32xf32> to vector<1x32xf32>
    %c0_6 = arith.constant 0 : index
    %c0_7 = arith.constant 0 : index
    %c0_8 = arith.constant 0 : index
    %12 = vector.load %arg4[%c0_6, %c0_7, %c0_8] : memref<1x1x32xf32, #tpu.memory_space<vmem>>, vector<1x1x32xf32>
    %13 = vector.shape_cast %12 : vector<1x1x32xf32> to vector<1x32xf32>
    %cst_9 = arith.constant dense<0.000000e+00> : vector<80xf32>
    %14 = vector.multi_reduction <add>, %3, %cst_9 [1] : vector<80x32xf32> to vector<80xf32>
    %15 = vector.shape_cast %14 : vector<80xf32> to vector<80x1xf32>
    %cst_10 = arith.constant 3.200000e+01 : f32
    %16 = vector.broadcast %cst_10 : f32 to vector<80x1xf32>
    %17 = arith.divf %15, %16 : vector<80x1xf32>
    %18 = arith.mulf %3, %3 : vector<80x32xf32>
    %cst_11 = arith.constant dense<0.000000e+00> : vector<80xf32>
    %19 = vector.multi_reduction <add>, %18, %cst_11 [1] : vector<80x32xf32> to vector<80xf32>
    %20 = vector.shape_cast %19 : vector<80xf32> to vector<80x1xf32>
    %cst_12 = arith.constant 3.200000e+01 : f32
    %21 = vector.broadcast %cst_12 : f32 to vector<80x1xf32>
    %22 = arith.divf %20, %21 : vector<80x1xf32>
    %23 = arith.mulf %17, %17 : vector<80x1xf32>
    %24 = arith.subf %22, %23 : vector<80x1xf32>
    %cst_13 = arith.constant 0.000000e+00 : f32
    %25 = vector.broadcast %cst_13 : f32 to vector<80x1xf32>
    %26 = arith.maximumf %24, %25 : vector<80x1xf32>
    %27 = vector.broadcast %17 : vector<80x1xf32> to vector<80x32xf32>
    %28 = arith.subf %3, %27 : vector<80x32xf32>
    %cst_14 = arith.constant 9.99999997E-7 : f32
    %29 = vector.broadcast %cst_14 : f32 to vector<80x1xf32>
    %30 = arith.addf %26, %29 : vector<80x1xf32>
    %31 = math.rsqrt %30 : vector<80x1xf32>
    %32 = vector.broadcast %31 : vector<80x1xf32> to vector<80x32xf32>
    %33 = arith.mulf %28, %32 : vector<80x32xf32>
    %34 = vector.broadcast %11 : vector<1x32xf32> to vector<80x32xf32>
    %35 = arith.mulf %33, %34 : vector<80x32xf32>
    %36 = vector.broadcast %13 : vector<1x32xf32> to vector<80x32xf32>
    %37 = arith.addf %35, %36 : vector<80x32xf32>
    %38 = arith.truncf %37 : vector<80x32xf32> to vector<80x32xbf16>
    %c0_15 = arith.constant 0 : index
    %c0_16 = arith.constant 0 : index
    %c0_17 = arith.constant 0 : index
    %39 = vector.load %arg5[%c0_15, %c0_16, %c0_17] : memref<1x32x96xbf16, #tpu.memory_space<vmem>>, vector<1x32x96xbf16>
    %40 = vector.shape_cast %39 : vector<1x32x96xbf16> to vector<32x96xbf16>
    %cst_18 = arith.constant dense<0.000000e+00> : vector<80x96xf32>
    %41 = tpu.matmul %38, %40, %cst_18 {dimension_numbers = #tpu.dot_dimension_numbers<[1], [0], [0], [1], [0, 0, 1, 1], [], []>} : vector<80x32xbf16>, vector<32x96xbf16>, vector<80x96xf32> -> vector<80x96xf32>
    %c0_19 = arith.constant 0 : index
    %c0_20 = arith.constant 0 : index
    %c0_21 = arith.constant 0 : index
    %42 = vector.load %arg6[%c0_19, %c0_20, %c0_21] : memref<1x1x96xf32, #tpu.memory_space<vmem>>, vector<1x1x96xf32>
    %43 = vector.shape_cast %42 : vector<1x1x96xf32> to vector<1x96xf32>
    %44 = vector.broadcast %43 : vector<1x96xf32> to vector<80x96xf32>
    %45 = arith.addf %41, %44 : vector<80x96xf32>
    %46 = vector.extract_strided_slice %45 {offsets = [0, 0], sizes = [80, 8], strides = [1, 1]} : vector<80x96xf32> to vector<80x8xf32>
    %47 = arith.truncf %46 : vector<80x8xf32> to vector<80x8xbf16>
    %48 = vector.extract_strided_slice %45 {offsets = [0, 32], sizes = [80, 8], strides = [1, 1]} : vector<80x96xf32> to vector<80x8xf32>
    %49 = arith.truncf %48 : vector<80x8xf32> to vector<80x8xbf16>
    %50 = vector.extract_strided_slice %45 {offsets = [0, 64], sizes = [80, 8], strides = [1, 1]} : vector<80x96xf32> to vector<80x8xf32>
    %51 = arith.truncf %50 : vector<80x8xf32> to vector<80x8xbf16>
    %52 = vector.extract_strided_slice %45 {offsets = [0, 8], sizes = [80, 8], strides = [1, 1]} : vector<80x96xf32> to vector<80x8xf32>
    %53 = arith.truncf %52 : vector<80x8xf32> to vector<80x8xbf16>
    %54 = vector.extract_strided_slice %45 {offsets = [0, 40], sizes = [80, 8], strides = [1, 1]} : vector<80x96xf32> to vector<80x8xf32>
    %55 = arith.truncf %54 : vector<80x8xf32> to vector<80x8xbf16>
    %56 = vector.extract_strided_slice %45 {offsets = [0, 72], sizes = [80, 8], strides = [1, 1]} : vector<80x96xf32> to vector<80x8xf32>
    %57 = arith.truncf %56 : vector<80x8xf32> to vector<80x8xbf16>
    %58 = vector.extract_strided_slice %45 {offsets = [0, 16], sizes = [80, 8], strides = [1, 1]} : vector<80x96xf32> to vector<80x8xf32>
    %59 = arith.truncf %58 : vector<80x8xf32> to vector<80x8xbf16>
    %60 = vector.extract_strided_slice %45 {offsets = [0, 48], sizes = [80, 8], strides = [1, 1]} : vector<80x96xf32> to vector<80x8xf32>
    %61 = arith.truncf %60 : vector<80x8xf32> to vector<80x8xbf16>
    %62 = vector.extract_strided_slice %45 {offsets = [0, 80], sizes = [80, 8], strides = [1, 1]} : vector<80x96xf32> to vector<80x8xf32>
    %63 = arith.truncf %62 : vector<80x8xf32> to vector<80x8xbf16>
    %64 = vector.extract_strided_slice %45 {offsets = [0, 24], sizes = [80, 8], strides = [1, 1]} : vector<80x96xf32> to vector<80x8xf32>
    %65 = arith.truncf %64 : vector<80x8xf32> to vector<80x8xbf16>
    %66 = vector.extract_strided_slice %45 {offsets = [0, 56], sizes = [80, 8], strides = [1, 1]} : vector<80x96xf32> to vector<80x8xf32>
    %67 = arith.truncf %66 : vector<80x8xf32> to vector<80x8xbf16>
    %68 = vector.extract_strided_slice %45 {offsets = [0, 88], sizes = [80, 8], strides = [1, 1]} : vector<80x96xf32> to vector<80x8xf32>
    %69 = arith.truncf %68 : vector<80x8xf32> to vector<80x8xbf16>
    %cst_22 = arith.constant 0.000000e+00 : f32
    %70 = vector.broadcast %cst_22 : f32 to vector<40x32xf32>
    %71 = vector.extract_strided_slice %47 {offsets = [0, 0], sizes = [40, 8], strides = [1, 1]} : vector<80x8xbf16> to vector<40x8xbf16>
    %72 = vector.extract_strided_slice %49 {offsets = [0, 0], sizes = [40, 8], strides = [1, 1]} : vector<80x8xbf16> to vector<40x8xbf16>
    %73 = vector.extract_strided_slice %51 {offsets = [0, 0], sizes = [40, 8], strides = [1, 1]} : vector<80x8xbf16> to vector<40x8xbf16>
    %cst_23 = arith.constant dense<0.000000e+00> : vector<40x40xf32>
    %74 = tpu.matmul %71, %72, %cst_23 {dimension_numbers = #tpu.dot_dimension_numbers<[1], [1], [0], [0], [0, 0, 1, 0], [], []>} : vector<40x8xbf16>, vector<40x8xbf16>, vector<40x40xf32> -> vector<40x40xf32>
    %75 = vector.broadcast %9 : vector<1x40xf32> to vector<40x40xf32>
    %76 = arith.addf %74, %75 : vector<40x40xf32>
    %cst_24 = arith.constant dense<0xFF800000> : vector<40xf32>
    %77 = vector.multi_reduction <maximumf>, %76, %cst_24 [1] : vector<40x40xf32> to vector<40xf32>
    %78 = vector.shape_cast %77 : vector<40xf32> to vector<40x1xf32>
    %79 = vector.broadcast %78 : vector<40x1xf32> to vector<40x40xf32>
    %80 = arith.subf %76, %79 : vector<40x40xf32>
    %81 = math.exp %80 : vector<40x40xf32>
    %cst_25 = arith.constant dense<0.000000e+00> : vector<40xf32>
    %82 = vector.multi_reduction <add>, %81, %cst_25 [1] : vector<40x40xf32> to vector<40xf32>
    %83 = vector.shape_cast %82 : vector<40xf32> to vector<40x1xf32>
    %84 = tpu.reciprocal %83 {approx = true} : vector<40x1xf32> -> vector<40x1xf32>
    %85 = vector.broadcast %84 : vector<40x1xf32> to vector<40x40xf32>
    %86 = arith.mulf %81, %85 : vector<40x40xf32>
    %87 = arith.truncf %86 : vector<40x40xf32> to vector<40x40xbf16>
    %cst_26 = arith.constant dense<0.000000e+00> : vector<40x8xf32>
    %88 = tpu.matmul %87, %73, %cst_26 {dimension_numbers = #tpu.dot_dimension_numbers<[1], [0], [0], [1], [0, 0, 1, 1], [], []>} : vector<40x40xbf16>, vector<40x8xbf16>, vector<40x8xf32> -> vector<40x8xf32>
    %89 = arith.truncf %88 : vector<40x8xf32> to vector<40x8xbf16>
    %c0_27 = arith.constant 0 : index
    %c0_28 = arith.constant 0 : index
    %c0_29 = arith.constant 0 : index
    %c0_30 = arith.constant 0 : index
    %90 = vector.load %arg7[%c0_27, %c0_28, %c0_29, %c0_30] : memref<1x4x8x32xbf16, #tpu.memory_space<vmem>>, vector<1x1x8x32xbf16>
    %91 = vector.shape_cast %90 : vector<1x1x8x32xbf16> to vector<8x32xbf16>
    %cst_31 = arith.constant dense<0.000000e+00> : vector<40x32xf32>
    %92 = tpu.matmul %89, %91, %cst_31 {dimension_numbers = #tpu.dot_dimension_numbers<[1], [0], [0], [1], [0, 0, 1, 1], [], []>} : vector<40x8xbf16>, vector<8x32xbf16>, vector<40x32xf32> -> vector<40x32xf32>
    %93 = arith.addf %70, %92 : vector<40x32xf32>
    %94 = vector.extract_strided_slice %53 {offsets = [0, 0], sizes = [40, 8], strides = [1, 1]} : vector<80x8xbf16> to vector<40x8xbf16>
    %95 = vector.extract_strided_slice %55 {offsets = [0, 0], sizes = [40, 8], strides = [1, 1]} : vector<80x8xbf16> to vector<40x8xbf16>
    %96 = vector.extract_strided_slice %57 {offsets = [0, 0], sizes = [40, 8], strides = [1, 1]} : vector<80x8xbf16> to vector<40x8xbf16>
    %cst_32 = arith.constant dense<0.000000e+00> : vector<40x40xf32>
    %97 = tpu.matmul %94, %95, %cst_32 {dimension_numbers = #tpu.dot_dimension_numbers<[1], [1], [0], [0], [0, 0, 1, 0], [], []>} : vector<40x8xbf16>, vector<40x8xbf16>, vector<40x40xf32> -> vector<40x40xf32>
    %98 = vector.broadcast %9 : vector<1x40xf32> to vector<40x40xf32>
    %99 = arith.addf %97, %98 : vector<40x40xf32>
    %cst_33 = arith.constant dense<0xFF800000> : vector<40xf32>
    %100 = vector.multi_reduction <maximumf>, %99, %cst_33 [1] : vector<40x40xf32> to vector<40xf32>
    %101 = vector.shape_cast %100 : vector<40xf32> to vector<40x1xf32>
    %102 = vector.broadcast %101 : vector<40x1xf32> to vector<40x40xf32>
    %103 = arith.subf %99, %102 : vector<40x40xf32>
    %104 = math.exp %103 : vector<40x40xf32>
    %cst_34 = arith.constant dense<0.000000e+00> : vector<40xf32>
    %105 = vector.multi_reduction <add>, %104, %cst_34 [1] : vector<40x40xf32> to vector<40xf32>
    %106 = vector.shape_cast %105 : vector<40xf32> to vector<40x1xf32>
    %107 = tpu.reciprocal %106 {approx = true} : vector<40x1xf32> -> vector<40x1xf32>
    %108 = vector.broadcast %107 : vector<40x1xf32> to vector<40x40xf32>
    %109 = arith.mulf %104, %108 : vector<40x40xf32>
    %110 = arith.truncf %109 : vector<40x40xf32> to vector<40x40xbf16>
    %cst_35 = arith.constant dense<0.000000e+00> : vector<40x8xf32>
    %111 = tpu.matmul %110, %96, %cst_35 {dimension_numbers = #tpu.dot_dimension_numbers<[1], [0], [0], [1], [0, 0, 1, 1], [], []>} : vector<40x40xbf16>, vector<40x8xbf16>, vector<40x8xf32> -> vector<40x8xf32>
    %112 = arith.truncf %111 : vector<40x8xf32> to vector<40x8xbf16>
    %c0_36 = arith.constant 0 : index
    %c1 = arith.constant 1 : index
    %c0_37 = arith.constant 0 : index
    %c0_38 = arith.constant 0 : index
    %113 = vector.load %arg7[%c0_36, %c1, %c0_37, %c0_38] : memref<1x4x8x32xbf16, #tpu.memory_space<vmem>>, vector<1x1x8x32xbf16>
    %114 = vector.shape_cast %113 : vector<1x1x8x32xbf16> to vector<8x32xbf16>
    %cst_39 = arith.constant dense<0.000000e+00> : vector<40x32xf32>
    %115 = tpu.matmul %112, %114, %cst_39 {dimension_numbers = #tpu.dot_dimension_numbers<[1], [0], [0], [1], [0, 0, 1, 1], [], []>} : vector<40x8xbf16>, vector<8x32xbf16>, vector<40x32xf32> -> vector<40x32xf32>
    %116 = arith.addf %93, %115 : vector<40x32xf32>
    %117 = vector.extract_strided_slice %59 {offsets = [0, 0], sizes = [40, 8], strides = [1, 1]} : vector<80x8xbf16> to vector<40x8xbf16>
    %118 = vector.extract_strided_slice %61 {offsets = [0, 0], sizes = [40, 8], strides = [1, 1]} : vector<80x8xbf16> to vector<40x8xbf16>
    %119 = vector.extract_strided_slice %63 {offsets = [0, 0], sizes = [40, 8], strides = [1, 1]} : vector<80x8xbf16> to vector<40x8xbf16>
    %cst_40 = arith.constant dense<0.000000e+00> : vector<40x40xf32>
    %120 = tpu.matmul %117, %118, %cst_40 {dimension_numbers = #tpu.dot_dimension_numbers<[1], [1], [0], [0], [0, 0, 1, 0], [], []>} : vector<40x8xbf16>, vector<40x8xbf16>, vector<40x40xf32> -> vector<40x40xf32>
    %121 = vector.broadcast %9 : vector<1x40xf32> to vector<40x40xf32>
    %122 = arith.addf %120, %121 : vector<40x40xf32>
    %cst_41 = arith.constant dense<0xFF800000> : vector<40xf32>
    %123 = vector.multi_reduction <maximumf>, %122, %cst_41 [1] : vector<40x40xf32> to vector<40xf32>
    %124 = vector.shape_cast %123 : vector<40xf32> to vector<40x1xf32>
    %125 = vector.broadcast %124 : vector<40x1xf32> to vector<40x40xf32>
    %126 = arith.subf %122, %125 : vector<40x40xf32>
    %127 = math.exp %126 : vector<40x40xf32>
    %cst_42 = arith.constant dense<0.000000e+00> : vector<40xf32>
    %128 = vector.multi_reduction <add>, %127, %cst_42 [1] : vector<40x40xf32> to vector<40xf32>
    %129 = vector.shape_cast %128 : vector<40xf32> to vector<40x1xf32>
    %130 = tpu.reciprocal %129 {approx = true} : vector<40x1xf32> -> vector<40x1xf32>
    %131 = vector.broadcast %130 : vector<40x1xf32> to vector<40x40xf32>
    %132 = arith.mulf %127, %131 : vector<40x40xf32>
    %133 = arith.truncf %132 : vector<40x40xf32> to vector<40x40xbf16>
    %cst_43 = arith.constant dense<0.000000e+00> : vector<40x8xf32>
    %134 = tpu.matmul %133, %119, %cst_43 {dimension_numbers = #tpu.dot_dimension_numbers<[1], [0], [0], [1], [0, 0, 1, 1], [], []>} : vector<40x40xbf16>, vector<40x8xbf16>, vector<40x8xf32> -> vector<40x8xf32>
    %135 = arith.truncf %134 : vector<40x8xf32> to vector<40x8xbf16>
    %c0_44 = arith.constant 0 : index
    %c2 = arith.constant 2 : index
    %c0_45 = arith.constant 0 : index
    %c0_46 = arith.constant 0 : index
    %136 = vector.load %arg7[%c0_44, %c2, %c0_45, %c0_46] : memref<1x4x8x32xbf16, #tpu.memory_space<vmem>>, vector<1x1x8x32xbf16>
    %137 = vector.shape_cast %136 : vector<1x1x8x32xbf16> to vector<8x32xbf16>
    %cst_47 = arith.constant dense<0.000000e+00> : vector<40x32xf32>
    %138 = tpu.matmul %135, %137, %cst_47 {dimension_numbers = #tpu.dot_dimension_numbers<[1], [0], [0], [1], [0, 0, 1, 1], [], []>} : vector<40x8xbf16>, vector<8x32xbf16>, vector<40x32xf32> -> vector<40x32xf32>
    %139 = arith.addf %116, %138 : vector<40x32xf32>
    %140 = vector.extract_strided_slice %65 {offsets = [0, 0], sizes = [40, 8], strides = [1, 1]} : vector<80x8xbf16> to vector<40x8xbf16>
    %141 = vector.extract_strided_slice %67 {offsets = [0, 0], sizes = [40, 8], strides = [1, 1]} : vector<80x8xbf16> to vector<40x8xbf16>
    %142 = vector.extract_strided_slice %69 {offsets = [0, 0], sizes = [40, 8], strides = [1, 1]} : vector<80x8xbf16> to vector<40x8xbf16>
    %cst_48 = arith.constant dense<0.000000e+00> : vector<40x40xf32>
    %143 = tpu.matmul %140, %141, %cst_48 {dimension_numbers = #tpu.dot_dimension_numbers<[1], [1], [0], [0], [0, 0, 1, 0], [], []>} : vector<40x8xbf16>, vector<40x8xbf16>, vector<40x40xf32> -> vector<40x40xf32>
    %144 = vector.broadcast %9 : vector<1x40xf32> to vector<40x40xf32>
    %145 = arith.addf %143, %144 : vector<40x40xf32>
    %cst_49 = arith.constant dense<0xFF800000> : vector<40xf32>
    %146 = vector.multi_reduction <maximumf>, %145, %cst_49 [1] : vector<40x40xf32> to vector<40xf32>
    %147 = vector.shape_cast %146 : vector<40xf32> to vector<40x1xf32>
    %148 = vector.broadcast %147 : vector<40x1xf32> to vector<40x40xf32>
    %149 = arith.subf %145, %148 : vector<40x40xf32>
    %150 = math.exp %149 : vector<40x40xf32>
    %cst_50 = arith.constant dense<0.000000e+00> : vector<40xf32>
    %151 = vector.multi_reduction <add>, %150, %cst_50 [1] : vector<40x40xf32> to vector<40xf32>
    %152 = vector.shape_cast %151 : vector<40xf32> to vector<40x1xf32>
    %153 = tpu.reciprocal %152 {approx = true} : vector<40x1xf32> -> vector<40x1xf32>
    %154 = vector.broadcast %153 : vector<40x1xf32> to vector<40x40xf32>
    %155 = arith.mulf %150, %154 : vector<40x40xf32>
    %156 = arith.truncf %155 : vector<40x40xf32> to vector<40x40xbf16>
    %cst_51 = arith.constant dense<0.000000e+00> : vector<40x8xf32>
    %157 = tpu.matmul %156, %142, %cst_51 {dimension_numbers = #tpu.dot_dimension_numbers<[1], [0], [0], [1], [0, 0, 1, 1], [], []>} : vector<40x40xbf16>, vector<40x8xbf16>, vector<40x8xf32> -> vector<40x8xf32>
    %158 = arith.truncf %157 : vector<40x8xf32> to vector<40x8xbf16>
    %c0_52 = arith.constant 0 : index
    %c3 = arith.constant 3 : index
    %c0_53 = arith.constant 0 : index
    %c0_54 = arith.constant 0 : index
    %159 = vector.load %arg7[%c0_52, %c3, %c0_53, %c0_54] : memref<1x4x8x32xbf16, #tpu.memory_space<vmem>>, vector<1x1x8x32xbf16>
    %160 = vector.shape_cast %159 : vector<1x1x8x32xbf16> to vector<8x32xbf16>
    %cst_55 = arith.constant dense<0.000000e+00> : vector<40x32xf32>
    %161 = tpu.matmul %158, %160, %cst_55 {dimension_numbers = #tpu.dot_dimension_numbers<[1], [0], [0], [1], [0, 0, 1, 1], [], []>} : vector<40x8xbf16>, vector<8x32xbf16>, vector<40x32xf32> -> vector<40x32xf32>
    %162 = arith.addf %139, %161 : vector<40x32xf32>
    %cst_56 = arith.constant 0.000000e+00 : f32
    %163 = vector.broadcast %cst_56 : f32 to vector<40x32xf32>
    %164 = vector.extract_strided_slice %47 {offsets = [40, 0], sizes = [40, 8], strides = [1, 1]} : vector<80x8xbf16> to vector<40x8xbf16>
    %165 = vector.extract_strided_slice %49 {offsets = [40, 0], sizes = [40, 8], strides = [1, 1]} : vector<80x8xbf16> to vector<40x8xbf16>
    %166 = vector.extract_strided_slice %51 {offsets = [40, 0], sizes = [40, 8], strides = [1, 1]} : vector<80x8xbf16> to vector<40x8xbf16>
    %cst_57 = arith.constant dense<0.000000e+00> : vector<40x40xf32>
    %167 = tpu.matmul %164, %165, %cst_57 {dimension_numbers = #tpu.dot_dimension_numbers<[1], [1], [0], [0], [0, 0, 1, 0], [], []>} : vector<40x8xbf16>, vector<40x8xbf16>, vector<40x40xf32> -> vector<40x40xf32>
    %168 = vector.broadcast %9 : vector<1x40xf32> to vector<40x40xf32>
    %169 = arith.addf %167, %168 : vector<40x40xf32>
    %cst_58 = arith.constant dense<0xFF800000> : vector<40xf32>
    %170 = vector.multi_reduction <maximumf>, %169, %cst_58 [1] : vector<40x40xf32> to vector<40xf32>
    %171 = vector.shape_cast %170 : vector<40xf32> to vector<40x1xf32>
    %172 = vector.broadcast %171 : vector<40x1xf32> to vector<40x40xf32>
    %173 = arith.subf %169, %172 : vector<40x40xf32>
    %174 = math.exp %173 : vector<40x40xf32>
    %cst_59 = arith.constant dense<0.000000e+00> : vector<40xf32>
    %175 = vector.multi_reduction <add>, %174, %cst_59 [1] : vector<40x40xf32> to vector<40xf32>
    %176 = vector.shape_cast %175 : vector<40xf32> to vector<40x1xf32>
    %177 = tpu.reciprocal %176 {approx = true} : vector<40x1xf32> -> vector<40x1xf32>
    %178 = vector.broadcast %177 : vector<40x1xf32> to vector<40x40xf32>
    %179 = arith.mulf %174, %178 : vector<40x40xf32>
    %180 = arith.truncf %179 : vector<40x40xf32> to vector<40x40xbf16>
    %cst_60 = arith.constant dense<0.000000e+00> : vector<40x8xf32>
    %181 = tpu.matmul %180, %166, %cst_60 {dimension_numbers = #tpu.dot_dimension_numbers<[1], [0], [0], [1], [0, 0, 1, 1], [], []>} : vector<40x40xbf16>, vector<40x8xbf16>, vector<40x8xf32> -> vector<40x8xf32>
    %182 = arith.truncf %181 : vector<40x8xf32> to vector<40x8xbf16>
    %c0_61 = arith.constant 0 : index
    %c0_62 = arith.constant 0 : index
    %c0_63 = arith.constant 0 : index
    %c0_64 = arith.constant 0 : index
    %183 = vector.load %arg7[%c0_61, %c0_62, %c0_63, %c0_64] : memref<1x4x8x32xbf16, #tpu.memory_space<vmem>>, vector<1x1x8x32xbf16>
    %184 = vector.shape_cast %183 : vector<1x1x8x32xbf16> to vector<8x32xbf16>
    %cst_65 = arith.constant dense<0.000000e+00> : vector<40x32xf32>
    %185 = tpu.matmul %182, %184, %cst_65 {dimension_numbers = #tpu.dot_dimension_numbers<[1], [0], [0], [1], [0, 0, 1, 1], [], []>} : vector<40x8xbf16>, vector<8x32xbf16>, vector<40x32xf32> -> vector<40x32xf32>
    %186 = arith.addf %163, %185 : vector<40x32xf32>
    %187 = vector.extract_strided_slice %53 {offsets = [40, 0], sizes = [40, 8], strides = [1, 1]} : vector<80x8xbf16> to vector<40x8xbf16>
    %188 = vector.extract_strided_slice %55 {offsets = [40, 0], sizes = [40, 8], strides = [1, 1]} : vector<80x8xbf16> to vector<40x8xbf16>
    %189 = vector.extract_strided_slice %57 {offsets = [40, 0], sizes = [40, 8], strides = [1, 1]} : vector<80x8xbf16> to vector<40x8xbf16>
    %cst_66 = arith.constant dense<0.000000e+00> : vector<40x40xf32>
    %190 = tpu.matmul %187, %188, %cst_66 {dimension_numbers = #tpu.dot_dimension_numbers<[1], [1], [0], [0], [0, 0, 1, 0], [], []>} : vector<40x8xbf16>, vector<40x8xbf16>, vector<40x40xf32> -> vector<40x40xf32>
    %191 = vector.broadcast %9 : vector<1x40xf32> to vector<40x40xf32>
    %192 = arith.addf %190, %191 : vector<40x40xf32>
    %cst_67 = arith.constant dense<0xFF800000> : vector<40xf32>
    %193 = vector.multi_reduction <maximumf>, %192, %cst_67 [1] : vector<40x40xf32> to vector<40xf32>
    %194 = vector.shape_cast %193 : vector<40xf32> to vector<40x1xf32>
    %195 = vector.broadcast %194 : vector<40x1xf32> to vector<40x40xf32>
    %196 = arith.subf %192, %195 : vector<40x40xf32>
    %197 = math.exp %196 : vector<40x40xf32>
    %cst_68 = arith.constant dense<0.000000e+00> : vector<40xf32>
    %198 = vector.multi_reduction <add>, %197, %cst_68 [1] : vector<40x40xf32> to vector<40xf32>
    %199 = vector.shape_cast %198 : vector<40xf32> to vector<40x1xf32>
    %200 = tpu.reciprocal %199 {approx = true} : vector<40x1xf32> -> vector<40x1xf32>
    %201 = vector.broadcast %200 : vector<40x1xf32> to vector<40x40xf32>
    %202 = arith.mulf %197, %201 : vector<40x40xf32>
    %203 = arith.truncf %202 : vector<40x40xf32> to vector<40x40xbf16>
    %cst_69 = arith.constant dense<0.000000e+00> : vector<40x8xf32>
    %204 = tpu.matmul %203, %189, %cst_69 {dimension_numbers = #tpu.dot_dimension_numbers<[1], [0], [0], [1], [0, 0, 1, 1], [], []>} : vector<40x40xbf16>, vector<40x8xbf16>, vector<40x8xf32> -> vector<40x8xf32>
    %205 = arith.truncf %204 : vector<40x8xf32> to vector<40x8xbf16>
    %c0_70 = arith.constant 0 : index
    %c1_71 = arith.constant 1 : index
    %c0_72 = arith.constant 0 : index
    %c0_73 = arith.constant 0 : index
    %206 = vector.load %arg7[%c0_70, %c1_71, %c0_72, %c0_73] : memref<1x4x8x32xbf16, #tpu.memory_space<vmem>>, vector<1x1x8x32xbf16>
    %207 = vector.shape_cast %206 : vector<1x1x8x32xbf16> to vector<8x32xbf16>
    %cst_74 = arith.constant dense<0.000000e+00> : vector<40x32xf32>
    %208 = tpu.matmul %205, %207, %cst_74 {dimension_numbers = #tpu.dot_dimension_numbers<[1], [0], [0], [1], [0, 0, 1, 1], [], []>} : vector<40x8xbf16>, vector<8x32xbf16>, vector<40x32xf32> -> vector<40x32xf32>
    %209 = arith.addf %186, %208 : vector<40x32xf32>
    %210 = vector.extract_strided_slice %59 {offsets = [40, 0], sizes = [40, 8], strides = [1, 1]} : vector<80x8xbf16> to vector<40x8xbf16>
    %211 = vector.extract_strided_slice %61 {offsets = [40, 0], sizes = [40, 8], strides = [1, 1]} : vector<80x8xbf16> to vector<40x8xbf16>
    %212 = vector.extract_strided_slice %63 {offsets = [40, 0], sizes = [40, 8], strides = [1, 1]} : vector<80x8xbf16> to vector<40x8xbf16>
    %cst_75 = arith.constant dense<0.000000e+00> : vector<40x40xf32>
    %213 = tpu.matmul %210, %211, %cst_75 {dimension_numbers = #tpu.dot_dimension_numbers<[1], [1], [0], [0], [0, 0, 1, 0], [], []>} : vector<40x8xbf16>, vector<40x8xbf16>, vector<40x40xf32> -> vector<40x40xf32>
    %214 = vector.broadcast %9 : vector<1x40xf32> to vector<40x40xf32>
    %215 = arith.addf %213, %214 : vector<40x40xf32>
    %cst_76 = arith.constant dense<0xFF800000> : vector<40xf32>
    %216 = vector.multi_reduction <maximumf>, %215, %cst_76 [1] : vector<40x40xf32> to vector<40xf32>
    %217 = vector.shape_cast %216 : vector<40xf32> to vector<40x1xf32>
    %218 = vector.broadcast %217 : vector<40x1xf32> to vector<40x40xf32>
    %219 = arith.subf %215, %218 : vector<40x40xf32>
    %220 = math.exp %219 : vector<40x40xf32>
    %cst_77 = arith.constant dense<0.000000e+00> : vector<40xf32>
    %221 = vector.multi_reduction <add>, %220, %cst_77 [1] : vector<40x40xf32> to vector<40xf32>
    %222 = vector.shape_cast %221 : vector<40xf32> to vector<40x1xf32>
    %223 = tpu.reciprocal %222 {approx = true} : vector<40x1xf32> -> vector<40x1xf32>
    %224 = vector.broadcast %223 : vector<40x1xf32> to vector<40x40xf32>
    %225 = arith.mulf %220, %224 : vector<40x40xf32>
    %226 = arith.truncf %225 : vector<40x40xf32> to vector<40x40xbf16>
    %cst_78 = arith.constant dense<0.000000e+00> : vector<40x8xf32>
    %227 = tpu.matmul %226, %212, %cst_78 {dimension_numbers = #tpu.dot_dimension_numbers<[1], [0], [0], [1], [0, 0, 1, 1], [], []>} : vector<40x40xbf16>, vector<40x8xbf16>, vector<40x8xf32> -> vector<40x8xf32>
    %228 = arith.truncf %227 : vector<40x8xf32> to vector<40x8xbf16>
    %c0_79 = arith.constant 0 : index
    %c2_80 = arith.constant 2 : index
    %c0_81 = arith.constant 0 : index
    %c0_82 = arith.constant 0 : index
    %229 = vector.load %arg7[%c0_79, %c2_80, %c0_81, %c0_82] : memref<1x4x8x32xbf16, #tpu.memory_space<vmem>>, vector<1x1x8x32xbf16>
    %230 = vector.shape_cast %229 : vector<1x1x8x32xbf16> to vector<8x32xbf16>
    %cst_83 = arith.constant dense<0.000000e+00> : vector<40x32xf32>
    %231 = tpu.matmul %228, %230, %cst_83 {dimension_numbers = #tpu.dot_dimension_numbers<[1], [0], [0], [1], [0, 0, 1, 1], [], []>} : vector<40x8xbf16>, vector<8x32xbf16>, vector<40x32xf32> -> vector<40x32xf32>
    %232 = arith.addf %209, %231 : vector<40x32xf32>
    %233 = vector.extract_strided_slice %65 {offsets = [40, 0], sizes = [40, 8], strides = [1, 1]} : vector<80x8xbf16> to vector<40x8xbf16>
    %234 = vector.extract_strided_slice %67 {offsets = [40, 0], sizes = [40, 8], strides = [1, 1]} : vector<80x8xbf16> to vector<40x8xbf16>
    %235 = vector.extract_strided_slice %69 {offsets = [40, 0], sizes = [40, 8], strides = [1, 1]} : vector<80x8xbf16> to vector<40x8xbf16>
    %cst_84 = arith.constant dense<0.000000e+00> : vector<40x40xf32>
    %236 = tpu.matmul %233, %234, %cst_84 {dimension_numbers = #tpu.dot_dimension_numbers<[1], [1], [0], [0], [0, 0, 1, 0], [], []>} : vector<40x8xbf16>, vector<40x8xbf16>, vector<40x40xf32> -> vector<40x40xf32>
    %237 = vector.broadcast %9 : vector<1x40xf32> to vector<40x40xf32>
    %238 = arith.addf %236, %237 : vector<40x40xf32>
    %cst_85 = arith.constant dense<0xFF800000> : vector<40xf32>
    %239 = vector.multi_reduction <maximumf>, %238, %cst_85 [1] : vector<40x40xf32> to vector<40xf32>
    %240 = vector.shape_cast %239 : vector<40xf32> to vector<40x1xf32>
    %241 = vector.broadcast %240 : vector<40x1xf32> to vector<40x40xf32>
    %242 = arith.subf %238, %241 : vector<40x40xf32>
    %243 = math.exp %242 : vector<40x40xf32>
    %cst_86 = arith.constant dense<0.000000e+00> : vector<40xf32>
    %244 = vector.multi_reduction <add>, %243, %cst_86 [1] : vector<40x40xf32> to vector<40xf32>
    %245 = vector.shape_cast %244 : vector<40xf32> to vector<40x1xf32>
    %246 = tpu.reciprocal %245 {approx = true} : vector<40x1xf32> -> vector<40x1xf32>
    %247 = vector.broadcast %246 : vector<40x1xf32> to vector<40x40xf32>
    %248 = arith.mulf %243, %247 : vector<40x40xf32>
    %249 = arith.truncf %248 : vector<40x40xf32> to vector<40x40xbf16>
    %cst_87 = arith.constant dense<0.000000e+00> : vector<40x8xf32>
    %250 = tpu.matmul %249, %235, %cst_87 {dimension_numbers = #tpu.dot_dimension_numbers<[1], [0], [0], [1], [0, 0, 1, 1], [], []>} : vector<40x40xbf16>, vector<40x8xbf16>, vector<40x8xf32> -> vector<40x8xf32>
    %251 = arith.truncf %250 : vector<40x8xf32> to vector<40x8xbf16>
    %c0_88 = arith.constant 0 : index
    %c3_89 = arith.constant 3 : index
    %c0_90 = arith.constant 0 : index
    %c0_91 = arith.constant 0 : index
    %252 = vector.load %arg7[%c0_88, %c3_89, %c0_90, %c0_91] : memref<1x4x8x32xbf16, #tpu.memory_space<vmem>>, vector<1x1x8x32xbf16>
    %253 = vector.shape_cast %252 : vector<1x1x8x32xbf16> to vector<8x32xbf16>
    %cst_92 = arith.constant dense<0.000000e+00> : vector<40x32xf32>
    %254 = tpu.matmul %251, %253, %cst_92 {dimension_numbers = #tpu.dot_dimension_numbers<[1], [0], [0], [1], [0, 0, 1, 1], [], []>} : vector<40x8xbf16>, vector<8x32xbf16>, vector<40x32xf32> -> vector<40x32xf32>
    %255 = arith.addf %232, %254 : vector<40x32xf32>
    %256 = tpu.concatenate %162, %255 in 0 : vector<40x32xf32>, vector<40x32xf32> -> vector<80x32xf32>
    %257 = arith.addf %3, %256 : vector<80x32xf32>
    %c0_93 = arith.constant 0 : index
    %c0_94 = arith.constant 0 : index
    %c0_95 = arith.constant 0 : index
    %258 = vector.load %arg8[%c0_93, %c0_94, %c0_95] : memref<1x1x32xf32, #tpu.memory_space<vmem>>, vector<1x1x32xf32>
    %259 = vector.shape_cast %258 : vector<1x1x32xf32> to vector<1x32xf32>
    %260 = vector.broadcast %259 : vector<1x32xf32> to vector<80x32xf32>
    %261 = arith.addf %257, %260 : vector<80x32xf32>
    %c0_96 = arith.constant 0 : index
    %c0_97 = arith.constant 0 : index
    %c0_98 = arith.constant 0 : index
    %262 = vector.load %arg9[%c0_96, %c0_97, %c0_98] : memref<1x1x32xf32, #tpu.memory_space<vmem>>, vector<1x1x32xf32>
    %263 = vector.shape_cast %262 : vector<1x1x32xf32> to vector<1x32xf32>
    %c0_99 = arith.constant 0 : index
    %c0_100 = arith.constant 0 : index
    %c0_101 = arith.constant 0 : index
    %264 = vector.load %arg10[%c0_99, %c0_100, %c0_101] : memref<1x1x32xf32, #tpu.memory_space<vmem>>, vector<1x1x32xf32>
    %265 = vector.shape_cast %264 : vector<1x1x32xf32> to vector<1x32xf32>
    %cst_102 = arith.constant dense<0.000000e+00> : vector<80xf32>
    %266 = vector.multi_reduction <add>, %261, %cst_102 [1] : vector<80x32xf32> to vector<80xf32>
    %267 = vector.shape_cast %266 : vector<80xf32> to vector<80x1xf32>
    %cst_103 = arith.constant 3.200000e+01 : f32
    %268 = vector.broadcast %cst_103 : f32 to vector<80x1xf32>
    %269 = arith.divf %267, %268 : vector<80x1xf32>
    %270 = arith.mulf %261, %261 : vector<80x32xf32>
    %cst_104 = arith.constant dense<0.000000e+00> : vector<80xf32>
    %271 = vector.multi_reduction <add>, %270, %cst_104 [1] : vector<80x32xf32> to vector<80xf32>
    %272 = vector.shape_cast %271 : vector<80xf32> to vector<80x1xf32>
    %cst_105 = arith.constant 3.200000e+01 : f32
    %273 = vector.broadcast %cst_105 : f32 to vector<80x1xf32>
    %274 = arith.divf %272, %273 : vector<80x1xf32>
    %275 = arith.mulf %269, %269 : vector<80x1xf32>
    %276 = arith.subf %274, %275 : vector<80x1xf32>
    %cst_106 = arith.constant 0.000000e+00 : f32
    %277 = vector.broadcast %cst_106 : f32 to vector<80x1xf32>
    %278 = arith.maximumf %276, %277 : vector<80x1xf32>
    %279 = vector.broadcast %269 : vector<80x1xf32> to vector<80x32xf32>
    %280 = arith.subf %261, %279 : vector<80x32xf32>
    %cst_107 = arith.constant 9.99999997E-7 : f32
    %281 = vector.broadcast %cst_107 : f32 to vector<80x1xf32>
    %282 = arith.addf %278, %281 : vector<80x1xf32>
    %283 = math.rsqrt %282 : vector<80x1xf32>
    %284 = vector.broadcast %283 : vector<80x1xf32> to vector<80x32xf32>
    %285 = arith.mulf %280, %284 : vector<80x32xf32>
    %286 = vector.broadcast %263 : vector<1x32xf32> to vector<80x32xf32>
    %287 = arith.mulf %285, %286 : vector<80x32xf32>
    %288 = vector.broadcast %265 : vector<1x32xf32> to vector<80x32xf32>
    %289 = arith.addf %287, %288 : vector<80x32xf32>
    %290 = arith.truncf %289 : vector<80x32xf32> to vector<80x32xbf16>
    %c0_108 = arith.constant 0 : index
    %c0_109 = arith.constant 0 : index
    %c0_110 = arith.constant 0 : index
    %291 = vector.load %arg11[%c0_108, %c0_109, %c0_110] : memref<1x32x64xbf16, #tpu.memory_space<vmem>>, vector<1x32x64xbf16>
    %292 = vector.shape_cast %291 : vector<1x32x64xbf16> to vector<32x64xbf16>
    %cst_111 = arith.constant dense<0.000000e+00> : vector<80x64xf32>
    %293 = tpu.matmul %290, %292, %cst_111 {dimension_numbers = #tpu.dot_dimension_numbers<[1], [0], [0], [1], [0, 0, 1, 1], [], []>} : vector<80x32xbf16>, vector<32x64xbf16>, vector<80x64xf32> -> vector<80x64xf32>
    %c0_112 = arith.constant 0 : index
    %c0_113 = arith.constant 0 : index
    %c0_114 = arith.constant 0 : index
    %294 = vector.load %arg12[%c0_112, %c0_113, %c0_114] : memref<1x1x64xf32, #tpu.memory_space<vmem>>, vector<1x1x64xf32>
    %295 = vector.shape_cast %294 : vector<1x1x64xf32> to vector<1x64xf32>
    %296 = vector.broadcast %295 : vector<1x64xf32> to vector<80x64xf32>
    %297 = arith.addf %293, %296 : vector<80x64xf32>
    %cst_115 = arith.constant 5.000000e-01 : f32
    %298 = vector.broadcast %cst_115 : f32 to vector<80x64xf32>
    %299 = arith.mulf %298, %297 : vector<80x64xf32>
    %cst_116 = arith.constant 0.707106769 : f32
    %300 = vector.broadcast %cst_116 : f32 to vector<80x64xf32>
    %301 = arith.mulf %297, %300 : vector<80x64xf32>
    %302 = math.absf %301 : vector<80x64xf32>
    %cst_117 = arith.constant 0.327591091 : f32
    %303 = vector.broadcast %cst_117 : f32 to vector<80x64xf32>
    %304 = arith.mulf %303, %302 : vector<80x64xf32>
    %cst_118 = arith.constant 1.000000e+00 : f32
    %305 = vector.broadcast %cst_118 : f32 to vector<80x64xf32>
    %306 = arith.addf %305, %304 : vector<80x64xf32>
    %cst_119 = arith.constant 1.000000e+00 : f32
    %307 = vector.broadcast %cst_119 : f32 to vector<80x64xf32>
    %308 = arith.divf %307, %306 : vector<80x64xf32>
    %cst_120 = arith.constant 1.06140542 : f32
    %309 = vector.broadcast %cst_120 : f32 to vector<80x64xf32>
    %310 = arith.mulf %309, %308 : vector<80x64xf32>
    %cst_121 = arith.constant -1.45315206 : f32
    %311 = vector.broadcast %cst_121 : f32 to vector<80x64xf32>
    %312 = arith.addf %310, %311 : vector<80x64xf32>
    %313 = arith.mulf %312, %308 : vector<80x64xf32>
    %cst_122 = arith.constant 1.42141378 : f32
    %314 = vector.broadcast %cst_122 : f32 to vector<80x64xf32>
    %315 = arith.addf %313, %314 : vector<80x64xf32>
    %316 = arith.mulf %315, %308 : vector<80x64xf32>
    %cst_123 = arith.constant -0.284496725 : f32
    %317 = vector.broadcast %cst_123 : f32 to vector<80x64xf32>
    %318 = arith.addf %316, %317 : vector<80x64xf32>
    %319 = arith.mulf %318, %308 : vector<80x64xf32>
    %cst_124 = arith.constant 0.254829586 : f32
    %320 = vector.broadcast %cst_124 : f32 to vector<80x64xf32>
    %321 = arith.addf %319, %320 : vector<80x64xf32>
    %322 = arith.mulf %321, %308 : vector<80x64xf32>
    %cst_125 = arith.constant 0.000000e+00 : f32
    %323 = vector.broadcast %cst_125 : f32 to vector<80x64xf32>
    %324 = arith.subf %323, %302 : vector<80x64xf32>
    %325 = arith.mulf %324, %302 : vector<80x64xf32>
    %326 = math.exp %325 : vector<80x64xf32>
    %327 = arith.mulf %322, %326 : vector<80x64xf32>
    %cst_126 = arith.constant 1.000000e+00 : f32
    %328 = vector.broadcast %cst_126 : f32 to vector<80x64xf32>
    %329 = arith.subf %328, %327 : vector<80x64xf32>
    %cst_127 = arith.constant 0.000000e+00 : f32
    %330 = vector.broadcast %cst_127 : f32 to vector<80x64xf32>
    %331 = arith.cmpf olt, %301, %330 : vector<80x64xf32>
    %cst_128 = arith.constant 0.000000e+00 : f32
    %332 = vector.broadcast %cst_128 : f32 to vector<80x64xf32>
    %333 = arith.subf %332, %329 : vector<80x64xf32>
    %334 = arith.select %331, %333, %329 : vector<80x64xi1>, vector<80x64xf32>
    %cst_129 = arith.constant 1.000000e+00 : f32
    %335 = vector.broadcast %cst_129 : f32 to vector<80x64xf32>
    %336 = arith.addf %335, %334 : vector<80x64xf32>
    %337 = arith.mulf %299, %336 : vector<80x64xf32>
    %338 = arith.truncf %337 : vector<80x64xf32> to vector<80x64xbf16>
    %c0_130 = arith.constant 0 : index
    %c0_131 = arith.constant 0 : index
    %c0_132 = arith.constant 0 : index
    %339 = vector.load %arg13[%c0_130, %c0_131, %c0_132] : memref<1x64x32xbf16, #tpu.memory_space<vmem>>, vector<1x64x32xbf16>
    %340 = vector.shape_cast %339 : vector<1x64x32xbf16> to vector<64x32xbf16>
    %cst_133 = arith.constant dense<0.000000e+00> : vector<80x32xf32>
    %341 = tpu.matmul %338, %340, %cst_133 {dimension_numbers = #tpu.dot_dimension_numbers<[1], [0], [0], [1], [0, 0, 1, 1], [], []>} : vector<80x64xbf16>, vector<64x32xbf16>, vector<80x32xf32> -> vector<80x32xf32>
    %c0_134 = arith.constant 0 : index
    %c0_135 = arith.constant 0 : index
    %c0_136 = arith.constant 0 : index
    %342 = vector.load %arg14[%c0_134, %c0_135, %c0_136] : memref<1x1x32xf32, #tpu.memory_space<vmem>>, vector<1x1x32xf32>
    %343 = vector.shape_cast %342 : vector<1x1x32xf32> to vector<1x32xf32>
    %344 = vector.broadcast %343 : vector<1x32xf32> to vector<80x32xf32>
    %345 = arith.addf %341, %344 : vector<80x32xf32>
    %346 = arith.addf %261, %345 : vector<80x32xf32>
    %c0_137 = arith.constant 0 : index
    %c0_138 = arith.constant 0 : index
    %347 = vector.load %arg20[%c0_137, %c0_138] : memref<80x32xf32, #tpu.memory_space<vmem>>, vector<80x32xf32>
    tpu.vector_store %arg20[%c0_137, %c0_138], %346 {strides = array<i32>} : memref<80x32xf32, #tpu.memory_space<vmem>>, vector<80x32xf32>,
    %c1_i32 = arith.constant 1 : i32
    %348 = arith.cmpi eq, %arg1, %c1_i32 : i32
    %349 = arith.extui %348 : i1 to i32
    %c0_i32_139 = arith.constant 0 : i32
    %350 = arith.cmpi ne, %349, %c0_i32_139 : i32
    scf.if %350 {
      %c0_140 = arith.constant 0 : index
      %c0_141 = arith.constant 0 : index
      %351 = vector.load %arg15[%c0_140, %c0_141] : memref<1x32xf32, #tpu.memory_space<vmem>>, vector<1x32xf32>
      %c0_142 = arith.constant 0 : index
      %c0_143 = arith.constant 0 : index
      %352 = vector.load %arg16[%c0_142, %c0_143] : memref<1x32xf32, #tpu.memory_space<vmem>>, vector<1x32xf32>
      %cst_144 = arith.constant dense<0.000000e+00> : vector<80xf32>
      %353 = vector.multi_reduction <add>, %346, %cst_144 [1] : vector<80x32xf32> to vector<80xf32>
      %354 = vector.shape_cast %353 : vector<80xf32> to vector<80x1xf32>
      %cst_145 = arith.constant 3.200000e+01 : f32
      %355 = vector.broadcast %cst_145 : f32 to vector<80x1xf32>
      %356 = arith.divf %354, %355 : vector<80x1xf32>
      %357 = arith.mulf %346, %346 : vector<80x32xf32>
      %cst_146 = arith.constant dense<0.000000e+00> : vector<80xf32>
      %358 = vector.multi_reduction <add>, %357, %cst_146 [1] : vector<80x32xf32> to vector<80xf32>
      %359 = vector.shape_cast %358 : vector<80xf32> to vector<80x1xf32>
      %cst_147 = arith.constant 3.200000e+01 : f32
      %360 = vector.broadcast %cst_147 : f32 to vector<80x1xf32>
      %361 = arith.divf %359, %360 : vector<80x1xf32>
      %362 = arith.mulf %356, %356 : vector<80x1xf32>
      %363 = arith.subf %361, %362 : vector<80x1xf32>
      %cst_148 = arith.constant 0.000000e+00 : f32
      %364 = vector.broadcast %cst_148 : f32 to vector<80x1xf32>
      %365 = arith.maximumf %363, %364 : vector<80x1xf32>
      %366 = vector.broadcast %356 : vector<80x1xf32> to vector<80x32xf32>
      %367 = arith.subf %346, %366 : vector<80x32xf32>
      %cst_149 = arith.constant 9.99999997E-7 : f32
      %368 = vector.broadcast %cst_149 : f32 to vector<80x1xf32>
      %369 = arith.addf %365, %368 : vector<80x1xf32>
      %370 = math.rsqrt %369 : vector<80x1xf32>
      %371 = vector.broadcast %370 : vector<80x1xf32> to vector<80x32xf32>
      %372 = arith.mulf %367, %371 : vector<80x32xf32>
      %373 = vector.broadcast %351 : vector<1x32xf32> to vector<80x32xf32>
      %374 = arith.mulf %372, %373 : vector<80x32xf32>
      %375 = vector.broadcast %352 : vector<1x32xf32> to vector<80x32xf32>
      %376 = arith.addf %374, %375 : vector<80x32xf32>
      %377 = tpu.iota {dimensions = array<i32: 0>} : vector<40x1xi32>
      %c25_i32 = arith.constant 25 : i32
      %378 = vector.broadcast %c25_i32 : i32 to vector<40x1xi32>
      %379 = arith.cmpi sge, %377, %378 : vector<40x1xi32>
      %c33_i32_150 = arith.constant 33 : i32
      %380 = vector.broadcast %c33_i32_150 : i32 to vector<40x1xi32>
      %381 = arith.cmpi slt, %377, %380 : vector<40x1xi32>
      %382 = arith.andi %379, %381 : vector<40x1xi1>
      %383 = vector.extract_strided_slice %376 {offsets = [0, 0], sizes = [40, 32], strides = [1, 1]} : vector<80x32xf32> to vector<40x32xf32>
      %cst_151 = arith.constant 0.000000e+00 : f32
      %384 = vector.shape_cast %382 : vector<40x1xi1> to vector<40x1xi1>
      %385 = vector.broadcast %384 : vector<40x1xi1> to vector<40x32xi1>
      %386 = vector.broadcast %cst_151 : f32 to vector<40x32xf32>
      %387 = arith.select %385, %383, %386 : vector<40x32xi1>, vector<40x32xf32>
      %cst_152 = arith.constant dense<0.000000e+00> : vector<32xf32>
      %388 = vector.multi_reduction <add>, %387, %cst_152 [0] : vector<40x32xf32> to vector<32xf32>
      %389 = vector.shape_cast %388 : vector<32xf32> to vector<1x32xf32>
      %390 = arith.truncf %389 : vector<1x32xf32> to vector<1x32xbf16>
      %c0_153 = arith.constant 0 : index
      %c0_154 = arith.constant 0 : index
      %391 = vector.load %arg17[%c0_153, %c0_154] : memref<32x2688xbf16, #tpu.memory_space<vmem>>, vector<32x2688xbf16>
      %cst_155 = arith.constant dense<0.000000e+00> : vector<1x2688xf32>
      %392 = tpu.matmul %390, %391, %cst_155 {dimension_numbers = #tpu.dot_dimension_numbers<[1], [0], [0], [1], [0, 0, 1, 1], [], []>} : vector<1x32xbf16>, vector<32x2688xbf16>, vector<1x2688xf32> -> vector<1x2688xf32>
      %c0_156 = arith.constant 0 : index
      %c0_157 = arith.constant 0 : index
      %393 = vector.load %arg18[%c0_156, %c0_157] : memref<1x2688xf32, #tpu.memory_space<vmem>>, vector<1x2688xf32>
      %cst_158 = arith.constant 8.000000e+00 : f32
      %394 = vector.broadcast %cst_158 : f32 to vector<1x2688xf32>
      %395 = arith.mulf %394, %393 : vector<1x2688xf32>
      %396 = arith.addf %392, %395 : vector<1x2688xf32>
      %c0_159 = arith.constant 0 : index
      %c0_160 = arith.constant 0 : index
      %c0_161 = arith.constant 0 : index
      %397 = vector.load %arg19[%c0_159, %c0_160, %c0_161] : memref<2x1x2688xf32, #tpu.memory_space<vmem>>, vector<1x1x2688xf32>
      %398 = vector.shape_cast %397 : vector<1x1x2688xf32> to vector<1x2688xf32>
      %399 = vector.shape_cast %396 : vector<1x2688xf32> to vector<1x1x2688xf32>
      tpu.vector_store %arg19[%c0_159, %c0_160, %c0_161], %399 {strides = array<i32>} : memref<2x1x2688xf32, #tpu.memory_space<vmem>>, vector<1x1x2688xf32>,
      %400 = vector.extract_strided_slice %376 {offsets = [40, 0], sizes = [40, 32], strides = [1, 1]} : vector<80x32xf32> to vector<40x32xf32>
      %cst_162 = arith.constant 0.000000e+00 : f32
      %401 = vector.shape_cast %382 : vector<40x1xi1> to vector<40x1xi1>
      %402 = vector.broadcast %401 : vector<40x1xi1> to vector<40x32xi1>
      %403 = vector.broadcast %cst_162 : f32 to vector<40x32xf32>
      %404 = arith.select %402, %400, %403 : vector<40x32xi1>, vector<40x32xf32>
      %cst_163 = arith.constant dense<0.000000e+00> : vector<32xf32>
      %405 = vector.multi_reduction <add>, %404, %cst_163 [0] : vector<40x32xf32> to vector<32xf32>
      %406 = vector.shape_cast %405 : vector<32xf32> to vector<1x32xf32>
      %407 = arith.truncf %406 : vector<1x32xf32> to vector<1x32xbf16>
      %c0_164 = arith.constant 0 : index
      %c0_165 = arith.constant 0 : index
      %408 = vector.load %arg17[%c0_164, %c0_165] : memref<32x2688xbf16, #tpu.memory_space<vmem>>, vector<32x2688xbf16>
      %cst_166 = arith.constant dense<0.000000e+00> : vector<1x2688xf32>
      %409 = tpu.matmul %407, %408, %cst_166 {dimension_numbers = #tpu.dot_dimension_numbers<[1], [0], [0], [1], [0, 0, 1, 1], [], []>} : vector<1x32xbf16>, vector<32x2688xbf16>, vector<1x2688xf32> -> vector<1x2688xf32>
      %c0_167 = arith.constant 0 : index
      %c0_168 = arith.constant 0 : index
      %410 = vector.load %arg18[%c0_167, %c0_168] : memref<1x2688xf32, #tpu.memory_space<vmem>>, vector<1x2688xf32>
      %cst_169 = arith.constant 8.000000e+00 : f32
      %411 = vector.broadcast %cst_169 : f32 to vector<1x2688xf32>
      %412 = arith.mulf %411, %410 : vector<1x2688xf32>
      %413 = arith.addf %409, %412 : vector<1x2688xf32>
      %c1_170 = arith.constant 1 : index
      %c0_171 = arith.constant 0 : index
      %c0_172 = arith.constant 0 : index
      %414 = vector.load %arg19[%c1_170, %c0_171, %c0_172] : memref<2x1x2688xf32, #tpu.memory_space<vmem>>, vector<1x1x2688xf32>
      %415 = vector.shape_cast %414 : vector<1x1x2688xf32> to vector<1x2688xf32>
      %416 = vector.shape_cast %413 : vector<1x2688xf32> to vector<1x1x2688xf32>
      tpu.vector_store %arg19[%c1_170, %c0_171, %c0_172], %416 {strides = array<i32>} : memref<2x1x2688xf32, #tpu.memory_space<vmem>>, vector<1x1x2688xf32>,
    } else {
    }
    return
  }
  func.func @transform_0(%arg0: i32, %arg1: i32) -> (i32, i32, i32) {
    %c0_i32 = arith.constant 0 : i32
    %c0_i32_0 = arith.constant 0 : i32
    %c0_i32_1 = arith.constant 0 : i32
    return %arg0, %c0_i32, %c0_i32_0 : i32, i32, i32
  }
  func.func @transform_1(%arg0: i32, %arg1: i32) -> (i32, i32, i32) {
    %c0_i32 = arith.constant 0 : i32
    %c0_i32_0 = arith.constant 0 : i32
    %c0_i32_1 = arith.constant 0 : i32
    return %arg1, %c0_i32, %c0_i32_0 : i32, i32, i32
  }
  func.func @transform_2(%arg0: i32, %arg1: i32) -> (i32, i32, i32) {
    %c0_i32 = arith.constant 0 : i32
    %c0_i32_0 = arith.constant 0 : i32
    %c0_i32_1 = arith.constant 0 : i32
    return %arg1, %c0_i32, %c0_i32_0 : i32, i32, i32
  }
  func.func @transform_3(%arg0: i32, %arg1: i32) -> (i32, i32, i32) {
    %c0_i32 = arith.constant 0 : i32
    %c0_i32_0 = arith.constant 0 : i32
    %c0_i32_1 = arith.constant 0 : i32
    return %arg1, %c0_i32, %c0_i32_0 : i32, i32, i32
  }
  func.func @transform_4(%arg0: i32, %arg1: i32) -> (i32, i32, i32) {
    %c0_i32 = arith.constant 0 : i32
    %c0_i32_0 = arith.constant 0 : i32
    %c0_i32_1 = arith.constant 0 : i32
    return %arg1, %c0_i32, %c0_i32_0 : i32, i32, i32
  }
  func.func @transform_5(%arg0: i32, %arg1: i32) -> (i32, i32, i32, i32) {
    %c0_i32 = arith.constant 0 : i32
    %c0_i32_0 = arith.constant 0 : i32
    %c0_i32_1 = arith.constant 0 : i32
    %c0_i32_2 = arith.constant 0 : i32
    return %arg1, %c0_i32, %c0_i32_0, %c0_i32_1 : i32, i32, i32, i32
  }
  func.func @transform_6(%arg0: i32, %arg1: i32) -> (i32, i32, i32) {
    %c0_i32 = arith.constant 0 : i32
    %c0_i32_0 = arith.constant 0 : i32
    %c0_i32_1 = arith.constant 0 : i32
    return %arg1, %c0_i32, %c0_i32_0 : i32, i32, i32
  }
  func.func @transform_7(%arg0: i32, %arg1: i32) -> (i32, i32, i32) {
    %c0_i32 = arith.constant 0 : i32
    %c0_i32_0 = arith.constant 0 : i32
    %c0_i32_1 = arith.constant 0 : i32
    return %arg1, %c0_i32, %c0_i32_0 : i32, i32, i32
  }
  func.func @transform_8(%arg0: i32, %arg1: i32) -> (i32, i32, i32) {
    %c0_i32 = arith.constant 0 : i32
    %c0_i32_0 = arith.constant 0 : i32
    %c0_i32_1 = arith.constant 0 : i32
    return %arg1, %c0_i32, %c0_i32_0 : i32, i32, i32
  }
  func.func @transform_9(%arg0: i32, %arg1: i32) -> (i32, i32, i32) {
    %c0_i32 = arith.constant 0 : i32
    %c0_i32_0 = arith.constant 0 : i32
    %c0_i32_1 = arith.constant 0 : i32
    return %arg1, %c0_i32, %c0_i32_0 : i32, i32, i32
  }
  func.func @transform_10(%arg0: i32, %arg1: i32) -> (i32, i32, i32) {
    %c0_i32 = arith.constant 0 : i32
    %c0_i32_0 = arith.constant 0 : i32
    %c0_i32_1 = arith.constant 0 : i32
    return %arg1, %c0_i32, %c0_i32_0 : i32, i32, i32
  }
  func.func @transform_11(%arg0: i32, %arg1: i32) -> (i32, i32, i32) {
    %c0_i32 = arith.constant 0 : i32
    %c0_i32_0 = arith.constant 0 : i32
    %c0_i32_1 = arith.constant 0 : i32
    return %arg1, %c0_i32, %c0_i32_0 : i32, i32, i32
  }
  func.func @transform_12(%arg0: i32, %arg1: i32) -> (i32, i32, i32) {
    %c0_i32 = arith.constant 0 : i32
    %c0_i32_0 = arith.constant 0 : i32
    %c0_i32_1 = arith.constant 0 : i32
    return %arg1, %c0_i32, %c0_i32_0 : i32, i32, i32
  }
  func.func @transform_13(%arg0: i32, %arg1: i32) -> (i32, i32) {
    %c0_i32 = arith.constant 0 : i32
    %c0_i32_0 = arith.constant 0 : i32
    %c0_i32_1 = arith.constant 0 : i32
    return %c0_i32, %c0_i32_0 : i32, i32
  }
  func.func @transform_14(%arg0: i32, %arg1: i32) -> (i32, i32) {
    %c0_i32 = arith.constant 0 : i32
    %c0_i32_0 = arith.constant 0 : i32
    %c0_i32_1 = arith.constant 0 : i32
    return %c0_i32, %c0_i32_0 : i32, i32
  }
  func.func @transform_15(%arg0: i32, %arg1: i32) -> (i32, i32) {
    %c0_i32 = arith.constant 0 : i32
    %c0_i32_0 = arith.constant 0 : i32
    %c0_i32_1 = arith.constant 0 : i32
    return %c0_i32, %c0_i32_0 : i32, i32
  }
  func.func @transform_16(%arg0: i32, %arg1: i32) -> (i32, i32) {
    %c0_i32 = arith.constant 0 : i32
    %c0_i32_0 = arith.constant 0 : i32
    %c0_i32_1 = arith.constant 0 : i32
    return %c0_i32, %c0_i32_0 : i32, i32
  }
  func.func @transform_17(%arg0: i32, %arg1: i32) -> (i32, i32, i32) {
    %c0_i32 = arith.constant 0 : i32
    %c0_i32_0 = arith.constant 0 : i32
    %c0_i32_1 = arith.constant 0 : i32
    return %arg0, %c0_i32, %c0_i32_0 : i32, i32, i32
  }
}

</mosaic_0001>

<llo_original>
// kernel: vit_forward.1
$region0: #{vit_forward.1}
  #allocation0 [shape = 'u32[]', space=smem, size = 0x4, offset = 0x4, fixed_abs, tag = 'smem constant byte address 0x4 - core index']
  #allocation1 [shape = 'u32[144,128]{1,0:T(1,128)}', space=vmem, size = 0x12000, scoped, tag = 'internal scratch']
  #allocation2 [shape = 'f32[80,32]{1,0:T(8,128)}', space=vmem, size = 0xa000, scoped, tag = 'scratch operand']
  %s0 = inlined_call_operand.vmem [shape: f32[4,40,32], index: 0, kind: input, shape index: {}]
  %s1 = inlined_call_operand.vmem [shape: f32[2,1,32], index: 1, kind: input, shape index: {}]
  %s2 = inlined_call_operand.vmem [shape: f32[2,1,32], index: 2, kind: input, shape index: {}]
  %s3 = inlined_call_operand.vmem [shape: bf16[2,32,96], index: 3, kind: input, shape index: {}]
  %s4 = inlined_call_operand.vmem [shape: f32[2,1,96], index: 4, kind: input, shape index: {}]
  %s5 = inlined_call_operand.vmem [shape: bf16[2,4,8,32], index: 5, kind: input, shape index: {}]
  %s6 = inlined_call_operand.vmem [shape: f32[2,1,32], index: 6, kind: input, shape index: {}]
  %s7 = inlined_call_operand.vmem [shape: f32[2,1,32], index: 7, kind: input, shape index: {}]
  %s8 = inlined_call_operand.vmem [shape: f32[2,1,32], index: 8, kind: input, shape index: {}]
  %s9 = inlined_call_operand.vmem [shape: bf16[2,32,64], index: 9, kind: input, shape index: {}]
  %s10 = inlined_call_operand.vmem [shape: f32[2,1,64], index: 10, kind: input, shape index: {}]
  %s11 = inlined_call_operand.vmem [shape: bf16[2,64,32], index: 11, kind: input, shape index: {}]
  %s12 = inlined_call_operand.vmem [shape: f32[2,1,32], index: 12, kind: input, shape index: {}]
  %s13 = inlined_call_operand.vmem [shape: f32[1,32], index: 13, kind: input, shape index: {}]
  %s14 = inlined_call_operand.vmem [shape: f32[1,32], index: 14, kind: input, shape index: {}]
  %s15 = inlined_call_operand.vmem [shape: bf16[32,2688], index: 15, kind: input, shape index: {}]
  %s16 = inlined_call_operand.vmem [shape: f32[1,2688], index: 16, kind: input, shape index: {}]
  %s17 = inlined_call_operand.vmem [shape: f32[4,1,2688], index: 17, kind: output, shape index: {}]
  %s18 = sld [smem:[#allocation0]]
  $region109: #{vit_forward.1} parent=0
    _
  %s20 = ssub.s32 1, %s18
  %s21 = scalar_select 0, %s20, %s18
  loop: start=0, step=1, limit=6
  $region2: #{vit_forward.1} parent=0 // loop_pre_header
    _
  $region3: #{vit_forward.1} parent=0 // loop_header
    %s23 = sphi 0, %s27
    %p24 = scmp.ge.s32.totalorder %s23, 6
    %s30 = sphi 0, %s42
    %s31 = sphi 0, %s38
    %s32 = sphi 0, %s30
    %s33 = sphi 0, %s31
    %s34 = sphi 0, %s32
    %s35 = sphi 0, %s33
    %s45 = sphi 0, %s47
    %s48 = sphi 0, %s45
    %s49 = sphi 0, %s48
    %s65 = sphi 0, %s49
    %s71 = sphi 0, %s73
    %s74 = sphi 0, %s71
    %s75 = sphi 0, %s74
    %s91 = sphi 0, %s75
    %s97 = sphi 0, %s99
    %s100 = sphi 0, %s97
    %s101 = sphi 0, %s100
    %s117 = sphi 0, %s101
    %s123 = sphi 0, %s125
    %s126 = sphi 0, %s123
    %s127 = sphi 0, %s126
    %s143 = sphi 0, %s127
    %s149 = sphi 0, %s151
    %s152 = sphi 0, %s149
    %s153 = sphi 0, %s152
    %s169 = sphi 0, %s153
    %s175 = sphi 0, %s177
    %s178 = sphi 0, %s175
    %s179 = sphi 0, %s178
    %s195 = sphi 0, %s179
    %s201 = sphi 0, %s203
    %s204 = sphi 0, %s201
    %s205 = sphi 0, %s204
    %s221 = sphi 0, %s205
    %s227 = sphi 0, %s229
    %s230 = sphi 0, %s227
    %s231 = sphi 0, %s230
    %s247 = sphi 0, %s231
    %s253 = sphi 0, %s255
    %s256 = sphi 0, %s253
    %s257 = sphi 0, %s256
    %s273 = sphi 0, %s257
    %s279 = sphi 0, %s281
    %s282 = sphi 0, %s279
    %s283 = sphi 0, %s282
    %s299 = sphi 0, %s283
    %s305 = sphi 0, %s307
    %s308 = sphi 0, %s305
    %s309 = sphi 0, %s308
    %s325 = sphi 0, %s309
    %s331 = sphi 0, %s333
    %s334 = sphi 0, %s331
    %s335 = sphi 0, %s334
    %s351 = sphi 0, %s335
    %s357 = sphi 0, %s359
    %s360 = sphi 0, %s357
    %s361 = sphi 0, %s360
    %s377 = sphi 0, %s361
    %s381 = sphi 0, %s381
    %s383 = sphi 0, %s381
    %s384 = sphi 0, %s383
    %s398 = sphi 0, %s384
    %s402 = sphi 0, %s402
    %s404 = sphi 0, %s402
    %s405 = sphi 0, %s404
    %s419 = sphi 0, %s405
    %s423 = sphi 0, %s423
    %s425 = sphi 0, %s423
    %s426 = sphi 0, %s425
    %s440 = sphi 0, %s426
    %s444 = sphi 0, %s444
    %s446 = sphi 0, %s444
    %s447 = sphi 0, %s446
    %s461 = sphi 0, %s447
    %s467 = sphi 0, %s469
    %s470 = sphi 0, %s467
    %s471 = sphi 0, %s470
    %s487 = sphi 0, %s471
  $region4: #{vit_forward.1} parent=0 // loop_header_branch
    %26 = sbr.rel (%p24) target = $region8
  $region5: #{vit_forward.1} parent=0 // loop_body
    %s28 = ssub.s32 %s23, 1
    %s29 = ssub.s32 %s23, 2
    %s36 = sadd.s32 1, %s31
    %p37 = scmp.ge.s32.totalorder %s36, 2
    %s38 = scalar_select %p37, 0, %s36
    %s39 = sadd.s32 1, %s30
    %s40 = scalar_select %p37, %s39, %s30
    %p41 = scmp.ge.s32.totalorder %s40, 2
    %s42 = scalar_select %p41, 0, %s40
    %s43 = ssub.s32 %s30, %s42
    %p44 = scmp.eq.s32.totalorder %s43, 0
    %s46 = sadd.s32 %s45, 1
    %s47 = scalar_select %p44, %s45, %s46
    %p50 = pneg %p44
    %p51 = scmp.eq.s32.totalorder %s23, 3
    %p52 = por %p50, %p51
    %p53 = scmp.ne.s32.totalorder %s45, %s48
    %p54 = scmp.eq.s32.totalorder %s23, 0
    %p55 = por %p53, %p54
    %p56 = scmp.ne.s32.totalorder %s45, %s48
    %p57 = scmp.eq.s32.totalorder %s28, 3
    %p58 = por %p56, %p57
    %p59 = scmp.ne.s32.totalorder %s48, %s49
    %p60 = scmp.eq.s32.totalorder %s28, 0
    %p61 = por %p59, %p60
    %p62 = scmp.ne.s32.totalorder %s48, %s49
    %p63 = scmp.eq.s32.totalorder %s29, 3
    %p64 = por %p62, %p63
    %p66 = scmp.ne.s32.totalorder %s49, %s65
    %p67 = scmp.eq.s32.totalorder %s29, 0
    %p68 = por %p66, %p67
    %s69 = ssub.s32 %s31, %s38
    %p70 = scmp.eq.s32.totalorder %s69, 0
    %s72 = sadd.s32 %s71, 1
    %s73 = scalar_select %p70, %s71, %s72
    %p76 = pneg %p70
    %p77 = scmp.eq.s32.totalorder %s23, 3
    %p78 = por %p76, %p77
    %p79 = scmp.ne.s32.totalorder %s71, %s74
    %p80 = scmp.eq.s32.totalorder %s23, 0
    %p81 = por %p79, %p80
    %p82 = scmp.ne.s32.totalorder %s71, %s74
    %p83 = scmp.eq.s32.totalorder %s28, 3
    %p84 = por %p82, %p83
    %p85 = scmp.ne.s32.totalorder %s74, %s75
    %p86 = scmp.eq.s32.totalorder %s28, 0
    %p87 = por %p85, %p86
    %p88 = scmp.ne.s32.totalorder %s74, %s75
    %p89 = scmp.eq.s32.totalorder %s29, 3
    %p90 = por %p88, %p89
    %p92 = scmp.ne.s32.totalorder %s75, %s91
    %p93 = scmp.eq.s32.totalorder %s29, 0
    %p94 = por %p92, %p93
    %s95 = ssub.s32 %s31, %s38
    %p96 = scmp.eq.s32.totalorder %s95, 0
    %s98 = sadd.s32 %s97, 1
    %s99 = scalar_select %p96, %s97, %s98
    %p102 = pneg %p96
    %p103 = scmp.eq.s32.totalorder %s23, 3
    %p104 = por %p102, %p103
    %p105 = scmp.ne.s32.totalorder %s97, %s100
    %p106 = scmp.eq.s32.totalorder %s23, 0
    %p107 = por %p105, %p106
    %p108 = scmp.ne.s32.totalorder %s97, %s100
    %p109 = scmp.eq.s32.totalorder %s28, 3
    %p110 = por %p108, %p109
    %p111 = scmp.ne.s32.totalorder %s100, %s101
    %p112 = scmp.eq.s32.totalorder %s28, 0
    %p113 = por %p111, %p112
    %p114 = scmp.ne.s32.totalorder %s100, %s101
    %p115 = scmp.eq.s32.totalorder %s29, 3
    %p116 = por %p114, %p115
    %p118 = scmp.ne.s32.totalorder %s101, %s117
    %p119 = scmp.eq.s32.totalorder %s29, 0
    %p120 = por %p118, %p119
    %s121 = ssub.s32 %s31, %s38
    %p122 = scmp.eq.s32.totalorder %s121, 0
    %s124 = sadd.s32 %s123, 1
    %s125 = scalar_select %p122, %s123, %s124
    %p128 = pneg %p122
    %p129 = scmp.eq.s32.totalorder %s23, 3
    %p130 = por %p128, %p129
    %p131 = scmp.ne.s32.totalorder %s123, %s126
    %p132 = scmp.eq.s32.totalorder %s23, 0
    %p133 = por %p131, %p132
    %p134 = scmp.ne.s32.totalorder %s123, %s126
    %p135 = scmp.eq.s32.totalorder %s28, 3
    %p136 = por %p134, %p135
    %p137 = scmp.ne.s32.totalorder %s126, %s127
    %p138 = scmp.eq.s32.totalorder %s28, 0
    %p139 = por %p137, %p138
    %p140 = scmp.ne.s32.totalorder %s126, %s127
    %p141 = scmp.eq.s32.totalorder %s29, 3
    %p142 = por %p140, %p141
    %p144 = scmp.ne.s32.totalorder %s127, %s143
    %p145 = scmp.eq.s32.totalorder %s29, 0
    %p146 = por %p144, %p145
    %s147 = ssub.s32 %s31, %s38
    %p148 = scmp.eq.s32.totalorder %s147, 0
    %s150 = sadd.s32 %s149, 1
    %s151 = scalar_select %p148, %s149, %s150
    %p154 = pneg %p148
    %p155 = scmp.eq.s32.totalorder %s23, 3
    %p156 = por %p154, %p155
    %p157 = scmp.ne.s32.totalorder %s149, %s152
    %p158 = scmp.eq.s32.totalorder %s23, 0
    %p159 = por %p157, %p158
    %p160 = scmp.ne.s32.totalorder %s149, %s152
    %p161 = scmp.eq.s32.totalorder %s28, 3
    %p162 = por %p160, %p161
    %p163 = scmp.ne.s32.totalorder %s152, %s153
    %p164 = scmp.eq.s32.totalorder %s28, 0
    %p165 = por %p163, %p164
    %p166 = scmp.ne.s32.totalorder %s152, %s153
    %p167 = scmp.eq.s32.totalorder %s29, 3
    %p168 = por %p166, %p167
    %p170 = scmp.ne.s32.totalorder %s153, %s169
    %p171 = scmp.eq.s32.totalorder %s29, 0
    %p172 = por %p170, %p171
    %s173 = ssub.s32 %s31, %s38
    %p174 = scmp.eq.s32.totalorder %s173, 0
    %s176 = sadd.s32 %s175, 1
    %s177 = scalar_select %p174, %s175, %s176
    %p180 = pneg %p174
    %p181 = scmp.eq.s32.totalorder %s23, 3
    %p182 = por %p180, %p181
    %p183 = scmp.ne.s32.totalorder %s175, %s178
    %p184 = scmp.eq.s32.totalorder %s23, 0
    %p185 = por %p183, %p184
    %p186 = scmp.ne.s32.totalorder %s175, %s178
    %p187 = scmp.eq.s32.totalorder %s28, 3
    %p188 = por %p186, %p187
    %p189 = scmp.ne.s32.totalorder %s178, %s179
    %p190 = scmp.eq.s32.totalorder %s28, 0
    %p191 = por %p189, %p190
    %p192 = scmp.ne.s32.totalorder %s178, %s179
    %p193 = scmp.eq.s32.totalorder %s29, 3
    %p194 = por %p192, %p193
    %p196 = scmp.ne.s32.totalorder %s179, %s195
    %p197 = scmp.eq.s32.totalorder %s29, 0
    %p198 = por %p196, %p197
    %s199 = ssub.s32 %s31, %s38
    %p200 = scmp.eq.s32.totalorder %s199, 0
    %s202 = sadd.s32 %s201, 1
    %s203 = scalar_select %p200, %s201, %s202
    %p206 = pneg %p200
    %p207 = scmp.eq.s32.totalorder %s23, 3
    %p208 = por %p206, %p207
    %p209 = scmp.ne.s32.totalorder %s201, %s204
    %p210 = scmp.eq.s32.totalorder %s23, 0
    %p211 = por %p209, %p210
    %p212 = scmp.ne.s32.totalorder %s201, %s204
    %p213 = scmp.eq.s32.totalorder %s28, 3
    %p214 = por %p212, %p213
    %p215 = scmp.ne.s32.totalorder %s204, %s205
    %p216 = scmp.eq.s32.totalorder %s28, 0
    %p217 = por %p215, %p216
    %p218 = scmp.ne.s32.totalorder %s204, %s205
    %p219 = scmp.eq.s32.totalorder %s29, 3
    %p220 = por %p218, %p219
    %p222 = scmp.ne.s32.totalorder %s205, %s221
    %p223 = scmp.eq.s32.totalorder %s29, 0
    %p224 = por %p222, %p223
    %s225 = ssub.s32 %s31, %s38
    %p226 = scmp.eq.s32.totalorder %s225, 0
    %s228 = sadd.s32 %s227, 1
    %s229 = scalar_select %p226, %s227, %s228
    %p232 = pneg %p226
    %p233 = scmp.eq.s32.totalorder %s23, 3
    %p234 = por %p232, %p233
    %p235 = scmp.ne.s32.totalorder %s227, %s230
    %p236 = scmp.eq.s32.totalorder %s23, 0
    %p237 = por %p235, %p236
    %p238 = scmp.ne.s32.totalorder %s227, %s230
    %p239 = scmp.eq.s32.totalorder %s28, 3
    %p240 = por %p238, %p239
    %p241 = scmp.ne.s32.totalorder %s230, %s231
    %p242 = scmp.eq.s32.totalorder %s28, 0
    %p243 = por %p241, %p242
    %p244 = scmp.ne.s32.totalorder %s230, %s231
    %p245 = scmp.eq.s32.totalorder %s29, 3
    %p246 = por %p244, %p245
    %p248 = scmp.ne.s32.totalorder %s231, %s247
    %p249 = scmp.eq.s32.totalorder %s29, 0
    %p250 = por %p248, %p249
    %s251 = ssub.s32 %s31, %s38
    %p252 = scmp.eq.s32.totalorder %s251, 0
    %s254 = sadd.s32 %s253, 1
    %s255 = scalar_select %p252, %s253, %s254
    %p258 = pneg %p252
    %p259 = scmp.eq.s32.totalorder %s23, 3
    %p260 = por %p258, %p259
    %p261 = scmp.ne.s32.totalorder %s253, %s256
    %p262 = scmp.eq.s32.totalorder %s23, 0
    %p263 = por %p261, %p262
    %p264 = scmp.ne.s32.totalorder %s253, %s256
    %p265 = scmp.eq.s32.totalorder %s28, 3
    %p266 = por %p264, %p265
    %p267 = scmp.ne.s32.totalorder %s256, %s257
    %p268 = scmp.eq.s32.totalorder %s28, 0
    %p269 = por %p267, %p268
    %p270 = scmp.ne.s32.totalorder %s256, %s257
    %p271 = scmp.eq.s32.totalorder %s29, 3
    %p272 = por %p270, %p271
    %p274 = scmp.ne.s32.totalorder %s257, %s273
    %p275 = scmp.eq.s32.totalorder %s29, 0
    %p276 = por %p274, %p275
    %s277 = ssub.s32 %s31, %s38
    %p278 = scmp.eq.s32.totalorder %s277, 0
    %s280 = sadd.s32 %s279, 1
    %s281 = scalar_select %p278, %s279, %s280
    %p284 = pneg %p278
    %p285 = scmp.eq.s32.totalorder %s23, 3
    %p286 = por %p284, %p285
    %p287 = scmp.ne.s32.totalorder %s279, %s282
    %p288 = scmp.eq.s32.totalorder %s23, 0
    %p289 = por %p287, %p288
    %p290 = scmp.ne.s32.totalorder %s279, %s282
    %p291 = scmp.eq.s32.totalorder %s28, 3
    %p292 = por %p290, %p291
    %p293 = scmp.ne.s32.totalorder %s282, %s283
    %p294 = scmp.eq.s32.totalorder %s28, 0
    %p295 = por %p293, %p294
    %p296 = scmp.ne.s32.totalorder %s282, %s283
    %p297 = scmp.eq.s32.totalorder %s29, 3
    %p298 = por %p296, %p297
    %p300 = scmp.ne.s32.totalorder %s283, %s299
    %p301 = scmp.eq.s32.totalorder %s29, 0
    %p302 = por %p300, %p301
    %s303 = ssub.s32 %s31, %s38
    %p304 = scmp.eq.s32.totalorder %s303, 0
    %s306 = sadd.s32 %s305, 1
    %s307 = scalar_select %p304, %s305, %s306
    %p310 = pneg %p304
    %p311 = scmp.eq.s32.totalorder %s23, 3
    %p312 = por %p310, %p311
    %p313 = scmp.ne.s32.totalorder %s305, %s308
    %p314 = scmp.eq.s32.totalorder %s23, 0
    %p315 = por %p313, %p314
    %p316 = scmp.ne.s32.totalorder %s305, %s308
    %p317 = scmp.eq.s32.totalorder %s28, 3
    %p318 = por %p316, %p317
    %p319 = scmp.ne.s32.totalorder %s308, %s309
    %p320 = scmp.eq.s32.totalorder %s28, 0
    %p321 = por %p319, %p320
    %p322 = scmp.ne.s32.totalorder %s308, %s309
    %p323 = scmp.eq.s32.totalorder %s29, 3
    %p324 = por %p322, %p323
    %p326 = scmp.ne.s32.totalorder %s309, %s325
    %p327 = scmp.eq.s32.totalorder %s29, 0
    %p328 = por %p326, %p327
    %s329 = ssub.s32 %s31, %s38
    %p330 = scmp.eq.s32.totalorder %s329, 0
    %s332 = sadd.s32 %s331, 1
    %s333 = scalar_select %p330, %s331, %s332
    %p336 = pneg %p330
    %p337 = scmp.eq.s32.totalorder %s23, 3
    %p338 = por %p336, %p337
    %p339 = scmp.ne.s32.totalorder %s331, %s334
    %p340 = scmp.eq.s32.totalorder %s23, 0
    %p341 = por %p339, %p340
    %p342 = scmp.ne.s32.totalorder %s331, %s334
    %p343 = scmp.eq.s32.totalorder %s28, 3
    %p344 = por %p342, %p343
    %p345 = scmp.ne.s32.totalorder %s334, %s335
    %p346 = scmp.eq.s32.totalorder %s28, 0
    %p347 = por %p345, %p346
    %p348 = scmp.ne.s32.totalorder %s334, %s335
    %p349 = scmp.eq.s32.totalorder %s29, 3
    %p350 = por %p348, %p349
    %p352 = scmp.ne.s32.totalorder %s335, %s351
    %p353 = scmp.eq.s32.totalorder %s29, 0
    %p354 = por %p352, %p353
    %s355 = ssub.s32 %s31, %s38
    %p356 = scmp.eq.s32.totalorder %s355, 0
    %s358 = sadd.s32 %s357, 1
    %s359 = scalar_select %p356, %s357, %s358
    %p362 = pneg %p356
    %p363 = scmp.eq.s32.totalorder %s23, 3
    %p364 = por %p362, %p363
    %p365 = scmp.ne.s32.totalorder %s357, %s360
    %p366 = scmp.eq.s32.totalorder %s23, 0
    %p367 = por %p365, %p366
    %p368 = scmp.ne.s32.totalorder %s357, %s360
    %p369 = scmp.eq.s32.totalorder %s28, 3
    %p370 = por %p368, %p369
    %p371 = scmp.ne.s32.totalorder %s360, %s361
    %p372 = scmp.eq.s32.totalorder %s28, 0
    %p373 = por %p371, %p372
    %p374 = scmp.ne.s32.totalorder %s360, %s361
    %p375 = scmp.eq.s32.totalorder %s29, 3
    %p376 = por %p374, %p375
    %p378 = scmp.ne.s32.totalorder %s361, %s377
    %p379 = scmp.eq.s32.totalorder %s29, 0
    %p380 = por %p378, %p379
    %s382 = sadd.s32 %s381, 1
    %p385 = scmp.eq.s32.totalorder %s23, 3
    %p386 = scmp.ne.s32.totalorder %s381, %s383
    %p387 = scmp.eq.s32.totalorder %s23, 0
    %p388 = por %p386, %p387
    %p389 = scmp.ne.s32.totalorder %s381, %s383
    %p390 = scmp.eq.s32.totalorder %s28, 3
    %p391 = por %p389, %p390
    %p392 = scmp.ne.s32.totalorder %s383, %s384
    %p393 = scmp.eq.s32.totalorder %s28, 0
    %p394 = por %p392, %p393
    %p395 = scmp.ne.s32.totalorder %s383, %s384
    %p396 = scmp.eq.s32.totalorder %s29, 3
    %p397 = por %p395, %p396
    %p399 = scmp.ne.s32.totalorder %s384, %s398
    %p400 = scmp.eq.s32.totalorder %s29, 0
    %p401 = por %p399, %p400
    %s403 = sadd.s32 %s402, 1
    %p406 = scmp.eq.s32.totalorder %s23, 3
    %p407 = scmp.ne.s32.totalorder %s402, %s404
    %p408 = scmp.eq.s32.totalorder %s23, 0
    %p409 = por %p407, %p408
    %p410 = scmp.ne.s32.totalorder %s402, %s404
    %p411 = scmp.eq.s32.totalorder %s28, 3
    %p412 = por %p410, %p411
    %p413 = scmp.ne.s32.totalorder %s404, %s405
    %p414 = scmp.eq.s32.totalorder %s28, 0
    %p415 = por %p413, %p414
    %p416 = scmp.ne.s32.totalorder %s404, %s405
    %p417 = scmp.eq.s32.totalorder %s29, 3
    %p418 = por %p416, %p417
    %p420 = scmp.ne.s32.totalorder %s405, %s419
    %p421 = scmp.eq.s32.totalorder %s29, 0
    %p422 = por %p420, %p421
    %s424 = sadd.s32 %s423, 1
    %p427 = scmp.eq.s32.totalorder %s23, 3
    %p428 = scmp.ne.s32.totalorder %s423, %s425
    %p429 = scmp.eq.s32.totalorder %s23, 0
    %p430 = por %p428, %p429
    %p431 = scmp.ne.s32.totalorder %s423, %s425
    %p432 = scmp.eq.s32.totalorder %s28, 3
    %p433 = por %p431, %p432
    %p434 = scmp.ne.s32.totalorder %s425, %s426
    %p435 = scmp.eq.s32.totalorder %s28, 0
    %p436 = por %p434, %p435
    %p437 = scmp.ne.s32.totalorder %s425, %s426
    %p438 = scmp.eq.s32.totalorder %s29, 3
    %p439 = por %p437, %p438
    %p441 = scmp.ne.s32.totalorder %s426, %s440
    %p442 = scmp.eq.s32.totalorder %s29, 0
    %p443 = por %p441, %p442
    %s445 = sadd.s32 %s444, 1
    %p448 = scmp.eq.s32.totalorder %s23, 3
    %p449 = scmp.ne.s32.totalorder %s444, %s446
    %p450 = scmp.eq.s32.totalorder %s23, 0
    %p451 = por %p449, %p450
    %p452 = scmp.ne.s32.totalorder %s444, %s446
    %p453 = scmp.eq.s32.totalorder %s28, 3
    %p454 = por %p452, %p453
    %p455 = scmp.ne.s32.totalorder %s446, %s447
    %p456 = scmp.eq.s32.totalorder %s28, 0
    %p457 = por %p455, %p456
    %p458 = scmp.ne.s32.totalorder %s446, %s447
    %p459 = scmp.eq.s32.totalorder %s29, 3
    %p460 = por %p458, %p459
    %p462 = scmp.ne.s32.totalorder %s447, %s461
    %p463 = scmp.eq.s32.totalorder %s29, 0
    %p464 = por %p462, %p463
    %s465 = ssub.s32 %s30, %s42
    %p466 = scmp.eq.s32.totalorder %s465, 0
    %s468 = sadd.s32 %s467, 1
    %s469 = scalar_select %p466, %s467, %s468
    %p472 = pneg %p466
    %p473 = scmp.eq.s32.totalorder %s23, 3
    %p474 = por %p472, %p473
    %p475 = scmp.ne.s32.totalorder %s467, %s470
    %p476 = scmp.eq.s32.totalorder %s23, 0
    %p477 = por %p475, %p476
    %p478 = scmp.ne.s32.totalorder %s467, %s470
    %p479 = scmp.eq.s32.totalorder %s28, 3
    %p480 = por %p478, %p479
    %p481 = scmp.ne.s32.totalorder %s470, %s471
    %p482 = scmp.eq.s32.totalorder %s28, 0
    %p483 = por %p481, %p482
    %p484 = scmp.ne.s32.totalorder %s470, %s471
    %p485 = scmp.eq.s32.totalorder %s29, 3
    %p486 = por %p484, %p485
    %p488 = scmp.ne.s32.totalorder %s471, %s487
    %p489 = scmp.eq.s32.totalorder %s29, 0
    %p490 = por %p488, %p489
    %p491 = scmp.le.s32.totalorder 1, %s23
    %p492 = scmp.lt.s32.totalorder %s23, 5
    %p493 = pnand %p491, %p492
    %p494 = pneg %p493
    // Predicated region
    $region9: #{vit_forward.1} parent=5 // pred_check
      _
    $region10: #{vit_forward.1} parent=5 // pred_check_branch
      %496 = sbr.rel (%p493) target = $region12
    $region11: #{vit_forward.1} parent=5 // pred_region
      %s497 = ssub.s32 %s23, 1
      // Predicated region
      $region13: #{vit_forward.1} parent=11 // pred_check
        %p498 = pneg %p394
      $region14: #{vit_forward.1} parent=11 // pred_check_branch
        %500 = sbr.rel (%p498) target = $region16
      $region15: #{vit_forward.1} parent=11 // pred_region
        _
      $region16: #{vit_forward.1} parent=11 // pred_fallthru
        _
      // Predicated region
      $region17: #{vit_forward.1} parent=11 // pred_check
        %p501 = pneg %p415
      $region18: #{vit_forward.1} parent=11 // pred_check_branch
        %503 = sbr.rel (%p501) target = $region20
      $region19: #{vit_forward.1} parent=11 // pred_region
        _
      $region20: #{vit_forward.1} parent=11 // pred_fallthru
        _
      // Predicated region
      $region21: #{vit_forward.1} parent=11 // pred_check
        %p504 = pneg %p436
      $region22: #{vit_forward.1} parent=11 // pred_check_branch
        %506 = sbr.rel (%p504) target = $region24
      $region23: #{vit_forward.1} parent=11 // pred_region
        _
      $region24: #{vit_forward.1} parent=11 // pred_fallthru
        _
      // Predicated region
      $region25: #{vit_forward.1} parent=11 // pred_check
        %p507 = pneg %p457
      $region26: #{vit_forward.1} parent=11 // pred_check_branch
        %509 = sbr.rel (%p507) target = $region28
      $region27: #{vit_forward.1} parent=11 // pred_region
        _
      $region28: #{vit_forward.1} parent=11 // pred_fallthru
        _
    $region12: #{vit_forward.1} parent=5 // pred_fallthru
      _
    %p510 = scmp.lt.s32.totalorder %s23, 4
    // Predicated region
    $region29: #{vit_forward.1} parent=5 // pred_check
      %p511 = pneg %p510
    $region30: #{vit_forward.1} parent=5 // pred_check_branch
      %513 = sbr.rel (%p511) target = $region32
    $region31: #{vit_forward.1} parent=5 // pred_region
      // Predicated region
      $region33: #{vit_forward.1} parent=31 // pred_check
        %p514 = pneg %p55
      $region34: #{vit_forward.1} parent=31 // pred_check_branch
        %516 = sbr.rel (%p514) target = $region36
      $region35: #{vit_forward.1} parent=31 // pred_region
        %s517 = smul.u32 2, %s30
        %p518 = scmp.lt.s32.totalorder %s517, 3
        %s519 = scalar_select %p518, %s517, 3
        %s520 = smul.addr %s519, 5
        %s521 = smul.addr %s520, 8
        %s522 = scalar_lea.vmem %s0, %s521
        %s523 = smul.u32 2, %s30
      $region36: #{vit_forward.1} parent=31 // pred_fallthru
        _
      // Predicated region
      $region37: #{vit_forward.1} parent=31 // pred_check
        %p524 = pneg %p81
      $region38: #{vit_forward.1} parent=31 // pred_check_branch
        %526 = sbr.rel (%p524) target = $region40
      $region39: #{vit_forward.1} parent=31 // pred_region
        %p527 = scmp.lt.s32.totalorder %s31, 1
        %s528 = scalar_select %p527, %s31, 1
        %s529 = scalar_lea.vmem %s1, %s528
      $region40: #{vit_forward.1} parent=31 // pred_fallthru
        _
      // Predicated region
      $region41: #{vit_forward.1} parent=31 // pred_check
        %p530 = pneg %p107
      $region42: #{vit_forward.1} parent=31 // pred_check_branch
        %532 = sbr.rel (%p530) target = $region44
      $region43: #{vit_forward.1} parent=31 // pred_region
        %p533 = scmp.lt.s32.totalorder %s31, 1
        %s534 = scalar_select %p533, %s31, 1
        %s535 = scalar_lea.vmem %s2, %s534
      $region44: #{vit_forward.1} parent=31 // pred_fallthru
        _
      // Predicated region
      $region45: #{vit_forward.1} parent=31 // pred_check
        %p536 = pneg %p133
      $region46: #{vit_forward.1} parent=31 // pred_check_branch
        %538 = sbr.rel (%p536) target = $region48
      $region47: #{vit_forward.1} parent=31 // pred_region
        %p539 = scmp.lt.s32.totalorder %s31, 1
        %s540 = scalar_select %p539, %s31, 1
        %s541 = smul.addr %s540, 4
        %s542 = smul.addr %s541, 4
        %s543 = scalar_lea.vmem %s3, %s542
      $region48: #{vit_forward.1} parent=31 // pred_fallthru
        _
      // Predicated region
      $region49: #{vit_forward.1} parent=31 // pred_check
        %p544 = pneg %p159
      $region50: #{vit_forward.1} parent=31 // pred_check_branch
        %546 = sbr.rel (%p544) target = $region52
      $region51: #{vit_forward.1} parent=31 // pred_region
        %p547 = scmp.lt.s32.totalorder %s31, 1
        %s548 = scalar_select %p547, %s31, 1
        %s549 = scalar_lea.vmem %s4, %s548
      $region52: #{vit_forward.1} parent=31 // pred_fallthru
        _
      // Predicated region
      $region53: #{vit_forward.1} parent=31 // pred_check
        %p550 = pneg %p185
      $region54: #{vit_forward.1} parent=31 // pred_check_branch
        %552 = sbr.rel (%p550) target = $region56
      $region55: #{vit_forward.1} parent=31 // pred_region
        %p553 = scmp.lt.s32.totalorder %s31, 1
        %s554 = scalar_select %p553, %s31, 1
        %s555 = smul.addr %s554, 4
        %s556 = smul.addr %s555, 4
        %s557 = scalar_lea.vmem %s5, %s556
      $region56: #{vit_forward.1} parent=31 // pred_fallthru
        _
      // Predicated region
      $region57: #{vit_forward.1} parent=31 // pred_check
        %p558 = pneg %p211
      $region58: #{vit_forward.1} parent=31 // pred_check_branch
        %560 = sbr.rel (%p558) target = $region60
      $region59: #{vit_forward.1} parent=31 // pred_region
        %p561 = scmp.lt.s32.totalorder %s31, 1
        %s562 = scalar_select %p561, %s31, 1
        %s563 = scalar_lea.vmem %s6, %s562
      $region60: #{vit_forward.1} parent=31 // pred_fallthru
        _
      // Predicated region
      $region61: #{vit_forward.1} parent=31 // pred_check
        %p564 = pneg %p237
      $region62: #{vit_forward.1} parent=31 // pred_check_branch
        %566 = sbr.rel (%p564) target = $region64
      $region63: #{vit_forward.1} parent=31 // pred_region
        %p567 = scmp.lt.s32.totalorder %s31, 1
        %s568 = scalar_select %p567, %s31, 1
        %s569 = scalar_lea.vmem %s7, %s568
      $region64: #{vit_forward.1} parent=31 // pred_fallthru
        _
      // Predicated region
      $region65: #{vit_forward.1} parent=31 // pred_check
        %p570 = pneg %p263
      $region66: #{vit_forward.1} parent=31 // pred_check_branch
        %572 = sbr.rel (%p570) target = $region68
      $region67: #{vit_forward.1} parent=31 // pred_region
        %p573 = scmp.lt.s32.totalorder %s31, 1
        %s574 = scalar_select %p573, %s31, 1
        %s575 = scalar_lea.vmem %s8, %s574
      $region68: #{vit_forward.1} parent=31 // pred_fallthru
        _
      // Predicated region
      $region69: #{vit_forward.1} parent=31 // pred_check
        %p576 = pneg %p289
      $region70: #{vit_forward.1} parent=31 // pred_check_branch
        %578 = sbr.rel (%p576) target = $region72
      $region71: #{vit_forward.1} parent=31 // pred_region
        %p579 = scmp.lt.s32.totalorder %s31, 1
        %s580 = scalar_select %p579, %s31, 1
        %s581 = smul.addr %s580, 4
        %s582 = smul.addr %s581, 4
        %s583 = scalar_lea.vmem %s9, %s582
      $region72: #{vit_forward.1} parent=31 // pred_fallthru
        _
      // Predicated region
      $region73: #{vit_forward.1} parent=31 // pred_check
        %p584 = pneg %p315
      $region74: #{vit_forward.1} parent=31 // pred_check_branch
        %586 = sbr.rel (%p584) target = $region76
      $region75: #{vit_forward.1} parent=31 // pred_region
        %p587 = scmp.lt.s32.totalorder %s31, 1
        %s588 = scalar_select %p587, %s31, 1
        %s589 = scalar_lea.vmem %s10, %s588
      $region76: #{vit_forward.1} parent=31 // pred_fallthru
        _
      // Predicated region
      $region77: #{vit_forward.1} parent=31 // pred_check
        %p590 = pneg %p341
      $region78: #{vit_forward.1} parent=31 // pred_check_branch
        %592 = sbr.rel (%p590) target = $region80
      $region79: #{vit_forward.1} parent=31 // pred_region
        %p593 = scmp.lt.s32.totalorder %s31, 1
        %s594 = scalar_select %p593, %s31, 1
        %s595 = smul.addr %s594, 8
        %s596 = smul.addr %s595, 4
        %s597 = scalar_lea.vmem %s11, %s596
      $region80: #{vit_forward.1} parent=31 // pred_fallthru
        _
      // Predicated region
      $region81: #{vit_forward.1} parent=31 // pred_check
        %p598 = pneg %p367
      $region82: #{vit_forward.1} parent=31 // pred_check_branch
        %600 = sbr.rel (%p598) target = $region84
      $region83: #{vit_forward.1} parent=31 // pred_region
        %p601 = scmp.lt.s32.totalorder %s31, 1
        %s602 = scalar_select %p601, %s31, 1
        %s603 = scalar_lea.vmem %s12, %s602
      $region84: #{vit_forward.1} parent=31 // pred_fallthru
        _
    $region32: #{vit_forward.1} parent=5 // pred_fallthru
      _
    %p604 = scmp.le.s32.totalorder 1, %s23
    %p605 = scmp.lt.s32.totalorder %s23, 5
    %p606 = pnand %p604, %p605
    %p607 = pneg %p606
    // Predicated region
    $region85: #{vit_forward.1} parent=5 // pred_check
      _
    $region86: #{vit_forward.1} parent=5 // pred_check_branch
      %609 = sbr.rel (%p606) target = $region88
    $region87: #{vit_forward.1} parent=5 // pred_region
      %s610 = ssub.s32 %s23, 1
      %s611 = smul.u32 2, %s32
      %p612 = scmp.lt.s32.totalorder %s611, 3
      %s613 = scalar_select %p612, %s611, 3
      %s614 = smul.addr %s613, 5
      %s615 = smul.addr %s614, 8
      %s616 = scalar_lea.vmem %s0, %s615
      %p617 = pneg %p61
      %p618 = pneg %p58
      %p619 = scmp.lt.s32.totalorder %s33, 1
      %s620 = scalar_select %p619, %s33, 1
      %s621 = scalar_lea.vmem %s1, %s620
      %p622 = pneg %p87
      %p623 = pneg %p84
      %p624 = scmp.lt.s32.totalorder %s33, 1
      %s625 = scalar_select %p624, %s33, 1
      %s626 = scalar_lea.vmem %s2, %s625
      %p627 = pneg %p113
      %p628 = pneg %p110
      %p629 = scmp.lt.s32.totalorder %s33, 1
      %s630 = scalar_select %p629, %s33, 1
      %s631 = smul.addr %s630, 4
      %s632 = smul.addr %s631, 4
      %s633 = scalar_lea.vmem %s3, %s632
      %p634 = pneg %p139
      %p635 = pneg %p136
      %p636 = scmp.lt.s32.totalorder %s33, 1
      %s637 = scalar_select %p636, %s33, 1
      %s638 = scalar_lea.vmem %s4, %s637
      %p639 = pneg %p165
      %p640 = pneg %p162
      %p641 = scmp.lt.s32.totalorder %s33, 1
      %s642 = scalar_select %p641, %s33, 1
      %s643 = smul.addr %s642, 4
      %s644 = smul.addr %s643, 4
      %s645 = scalar_lea.vmem %s5, %s644
      %p646 = pneg %p191
      %p647 = pneg %p188
      %p648 = scmp.lt.s32.totalorder %s33, 1
      %s649 = scalar_select %p648, %s33, 1
      %s650 = scalar_lea.vmem %s6, %s649
      %p651 = pneg %p217
      %p652 = pneg %p214
      %p653 = scmp.lt.s32.totalorder %s33, 1
      %s654 = scalar_select %p653, %s33, 1
      %s655 = scalar_lea.vmem %s7, %s654
      %p656 = pneg %p243
      %p657 = pneg %p240
      %p658 = scmp.lt.s32.totalorder %s33, 1
      %s659 = scalar_select %p658, %s33, 1
      %s660 = scalar_lea.vmem %s8, %s659
      %p661 = pneg %p269
      %p662 = pneg %p266
      %p663 = scmp.lt.s32.totalorder %s33, 1
      %s664 = scalar_select %p663, %s33, 1
      %s665 = smul.addr %s664, 4
      %s666 = smul.addr %s665, 4
      %s667 = scalar_lea.vmem %s9, %s666
      %p668 = pneg %p295
      %p669 = pneg %p292
      %p670 = scmp.lt.s32.totalorder %s33, 1
      %s671 = scalar_select %p670, %s33, 1
      %s672 = scalar_lea.vmem %s10, %s671
      %p673 = pneg %p321
      %p674 = pneg %p318
      %p675 = scmp.lt.s32.totalorder %s33, 1
      %s676 = scalar_select %p675, %s33, 1
      %s677 = smul.addr %s676, 8
      %s678 = smul.addr %s677, 4
      %s679 = scalar_lea.vmem %s11, %s678
      %p680 = pneg %p347
      %p681 = pneg %p344
      %p682 = scmp.lt.s32.totalorder %s33, 1
      %s683 = scalar_select %p682, %s33, 1
      %s684 = scalar_lea.vmem %s12, %s683
      %p685 = pneg %p373
      %p686 = pneg %p370
      %p687 = pneg %p394
      %p688 = pneg %p391
      %p689 = pneg %p415
      %p690 = pneg %p412
      %p691 = pneg %p436
      %p692 = pneg %p433
      %p693 = pneg %p457
      %p694 = pneg %p454
      %p695 = pneg %p483
      %p696 = pneg %p480
      %s697 = smul.u32 2, %s32
      %p698 = scmp.lt.s32.totalorder %s697, 3
      %s699 = scalar_select %p698, %s697, 3
      %s700 = smul.addr %s699, 21
      %s701 = scalar_lea.vmem %s17, %s700
      %s702 = smul.u32 2, %s32
      %p703 = scmp.lt.s32.totalorder %s702, 3
      %s704 = scalar_select %p703, %s702, 3
      %s705 = smul.addr %s704, 5
      %s706 = smul.addr %s705, 8
      %s707 = scalar_lea.vmem %s0, %s706
      %s708 = smul.u32 2, %s32
      %p709 = scmp.lt.s32.totalorder %s33, 1
      %s710 = scalar_select %p709, %s33, 1
      %s711 = scalar_lea.vmem %s1, %s710
      %p712 = scmp.lt.s32.totalorder %s33, 1
      %s713 = scalar_select %p712, %s33, 1
      %s714 = scalar_lea.vmem %s2, %s713
      %p715 = scmp.lt.s32.totalorder %s33, 1
      %s716 = scalar_select %p715, %s33, 1
      %s717 = smul.addr %s716, 4
      %s718 = smul.addr %s717, 4
      %s719 = scalar_lea.vmem %s3, %s718
      %p720 = scmp.lt.s32.totalorder %s33, 1
      %s721 = scalar_select %p720, %s33, 1
      %s722 = scalar_lea.vmem %s4, %s721
      %p723 = scmp.lt.s32.totalorder %s33, 1
      %s724 = scalar_select %p723, %s33, 1
      %s725 = smul.addr %s724, 4
      %s726 = smul.addr %s725, 4
      %s727 = scalar_lea.vmem %s5, %s726
      %p728 = scmp.lt.s32.totalorder %s33, 1
      %s729 = scalar_select %p728, %s33, 1
      %s730 = scalar_lea.vmem %s6, %s729
      %p731 = scmp.lt.s32.totalorder %s33, 1
      %s732 = scalar_select %p731, %s33, 1
      %s733 = scalar_lea.vmem %s7, %s732
      %p734 = scmp.lt.s32.totalorder %s33, 1
      %s735 = scalar_select %p734, %s33, 1
      %s736 = scalar_lea.vmem %s8, %s735
      %p737 = scmp.lt.s32.totalorder %s33, 1
      %s738 = scalar_select %p737, %s33, 1
      %s739 = smul.addr %s738, 4
      %s740 = smul.addr %s739, 4
      %s741 = scalar_lea.vmem %s9, %s740
      %p742 = scmp.lt.s32.totalorder %s33, 1
      %s743 = scalar_select %p742, %s33, 1
      %s744 = scalar_lea.vmem %s10, %s743
      %p745 = scmp.lt.s32.totalorder %s33, 1
      %s746 = scalar_select %p745, %s33, 1
      %s747 = smul.addr %s746, 8
      %s748 = smul.addr %s747, 4
      %s749 = scalar_lea.vmem %s11, %s748
      %p750 = scmp.lt.s32.totalorder %s33, 1
      %s751 = scalar_select %p750, %s33, 1
      %s752 = scalar_lea.vmem %s12, %s751
      %s753 = smul.u32 2, %s32
      %p754 = scmp.lt.s32.totalorder %s753, 3
      %s755 = scalar_select %p754, %s753, 3
      %s756 = smul.addr %s755, 21
      %s757 = scalar_lea.vmem %s17, %s756
      %s758 = smul.u32 2, %s32
      %p760 = scmp.eq.s32.totalorder %s33, 0
      // Predicated region
      $region89: #{vit_forward.1} parent=87 // pred_check
        %p761 = pneg %p760
      $region90: #{vit_forward.1} parent=87 // pred_check_branch
        %763 = sbr.rel (%p761) target = $region92
      $region91: #{vit_forward.1} parent=87 // pred_region
        %v764 = vld [vmem:[%s707] sm:$0xff]
        %v765 = vld [vmem:[%s707 + $0x8] sm:$0xff]
        %v766 = vld [vmem:[%s707 + $0x10] sm:$0xff]
        %v767 = vld [vmem:[%s707 + $0x18] sm:$0xff]
        %v768 = vld [vmem:[%s707 + $0x20] sm:$0xff]
        %v769 = vld [vmem:[%s707 + $0x28] sm:$0xff]
        %v770 = vld [vmem:[%s707 + $0x30] sm:$0xff]
        %v771 = vld [vmem:[%s707 + $0x38] sm:$0xff]
        %v772 = vld [vmem:[%s707 + $0x40] sm:$0xff]
        %v773 = vld [vmem:[%s707 + $0x48] sm:$0xff]
        %vm774 = vcmask 261120
        %775 = vst.msk [vmem:[#allocation2] sm:$0xff] %vm774, %v764
        %776 = vst.msk [vmem:[#allocation2 + $0x8] sm:$0xff] %vm774, %v765
        %777 = vst.msk [vmem:[#allocation2 + $0x10] sm:$0xff] %vm774, %v766
        %778 = vst.msk [vmem:[#allocation2 + $0x18] sm:$0xff] %vm774, %v767
        %779 = vst.msk [vmem:[#allocation2 + $0x20] sm:$0xff] %vm774, %v768
        %780 = vst.msk [vmem:[#allocation2 + $0x28] sm:$0xff] %vm774, %v769
        %781 = vst.msk [vmem:[#allocation2 + $0x30] sm:$0xff] %vm774, %v770
        %782 = vst.msk [vmem:[#allocation2 + $0x38] sm:$0xff] %vm774, %v771
        %783 = vst.msk [vmem:[#allocation2 + $0x40] sm:$0xff] %vm774, %v772
        %784 = vst.msk [vmem:[#allocation2 + $0x48] sm:$0xff] %vm774, %v773
      $region92: #{vit_forward.1} parent=87 // pred_fallthru
        _
      %v785 = vld [vmem:[#allocation2] sm:$0xff]
      %v786 = vld [vmem:[#allocation2 + $0x8] sm:$0xff]
      %v787 = vld [vmem:[#allocation2 + $0x10] sm:$0xff]
      %v788 = vld [vmem:[#allocation2 + $0x18] sm:$0xff]
      %v789 = vld [vmem:[#allocation2 + $0x20] sm:$0xff]
      %v790 = vld [vmem:[#allocation2 + $0x28] sm:$0xff]
      %v791 = vld [vmem:[#allocation2 + $0x30] sm:$0xff]
      %v792 = vld [vmem:[#allocation2 + $0x38] sm:$0xff]
      %v793 = vld [vmem:[#allocation2 + $0x40] sm:$0xff]
      %v794 = vld [vmem:[#allocation2 + $0x48] sm:$0xff]
      %v795 = vlaneseq
      %v796 = vand.u32 %v795, 127
      %vm797 = vcmp.lt.s32.totalorder %v796, 33
      %v798 = vsel %vm797, 0.0, -1e+30
      %v799 = vld [vmem:[%s711] sm:$0x1]
      %v800 = vld [vmem:[%s714] sm:$0x1]
      %vm801 = vcmask 261120
      %v802 = vsel %vm801, %v785, 0.0
      %803 = vadd.xlane.f32.xlu0 %v802
      %v804 = vpop.xlane.xlu0 %803
      %v805 = vsel %vm801, %v786, 0.0
      %806 = vadd.xlane.f32.xlu0 %v805
      %v807 = vpop.xlane.xlu0 %806
      %v808 = vsel %vm801, %v787, 0.0
      %809 = vadd.xlane.f32.xlu0 %v808
      %v810 = vpop.xlane.xlu0 %809
      %v811 = vsel %vm801, %v788, 0.0
      %812 = vadd.xlane.f32.xlu0 %v811
      %v813 = vpop.xlane.xlu0 %812
      %v814 = vsel %vm801, %v789, 0.0
      %815 = vadd.xlane.f32.xlu0 %v814
      %v816 = vpop.xlane.xlu0 %815
      %v817 = vsel %vm801, %v790, 0.0
      %818 = vadd.xlane.f32.xlu0 %v817
      %v819 = vpop.xlane.xlu0 %818
      %v820 = vsel %vm801, %v791, 0.0
      %821 = vadd.xlane.f32.xlu0 %v820
      %v822 = vpop.xlane.xlu0 %821
      %v823 = vsel %vm801, %v792, 0.0
      %824 = vadd.xlane.f32.xlu0 %v823
      %v825 = vpop.xlane.xlu0 %824
      %v826 = vsel %vm801, %v793, 0.0
      %827 = vadd.xlane.f32.xlu0 %v826
      %v828 = vpop.xlane.xlu0 %827
      %v829 = vsel %vm801, %v794, 0.0
      %830 = vadd.xlane.f32.xlu0 %v829
      %v831 = vpop.xlane.xlu0 %830
      %v832 = vrcp.pop 32.0
      %v833 = vmul.f32 %v804, %v832
      %v834 = vmul.f32 %v807, %v832
      %v835 = vmul.f32 %v810, %v832
      %v836 = vmul.f32 %v813, %v832
      %v837 = vmul.f32 %v816, %v832
      %v838 = vmul.f32 %v819, %v832
      %v839 = vmul.f32 %v822, %v832
      %v840 = vmul.f32 %v825, %v832
      %v841 = vmul.f32 %v828, %v832
      %v842 = vmul.f32 %v831, %v832
      %v843 = vmul.f32 %v785, %v785
      %v844 = vmul.f32 %v786, %v786
      %v845 = vmul.f32 %v787, %v787
      %v846 = vmul.f32 %v788, %v788
      %v847 = vmul.f32 %v789, %v789
      %v848 = vmul.f32 %v790, %v790
      %v849 = vmul.f32 %v791, %v791
      %v850 = vmul.f32 %v792, %v792
      %v851 = vmul.f32 %v793, %v793
      %v852 = vmul.f32 %v794, %v794
      %v853 = vsel %vm801, %v843, 0.0
      %854 = vadd.xlane.f32.xlu0 %v853
      %v855 = vpop.xlane.xlu0 %854
      %v856 = vsel %vm801, %v844, 0.0
      %857 = vadd.xlane.f32.xlu0 %v856
      %v858 = vpop.xlane.xlu0 %857
      %v859 = vsel %vm801, %v845, 0.0
      %860 = vadd.xlane.f32.xlu0 %v859
      %v861 = vpop.xlane.xlu0 %860
      %v862 = vsel %vm801, %v846, 0.0
      %863 = vadd.xlane.f32.xlu0 %v862
      %v864 = vpop.xlane.xlu0 %863
      %v865 = vsel %vm801, %v847, 0.0
      %866 = vadd.xlane.f32.xlu0 %v865
      %v867 = vpop.xlane.xlu0 %866
      %v868 = vsel %vm801, %v848, 0.0
      %869 = vadd.xlane.f32.xlu0 %v868
      %v870 = vpop.xlane.xlu0 %869
      %v871 = vsel %vm801, %v849, 0.0
      %872 = vadd.xlane.f32.xlu0 %v871
      %v873 = vpop.xlane.xlu0 %872
      %v874 = vsel %vm801, %v850, 0.0
      %875 = vadd.xlane.f32.xlu0 %v874
      %v876 = vpop.xlane.xlu0 %875
      %v877 = vsel %vm801, %v851, 0.0
      %878 = vadd.xlane.f32.xlu0 %v877
      %v879 = vpop.xlane.xlu0 %878
      %v880 = vsel %vm801, %v852, 0.0
      %881 = vadd.xlane.f32.xlu0 %v880
      %v882 = vpop.xlane.xlu0 %881
      %v883 = vmul.f32 %v855, %v832
      %v884 = vmul.f32 %v858, %v832
      %v885 = vmul.f32 %v861, %v832
      %v886 = vmul.f32 %v864, %v832
      %v887 = vmul.f32 %v867, %v832
      %v888 = vmul.f32 %v870, %v832
      %v889 = vmul.f32 %v873, %v832
      %v890 = vmul.f32 %v876, %v832
      %v891 = vmul.f32 %v879, %v832
      %v892 = vmul.f32 %v882, %v832
      %v893 = vmul.f32 %v833, %v833
      %v894 = vmul.f32 %v834, %v834
      %v895 = vmul.f32 %v835, %v835
      %v896 = vmul.f32 %v836, %v836
      %v897 = vmul.f32 %v837, %v837
      %v898 = vmul.f32 %v838, %v838
      %v899 = vmul.f32 %v839, %v839
      %v900 = vmul.f32 %v840, %v840
      %v901 = vmul.f32 %v841, %v841
      %v902 = vmul.f32 %v842, %v842
      %v903 = vsub.f32 %v883, %v893
      %v904 = vsub.f32 %v884, %v894
      %v905 = vsub.f32 %v885, %v895
      %v906 = vsub.f32 %v886, %v896
      %v907 = vsub.f32 %v887, %v897
      %v908 = vsub.f32 %v888, %v898
      %v909 = vsub.f32 %v889, %v899
      %v910 = vsub.f32 %v890, %v900
      %v911 = vsub.f32 %v891, %v901
      %v912 = vsub.f32 %v892, %v902
      %v913 = vmax.f32 %v903, 0.0
      %v914 = vmax.f32 %v904, 0.0
      %v915 = vmax.f32 %v905, 0.0
      %v916 = vmax.f32 %v906, 0.0
      %v917 = vmax.f32 %v907, 0.0
      %v918 = vmax.f32 %v908, 0.0
      %v919 = vmax.f32 %v909, 0.0
      %v920 = vmax.f32 %v910, 0.0
      %v921 = vmax.f32 %v911, 0.0
      %v922 = vmax.f32 %v912, 0.0
      %v923 = vsub.f32 %v785, %v833
      %v924 = vsub.f32 %v786, %v834
      %v925 = vsub.f32 %v787, %v835
      %v926 = vsub.f32 %v788, %v836
      %v927 = vsub.f32 %v789, %v837
      %v928 = vsub.f32 %v790, %v838
      %v929 = vsub.f32 %v791, %v839
      %v930 = vsub.f32 %v792, %v840
      %v931 = vsub.f32 %v793, %v841
      %v932 = vsub.f32 %v794, %v842
      %v933 = vadd.f32 %v913, 1e-06
      %v934 = vadd.f32 %v914, 1e-06
      %v935 = vadd.f32 %v915, 1e-06
      %v936 = vadd.f32 %v916, 1e-06
      %v937 = vadd.f32 %v917, 1e-06
      %v938 = vadd.f32 %v918, 1e-06
      %v939 = vadd.f32 %v919, 1e-06
      %v940 = vadd.f32 %v920, 1e-06
      %v941 = vadd.f32 %v921, 1e-06
      %v942 = vadd.f32 %v922, 1e-06
      %v943 = vrsqrt.pop %v933
      %v944 = vrsqrt.pop %v934
      %v945 = vrsqrt.pop %v935
      %v946 = vrsqrt.pop %v936
      %v947 = vrsqrt.pop %v937
      %v948 = vrsqrt.pop %v938
      %v949 = vrsqrt.pop %v939
      %v950 = vrsqrt.pop %v940
      %v951 = vrsqrt.pop %v941
      %v952 = vrsqrt.pop %v942
      %v953 = vmul.f32 %v923, %v943
      %v954 = vmul.f32 %v924, %v944
      %v955 = vmul.f32 %v925, %v945
      %v956 = vmul.f32 %v926, %v946
      %v957 = vmul.f32 %v927, %v947
      %v958 = vmul.f32 %v928, %v948
      %v959 = vmul.f32 %v929, %v949
      %v960 = vmul.f32 %v930, %v950
      %v961 = vmul.f32 %v931, %v951
      %v962 = vmul.f32 %v932, %v952
      %v964 = vlaneseq
      %v965 = vshrl.u32 %v964, 7
      %v966 = vsub.s32 0, %v965
      %v967 = vrot.slane %v799, %v966
      %v969 = vmul.f32 %v953, %v967
      %v970 = vmul.f32 %v954, %v967
      %v971 = vmul.f32 %v955, %v967
      %v972 = vmul.f32 %v956, %v967
      %v973 = vmul.f32 %v957, %v967
      %v974 = vmul.f32 %v958, %v967
      %v975 = vmul.f32 %v959, %v967
      %v976 = vmul.f32 %v960, %v967
      %v977 = vmul.f32 %v961, %v967
      %v978 = vmul.f32 %v962, %v967
      %v980 = vlaneseq
      %v981 = vshrl.u32 %v980, 7
      %v982 = vsub.s32 0, %v981
      %v983 = vrot.slane %v800, %v982
      %v985 = vadd.f32 %v969, %v983
      %v986 = vadd.f32 %v970, %v983
      %v987 = vadd.f32 %v971, %v983
      %v988 = vadd.f32 %v972, %v983
      %v989 = vadd.f32 %v973, %v983
      %v990 = vadd.f32 %v974, %v983
      %v991 = vadd.f32 %v975, %v983
      %v992 = vadd.f32 %v976, %v983
      %v993 = vadd.f32 %v977, %v983
      %v994 = vadd.f32 %v978, %v983
      %v995 = vpack.c.bf16 %v986, %v985
      %v996 = vpack.c.bf16 %v988, %v987
      %v997 = vpack.c.bf16 %v990, %v989
      %v998 = vpack.c.bf16 %v992, %v991
      %v999 = vpack.c.bf16 %v994, %v993
      %v1000 = vld [vmem:[%s719] sm:$0xf]
      %v1001 = vld [vmem:[%s719 + $0x4] sm:$0xf]
      %v1002 = vld [vmem:[%s719 + $0x8] sm:$0xf]
      %v1003 = vld [vmem:[%s719 + $0xc] sm:$0xf]
      %v1004 = vld [vmem:[%s722] sm:$0x1]
      %v1006 = vlaneseq
      %v1007 = vshrl.u32 %v1006, 7
      %v1008 = vsub.s32 0, %v1007
      %v1009 = vrot.slane %v1004, %v1008
      %v1015 = vunpack.c.l.b16 %v1000
      %v1016 = vunpack.c.l.b16 %v1001
      %v1017 = vunpack.c.l.b16 %v1002
      %v1018 = vunpack.c.l.b16 %v1003
      %v1019 = vpack.c.b16 %v1016, %v1015
      %v1020 = vpack.c.b16 %v1018, %v1017
      %v1024 = vsel %vm801, %v995, 0
      %v1027 = vsel %vm801, %v996, 0
      %v1030 = vsel %vm801, %v997, 0
      %v1033 = vsel %vm801, %v998, 0
      %v1036 = vsel %vm801, %v999, 0
      %1038 = vmatprep.subr.bf16.mxu0 0
      %1039 = vmatpush1.bf16.msra.mxu0 0
      %1040 = vmatprep.subr.bf16.mxu0 0
      %1041 = vmatpush1.bf16.msra.mxu0 0
      %1042 = vmatprep.subr.bf16.mxu0 0
      %1043 = vmatpush1.bf16.msra.mxu0 0
      %1044 = vmatprep.subr.bf16.mxu0 0
      %1045 = vmatpush1.bf16.msra.mxu0 0
      %1046 = vmatprep.subr.bf16.mxu0 0
      %1047 = vmatpush1.bf16.msra.mxu0 0
      %1048 = vmatprep.subr.bf16.mxu0 0
      %1049 = vmatpush1.bf16.msra.mxu0 0
      %1050 = vmatprep.subr.bf16.mxu0 0
      %1051 = vmatpush1.bf16.msra.mxu0 %v1020
      %1052 = vmatprep.subr.bf16.mxu0 0
      %1053 = vmatpush1.bf16.msra.mxu0 %v1019
      %1054 = vmatprep.subr.bf16.mxu0 0
      %1055 = vmatpush2.bf16.msra.mxu0 0
      %1056 = vmatprep.subr.bf16.mxu0 0
      %1057 = vmatpush2.bf16.msra.mxu0 0
      %1058 = vmatprep.subr.bf16.mxu0 0
      %1059 = vmatpush2.bf16.msra.mxu0 0
      %1060 = vmatprep.subr.bf16.mxu0 0
      %1061 = vmatpush2.bf16.msra.mxu0 0
      %1062 = vmatprep.subr.bf16.mxu0 0
      %1063 = vmatpush2.bf16.msra.mxu0 0
      %1064 = vmatprep.subr.bf16.mxu0 0
      %1065 = vmatpush2.bf16.msra.mxu0 0
      %1066 = vmatprep.subr.bf16.mxu0 0
      %1067 = vmatpush2.bf16.msra.mxu0 0
      %1068 = vmatprep.subr.bf16.mxu0 0
      %1069 = vmatpush2.bf16.msra.mxu0 0
      %1070 = vmatprep.mubr.bf16.mxu0 0
      %1071 = vmatmul.mubr.bf16.gmra.mxu0 %v1024
      %v1072 = vpop.f32.mrf.mxu0
      %v1073 = vadd.f32 %v1009, %v1072
      %v1074 = vpop.f32.mrf.mxu0
      %v1075 = vpop.f32.mrf.mxu0
      %v1076 = vadd.f32 %v1009, %v1075
      %v1077 = vpop.f32.mrf.mxu0
      %1078 = vmatprep.mubr.bf16.mxu0 0
      %1079 = vmatmul.mubr.bf16.gmra.mxu0 %v1027
      %v1080 = vpop.f32.mrf.mxu0
      %v1081 = vadd.f32 %v1009, %v1080
      %v1082 = vpop.f32.mrf.mxu0
      %v1083 = vpop.f32.mrf.mxu0
      %v1084 = vadd.f32 %v1009, %v1083
      %v1085 = vpop.f32.mrf.mxu0
      %1086 = vmatprep.mubr.bf16.mxu0 0
      %1087 = vmatmul.mubr.bf16.gmra.mxu0 %v1030
      %v1088 = vpop.f32.mrf.mxu0
      %v1089 = vadd.f32 %v1009, %v1088
      %v1090 = vpop.f32.mrf.mxu0
      %v1091 = vpop.f32.mrf.mxu0
      %v1092 = vadd.f32 %v1009, %v1091
      %v1093 = vpop.f32.mrf.mxu0
      %1094 = vmatprep.mubr.bf16.mxu0 0
      %1095 = vmatmul.mubr.bf16.gmra.mxu0 %v1033
      %v1096 = vpop.f32.mrf.mxu0
      %v1097 = vadd.f32 %v1009, %v1096
      %v1098 = vpop.f32.mrf.mxu0
      %v1099 = vpop.f32.mrf.mxu0
      %v1100 = vadd.f32 %v1009, %v1099
      %v1101 = vpop.f32.mrf.mxu0
      %1102 = vmatprep.mubr.bf16.mxu0 0
      %1103 = vmatmul.mubr.bf16.gmra.mxu0 %v1036
      %v1104 = vpop.f32.mrf.mxu0
      %v1105 = vadd.f32 %v1009, %v1104
      %v1106 = vpop.f32.mrf.mxu0
      %v1107 = vpop.f32.mrf.mxu0
      %v1108 = vadd.f32 %v1009, %v1107
      %v1109 = vpop.f32.mrf.mxu0
      %1110 = vdwg.mxu0
      %v1111 = vpack.c.bf16 %v1076, %v1073
      %v1112 = vpack.c.bf16 %v1084, %v1081
      %v1113 = vpack.c.bf16 %v1092, %v1089
      %v1114 = vpack.c.bf16 %v1100, %v1097
      %v1115 = vpack.c.bf16 %v1108, %v1105
      %1119 = vrot.lane.b32.xlu0 %v1111, 96
      %v1120 = vpop.permute.xlu0 %1119
      %1121 = vrot.lane.b32.xlu0 %v1112, 96
      %v1122 = vpop.permute.xlu0 %1121
      %1123 = vrot.lane.b32.xlu0 %v1113, 96
      %v1124 = vpop.permute.xlu0 %1123
      %vm1125 = vcmask 64512
      %v1127 = vsel %vm1125, %v1111, 0
      %v1130 = vsel %vm1125, %v1112, 0
      %v1133 = vsel %vm1125, %v1113, 0
      %v1136 = vsel %vm1125, %v1120, 0
      %v1139 = vsel %vm1125, %v1122, 0
      %v1142 = vsel %vm1125, %v1124, 0
      %1144 = vmatprep.subr.bf16.mxu0 0
      %1145 = vmatpush1.bf16.xpose.msra.mxu0 0
      %1146 = vmatprep.subr.bf16.mxu0 0
      %1147 = vmatpush1.bf16.xpose.msra.mxu0 0
      %1148 = vmatprep.subr.bf16.mxu0 0
      %1149 = vmatpush1.bf16.xpose.msra.mxu0 0
      %1150 = vmatprep.subr.bf16.mxu0 0
      %1151 = vmatpush1.bf16.xpose.msra.mxu0 0
      %1152 = vmatprep.subr.bf16.mxu0 0
      %1153 = vmatpush1.bf16.xpose.msra.mxu0 0
      %1154 = vmatprep.subr.bf16.mxu0 0
      %1155 = vmatpush1.bf16.xpose.msra.mxu0 %v1142
      %1156 = vmatprep.subr.bf16.mxu0 0
      %1157 = vmatpush1.bf16.xpose.msra.mxu0 %v1139
      %1158 = vmatprep.subr.bf16.mxu0 0
      %1159 = vmatpush1.bf16.xpose.msra.mxu0 %v1136
      %1160 = vmatprep.subr.bf16.mxu0 0
      %1161 = vmatpush2.bf16.xpose.msra.mxu0 0
      %1162 = vmatprep.subr.bf16.mxu0 0
      %1163 = vmatpush2.bf16.xpose.msra.mxu0 0
      %1164 = vmatprep.subr.bf16.mxu0 0
      %1165 = vmatpush2.bf16.xpose.msra.mxu0 0
      %1166 = vmatprep.subr.bf16.mxu0 0
      %1167 = vmatpush2.bf16.xpose.msra.mxu0 0
      %1168 = vmatprep.subr.bf16.mxu0 0
      %1169 = vmatpush2.bf16.xpose.msra.mxu0 0
      %1170 = vmatprep.subr.bf16.mxu0 0
      %1171 = vmatpush2.bf16.xpose.msra.mxu0 0
      %1172 = vmatprep.subr.bf16.mxu0 0
      %1173 = vmatpush2.bf16.xpose.msra.mxu0 0
      %1174 = vmatprep.subr.bf16.mxu0 0
      %1175 = vmatpush2.bf16.xpose.msra.mxu0 0
      %1176 = vmatprep.mubr.bf16.mxu0 0
      %1177 = vmatmul.mubr.bf16.gmra.mxu0 %v1127
      %v1178 = vpop.f32.mrf.mxu0
      %v1179 = vadd.f32 %v798, %v1178
      %v1180 = vpop.f32.mrf.mxu0
      %v1181 = vpop.f32.mrf.mxu0
      %v1182 = vadd.f32 %v798, %v1181
      %v1183 = vpop.f32.mrf.mxu0
      %1184 = vmatprep.mubr.bf16.mxu0 0
      %1185 = vmatmul.mubr.bf16.gmra.mxu0 %v1130
      %v1186 = vpop.f32.mrf.mxu0
      %v1187 = vadd.f32 %v798, %v1186
      %v1188 = vpop.f32.mrf.mxu0
      %v1189 = vpop.f32.mrf.mxu0
      %v1190 = vadd.f32 %v798, %v1189
      %v1191 = vpop.f32.mrf.mxu0
      %1192 = vmatprep.mubr.bf16.mxu0 0
      %1193 = vmatmul.mubr.bf16.gmra.mxu0 %v1133
      %v1194 = vpop.f32.mrf.mxu0
      %v1195 = vadd.f32 %v798, %v1194
      %v1196 = vpop.f32.mrf.mxu0
      %v1197 = vpop.f32.mrf.mxu0
      %v1198 = vpop.f32.mrf.mxu0
      %1199 = vdwg.mxu0
      %vm1200 = vcmask 326656
      %v1201 = vsel %vm1200, %v1179, -inf
      %1202 = vmax.xlane.f32.xlu0 %v1201
      %v1203 = vpop.xlane.xlu0 %1202
      %v1204 = vsel %vm1200, %v1182, -inf
      %1205 = vmax.xlane.f32.xlu0 %v1204
      %v1206 = vpop.xlane.xlu0 %1205
      %v1207 = vsel %vm1200, %v1187, -inf
      %1208 = vmax.xlane.f32.xlu0 %v1207
      %v1209 = vpop.xlane.xlu0 %1208
      %v1210 = vsel %vm1200, %v1190, -inf
      %1211 = vmax.xlane.f32.xlu0 %v1210
      %v1212 = vpop.xlane.xlu0 %1211
      %v1213 = vsel %vm1200, %v1195, -inf
      %1214 = vmax.xlane.f32.xlu0 %v1213
      %v1215 = vpop.xlane.xlu0 %1214
      %v1216 = vsub.f32 %v1179, %v1203
      %v1217 = vsub.f32 %v1182, %v1206
      %v1218 = vsub.f32 %v1187, %v1209
      %v1219 = vsub.f32 %v1190, %v1212
      %v1220 = vsub.f32 %v1195, %v1215
      %v1221 = vmul.f32 %v1216, 1.442695
      %v1222 = vpow.pop %v1221
      %v1223 = vmul.f32 %v1217, 1.442695
      %v1224 = vpow.pop %v1223
      %v1225 = vmul.f32 %v1218, 1.442695
      %v1226 = vpow.pop %v1225
      %v1227 = vmul.f32 %v1219, 1.442695
      %v1228 = vpow.pop %v1227
      %v1229 = vmul.f32 %v1220, 1.442695
      %v1230 = vpow.pop %v1229
      %v1231 = vsel %vm1200, %v1222, 0.0
      %1232 = vadd.xlane.f32.xlu0 %v1231
      %v1233 = vpop.xlane.xlu0 %1232
      %v1234 = vsel %vm1200, %v1224, 0.0
      %1235 = vadd.xlane.f32.xlu0 %v1234
      %v1236 = vpop.xlane.xlu0 %1235
      %v1237 = vsel %vm1200, %v1226, 0.0
      %1238 = vadd.xlane.f32.xlu0 %v1237
      %v1239 = vpop.xlane.xlu0 %1238
      %v1240 = vsel %vm1200, %v1228, 0.0
      %1241 = vadd.xlane.f32.xlu0 %v1240
      %v1242 = vpop.xlane.xlu0 %1241
      %v1243 = vsel %vm1200, %v1230, 0.0
      %1244 = vadd.xlane.f32.xlu0 %v1243
      %v1245 = vpop.xlane.xlu0 %1244
      %v1246 = vrcp.pop %v1233
      %v1247 = vrcp.pop %v1236
      %v1248 = vrcp.pop %v1239
      %v1249 = vrcp.pop %v1242
      %v1250 = vrcp.pop %v1245
      %v1251 = vmul.f32 %v1222, %v1246
      %v1252 = vmul.f32 %v1224, %v1247
      %v1253 = vmul.f32 %v1226, %v1248
      %v1254 = vmul.f32 %v1228, %v1249
      %v1255 = vmul.f32 %v1230, %v1250
      %v1256 = vpack.c.bf16 %v1252, %v1251
      %v1257 = vpack.c.bf16 %v1254, %v1253
      %v1258 = vpack.c.bf16 %v1255, %v1255
      %1259 = vrot.lane.b32.xlu0 %v1111, 64
      %v1260 = vpop.permute.xlu0 %1259
      %1261 = vrot.lane.b32.xlu0 %v1112, 64
      %v1262 = vpop.permute.xlu0 %1261
      %1263 = vrot.lane.b32.xlu0 %v1113, 64
      %v1264 = vpop.permute.xlu0 %1263
      %v1268 = vsel %vm1200, %v1256, 0
      %v1271 = vsel %vm1200, %v1257, 0
      %v1274 = vsel %vm1200, %v1258, 0
      %vm1276 = vcmask 1043456
      %v1278 = vsel %vm1276, %v1264, 0
      %1280 = vmatprep.subr.bf16.mxu0 0
      %1281 = vmatpush1.bf16.msra.mxu0 0
      %1282 = vmatprep.subr.bf16.mxu0 0
      %1283 = vmatpush1.bf16.msra.mxu0 0
      %1284 = vmatprep.subr.bf16.mxu0 0
      %1285 = vmatpush1.bf16.msra.mxu0 0
      %1286 = vmatprep.subr.bf16.mxu0 0
      %1287 = vmatpush1.bf16.msra.mxu0 0
      %1288 = vmatprep.subr.bf16.mxu0 0
      %1289 = vmatpush1.bf16.msra.mxu0 0
      %1290 = vmatprep.subr.bf16.mxu0 0
      %1291 = vmatpush1.bf16.msra.mxu0 %v1278
      %1292 = vmatprep.subr.bf16.mxu0 0
      %1293 = vmatpush1.bf16.msra.mxu0 %v1262
      %1294 = vmatprep.subr.bf16.mxu0 0
      %1295 = vmatpush1.bf16.msra.mxu0 %v1260
      %1296 = vmatprep.subr.bf16.mxu0 0
      %1297 = vmatpush2.bf16.msra.mxu0 0
      %1298 = vmatprep.subr.bf16.mxu0 0
      %1299 = vmatpush2.bf16.msra.mxu0 0
      %1300 = vmatprep.subr.bf16.mxu0 0
      %1301 = vmatpush2.bf16.msra.mxu0 0
      %1302 = vmatprep.subr.bf16.mxu0 0
      %1303 = vmatpush2.bf16.msra.mxu0 0
      %1304 = vmatprep.subr.bf16.mxu0 0
      %1305 = vmatpush2.bf16.msra.mxu0 0
      %1306 = vmatprep.subr.bf16.mxu0 0
      %1307 = vmatpush2.bf16.msra.mxu0 0
      %1308 = vmatprep.subr.bf16.mxu0 0
      %1309 = vmatpush2.bf16.msra.mxu0 0
      %1310 = vmatprep.subr.bf16.mxu0 0
      %1311 = vmatpush2.bf16.msra.mxu0 0
      %1312 = vmatprep.mubr.bf16.mxu0 0
      %1313 = vmatmul.mubr.bf16.gmra.mxu0 %v1268
      %v1314 = vpop.f32.mrf.mxu0
      %v1315 = vadd.f32 0.0, %v1314
      %v1316 = vpop.f32.mrf.mxu0
      %v1317 = vpop.f32.mrf.mxu0
      %v1318 = vadd.f32 0.0, %v1317
      %v1319 = vpop.f32.mrf.mxu0
      %1320 = vmatprep.mubr.bf16.mxu0 0
      %1321 = vmatmul.mubr.bf16.gmra.mxu0 %v1271
      %v1322 = vpop.f32.mrf.mxu0
      %v1323 = vadd.f32 0.0, %v1322
      %v1324 = vpop.f32.mrf.mxu0
      %v1325 = vpop.f32.mrf.mxu0
      %v1326 = vadd.f32 0.0, %v1325
      %v1327 = vpop.f32.mrf.mxu0
      %1328 = vmatprep.mubr.bf16.mxu0 0
      %1329 = vmatmul.mubr.bf16.gmra.mxu0 %v1274
      %v1330 = vpop.f32.mrf.mxu0
      %v1331 = vadd.f32 0.0, %v1330
      %v1332 = vpop.f32.mrf.mxu0
      %v1333 = vpop.f32.mrf.mxu0
      %v1334 = vpop.f32.mrf.mxu0
      %1335 = vdwg.mxu0
      %v1336 = vpack.c.bf16 %v1318, %v1315
      %v1337 = vpack.c.bf16 %v1326, %v1323
      %v1338 = vpack.c.bf16 %v1331, %v1331
      %v1339 = vld [vmem:[%s727] sm:$0xf]
      %1340 = vrot.lane.b32.xlu0 %v1111, 120
      %v1341 = vpop.permute.xlu0 %1340
      %1342 = vrot.lane.b32.xlu0 %v1112, 120
      %v1343 = vpop.permute.xlu0 %1342
      %1344 = vrot.lane.b32.xlu0 %v1113, 120
      %v1345 = vpop.permute.xlu0 %1344
      %1346 = vrot.lane.b32.xlu0 %v1111, 88
      %v1347 = vpop.permute.xlu0 %1346
      %1348 = vrot.lane.b32.xlu0 %v1112, 88
      %v1349 = vpop.permute.xlu0 %1348
      %1350 = vrot.lane.b32.xlu0 %v1113, 88
      %v1351 = vpop.permute.xlu0 %1350
      %v1353 = vsel %vm1125, %v1341, 0
      %v1356 = vsel %vm1125, %v1343, 0
      %v1359 = vsel %vm1125, %v1345, 0
      %v1362 = vsel %vm1125, %v1347, 0
      %v1365 = vsel %vm1125, %v1349, 0
      %v1368 = vsel %vm1125, %v1351, 0
      %1370 = vmatprep.subr.bf16.mxu0 0
      %1371 = vmatpush1.bf16.xpose.msra.mxu0 0
      %1372 = vmatprep.subr.bf16.mxu0 0
      %1373 = vmatpush1.bf16.xpose.msra.mxu0 0
      %1374 = vmatprep.subr.bf16.mxu0 0
      %1375 = vmatpush1.bf16.xpose.msra.mxu0 0
      %1376 = vmatprep.subr.bf16.mxu0 0
      %1377 = vmatpush1.bf16.xpose.msra.mxu0 0
      %1378 = vmatprep.subr.bf16.mxu0 0
      %1379 = vmatpush1.bf16.xpose.msra.mxu0 0
      %1380 = vmatprep.subr.bf16.mxu0 0
      %1381 = vmatpush1.bf16.xpose.msra.mxu0 %v1368
      %1382 = vmatprep.subr.bf16.mxu0 0
      %1383 = vmatpush1.bf16.xpose.msra.mxu0 %v1365
      %1384 = vmatprep.subr.bf16.mxu0 0
      %1385 = vmatpush1.bf16.xpose.msra.mxu0 %v1362
      %1386 = vmatprep.subr.bf16.mxu0 0
      %1387 = vmatpush2.bf16.xpose.msra.mxu0 0
      %1388 = vmatprep.subr.bf16.mxu0 0
      %1389 = vmatpush2.bf16.xpose.msra.mxu0 0
      %1390 = vmatprep.subr.bf16.mxu0 0
      %1391 = vmatpush2.bf16.xpose.msra.mxu0 0
      %1392 = vmatprep.subr.bf16.mxu0 0
      %1393 = vmatpush2.bf16.xpose.msra.mxu0 0
      %1394 = vmatprep.subr.bf16.mxu0 0
      %1395 = vmatpush2.bf16.xpose.msra.mxu0 0
      %1396 = vmatprep.subr.bf16.mxu0 0
      %1397 = vmatpush2.bf16.xpose.msra.mxu0 0
      %1398 = vmatprep.subr.bf16.mxu0 0
      %1399 = vmatpush2.bf16.xpose.msra.mxu0 0
      %1400 = vmatprep.subr.bf16.mxu0 0
      %1401 = vmatpush2.bf16.xpose.msra.mxu0 0
      %1402 = vmatprep.mubr.bf16.mxu0 0
      %1403 = vmatmul.mubr.bf16.gmra.mxu0 %v1353
      %v1404 = vpop.f32.mrf.mxu0
      %v1405 = vadd.f32 %v798, %v1404
      %v1406 = vpop.f32.mrf.mxu0
      %v1407 = vpop.f32.mrf.mxu0
      %v1408 = vadd.f32 %v798, %v1407
      %v1409 = vpop.f32.mrf.mxu0
      %1410 = vmatprep.mubr.bf16.mxu0 0
      %1411 = vmatmul.mubr.bf16.gmra.mxu0 %v1356
      %v1412 = vpop.f32.mrf.mxu0
      %v1413 = vadd.f32 %v798, %v1412
      %v1414 = vpop.f32.mrf.mxu0
      %v1415 = vpop.f32.mrf.mxu0
      %v1416 = vadd.f32 %v798, %v1415
      %v1417 = vpop.f32.mrf.mxu0
      %1418 = vmatprep.mubr.bf16.mxu0 0
      %1419 = vmatmul.mubr.bf16.gmra.mxu0 %v1359
      %v1420 = vpop.f32.mrf.mxu0
      %v1421 = vadd.f32 %v798, %v1420
      %v1422 = vpop.f32.mrf.mxu0
      %v1423 = vpop.f32.mrf.mxu0
      %v1424 = vpop.f32.mrf.mxu0
      %1425 = vdwg.mxu0
      %v1426 = vsel %vm1200, %v1405, -inf
      %1427 = vmax.xlane.f32.xlu0 %v1426
      %v1428 = vpop.xlane.xlu0 %1427
      %v1429 = vsel %vm1200, %v1408, -inf
      %1430 = vmax.xlane.f32.xlu0 %v1429
      %v1431 = vpop.xlane.xlu0 %1430
      %v1432 = vsel %vm1200, %v1413, -inf
      %1433 = vmax.xlane.f32.xlu0 %v1432
      %v1434 = vpop.xlane.xlu0 %1433
      %v1435 = vsel %vm1200, %v1416, -inf
      %1436 = vmax.xlane.f32.xlu0 %v1435
      %v1437 = vpop.xlane.xlu0 %1436
      %v1438 = vsel %vm1200, %v1421, -inf
      %1439 = vmax.xlane.f32.xlu0 %v1438
      %v1440 = vpop.xlane.xlu0 %1439
      %v1441 = vsub.f32 %v1405, %v1428
      %v1442 = vsub.f32 %v1408, %v1431
      %v1443 = vsub.f32 %v1413, %v1434
      %v1444 = vsub.f32 %v1416, %v1437
      %v1445 = vsub.f32 %v1421, %v1440
      %v1446 = vmul.f32 %v1441, 1.442695
      %v1447 = vpow.pop %v1446
      %v1448 = vmul.f32 %v1442, 1.442695
      %v1449 = vpow.pop %v1448
      %v1450 = vmul.f32 %v1443, 1.442695
      %v1451 = vpow.pop %v1450
      %v1452 = vmul.f32 %v1444, 1.442695
      %v1453 = vpow.pop %v1452
      %v1454 = vmul.f32 %v1445, 1.442695
      %v1455 = vpow.pop %v1454
      %v1456 = vsel %vm1200, %v1447, 0.0
      %1457 = vadd.xlane.f32.xlu0 %v1456
      %v1458 = vpop.xlane.xlu0 %1457
      %v1459 = vsel %vm1200, %v1449, 0.0
      %1460 = vadd.xlane.f32.xlu0 %v1459
      %v1461 = vpop.xlane.xlu0 %1460
      %v1462 = vsel %vm1200, %v1451, 0.0
      %1463 = vadd.xlane.f32.xlu0 %v1462
      %v1464 = vpop.xlane.xlu0 %1463
      %v1465 = vsel %vm1200, %v1453, 0.0
      %1466 = vadd.xlane.f32.xlu0 %v1465
      %v1467 = vpop.xlane.xlu0 %1466
      %v1468 = vsel %vm1200, %v1455, 0.0
      %1469 = vadd.xlane.f32.xlu0 %v1468
      %v1470 = vpop.xlane.xlu0 %1469
      %v1471 = vrcp.pop %v1458
      %v1472 = vrcp.pop %v1461
      %v1473 = vrcp.pop %v1464
      %v1474 = vrcp.pop %v1467
      %v1475 = vrcp.pop %v1470
      %v1476 = vmul.f32 %v1447, %v1471
      %v1477 = vmul.f32 %v1449, %v1472
      %v1478 = vmul.f32 %v1451, %v1473
      %v1479 = vmul.f32 %v1453, %v1474
      %v1480 = vmul.f32 %v1455, %v1475
      %v1481 = vpack.c.bf16 %v1477, %v1476
      %v1482 = vpack.c.bf16 %v1479, %v1478
      %v1483 = vpack.c.bf16 %v1480, %v1480
      %1484 = vrot.lane.b32.xlu0 %v1111, 56
      %v1485 = vpop.permute.xlu0 %1484
      %1486 = vrot.lane.b32.xlu0 %v1112, 56
      %v1487 = vpop.permute.xlu0 %1486
      %1488 = vrot.lane.b32.xlu0 %v1113, 56
      %v1489 = vpop.permute.xlu0 %1488
      %v1493 = vsel %vm1200, %v1481, 0
      %v1496 = vsel %vm1200, %v1482, 0
      %v1499 = vsel %vm1200, %v1483, 0
      %v1502 = vsel %vm1276, %v1489, 0
      %1504 = vmatprep.subr.bf16.mxu0 0
      %1505 = vmatpush1.bf16.msra.mxu0 0
      %1506 = vmatprep.subr.bf16.mxu0 0
      %1507 = vmatpush1.bf16.msra.mxu0 0
      %1508 = vmatprep.subr.bf16.mxu0 0
      %1509 = vmatpush1.bf16.msra.mxu0 0
      %1510 = vmatprep.subr.bf16.mxu0 0
      %1511 = vmatpush1.bf16.msra.mxu0 0
      %1512 = vmatprep.subr.bf16.mxu0 0
      %1513 = vmatpush1.bf16.msra.mxu0 0
      %1514 = vmatprep.subr.bf16.mxu0 0
      %1515 = vmatpush1.bf16.msra.mxu0 %v1502
      %1516 = vmatprep.subr.bf16.mxu0 0
      %1517 = vmatpush1.bf16.msra.mxu0 %v1487
      %1518 = vmatprep.subr.bf16.mxu0 0
      %1519 = vmatpush1.bf16.msra.mxu0 %v1485
      %1520 = vmatprep.subr.bf16.mxu0 0
      %1521 = vmatpush2.bf16.msra.mxu0 0
      %1522 = vmatprep.subr.bf16.mxu0 0
      %1523 = vmatpush2.bf16.msra.mxu0 0
      %1524 = vmatprep.subr.bf16.mxu0 0
      %1525 = vmatpush2.bf16.msra.mxu0 0
      %1526 = vmatprep.subr.bf16.mxu0 0
      %1527 = vmatpush2.bf16.msra.mxu0 0
      %1528 = vmatprep.subr.bf16.mxu0 0
      %1529 = vmatpush2.bf16.msra.mxu0 0
      %1530 = vmatprep.subr.bf16.mxu0 0
      %1531 = vmatpush2.bf16.msra.mxu0 0
      %1532 = vmatprep.subr.bf16.mxu0 0
      %1533 = vmatpush2.bf16.msra.mxu0 0
      %1534 = vmatprep.subr.bf16.mxu0 0
      %1535 = vmatpush2.bf16.msra.mxu0 0
      %1536 = vmatprep.mubr.bf16.mxu0 0
      %1537 = vmatmul.mubr.bf16.gmra.mxu0 %v1493
      %v1538 = vpop.f32.mrf.mxu0
      %v1539 = vadd.f32 0.0, %v1538
      %v1540 = vpop.f32.mrf.mxu0
      %v1541 = vpop.f32.mrf.mxu0
      %v1542 = vadd.f32 0.0, %v1541
      %v1543 = vpop.f32.mrf.mxu0
      %1544 = vmatprep.mubr.bf16.mxu0 0
      %1545 = vmatmul.mubr.bf16.gmra.mxu0 %v1496
      %v1546 = vpop.f32.mrf.mxu0
      %v1547 = vadd.f32 0.0, %v1546
      %v1548 = vpop.f32.mrf.mxu0
      %v1549 = vpop.f32.mrf.mxu0
      %v1550 = vadd.f32 0.0, %v1549
      %v1551 = vpop.f32.mrf.mxu0
      %1552 = vmatprep.mubr.bf16.mxu0 0
      %1553 = vmatmul.mubr.bf16.gmra.mxu0 %v1499
      %v1554 = vpop.f32.mrf.mxu0
      %v1555 = vadd.f32 0.0, %v1554
      %v1556 = vpop.f32.mrf.mxu0
      %v1557 = vpop.f32.mrf.mxu0
      %v1558 = vpop.f32.mrf.mxu0
      %1559 = vdwg.mxu0
      %v1560 = vpack.c.bf16 %v1542, %v1539
      %v1561 = vpack.c.bf16 %v1550, %v1547
      %v1562 = vpack.c.bf16 %v1555, %v1555
      %s1563 = scalar_lea.vmem %s727, 4
      %v1564 = vld [vmem:[%s1563] sm:$0xf]
      %v1566 = vsel %vm1125, %v1560, 0
      %v1569 = vsel %vm1125, %v1561, 0
      %v1572 = vsel %vm1125, %v1562, 0
      %v1575 = vsel %vm1276, %v1564, 0
      %1577 = vmatprep.subr.bf16.mxu0 0
      %1578 = vmatpush1.bf16.msra.mxu0 0
      %1579 = vmatprep.subr.bf16.mxu0 0
      %1580 = vmatpush1.bf16.msra.mxu0 0
      %1581 = vmatprep.subr.bf16.mxu0 0
      %1582 = vmatpush1.bf16.msra.mxu0 0
      %1583 = vmatprep.subr.bf16.mxu0 0
      %1584 = vmatpush1.bf16.msra.mxu0 0
      %1585 = vmatprep.subr.bf16.mxu0 0
      %1586 = vmatpush1.bf16.msra.mxu0 0
      %1587 = vmatprep.subr.bf16.mxu0 0
      %1588 = vmatpush1.bf16.msra.mxu0 0
      %1589 = vmatprep.subr.bf16.mxu0 0
      %1590 = vmatpush1.bf16.msra.mxu0 0
      %1591 = vmatprep.subr.bf16.mxu0 0
      %1592 = vmatpush1.bf16.msra.mxu0 %v1575
      %1593 = vmatprep.subr.bf16.mxu0 0
      %1594 = vmatpush2.bf16.msra.mxu0 0
      %1595 = vmatprep.subr.bf16.mxu0 0
      %1596 = vmatpush2.bf16.msra.mxu0 0
      %1597 = vmatprep.subr.bf16.mxu0 0
      %1598 = vmatpush2.bf16.msra.mxu0 0
      %1599 = vmatprep.subr.bf16.mxu0 0
      %1600 = vmatpush2.bf16.msra.mxu0 0
      %1601 = vmatprep.subr.bf16.mxu0 0
      %1602 = vmatpush2.bf16.msra.mxu0 0
      %1603 = vmatprep.subr.bf16.mxu0 0
      %1604 = vmatpush2.bf16.msra.mxu0 0
      %1605 = vmatprep.subr.bf16.mxu0 0
      %1606 = vmatpush2.bf16.msra.mxu0 0
      %1607 = vmatprep.subr.bf16.mxu0 0
      %1608 = vmatpush2.bf16.msra.mxu0 0
      %1609 = vmatprep.mubr.bf16.mxu0 0
      %1610 = vmatmul.mubr.bf16.gmra.mxu0 %v1566
      %v1611 = vpop.f32.mrf.mxu0
      %v1612 = vadd.f32 0.0, %v1611
      %v1613 = vpop.f32.mrf.mxu0
      %v1614 = vpop.f32.mrf.mxu0
      %v1615 = vadd.f32 0.0, %v1614
      %v1616 = vpop.f32.mrf.mxu0
      %1617 = vmatprep.mubr.bf16.mxu0 0
      %1618 = vmatmul.mubr.bf16.gmra.mxu0 %v1569
      %v1619 = vpop.f32.mrf.mxu0
      %v1620 = vadd.f32 0.0, %v1619
      %v1621 = vpop.f32.mrf.mxu0
      %v1622 = vpop.f32.mrf.mxu0
      %v1623 = vadd.f32 0.0, %v1622
      %v1624 = vpop.f32.mrf.mxu0
      %1625 = vmatprep.mubr.bf16.mxu0 0
      %1626 = vmatmul.mubr.bf16.gmra.mxu0 %v1572
      %v1627 = vpop.f32.mrf.mxu0
      %v1628 = vadd.f32 0.0, %v1627
      %v1629 = vpop.f32.mrf.mxu0
      %v1630 = vpop.f32.mrf.mxu0
      %v1631 = vpop.f32.mrf.mxu0
      %1632 = vdwg.mxu0
      %v1634 = vsel %vm1125, %v1336, 0
      %v1637 = vsel %vm1125, %v1337, 0
      %v1640 = vsel %vm1125, %v1338, 0
      %v1643 = vsel %vm1276, %v1339, 0
      %1645 = vmatprep.subr.bf16.mxu0 0
      %1646 = vmatpush1.bf16.msra.mxu0 0
      %1647 = vmatprep.subr.bf16.mxu0 0
      %1648 = vmatpush1.bf16.msra.mxu0 0
      %1649 = vmatprep.subr.bf16.mxu0 0
      %1650 = vmatpush1.bf16.msra.mxu0 0
      %1651 = vmatprep.subr.bf16.mxu0 0
      %1652 = vmatpush1.bf16.msra.mxu0 0
      %1653 = vmatprep.subr.bf16.mxu0 0
      %1654 = vmatpush1.bf16.msra.mxu0 0
      %1655 = vmatprep.subr.bf16.mxu0 0
      %1656 = vmatpush1.bf16.msra.mxu0 0
      %1657 = vmatprep.subr.bf16.mxu0 0
      %1658 = vmatpush1.bf16.msra.mxu0 0
      %1659 = vmatprep.subr.bf16.mxu0 0
      %1660 = vmatpush1.bf16.msra.mxu0 %v1643
      %1661 = vmatprep.subr.bf16.mxu0 0
      %1662 = vmatpush2.bf16.msra.mxu0 0
      %1663 = vmatprep.subr.bf16.mxu0 0
      %1664 = vmatpush2.bf16.msra.mxu0 0
      %1665 = vmatprep.subr.bf16.mxu0 0
      %1666 = vmatpush2.bf16.msra.mxu0 0
      %1667 = vmatprep.subr.bf16.mxu0 0
      %1668 = vmatpush2.bf16.msra.mxu0 0
      %1669 = vmatprep.subr.bf16.mxu0 0
      %1670 = vmatpush2.bf16.msra.mxu0 0
      %1671 = vmatprep.subr.bf16.mxu0 0
      %1672 = vmatpush2.bf16.msra.mxu0 0
      %1673 = vmatprep.subr.bf16.mxu0 0
      %1674 = vmatpush2.bf16.msra.mxu0 0
      %1675 = vmatprep.subr.bf16.mxu0 0
      %1676 = vmatpush2.bf16.msra.mxu0 0
      %1677 = vmatprep.mubr.bf16.mxu0 0
      %1678 = vmatmul.mubr.bf16.gmra.mxu0 %v1634
      %v1679 = vpop.f32.mrf.mxu0
      %v1680 = vadd.f32 %v1612, %v1679
      %v1681 = vpop.f32.mrf.mxu0
      %v1682 = vpop.f32.mrf.mxu0
      %v1683 = vadd.f32 %v1615, %v1682
      %v1684 = vpop.f32.mrf.mxu0
      %1685 = vmatprep.mubr.bf16.mxu0 0
      %1686 = vmatmul.mubr.bf16.gmra.mxu0 %v1637
      %v1687 = vpop.f32.mrf.mxu0
      %v1688 = vadd.f32 %v1620, %v1687
      %v1689 = vpop.f32.mrf.mxu0
      %v1690 = vpop.f32.mrf.mxu0
      %v1691 = vadd.f32 %v1623, %v1690
      %v1692 = vpop.f32.mrf.mxu0
      %1693 = vmatprep.mubr.bf16.mxu0 0
      %1694 = vmatmul.mubr.bf16.gmra.mxu0 %v1640
      %v1695 = vpop.f32.mrf.mxu0
      %v1696 = vadd.f32 %v1628, %v1695
      %v1697 = vpop.f32.mrf.mxu0
      %v1698 = vpop.f32.mrf.mxu0
      %v1699 = vpop.f32.mrf.mxu0
      %1700 = vdwg.mxu0
      %1701 = vrot.lane.b32.xlu0 %v1111, 112
      %v1702 = vpop.permute.xlu0 %1701
      %1703 = vrot.lane.b32.xlu0 %v1112, 112
      %v1704 = vpop.permute.xlu0 %1703
      %1705 = vrot.lane.b32.xlu0 %v1113, 112
      %v1706 = vpop.permute.xlu0 %1705
      %1707 = vrot.lane.b32.xlu0 %v1111, 80
      %v1708 = vpop.permute.xlu0 %1707
      %1709 = vrot.lane.b32.xlu0 %v1112, 80
      %v1710 = vpop.permute.xlu0 %1709
      %1711 = vrot.lane.b32.xlu0 %v1113, 80
      %v1712 = vpop.permute.xlu0 %1711
      %v1714 = vsel %vm1125, %v1702, 0
      %v1717 = vsel %vm1125, %v1704, 0
      %v1720 = vsel %vm1125, %v1706, 0
      %v1723 = vsel %vm1125, %v1708, 0
      %v1726 = vsel %vm1125, %v1710, 0
      %v1729 = vsel %vm1125, %v1712, 0
      %1731 = vmatprep.subr.bf16.mxu0 0
      %1732 = vmatpush1.bf16.xpose.msra.mxu0 0
      %1733 = vmatprep.subr.bf16.mxu0 0
      %1734 = vmatpush1.bf16.xpose.msra.mxu0 0
      %1735 = vmatprep.subr.bf16.mxu0 0
      %1736 = vmatpush1.bf16.xpose.msra.mxu0 0
      %1737 = vmatprep.subr.bf16.mxu0 0
      %1738 = vmatpush1.bf16.xpose.msra.mxu0 0
      %1739 = vmatprep.subr.bf16.mxu0 0
      %1740 = vmatpush1.bf16.xpose.msra.mxu0 0
      %1741 = vmatprep.subr.bf16.mxu0 0
      %1742 = vmatpush1.bf16.xpose.msra.mxu0 %v1729
      %1743 = vmatprep.subr.bf16.mxu0 0
      %1744 = vmatpush1.bf16.xpose.msra.mxu0 %v1726
      %1745 = vmatprep.subr.bf16.mxu0 0
      %1746 = vmatpush1.bf16.xpose.msra.mxu0 %v1723
      %1747 = vmatprep.subr.bf16.mxu0 0
      %1748 = vmatpush2.bf16.xpose.msra.mxu0 0
      %1749 = vmatprep.subr.bf16.mxu0 0
      %1750 = vmatpush2.bf16.xpose.msra.mxu0 0
      %1751 = vmatprep.subr.bf16.mxu0 0
      %1752 = vmatpush2.bf16.xpose.msra.mxu0 0
      %1753 = vmatprep.subr.bf16.mxu0 0
      %1754 = vmatpush2.bf16.xpose.msra.mxu0 0
      %1755 = vmatprep.subr.bf16.mxu0 0
      %1756 = vmatpush2.bf16.xpose.msra.mxu0 0
      %1757 = vmatprep.subr.bf16.mxu0 0
      %1758 = vmatpush2.bf16.xpose.msra.mxu0 0
      %1759 = vmatprep.subr.bf16.mxu0 0
      %1760 = vmatpush2.bf16.xpose.msra.mxu0 0
      %1761 = vmatprep.subr.bf16.mxu0 0
      %1762 = vmatpush2.bf16.xpose.msra.mxu0 0
      %1763 = vmatprep.mubr.bf16.mxu0 0
      %1764 = vmatmul.mubr.bf16.gmra.mxu0 %v1714
      %v1765 = vpop.f32.mrf.mxu0
      %v1766 = vadd.f32 %v798, %v1765
      %v1767 = vpop.f32.mrf.mxu0
      %v1768 = vpop.f32.mrf.mxu0
      %v1769 = vadd.f32 %v798, %v1768
      %v1770 = vpop.f32.mrf.mxu0
      %1771 = vmatprep.mubr.bf16.mxu0 0
      %1772 = vmatmul.mubr.bf16.gmra.mxu0 %v1717
      %v1773 = vpop.f32.mrf.mxu0
      %v1774 = vadd.f32 %v798, %v1773
      %v1775 = vpop.f32.mrf.mxu0
      %v1776 = vpop.f32.mrf.mxu0
      %v1777 = vadd.f32 %v798, %v1776
      %v1778 = vpop.f32.mrf.mxu0
      %1779 = vmatprep.mubr.bf16.mxu0 0
      %1780 = vmatmul.mubr.bf16.gmra.mxu0 %v1720
      %v1781 = vpop.f32.mrf.mxu0
      %v1782 = vadd.f32 %v798, %v1781
      %v1783 = vpop.f32.mrf.mxu0
      %v1784 = vpop.f32.mrf.mxu0
      %v1785 = vpop.f32.mrf.mxu0
      %1786 = vdwg.mxu0
      %v1787 = vsel %vm1200, %v1766, -inf
      %1788 = vmax.xlane.f32.xlu0 %v1787
      %v1789 = vpop.xlane.xlu0 %1788
      %v1790 = vsel %vm1200, %v1769, -inf
      %1791 = vmax.xlane.f32.xlu0 %v1790
      %v1792 = vpop.xlane.xlu0 %1791
      %v1793 = vsel %vm1200, %v1774, -inf
      %1794 = vmax.xlane.f32.xlu0 %v1793
      %v1795 = vpop.xlane.xlu0 %1794
      %v1796 = vsel %vm1200, %v1777, -inf
      %1797 = vmax.xlane.f32.xlu0 %v1796
      %v1798 = vpop.xlane.xlu0 %1797
      %v1799 = vsel %vm1200, %v1782, -inf
      %1800 = vmax.xlane.f32.xlu0 %v1799
      %v1801 = vpop.xlane.xlu0 %1800
      %v1802 = vsub.f32 %v1766, %v1789
      %v1803 = vsub.f32 %v1769, %v1792
      %v1804 = vsub.f32 %v1774, %v1795
      %v1805 = vsub.f32 %v1777, %v1798
      %v1806 = vsub.f32 %v1782, %v1801
      %v1807 = vmul.f32 %v1802, 1.442695
      %v1808 = vpow.pop %v1807
      %v1809 = vmul.f32 %v1803, 1.442695
      %v1810 = vpow.pop %v1809
      %v1811 = vmul.f32 %v1804, 1.442695
      %v1812 = vpow.pop %v1811
      %v1813 = vmul.f32 %v1805, 1.442695
      %v1814 = vpow.pop %v1813
      %v1815 = vmul.f32 %v1806, 1.442695
      %v1816 = vpow.pop %v1815
      %v1817 = vsel %vm1200, %v1808, 0.0
      %1818 = vadd.xlane.f32.xlu0 %v1817
      %v1819 = vpop.xlane.xlu0 %1818
      %v1820 = vsel %vm1200, %v1810, 0.0
      %1821 = vadd.xlane.f32.xlu0 %v1820
      %v1822 = vpop.xlane.xlu0 %1821
      %v1823 = vsel %vm1200, %v1812, 0.0
      %1824 = vadd.xlane.f32.xlu0 %v1823
      %v1825 = vpop.xlane.xlu0 %1824
      %v1826 = vsel %vm1200, %v1814, 0.0
      %1827 = vadd.xlane.f32.xlu0 %v1826
      %v1828 = vpop.xlane.xlu0 %1827
      %v1829 = vsel %vm1200, %v1816, 0.0
      %1830 = vadd.xlane.f32.xlu0 %v1829
      %v1831 = vpop.xlane.xlu0 %1830
      %v1832 = vrcp.pop %v1819
      %v1833 = vrcp.pop %v1822
      %v1834 = vrcp.pop %v1825
      %v1835 = vrcp.pop %v1828
      %v1836 = vrcp.pop %v1831
      %v1837 = vmul.f32 %v1808, %v1832
      %v1838 = vmul.f32 %v1810, %v1833
      %v1839 = vmul.f32 %v1812, %v1834
      %v1840 = vmul.f32 %v1814, %v1835
      %v1841 = vmul.f32 %v1816, %v1836
      %v1842 = vpack.c.bf16 %v1838, %v1837
      %v1843 = vpack.c.bf16 %v1840, %v1839
      %v1844 = vpack.c.bf16 %v1841, %v1841
      %1845 = vrot.lane.b32.xlu0 %v1111, 48
      %v1846 = vpop.permute.xlu0 %1845
      %1847 = vrot.lane.b32.xlu0 %v1112, 48
      %v1848 = vpop.permute.xlu0 %1847
      %1849 = vrot.lane.b32.xlu0 %v1113, 48
      %v1850 = vpop.permute.xlu0 %1849
      %v1854 = vsel %vm1200, %v1842, 0
      %v1857 = vsel %vm1200, %v1843, 0
      %v1860 = vsel %vm1200, %v1844, 0
      %v1863 = vsel %vm1276, %v1850, 0
      %1865 = vmatprep.subr.bf16.mxu0 0
      %1866 = vmatpush1.bf16.msra.mxu0 0
      %1867 = vmatprep.subr.bf16.mxu0 0
      %1868 = vmatpush1.bf16.msra.mxu0 0
      %1869 = vmatprep.subr.bf16.mxu0 0
      %1870 = vmatpush1.bf16.msra.mxu0 0
      %1871 = vmatprep.subr.bf16.mxu0 0
      %1872 = vmatpush1.bf16.msra.mxu0 0
      %1873 = vmatprep.subr.bf16.mxu0 0
      %1874 = vmatpush1.bf16.msra.mxu0 0
      %1875 = vmatprep.subr.bf16.mxu0 0
      %1876 = vmatpush1.bf16.msra.mxu0 %v1863
      %1877 = vmatprep.subr.bf16.mxu0 0
      %1878 = vmatpush1.bf16.msra.mxu0 %v1848
      %1879 = vmatprep.subr.bf16.mxu0 0
      %1880 = vmatpush1.bf16.msra.mxu0 %v1846
      %1881 = vmatprep.subr.bf16.mxu0 0
      %1882 = vmatpush2.bf16.msra.mxu0 0
      %1883 = vmatprep.subr.bf16.mxu0 0
      %1884 = vmatpush2.bf16.msra.mxu0 0
      %1885 = vmatprep.subr.bf16.mxu0 0
      %1886 = vmatpush2.bf16.msra.mxu0 0
      %1887 = vmatprep.subr.bf16.mxu0 0
      %1888 = vmatpush2.bf16.msra.mxu0 0
      %1889 = vmatprep.subr.bf16.mxu0 0
      %1890 = vmatpush2.bf16.msra.mxu0 0
      %1891 = vmatprep.subr.bf16.mxu0 0
      %1892 = vmatpush2.bf16.msra.mxu0 0
      %1893 = vmatprep.subr.bf16.mxu0 0
      %1894 = vmatpush2.bf16.msra.mxu0 0
      %1895 = vmatprep.subr.bf16.mxu0 0
      %1896 = vmatpush2.bf16.msra.mxu0 0
      %1897 = vmatprep.mubr.bf16.mxu0 0
      %1898 = vmatmul.mubr.bf16.gmra.mxu0 %v1854
      %v1899 = vpop.f32.mrf.mxu0
      %v1900 = vadd.f32 0.0, %v1899
      %v1901 = vpop.f32.mrf.mxu0
      %v1902 = vpop.f32.mrf.mxu0
      %v1903 = vadd.f32 0.0, %v1902
      %v1904 = vpop.f32.mrf.mxu0
      %1905 = vmatprep.mubr.bf16.mxu0 0
      %1906 = vmatmul.mubr.bf16.gmra.mxu0 %v1857
      %v1907 = vpop.f32.mrf.mxu0
      %v1908 = vadd.f32 0.0, %v1907
      %v1909 = vpop.f32.mrf.mxu0
      %v1910 = vpop.f32.mrf.mxu0
      %v1911 = vadd.f32 0.0, %v1910
      %v1912 = vpop.f32.mrf.mxu0
      %1913 = vmatprep.mubr.bf16.mxu0 0
      %1914 = vmatmul.mubr.bf16.gmra.mxu0 %v1860
      %v1915 = vpop.f32.mrf.mxu0
      %v1916 = vadd.f32 0.0, %v1915
      %v1917 = vpop.f32.mrf.mxu0
      %v1918 = vpop.f32.mrf.mxu0
      %v1919 = vpop.f32.mrf.mxu0
      %1920 = vdwg.mxu0
      %v1921 = vpack.c.bf16 %v1903, %v1900
      %v1922 = vpack.c.bf16 %v1911, %v1908
      %v1923 = vpack.c.bf16 %v1916, %v1916
      %s1924 = scalar_lea.vmem %s727, 8
      %v1925 = vld [vmem:[%s1924] sm:$0xf]
      %v1927 = vsel %vm1125, %v1921, 0
      %v1930 = vsel %vm1125, %v1922, 0
      %v1933 = vsel %vm1125, %v1923, 0
      %v1936 = vsel %vm1276, %v1925, 0
      %1938 = vmatprep.subr.bf16.mxu0 0
      %1939 = vmatpush1.bf16.msra.mxu0 0
      %1940 = vmatprep.subr.bf16.mxu0 0
      %1941 = vmatpush1.bf16.msra.mxu0 0
      %1942 = vmatprep.subr.bf16.mxu0 0
      %1943 = vmatpush1.bf16.msra.mxu0 0
      %1944 = vmatprep.subr.bf16.mxu0 0
      %1945 = vmatpush1.bf16.msra.mxu0 0
      %1946 = vmatprep.subr.bf16.mxu0 0
      %1947 = vmatpush1.bf16.msra.mxu0 0
      %1948 = vmatprep.subr.bf16.mxu0 0
      %1949 = vmatpush1.bf16.msra.mxu0 0
      %1950 = vmatprep.subr.bf16.mxu0 0
      %1951 = vmatpush1.bf16.msra.mxu0 0
      %1952 = vmatprep.subr.bf16.mxu0 0
      %1953 = vmatpush1.bf16.msra.mxu0 %v1936
      %1954 = vmatprep.subr.bf16.mxu0 0
      %1955 = vmatpush2.bf16.msra.mxu0 0
      %1956 = vmatprep.subr.bf16.mxu0 0
      %1957 = vmatpush2.bf16.msra.mxu0 0
      %1958 = vmatprep.subr.bf16.mxu0 0
      %1959 = vmatpush2.bf16.msra.mxu0 0
      %1960 = vmatprep.subr.bf16.mxu0 0
      %1961 = vmatpush2.bf16.msra.mxu0 0
      %1962 = vmatprep.subr.bf16.mxu0 0
      %1963 = vmatpush2.bf16.msra.mxu0 0
      %1964 = vmatprep.subr.bf16.mxu0 0
      %1965 = vmatpush2.bf16.msra.mxu0 0
      %1966 = vmatprep.subr.bf16.mxu0 0
      %1967 = vmatpush2.bf16.msra.mxu0 0
      %1968 = vmatprep.subr.bf16.mxu0 0
      %1969 = vmatpush2.bf16.msra.mxu0 0
      %1970 = vmatprep.mubr.bf16.mxu0 0
      %1971 = vmatmul.mubr.bf16.gmra.mxu0 %v1927
      %v1972 = vpop.f32.mrf.mxu0
      %v1973 = vadd.f32 0.0, %v1972
      %v1974 = vpop.f32.mrf.mxu0
      %v1975 = vpop.f32.mrf.mxu0
      %v1976 = vadd.f32 0.0, %v1975
      %v1977 = vpop.f32.mrf.mxu0
      %1978 = vmatprep.mubr.bf16.mxu0 0
      %1979 = vmatmul.mubr.bf16.gmra.mxu0 %v1930
      %v1980 = vpop.f32.mrf.mxu0
      %v1981 = vadd.f32 0.0, %v1980
      %v1982 = vpop.f32.mrf.mxu0
      %v1983 = vpop.f32.mrf.mxu0
      %v1984 = vadd.f32 0.0, %v1983
      %v1985 = vpop.f32.mrf.mxu0
      %1986 = vmatprep.mubr.bf16.mxu0 0
      %1987 = vmatmul.mubr.bf16.gmra.mxu0 %v1933
      %v1988 = vpop.f32.mrf.mxu0
      %v1989 = vadd.f32 0.0, %v1988
      %v1990 = vpop.f32.mrf.mxu0
      %v1991 = vpop.f32.mrf.mxu0
      %v1992 = vpop.f32.mrf.mxu0
      %1993 = vdwg.mxu0
      %v1994 = vadd.f32 %v1680, %v1973
      %v1995 = vadd.f32 %v1683, %v1976
      %v1996 = vadd.f32 %v1688, %v1981
      %v1997 = vadd.f32 %v1691, %v1984
      %v1998 = vadd.f32 %v1696, %v1989
      %1999 = vrot.lane.b32.xlu0 %v1111, 104
      %v2000 = vpop.permute.xlu0 %1999
      %2001 = vrot.lane.b32.xlu0 %v1112, 104
      %v2002 = vpop.permute.xlu0 %2001
      %2003 = vrot.lane.b32.xlu0 %v1113, 104
      %v2004 = vpop.permute.xlu0 %2003
      %2005 = vrot.lane.b32.xlu0 %v1111, 72
      %v2006 = vpop.permute.xlu0 %2005
      %2007 = vrot.lane.b32.xlu0 %v1112, 72
      %v2008 = vpop.permute.xlu0 %2007
      %2009 = vrot.lane.b32.xlu0 %v1113, 72
      %v2010 = vpop.permute.xlu0 %2009
      %v2012 = vsel %vm1125, %v2000, 0
      %v2015 = vsel %vm1125, %v2002, 0
      %v2018 = vsel %vm1125, %v2004, 0
      %v2021 = vsel %vm1125, %v2006, 0
      %v2024 = vsel %vm1125, %v2008, 0
      %v2027 = vsel %vm1125, %v2010, 0
      %2029 = vmatprep.subr.bf16.mxu0 0
      %2030 = vmatpush1.bf16.xpose.msra.mxu0 0
      %2031 = vmatprep.subr.bf16.mxu0 0
      %2032 = vmatpush1.bf16.xpose.msra.mxu0 0
      %2033 = vmatprep.subr.bf16.mxu0 0
      %2034 = vmatpush1.bf16.xpose.msra.mxu0 0
      %2035 = vmatprep.subr.bf16.mxu0 0
      %2036 = vmatpush1.bf16.xpose.msra.mxu0 0
      %2037 = vmatprep.subr.bf16.mxu0 0
      %2038 = vmatpush1.bf16.xpose.msra.mxu0 0
      %2039 = vmatprep.subr.bf16.mxu0 0
      %2040 = vmatpush1.bf16.xpose.msra.mxu0 %v2027
      %2041 = vmatprep.subr.bf16.mxu0 0
      %2042 = vmatpush1.bf16.xpose.msra.mxu0 %v2024
      %2043 = vmatprep.subr.bf16.mxu0 0
      %2044 = vmatpush1.bf16.xpose.msra.mxu0 %v2021
      %2045 = vmatprep.subr.bf16.mxu0 0
      %2046 = vmatpush2.bf16.xpose.msra.mxu0 0
      %2047 = vmatprep.subr.bf16.mxu0 0
      %2048 = vmatpush2.bf16.xpose.msra.mxu0 0
      %2049 = vmatprep.subr.bf16.mxu0 0
      %2050 = vmatpush2.bf16.xpose.msra.mxu0 0
      %2051 = vmatprep.subr.bf16.mxu0 0
      %2052 = vmatpush2.bf16.xpose.msra.mxu0 0
      %2053 = vmatprep.subr.bf16.mxu0 0
      %2054 = vmatpush2.bf16.xpose.msra.mxu0 0
      %2055 = vmatprep.subr.bf16.mxu0 0
      %2056 = vmatpush2.bf16.xpose.msra.mxu0 0
      %2057 = vmatprep.subr.bf16.mxu0 0
      %2058 = vmatpush2.bf16.xpose.msra.mxu0 0
      %2059 = vmatprep.subr.bf16.mxu0 0
      %2060 = vmatpush2.bf16.xpose.msra.mxu0 0
      %2061 = vmatprep.mubr.bf16.mxu0 0
      %2062 = vmatmul.mubr.bf16.gmra.mxu0 %v2012
      %v2063 = vpop.f32.mrf.mxu0
      %v2064 = vadd.f32 %v798, %v2063
      %v2065 = vpop.f32.mrf.mxu0
      %v2066 = vpop.f32.mrf.mxu0
      %v2067 = vadd.f32 %v798, %v2066
      %v2068 = vpop.f32.mrf.mxu0
      %2069 = vmatprep.mubr.bf16.mxu0 0
      %2070 = vmatmul.mubr.bf16.gmra.mxu0 %v2015
      %v2071 = vpop.f32.mrf.mxu0
      %v2072 = vadd.f32 %v798, %v2071
      %v2073 = vpop.f32.mrf.mxu0
      %v2074 = vpop.f32.mrf.mxu0
      %v2075 = vadd.f32 %v798, %v2074
      %v2076 = vpop.f32.mrf.mxu0
      %2077 = vmatprep.mubr.bf16.mxu0 0
      %2078 = vmatmul.mubr.bf16.gmra.mxu0 %v2018
      %v2079 = vpop.f32.mrf.mxu0
      %v2080 = vadd.f32 %v798, %v2079
      %v2081 = vpop.f32.mrf.mxu0
      %v2082 = vpop.f32.mrf.mxu0
      %v2083 = vpop.f32.mrf.mxu0
      %2084 = vdwg.mxu0
      %v2085 = vsel %vm1200, %v2064, -inf
      %2086 = vmax.xlane.f32.xlu0 %v2085
      %v2087 = vpop.xlane.xlu0 %2086
      %v2088 = vsel %vm1200, %v2067, -inf
      %2089 = vmax.xlane.f32.xlu0 %v2088
      %v2090 = vpop.xlane.xlu0 %2089
      %v2091 = vsel %vm1200, %v2072, -inf
      %2092 = vmax.xlane.f32.xlu0 %v2091
      %v2093 = vpop.xlane.xlu0 %2092
      %v2094 = vsel %vm1200, %v2075, -inf
      %2095 = vmax.xlane.f32.xlu0 %v2094
      %v2096 = vpop.xlane.xlu0 %2095
      %v2097 = vsel %vm1200, %v2080, -inf
      %2098 = vmax.xlane.f32.xlu0 %v2097
      %v2099 = vpop.xlane.xlu0 %2098
      %v2100 = vsub.f32 %v2064, %v2087
      %v2101 = vsub.f32 %v2067, %v2090
      %v2102 = vsub.f32 %v2072, %v2093
      %v2103 = vsub.f32 %v2075, %v2096
      %v2104 = vsub.f32 %v2080, %v2099
      %v2105 = vmul.f32 %v2100, 1.442695
      %v2106 = vpow.pop %v2105
      %v2107 = vmul.f32 %v2101, 1.442695
      %v2108 = vpow.pop %v2107
      %v2109 = vmul.f32 %v2102, 1.442695
      %v2110 = vpow.pop %v2109
      %v2111 = vmul.f32 %v2103, 1.442695
      %v2112 = vpow.pop %v2111
      %v2113 = vmul.f32 %v2104, 1.442695
      %v2114 = vpow.pop %v2113
      %v2115 = vsel %vm1200, %v2106, 0.0
      %2116 = vadd.xlane.f32.xlu0 %v2115
      %v2117 = vpop.xlane.xlu0 %2116
      %v2118 = vsel %vm1200, %v2108, 0.0
      %2119 = vadd.xlane.f32.xlu0 %v2118
      %v2120 = vpop.xlane.xlu0 %2119
      %v2121 = vsel %vm1200, %v2110, 0.0
      %2122 = vadd.xlane.f32.xlu0 %v2121
      %v2123 = vpop.xlane.xlu0 %2122
      %v2124 = vsel %vm1200, %v2112, 0.0
      %2125 = vadd.xlane.f32.xlu0 %v2124
      %v2126 = vpop.xlane.xlu0 %2125
      %v2127 = vsel %vm1200, %v2114, 0.0
      %2128 = vadd.xlane.f32.xlu0 %v2127
      %v2129 = vpop.xlane.xlu0 %2128
      %v2130 = vrcp.pop %v2117
      %v2131 = vrcp.pop %v2120
      %v2132 = vrcp.pop %v2123
      %v2133 = vrcp.pop %v2126
      %v2134 = vrcp.pop %v2129
      %v2135 = vmul.f32 %v2106, %v2130
      %v2136 = vmul.f32 %v2108, %v2131
      %v2137 = vmul.f32 %v2110, %v2132
      %v2138 = vmul.f32 %v2112, %v2133
      %v2139 = vmul.f32 %v2114, %v2134
      %v2140 = vpack.c.bf16 %v2136, %v2135
      %v2141 = vpack.c.bf16 %v2138, %v2137
      %v2142 = vpack.c.bf16 %v2139, %v2139
      %2143 = vrot.lane.b32.xlu0 %v1111, 40
      %v2144 = vpop.permute.xlu0 %2143
      %2145 = vrot.lane.b32.xlu0 %v1112, 40
      %v2146 = vpop.permute.xlu0 %2145
      %2147 = vrot.lane.b32.xlu0 %v1113, 40
      %v2148 = vpop.permute.xlu0 %2147
      %v2152 = vsel %vm1200, %v2140, 0
      %v2155 = vsel %vm1200, %v2141, 0
      %v2158 = vsel %vm1200, %v2142, 0
      %v2161 = vsel %vm1276, %v2148, 0
      %2163 = vmatprep.subr.bf16.mxu0 0
      %2164 = vmatpush1.bf16.msra.mxu0 0
      %2165 = vmatprep.subr.bf16.mxu0 0
      %2166 = vmatpush1.bf16.msra.mxu0 0
      %2167 = vmatprep.subr.bf16.mxu0 0
      %2168 = vmatpush1.bf16.msra.mxu0 0
      %2169 = vmatprep.subr.bf16.mxu0 0
      %2170 = vmatpush1.bf16.msra.mxu0 0
      %2171 = vmatprep.subr.bf16.mxu0 0
      %2172 = vmatpush1.bf16.msra.mxu0 0
      %2173 = vmatprep.subr.bf16.mxu0 0
      %2174 = vmatpush1.bf16.msra.mxu0 %v2161
      %2175 = vmatprep.subr.bf16.mxu0 0
      %2176 = vmatpush1.bf16.msra.mxu0 %v2146
      %2177 = vmatprep.subr.bf16.mxu0 0
      %2178 = vmatpush1.bf16.msra.mxu0 %v2144
      %2179 = vmatprep.subr.bf16.mxu0 0
      %2180 = vmatpush2.bf16.msra.mxu0 0
      %2181 = vmatprep.subr.bf16.mxu0 0
      %2182 = vmatpush2.bf16.msra.mxu0 0
      %2183 = vmatprep.subr.bf16.mxu0 0
      %2184 = vmatpush2.bf16.msra.mxu0 0
      %2185 = vmatprep.subr.bf16.mxu0 0
      %2186 = vmatpush2.bf16.msra.mxu0 0
      %2187 = vmatprep.subr.bf16.mxu0 0
      %2188 = vmatpush2.bf16.msra.mxu0 0
      %2189 = vmatprep.subr.bf16.mxu0 0
      %2190 = vmatpush2.bf16.msra.mxu0 0
      %2191 = vmatprep.subr.bf16.mxu0 0
      %2192 = vmatpush2.bf16.msra.mxu0 0
      %2193 = vmatprep.subr.bf16.mxu0 0
      %2194 = vmatpush2.bf16.msra.mxu0 0
      %2195 = vmatprep.mubr.bf16.mxu0 0
      %2196 = vmatmul.mubr.bf16.gmra.mxu0 %v2152
      %v2197 = vpop.f32.mrf.mxu0
      %v2198 = vadd.f32 0.0, %v2197
      %v2199 = vpop.f32.mrf.mxu0
      %v2200 = vpop.f32.mrf.mxu0
      %v2201 = vadd.f32 0.0, %v2200
      %v2202 = vpop.f32.mrf.mxu0
      %2203 = vmatprep.mubr.bf16.mxu0 0
      %2204 = vmatmul.mubr.bf16.gmra.mxu0 %v2155
      %v2205 = vpop.f32.mrf.mxu0
      %v2206 = vadd.f32 0.0, %v2205
      %v2207 = vpop.f32.mrf.mxu0
      %v2208 = vpop.f32.mrf.mxu0
      %v2209 = vadd.f32 0.0, %v2208
      %v2210 = vpop.f32.mrf.mxu0
      %2211 = vmatprep.mubr.bf16.mxu0 0
      %2212 = vmatmul.mubr.bf16.gmra.mxu0 %v2158
      %v2213 = vpop.f32.mrf.mxu0
      %v2214 = vadd.f32 0.0, %v2213
      %v2215 = vpop.f32.mrf.mxu0
      %v2216 = vpop.f32.mrf.mxu0
      %v2217 = vpop.f32.mrf.mxu0
      %2218 = vdwg.mxu0
      %v2219 = vpack.c.bf16 %v2201, %v2198
      %v2220 = vpack.c.bf16 %v2209, %v2206
      %v2221 = vpack.c.bf16 %v2214, %v2214
      %s2222 = scalar_lea.vmem %s727, 12
      %v2223 = vld [vmem:[%s2222] sm:$0xf]
      %v2225 = vsel %vm1125, %v2219, 0
      %v2228 = vsel %vm1125, %v2220, 0
      %v2231 = vsel %vm1125, %v2221, 0
      %v2234 = vsel %vm1276, %v2223, 0
      %2236 = vmatprep.subr.bf16.mxu0 0
      %2237 = vmatpush1.bf16.msra.mxu0 0
      %2238 = vmatprep.subr.bf16.mxu0 0
      %2239 = vmatpush1.bf16.msra.mxu0 0
      %2240 = vmatprep.subr.bf16.mxu0 0
      %2241 = vmatpush1.bf16.msra.mxu0 0
      %2242 = vmatprep.subr.bf16.mxu0 0
      %2243 = vmatpush1.bf16.msra.mxu0 0
      %2244 = vmatprep.subr.bf16.mxu0 0
      %2245 = vmatpush1.bf16.msra.mxu0 0
      %2246 = vmatprep.subr.bf16.mxu0 0
      %2247 = vmatpush1.bf16.msra.mxu0 0
      %2248 = vmatprep.subr.bf16.mxu0 0
      %2249 = vmatpush1.bf16.msra.mxu0 0
      %2250 = vmatprep.subr.bf16.mxu0 0
      %2251 = vmatpush1.bf16.msra.mxu0 %v2234
      %2252 = vmatprep.subr.bf16.mxu0 0
      %2253 = vmatpush2.bf16.msra.mxu0 0
      %2254 = vmatprep.subr.bf16.mxu0 0
      %2255 = vmatpush2.bf16.msra.mxu0 0
      %2256 = vmatprep.subr.bf16.mxu0 0
      %2257 = vmatpush2.bf16.msra.mxu0 0
      %2258 = vmatprep.subr.bf16.mxu0 0
      %2259 = vmatpush2.bf16.msra.mxu0 0
      %2260 = vmatprep.subr.bf16.mxu0 0
      %2261 = vmatpush2.bf16.msra.mxu0 0
      %2262 = vmatprep.subr.bf16.mxu0 0
      %2263 = vmatpush2.bf16.msra.mxu0 0
      %2264 = vmatprep.subr.bf16.mxu0 0
      %2265 = vmatpush2.bf16.msra.mxu0 0
      %2266 = vmatprep.subr.bf16.mxu0 0
      %2267 = vmatpush2.bf16.msra.mxu0 0
      %2268 = vmatprep.mubr.bf16.mxu0 0
      %2269 = vmatmul.mubr.bf16.gmra.mxu0 %v2225
      %v2270 = vpop.f32.mrf.mxu0
      %v2271 = vadd.f32 0.0, %v2270
      %v2272 = vpop.f32.mrf.mxu0
      %v2273 = vpop.f32.mrf.mxu0
      %v2274 = vadd.f32 0.0, %v2273
      %v2275 = vpop.f32.mrf.mxu0
      %2276 = vmatprep.mubr.bf16.mxu0 0
      %2277 = vmatmul.mubr.bf16.gmra.mxu0 %v2228
      %v2278 = vpop.f32.mrf.mxu0
      %v2279 = vadd.f32 0.0, %v2278
      %v2280 = vpop.f32.mrf.mxu0
      %v2281 = vpop.f32.mrf.mxu0
      %v2282 = vadd.f32 0.0, %v2281
      %v2283 = vpop.f32.mrf.mxu0
      %2284 = vmatprep.mubr.bf16.mxu0 0
      %2285 = vmatmul.mubr.bf16.gmra.mxu0 %v2231
      %v2286 = vpop.f32.mrf.mxu0
      %v2287 = vadd.f32 0.0, %v2286
      %v2288 = vpop.f32.mrf.mxu0
      %v2289 = vpop.f32.mrf.mxu0
      %v2290 = vpop.f32.mrf.mxu0
      %2291 = vdwg.mxu0
      %v2292 = vadd.f32 %v1994, %v2271
      %v2293 = vadd.f32 %v1995, %v2274
      %v2294 = vadd.f32 %v1996, %v2279
      %v2295 = vadd.f32 %v1997, %v2282
      %v2296 = vadd.f32 %v1998, %v2287
      %vm2299 = vcmask 1043456
      %v2300 = vrot.slane %v1113, 4
      %v2301 = vrot.slane %v1114, 4
      %v2302 = vsel %vm2299, %v2300, %v2301
      %v2303 = vrot.slane %v1115, 4
      %v2304 = vsel %vm2299, %v2301, %v2303
      %2305 = vrot.lane.b32.xlu0 %v2302, 96
      %v2306 = vpop.permute.xlu0 %2305
      %2307 = vrot.lane.b32.xlu0 %v2304, 96
      %v2308 = vpop.permute.xlu0 %2307
      %2309 = vrot.lane.b32.xlu0 %v2303, 96
      %v2310 = vpop.permute.xlu0 %2309
      %v2312 = vsel %vm1125, %v2302, 0
      %v2315 = vsel %vm1125, %v2304, 0
      %v2318 = vsel %vm1125, %v2303, 0
      %v2321 = vsel %vm1125, %v2306, 0
      %v2324 = vsel %vm1125, %v2308, 0
      %v2327 = vsel %vm1125, %v2310, 0
      %2329 = vmatprep.subr.bf16.mxu0 0
      %2330 = vmatpush1.bf16.xpose.msra.mxu0 0
      %2331 = vmatprep.subr.bf16.mxu0 0
      %2332 = vmatpush1.bf16.xpose.msra.mxu0 0
      %2333 = vmatprep.subr.bf16.mxu0 0
      %2334 = vmatpush1.bf16.xpose.msra.mxu0 0
      %2335 = vmatprep.subr.bf16.mxu0 0
      %2336 = vmatpush1.bf16.xpose.msra.mxu0 0
      %2337 = vmatprep.subr.bf16.mxu0 0
      %2338 = vmatpush1.bf16.xpose.msra.mxu0 0
      %2339 = vmatprep.subr.bf16.mxu0 0
      %2340 = vmatpush1.bf16.xpose.msra.mxu0 %v2327
      %2341 = vmatprep.subr.bf16.mxu0 0
      %2342 = vmatpush1.bf16.xpose.msra.mxu0 %v2324
      %2343 = vmatprep.subr.bf16.mxu0 0
      %2344 = vmatpush1.bf16.xpose.msra.mxu0 %v2321
      %2345 = vmatprep.subr.bf16.mxu0 0
      %2346 = vmatpush2.bf16.xpose.msra.mxu0 0
      %2347 = vmatprep.subr.bf16.mxu0 0
      %2348 = vmatpush2.bf16.xpose.msra.mxu0 0
      %2349 = vmatprep.subr.bf16.mxu0 0
      %2350 = vmatpush2.bf16.xpose.msra.mxu0 0
      %2351 = vmatprep.subr.bf16.mxu0 0
      %2352 = vmatpush2.bf16.xpose.msra.mxu0 0
      %2353 = vmatprep.subr.bf16.mxu0 0
      %2354 = vmatpush2.bf16.xpose.msra.mxu0 0
      %2355 = vmatprep.subr.bf16.mxu0 0
      %2356 = vmatpush2.bf16.xpose.msra.mxu0 0
      %2357 = vmatprep.subr.bf16.mxu0 0
      %2358 = vmatpush2.bf16.xpose.msra.mxu0 0
      %2359 = vmatprep.subr.bf16.mxu0 0
      %2360 = vmatpush2.bf16.xpose.msra.mxu0 0
      %2361 = vmatprep.mubr.bf16.mxu0 0
      %2362 = vmatmul.mubr.bf16.gmra.mxu0 %v2312
      %v2363 = vpop.f32.mrf.mxu0
      %v2364 = vadd.f32 %v798, %v2363
      %v2365 = vpop.f32.mrf.mxu0
      %v2366 = vpop.f32.mrf.mxu0
      %v2367 = vadd.f32 %v798, %v2366
      %v2368 = vpop.f32.mrf.mxu0
      %2369 = vmatprep.mubr.bf16.mxu0 0
      %2370 = vmatmul.mubr.bf16.gmra.mxu0 %v2315
      %v2371 = vpop.f32.mrf.mxu0
      %v2372 = vadd.f32 %v798, %v2371
      %v2373 = vpop.f32.mrf.mxu0
      %v2374 = vpop.f32.mrf.mxu0
      %v2375 = vadd.f32 %v798, %v2374
      %v2376 = vpop.f32.mrf.mxu0
      %2377 = vmatprep.mubr.bf16.mxu0 0
      %2378 = vmatmul.mubr.bf16.gmra.mxu0 %v2318
      %v2379 = vpop.f32.mrf.mxu0
      %v2380 = vadd.f32 %v798, %v2379
      %v2381 = vpop.f32.mrf.mxu0
      %v2382 = vpop.f32.mrf.mxu0
      %v2383 = vpop.f32.mrf.mxu0
      %2384 = vdwg.mxu0
      %v2385 = vsel %vm1200, %v2364, -inf
      %2386 = vmax.xlane.f32.xlu0 %v2385
      %v2387 = vpop.xlane.xlu0 %2386
      %v2388 = vsel %vm1200, %v2367, -inf
      %2389 = vmax.xlane.f32.xlu0 %v2388
      %v2390 = vpop.xlane.xlu0 %2389
      %v2391 = vsel %vm1200, %v2372, -inf
      %2392 = vmax.xlane.f32.xlu0 %v2391
      %v2393 = vpop.xlane.xlu0 %2392
      %v2394 = vsel %vm1200, %v2375, -inf
      %2395 = vmax.xlane.f32.xlu0 %v2394
      %v2396 = vpop.xlane.xlu0 %2395
      %v2397 = vsel %vm1200, %v2380, -inf
      %2398 = vmax.xlane.f32.xlu0 %v2397
      %v2399 = vpop.xlane.xlu0 %2398
      %v2400 = vsub.f32 %v2364, %v2387
      %v2401 = vsub.f32 %v2367, %v2390
      %v2402 = vsub.f32 %v2372, %v2393
      %v2403 = vsub.f32 %v2375, %v2396
      %v2404 = vsub.f32 %v2380, %v2399
      %v2405 = vmul.f32 %v2400, 1.442695
      %v2406 = vpow.pop %v2405
      %v2407 = vmul.f32 %v2401, 1.442695
      %v2408 = vpow.pop %v2407
      %v2409 = vmul.f32 %v2402, 1.442695
      %v2410 = vpow.pop %v2409
      %v2411 = vmul.f32 %v2403, 1.442695
      %v2412 = vpow.pop %v2411
      %v2413 = vmul.f32 %v2404, 1.442695
      %v2414 = vpow.pop %v2413
      %v2415 = vsel %vm1200, %v2406, 0.0
      %2416 = vadd.xlane.f32.xlu0 %v2415
      %v2417 = vpop.xlane.xlu0 %2416
      %v2418 = vsel %vm1200, %v2408, 0.0
      %2419 = vadd.xlane.f32.xlu0 %v2418
      %v2420 = vpop.xlane.xlu0 %2419
      %v2421 = vsel %vm1200, %v2410, 0.0
      %2422 = vadd.xlane.f32.xlu0 %v2421
      %v2423 = vpop.xlane.xlu0 %2422
      %v2424 = vsel %vm1200, %v2412, 0.0
      %2425 = vadd.xlane.f32.xlu0 %v2424
      %v2426 = vpop.xlane.xlu0 %2425
      %v2427 = vsel %vm1200, %v2414, 0.0
      %2428 = vadd.xlane.f32.xlu0 %v2427
      %v2429 = vpop.xlane.xlu0 %2428
      %v2430 = vrcp.pop %v2417
      %v2431 = vrcp.pop %v2420
      %v2432 = vrcp.pop %v2423
      %v2433 = vrcp.pop %v2426
      %v2434 = vrcp.pop %v2429
      %v2435 = vmul.f32 %v2406, %v2430
      %v2436 = vmul.f32 %v2408, %v2431
      %v2437 = vmul.f32 %v2410, %v2432
      %v2438 = vmul.f32 %v2412, %v2433
      %v2439 = vmul.f32 %v2414, %v2434
      %v2440 = vpack.c.bf16 %v2436, %v2435
      %v2441 = vpack.c.bf16 %v2438, %v2437
      %v2442 = vpack.c.bf16 %v2439, %v2439
      %2443 = vrot.lane.b32.xlu0 %v2302, 64
      %v2444 = vpop.permute.xlu0 %2443
      %2445 = vrot.lane.b32.xlu0 %v2304, 64
      %v2446 = vpop.permute.xlu0 %2445
      %2447 = vrot.lane.b32.xlu0 %v2303, 64
      %v2448 = vpop.permute.xlu0 %2447
      %v2452 = vsel %vm1200, %v2440, 0
      %v2455 = vsel %vm1200, %v2441, 0
      %v2458 = vsel %vm1200, %v2442, 0
      %v2461 = vsel %vm1276, %v2448, 0
      %2463 = vmatprep.subr.bf16.mxu0 0
      %2464 = vmatpush1.bf16.msra.mxu0 0
      %2465 = vmatprep.subr.bf16.mxu0 0
      %2466 = vmatpush1.bf16.msra.mxu0 0
      %2467 = vmatprep.subr.bf16.mxu0 0
      %2468 = vmatpush1.bf16.msra.mxu0 0
      %2469 = vmatprep.subr.bf16.mxu0 0
      %2470 = vmatpush1.bf16.msra.mxu0 0
      %2471 = vmatprep.subr.bf16.mxu0 0
      %2472 = vmatpush1.bf16.msra.mxu0 0
      %2473 = vmatprep.subr.bf16.mxu0 0
      %2474 = vmatpush1.bf16.msra.mxu0 %v2461
      %2475 = vmatprep.subr.bf16.mxu0 0
      %2476 = vmatpush1.bf16.msra.mxu0 %v2446
      %2477 = vmatprep.subr.bf16.mxu0 0
      %2478 = vmatpush1.bf16.msra.mxu0 %v2444
      %2479 = vmatprep.subr.bf16.mxu0 0
      %2480 = vmatpush2.bf16.msra.mxu0 0
      %2481 = vmatprep.subr.bf16.mxu0 0
      %2482 = vmatpush2.bf16.msra.mxu0 0
      %2483 = vmatprep.subr.bf16.mxu0 0
      %2484 = vmatpush2.bf16.msra.mxu0 0
      %2485 = vmatprep.subr.bf16.mxu0 0
      %2486 = vmatpush2.bf16.msra.mxu0 0
      %2487 = vmatprep.subr.bf16.mxu0 0
      %2488 = vmatpush2.bf16.msra.mxu0 0
      %2489 = vmatprep.subr.bf16.mxu0 0
      %2490 = vmatpush2.bf16.msra.mxu0 0
      %2491 = vmatprep.subr.bf16.mxu0 0
      %2492 = vmatpush2.bf16.msra.mxu0 0
      %2493 = vmatprep.subr.bf16.mxu0 0
      %2494 = vmatpush2.bf16.msra.mxu0 0
      %2495 = vmatprep.mubr.bf16.mxu0 0
      %2496 = vmatmul.mubr.bf16.gmra.mxu0 %v2452
      %v2497 = vpop.f32.mrf.mxu0
      %v2498 = vadd.f32 0.0, %v2497
      %v2499 = vpop.f32.mrf.mxu0
      %v2500 = vpop.f32.mrf.mxu0
      %v2501 = vadd.f32 0.0, %v2500
      %v2502 = vpop.f32.mrf.mxu0
      %2503 = vmatprep.mubr.bf16.mxu0 0
      %2504 = vmatmul.mubr.bf16.gmra.mxu0 %v2455
      %v2505 = vpop.f32.mrf.mxu0
      %v2506 = vadd.f32 0.0, %v2505
      %v2507 = vpop.f32.mrf.mxu0
      %v2508 = vpop.f32.mrf.mxu0
      %v2509 = vadd.f32 0.0, %v2508
      %v2510 = vpop.f32.mrf.mxu0
      %2511 = vmatprep.mubr.bf16.mxu0 0
      %2512 = vmatmul.mubr.bf16.gmra.mxu0 %v2458
      %v2513 = vpop.f32.mrf.mxu0
      %v2514 = vadd.f32 0.0, %v2513
      %v2515 = vpop.f32.mrf.mxu0
      %v2516 = vpop.f32.mrf.mxu0
      %v2517 = vpop.f32.mrf.mxu0
      %2518 = vdwg.mxu0
      %v2519 = vpack.c.bf16 %v2501, %v2498
      %v2520 = vpack.c.bf16 %v2509, %v2506
      %v2521 = vpack.c.bf16 %v2514, %v2514
      %2522 = vrot.lane.b32.xlu0 %v2302, 120
      %v2523 = vpop.permute.xlu0 %2522
      %2524 = vrot.lane.b32.xlu0 %v2304, 120
      %v2525 = vpop.permute.xlu0 %2524
      %2526 = vrot.lane.b32.xlu0 %v2303, 120
      %v2527 = vpop.permute.xlu0 %2526
      %2528 = vrot.lane.b32.xlu0 %v2302, 88
      %v2529 = vpop.permute.xlu0 %2528
      %2530 = vrot.lane.b32.xlu0 %v2304, 88
      %v2531 = vpop.permute.xlu0 %2530
      %2532 = vrot.lane.b32.xlu0 %v2303, 88
      %v2533 = vpop.permute.xlu0 %2532
      %v2535 = vsel %vm1125, %v2523, 0
      %v2538 = vsel %vm1125, %v2525, 0
      %v2541 = vsel %vm1125, %v2527, 0
      %v2544 = vsel %vm1125, %v2529, 0
      %v2547 = vsel %vm1125, %v2531, 0
      %v2550 = vsel %vm1125, %v2533, 0
      %2552 = vmatprep.subr.bf16.mxu0 0
      %2553 = vmatpush1.bf16.xpose.msra.mxu0 0
      %2554 = vmatprep.subr.bf16.mxu0 0
      %2555 = vmatpush1.bf16.xpose.msra.mxu0 0
      %2556 = vmatprep.subr.bf16.mxu0 0
      %2557 = vmatpush1.bf16.xpose.msra.mxu0 0
      %2558 = vmatprep.subr.bf16.mxu0 0
      %2559 = vmatpush1.bf16.xpose.msra.mxu0 0
      %2560 = vmatprep.subr.bf16.mxu0 0
      %2561 = vmatpush1.bf16.xpose.msra.mxu0 0
      %2562 = vmatprep.subr.bf16.mxu0 0
      %2563 = vmatpush1.bf16.xpose.msra.mxu0 %v2550
      %2564 = vmatprep.subr.bf16.mxu0 0
      %2565 = vmatpush1.bf16.xpose.msra.mxu0 %v2547
      %2566 = vmatprep.subr.bf16.mxu0 0
      %2567 = vmatpush1.bf16.xpose.msra.mxu0 %v2544
      %2568 = vmatprep.subr.bf16.mxu0 0
      %2569 = vmatpush2.bf16.xpose.msra.mxu0 0
      %2570 = vmatprep.subr.bf16.mxu0 0
      %2571 = vmatpush2.bf16.xpose.msra.mxu0 0
      %2572 = vmatprep.subr.bf16.mxu0 0
      %2573 = vmatpush2.bf16.xpose.msra.mxu0 0
      %2574 = vmatprep.subr.bf16.mxu0 0
      %2575 = vmatpush2.bf16.xpose.msra.mxu0 0
      %2576 = vmatprep.subr.bf16.mxu0 0
      %2577 = vmatpush2.bf16.xpose.msra.mxu0 0
      %2578 = vmatprep.subr.bf16.mxu0 0
      %2579 = vmatpush2.bf16.xpose.msra.mxu0 0
      %2580 = vmatprep.subr.bf16.mxu0 0
      %2581 = vmatpush2.bf16.xpose.msra.mxu0 0
      %2582 = vmatprep.subr.bf16.mxu0 0
      %2583 = vmatpush2.bf16.xpose.msra.mxu0 0
      %2584 = vmatprep.mubr.bf16.mxu0 0
      %2585 = vmatmul.mubr.bf16.gmra.mxu0 %v2535
      %v2586 = vpop.f32.mrf.mxu0
      %v2587 = vadd.f32 %v798, %v2586
      %v2588 = vpop.f32.mrf.mxu0
      %v2589 = vpop.f32.mrf.mxu0
      %v2590 = vadd.f32 %v798, %v2589
      %v2591 = vpop.f32.mrf.mxu0
      %2592 = vmatprep.mubr.bf16.mxu0 0
      %2593 = vmatmul.mubr.bf16.gmra.mxu0 %v2538
      %v2594 = vpop.f32.mrf.mxu0
      %v2595 = vadd.f32 %v798, %v2594
      %v2596 = vpop.f32.mrf.mxu0
      %v2597 = vpop.f32.mrf.mxu0
      %v2598 = vadd.f32 %v798, %v2597
      %v2599 = vpop.f32.mrf.mxu0
      %2600 = vmatprep.mubr.bf16.mxu0 0
      %2601 = vmatmul.mubr.bf16.gmra.mxu0 %v2541
      %v2602 = vpop.f32.mrf.mxu0
      %v2603 = vadd.f32 %v798, %v2602
      %v2604 = vpop.f32.mrf.mxu0
      %v2605 = vpop.f32.mrf.mxu0
      %v2606 = vpop.f32.mrf.mxu0
      %2607 = vdwg.mxu0
      %v2608 = vsel %vm1200, %v2587, -inf
      %2609 = vmax.xlane.f32.xlu0 %v2608
      %v2610 = vpop.xlane.xlu0 %2609
      %v2611 = vsel %vm1200, %v2590, -inf
      %2612 = vmax.xlane.f32.xlu0 %v2611
      %v2613 = vpop.xlane.xlu0 %2612
      %v2614 = vsel %vm1200, %v2595, -inf
      %2615 = vmax.xlane.f32.xlu0 %v2614
      %v2616 = vpop.xlane.xlu0 %2615
      %v2617 = vsel %vm1200, %v2598, -inf
      %2618 = vmax.xlane.f32.xlu0 %v2617
      %v2619 = vpop.xlane.xlu0 %2618
      %v2620 = vsel %vm1200, %v2603, -inf
      %2621 = vmax.xlane.f32.xlu0 %v2620
      %v2622 = vpop.xlane.xlu0 %2621
      %v2623 = vsub.f32 %v2587, %v2610
      %v2624 = vsub.f32 %v2590, %v2613
      %v2625 = vsub.f32 %v2595, %v2616
      %v2626 = vsub.f32 %v2598, %v2619
      %v2627 = vsub.f32 %v2603, %v2622
      %v2628 = vmul.f32 %v2623, 1.442695
      %v2629 = vpow.pop %v2628
      %v2630 = vmul.f32 %v2624, 1.442695
      %v2631 = vpow.pop %v2630
      %v2632 = vmul.f32 %v2625, 1.442695
      %v2633 = vpow.pop %v2632
      %v2634 = vmul.f32 %v2626, 1.442695
      %v2635 = vpow.pop %v2634
      %v2636 = vmul.f32 %v2627, 1.442695
      %v2637 = vpow.pop %v2636
      %v2638 = vsel %vm1200, %v2629, 0.0
      %2639 = vadd.xlane.f32.xlu0 %v2638
      %v2640 = vpop.xlane.xlu0 %2639
      %v2641 = vsel %vm1200, %v2631, 0.0
      %2642 = vadd.xlane.f32.xlu0 %v2641
      %v2643 = vpop.xlane.xlu0 %2642
      %v2644 = vsel %vm1200, %v2633, 0.0
      %2645 = vadd.xlane.f32.xlu0 %v2644
      %v2646 = vpop.xlane.xlu0 %2645
      %v2647 = vsel %vm1200, %v2635, 0.0
      %2648 = vadd.xlane.f32.xlu0 %v2647
      %v2649 = vpop.xlane.xlu0 %2648
      %v2650 = vsel %vm1200, %v2637, 0.0
      %2651 = vadd.xlane.f32.xlu0 %v2650
      %v2652 = vpop.xlane.xlu0 %2651
      %v2653 = vrcp.pop %v2640
      %v2654 = vrcp.pop %v2643
      %v2655 = vrcp.pop %v2646
      %v2656 = vrcp.pop %v2649
      %v2657 = vrcp.pop %v2652
      %v2658 = vmul.f32 %v2629, %v2653
      %v2659 = vmul.f32 %v2631, %v2654
      %v2660 = vmul.f32 %v2633, %v2655
      %v2661 = vmul.f32 %v2635, %v2656
      %v2662 = vmul.f32 %v2637, %v2657
      %v2663 = vpack.c.bf16 %v2659, %v2658
      %v2664 = vpack.c.bf16 %v2661, %v2660
      %v2665 = vpack.c.bf16 %v2662, %v2662
      %2666 = vrot.lane.b32.xlu0 %v2302, 56
      %v2667 = vpop.permute.xlu0 %2666
      %2668 = vrot.lane.b32.xlu0 %v2304, 56
      %v2669 = vpop.permute.xlu0 %2668
      %2670 = vrot.lane.b32.xlu0 %v2303, 56
      %v2671 = vpop.permute.xlu0 %2670
      %v2675 = vsel %vm1200, %v2663, 0
      %v2678 = vsel %vm1200, %v2664, 0
      %v2681 = vsel %vm1200, %v2665, 0
      %v2684 = vsel %vm1276, %v2671, 0
      %2686 = vmatprep.subr.bf16.mxu0 0
      %2687 = vmatpush1.bf16.msra.mxu0 0
      %2688 = vmatprep.subr.bf16.mxu0 0
      %2689 = vmatpush1.bf16.msra.mxu0 0
      %2690 = vmatprep.subr.bf16.mxu0 0
      %2691 = vmatpush1.bf16.msra.mxu0 0
      %2692 = vmatprep.subr.bf16.mxu0 0
      %2693 = vmatpush1.bf16.msra.mxu0 0
      %2694 = vmatprep.subr.bf16.mxu0 0
      %2695 = vmatpush1.bf16.msra.mxu0 0
      %2696 = vmatprep.subr.bf16.mxu0 0
      %2697 = vmatpush1.bf16.msra.mxu0 %v2684
      %2698 = vmatprep.subr.bf16.mxu0 0
      %2699 = vmatpush1.bf16.msra.mxu0 %v2669
      %2700 = vmatprep.subr.bf16.mxu0 0
      %2701 = vmatpush1.bf16.msra.mxu0 %v2667
      %2702 = vmatprep.subr.bf16.mxu0 0
      %2703 = vmatpush2.bf16.msra.mxu0 0
      %2704 = vmatprep.subr.bf16.mxu0 0
      %2705 = vmatpush2.bf16.msra.mxu0 0
      %2706 = vmatprep.subr.bf16.mxu0 0
      %2707 = vmatpush2.bf16.msra.mxu0 0
      %2708 = vmatprep.subr.bf16.mxu0 0
      %2709 = vmatpush2.bf16.msra.mxu0 0
      %2710 = vmatprep.subr.bf16.mxu0 0
      %2711 = vmatpush2.bf16.msra.mxu0 0
      %2712 = vmatprep.subr.bf16.mxu0 0
      %2713 = vmatpush2.bf16.msra.mxu0 0
      %2714 = vmatprep.subr.bf16.mxu0 0
      %2715 = vmatpush2.bf16.msra.mxu0 0
      %2716 = vmatprep.subr.bf16.mxu0 0
      %2717 = vmatpush2.bf16.msra.mxu0 0
      %2718 = vmatprep.mubr.bf16.mxu0 0
      %2719 = vmatmul.mubr.bf16.gmra.mxu0 %v2675
      %v2720 = vpop.f32.mrf.mxu0
      %v2721 = vadd.f32 0.0, %v2720
      %v2722 = vpop.f32.mrf.mxu0
      %v2723 = vpop.f32.mrf.mxu0
      %v2724 = vadd.f32 0.0, %v2723
      %v2725 = vpop.f32.mrf.mxu0
      %2726 = vmatprep.mubr.bf16.mxu0 0
      %2727 = vmatmul.mubr.bf16.gmra.mxu0 %v2678
      %v2728 = vpop.f32.mrf.mxu0
      %v2729 = vadd.f32 0.0, %v2728
      %v2730 = vpop.f32.mrf.mxu0
      %v2731 = vpop.f32.mrf.mxu0
      %v2732 = vadd.f32 0.0, %v2731
      %v2733 = vpop.f32.mrf.mxu0
      %2734 = vmatprep.mubr.bf16.mxu0 0
      %2735 = vmatmul.mubr.bf16.gmra.mxu0 %v2681
      %v2736 = vpop.f32.mrf.mxu0
      %v2737 = vadd.f32 0.0, %v2736
      %v2738 = vpop.f32.mrf.mxu0
      %v2739 = vpop.f32.mrf.mxu0
      %v2740 = vpop.f32.mrf.mxu0
      %2741 = vdwg.mxu0
      %v2742 = vpack.c.bf16 %v2724, %v2721
      %v2743 = vpack.c.bf16 %v2732, %v2729
      %v2744 = vpack.c.bf16 %v2737, %v2737
      %v2746 = vsel %vm1125, %v2742, 0
      %v2749 = vsel %vm1125, %v2743, 0
      %v2752 = vsel %vm1125, %v2744, 0
      %2754 = vmatprep.subr.bf16.mxu0 0
      %2755 = vmatpush1.bf16.msra.mxu0 0
      %2756 = vmatprep.subr.bf16.mxu0 0
      %2757 = vmatpush1.bf16.msra.mxu0 0
      %2758 = vmatprep.subr.bf16.mxu0 0
      %2759 = vmatpush1.bf16.msra.mxu0 0
      %2760 = vmatprep.subr.bf16.mxu0 0
      %2761 = vmatpush1.bf16.msra.mxu0 0
      %2762 = vmatprep.subr.bf16.mxu0 0
      %2763 = vmatpush1.bf16.msra.mxu0 0
      %2764 = vmatprep.subr.bf16.mxu0 0
      %2765 = vmatpush1.bf16.msra.mxu0 0
      %2766 = vmatprep.subr.bf16.mxu0 0
      %2767 = vmatpush1.bf16.msra.mxu0 0
      %2768 = vmatprep.subr.bf16.mxu0 0
      %2769 = vmatpush1.bf16.msra.mxu0 %v1575
      %2770 = vmatprep.subr.bf16.mxu0 0
      %2771 = vmatpush2.bf16.msra.mxu0 0
      %2772 = vmatprep.subr.bf16.mxu0 0
      %2773 = vmatpush2.bf16.msra.mxu0 0
      %2774 = vmatprep.subr.bf16.mxu0 0
      %2775 = vmatpush2.bf16.msra.mxu0 0
      %2776 = vmatprep.subr.bf16.mxu0 0
      %2777 = vmatpush2.bf16.msra.mxu0 0
      %2778 = vmatprep.subr.bf16.mxu0 0
      %2779 = vmatpush2.bf16.msra.mxu0 0
      %2780 = vmatprep.subr.bf16.mxu0 0
      %2781 = vmatpush2.bf16.msra.mxu0 0
      %2782 = vmatprep.subr.bf16.mxu0 0
      %2783 = vmatpush2.bf16.msra.mxu0 0
      %2784 = vmatprep.subr.bf16.mxu0 0
      %2785 = vmatpush2.bf16.msra.mxu0 0
      %2786 = vmatprep.mubr.bf16.mxu0 0
      %2787 = vmatmul.mubr.bf16.gmra.mxu0 %v2746
      %v2788 = vpop.f32.mrf.mxu0
      %v2789 = vadd.f32 0.0, %v2788
      %v2790 = vpop.f32.mrf.mxu0
      %v2791 = vpop.f32.mrf.mxu0
      %v2792 = vadd.f32 0.0, %v2791
      %v2793 = vpop.f32.mrf.mxu0
      %2794 = vmatprep.mubr.bf16.mxu0 0
      %2795 = vmatmul.mubr.bf16.gmra.mxu0 %v2749
      %v2796 = vpop.f32.mrf.mxu0
      %v2797 = vadd.f32 0.0, %v2796
      %v2798 = vpop.f32.mrf.mxu0
      %v2799 = vpop.f32.mrf.mxu0
      %v2800 = vadd.f32 0.0, %v2799
      %v2801 = vpop.f32.mrf.mxu0
      %2802 = vmatprep.mubr.bf16.mxu0 0
      %2803 = vmatmul.mubr.bf16.gmra.mxu0 %v2752
      %v2804 = vpop.f32.mrf.mxu0
      %v2805 = vadd.f32 0.0, %v2804
      %v2806 = vpop.f32.mrf.mxu0
      %v2807 = vpop.f32.mrf.mxu0
      %v2808 = vpop.f32.mrf.mxu0
      %2809 = vdwg.mxu0
      %v2811 = vsel %vm1125, %v2519, 0
      %v2814 = vsel %vm1125, %v2520, 0
      %v2817 = vsel %vm1125, %v2521, 0
      %2819 = vmatprep.subr.bf16.mxu0 0
      %2820 = vmatpush1.bf16.msra.mxu0 0
      %2821 = vmatprep.subr.bf16.mxu0 0
      %2822 = vmatpush1.bf16.msra.mxu0 0
      %2823 = vmatprep.subr.bf16.mxu0 0
      %2824 = vmatpush1.bf16.msra.mxu0 0
      %2825 = vmatprep.subr.bf16.mxu0 0
      %2826 = vmatpush1.bf16.msra.mxu0 0
      %2827 = vmatprep.subr.bf16.mxu0 0
      %2828 = vmatpush1.bf16.msra.mxu0 0
      %2829 = vmatprep.subr.bf16.mxu0 0
      %2830 = vmatpush1.bf16.msra.mxu0 0
      %2831 = vmatprep.subr.bf16.mxu0 0
      %2832 = vmatpush1.bf16.msra.mxu0 0
      %2833 = vmatprep.subr.bf16.mxu0 0
      %2834 = vmatpush1.bf16.msra.mxu0 %v1643
      %2835 = vmatprep.subr.bf16.mxu0 0
      %2836 = vmatpush2.bf16.msra.mxu0 0
      %2837 = vmatprep.subr.bf16.mxu0 0
      %2838 = vmatpush2.bf16.msra.mxu0 0
      %2839 = vmatprep.subr.bf16.mxu0 0
      %2840 = vmatpush2.bf16.msra.mxu0 0
      %2841 = vmatprep.subr.bf16.mxu0 0
      %2842 = vmatpush2.bf16.msra.mxu0 0
      %2843 = vmatprep.subr.bf16.mxu0 0
      %2844 = vmatpush2.bf16.msra.mxu0 0
      %2845 = vmatprep.subr.bf16.mxu0 0
      %2846 = vmatpush2.bf16.msra.mxu0 0
      %2847 = vmatprep.subr.bf16.mxu0 0
      %2848 = vmatpush2.bf16.msra.mxu0 0
      %2849 = vmatprep.subr.bf16.mxu0 0
      %2850 = vmatpush2.bf16.msra.mxu0 0
      %2851 = vmatprep.mubr.bf16.mxu0 0
      %2852 = vmatmul.mubr.bf16.gmra.mxu0 %v2811
      %v2853 = vpop.f32.mrf.mxu0
      %v2854 = vadd.f32 %v2789, %v2853
      %v2855 = vpop.f32.mrf.mxu0
      %v2856 = vpop.f32.mrf.mxu0
      %v2857 = vadd.f32 %v2792, %v2856
      %v2858 = vpop.f32.mrf.mxu0
      %2859 = vmatprep.mubr.bf16.mxu0 0
      %2860 = vmatmul.mubr.bf16.gmra.mxu0 %v2814
      %v2861 = vpop.f32.mrf.mxu0
      %v2862 = vadd.f32 %v2797, %v2861
      %v2863 = vpop.f32.mrf.mxu0
      %v2864 = vpop.f32.mrf.mxu0
      %v2865 = vadd.f32 %v2800, %v2864
      %v2866 = vpop.f32.mrf.mxu0
      %2867 = vmatprep.mubr.bf16.mxu0 0
      %2868 = vmatmul.mubr.bf16.gmra.mxu0 %v2817
      %v2869 = vpop.f32.mrf.mxu0
      %v2870 = vadd.f32 %v2805, %v2869
      %v2871 = vpop.f32.mrf.mxu0
      %v2872 = vpop.f32.mrf.mxu0
      %v2873 = vpop.f32.mrf.mxu0
      %2874 = vdwg.mxu0
      %2875 = vrot.lane.b32.xlu0 %v2302, 112
      %v2876 = vpop.permute.xlu0 %2875
      %2877 = vrot.lane.b32.xlu0 %v2304, 112
      %v2878 = vpop.permute.xlu0 %2877
      %2879 = vrot.lane.b32.xlu0 %v2303, 112
      %v2880 = vpop.permute.xlu0 %2879
      %2881 = vrot.lane.b32.xlu0 %v2302, 80
      %v2882 = vpop.permute.xlu0 %2881
      %2883 = vrot.lane.b32.xlu0 %v2304, 80
      %v2884 = vpop.permute.xlu0 %2883
      %2885 = vrot.lane.b32.xlu0 %v2303, 80
      %v2886 = vpop.permute.xlu0 %2885
      %v2888 = vsel %vm1125, %v2876, 0
      %v2891 = vsel %vm1125, %v2878, 0
      %v2894 = vsel %vm1125, %v2880, 0
      %v2897 = vsel %vm1125, %v2882, 0
      %v2900 = vsel %vm1125, %v2884, 0
      %v2903 = vsel %vm1125, %v2886, 0
      %2905 = vmatprep.subr.bf16.mxu0 0
      %2906 = vmatpush1.bf16.xpose.msra.mxu0 0
      %2907 = vmatprep.subr.bf16.mxu0 0
      %2908 = vmatpush1.bf16.xpose.msra.mxu0 0
      %2909 = vmatprep.subr.bf16.mxu0 0
      %2910 = vmatpush1.bf16.xpose.msra.mxu0 0
      %2911 = vmatprep.subr.bf16.mxu0 0
      %2912 = vmatpush1.bf16.xpose.msra.mxu0 0
      %2913 = vmatprep.subr.bf16.mxu0 0
      %2914 = vmatpush1.bf16.xpose.msra.mxu0 0
      %2915 = vmatprep.subr.bf16.mxu0 0
      %2916 = vmatpush1.bf16.xpose.msra.mxu0 %v2903
      %2917 = vmatprep.subr.bf16.mxu0 0
      %2918 = vmatpush1.bf16.xpose.msra.mxu0 %v2900
      %2919 = vmatprep.subr.bf16.mxu0 0
      %2920 = vmatpush1.bf16.xpose.msra.mxu0 %v2897
      %2921 = vmatprep.subr.bf16.mxu0 0
      %2922 = vmatpush2.bf16.xpose.msra.mxu0 0
      %2923 = vmatprep.subr.bf16.mxu0 0
      %2924 = vmatpush2.bf16.xpose.msra.mxu0 0
      %2925 = vmatprep.subr.bf16.mxu0 0
      %2926 = vmatpush2.bf16.xpose.msra.mxu0 0
      %2927 = vmatprep.subr.bf16.mxu0 0
      %2928 = vmatpush2.bf16.xpose.msra.mxu0 0
      %2929 = vmatprep.subr.bf16.mxu0 0
      %2930 = vmatpush2.bf16.xpose.msra.mxu0 0
      %2931 = vmatprep.subr.bf16.mxu0 0
      %2932 = vmatpush2.bf16.xpose.msra.mxu0 0
      %2933 = vmatprep.subr.bf16.mxu0 0
      %2934 = vmatpush2.bf16.xpose.msra.mxu0 0
      %2935 = vmatprep.subr.bf16.mxu0 0
      %2936 = vmatpush2.bf16.xpose.msra.mxu0 0
      %2937 = vmatprep.mubr.bf16.mxu0 0
      %2938 = vmatmul.mubr.bf16.gmra.mxu0 %v2888
      %v2939 = vpop.f32.mrf.mxu0
      %v2940 = vadd.f32 %v798, %v2939
      %v2941 = vpop.f32.mrf.mxu0
      %v2942 = vpop.f32.mrf.mxu0
      %v2943 = vadd.f32 %v798, %v2942
      %v2944 = vpop.f32.mrf.mxu0
      %2945 = vmatprep.mubr.bf16.mxu0 0
      %2946 = vmatmul.mubr.bf16.gmra.mxu0 %v2891
      %v2947 = vpop.f32.mrf.mxu0
      %v2948 = vadd.f32 %v798, %v2947
      %v2949 = vpop.f32.mrf.mxu0
      %v2950 = vpop.f32.mrf.mxu0
      %v2951 = vadd.f32 %v798, %v2950
      %v2952 = vpop.f32.mrf.mxu0
      %2953 = vmatprep.mubr.bf16.mxu0 0
      %2954 = vmatmul.mubr.bf16.gmra.mxu0 %v2894
      %v2955 = vpop.f32.mrf.mxu0
      %v2956 = vadd.f32 %v798, %v2955
      %v2957 = vpop.f32.mrf.mxu0
      %v2958 = vpop.f32.mrf.mxu0
      %v2959 = vpop.f32.mrf.mxu0
      %2960 = vdwg.mxu0
      %v2961 = vsel %vm1200, %v2940, -inf
      %2962 = vmax.xlane.f32.xlu0 %v2961
      %v2963 = vpop.xlane.xlu0 %2962
      %v2964 = vsel %vm1200, %v2943, -inf
      %2965 = vmax.xlane.f32.xlu0 %v2964
      %v2966 = vpop.xlane.xlu0 %2965
      %v2967 = vsel %vm1200, %v2948, -inf
      %2968 = vmax.xlane.f32.xlu0 %v2967
      %v2969 = vpop.xlane.xlu0 %2968
      %v2970 = vsel %vm1200, %v2951, -inf
      %2971 = vmax.xlane.f32.xlu0 %v2970
      %v2972 = vpop.xlane.xlu0 %2971
      %v2973 = vsel %vm1200, %v2956, -inf
      %2974 = vmax.xlane.f32.xlu0 %v2973
      %v2975 = vpop.xlane.xlu0 %2974
      %v2976 = vsub.f32 %v2940, %v2963
      %v2977 = vsub.f32 %v2943, %v2966
      %v2978 = vsub.f32 %v2948, %v2969
      %v2979 = vsub.f32 %v2951, %v2972
      %v2980 = vsub.f32 %v2956, %v2975
      %v2981 = vmul.f32 %v2976, 1.442695
      %v2982 = vpow.pop %v2981
      %v2983 = vmul.f32 %v2977, 1.442695
      %v2984 = vpow.pop %v2983
      %v2985 = vmul.f32 %v2978, 1.442695
      %v2986 = vpow.pop %v2985
      %v2987 = vmul.f32 %v2979, 1.442695
      %v2988 = vpow.pop %v2987
      %v2989 = vmul.f32 %v2980, 1.442695
      %v2990 = vpow.pop %v2989
      %v2991 = vsel %vm1200, %v2982, 0.0
      %2992 = vadd.xlane.f32.xlu0 %v2991
      %v2993 = vpop.xlane.xlu0 %2992
      %v2994 = vsel %vm1200, %v2984, 0.0
      %2995 = vadd.xlane.f32.xlu0 %v2994
      %v2996 = vpop.xlane.xlu0 %2995
      %v2997 = vsel %vm1200, %v2986, 0.0
      %2998 = vadd.xlane.f32.xlu0 %v2997
      %v2999 = vpop.xlane.xlu0 %2998
      %v3000 = vsel %vm1200, %v2988, 0.0
      %3001 = vadd.xlane.f32.xlu0 %v3000
      %v3002 = vpop.xlane.xlu0 %3001
      %v3003 = vsel %vm1200, %v2990, 0.0
      %3004 = vadd.xlane.f32.xlu0 %v3003
      %v3005 = vpop.xlane.xlu0 %3004
      %v3006 = vrcp.pop %v2993
      %v3007 = vrcp.pop %v2996
      %v3008 = vrcp.pop %v2999
      %v3009 = vrcp.pop %v3002
      %v3010 = vrcp.pop %v3005
      %v3011 = vmul.f32 %v2982, %v3006
      %v3012 = vmul.f32 %v2984, %v3007
      %v3013 = vmul.f32 %v2986, %v3008
      %v3014 = vmul.f32 %v2988, %v3009
      %v3015 = vmul.f32 %v2990, %v3010
      %v3016 = vpack.c.bf16 %v3012, %v3011
      %v3017 = vpack.c.bf16 %v3014, %v3013
      %v3018 = vpack.c.bf16 %v3015, %v3015
      %3019 = vrot.lane.b32.xlu0 %v2302, 48
      %v3020 = vpop.permute.xlu0 %3019
      %3021 = vrot.lane.b32.xlu0 %v2304, 48
      %v3022 = vpop.permute.xlu0 %3021
      %3023 = vrot.lane.b32.xlu0 %v2303, 48
      %v3024 = vpop.permute.xlu0 %3023
      %v3028 = vsel %vm1200, %v3016, 0
      %v3031 = vsel %vm1200, %v3017, 0
      %v3034 = vsel %vm1200, %v3018, 0
      %v3037 = vsel %vm1276, %v3024, 0
      %3039 = vmatprep.subr.bf16.mxu0 0
      %3040 = vmatpush1.bf16.msra.mxu0 0
      %3041 = vmatprep.subr.bf16.mxu0 0
      %3042 = vmatpush1.bf16.msra.mxu0 0
      %3043 = vmatprep.subr.bf16.mxu0 0
      %3044 = vmatpush1.bf16.msra.mxu0 0
      %3045 = vmatprep.subr.bf16.mxu0 0
      %3046 = vmatpush1.bf16.msra.mxu0 0
      %3047 = vmatprep.subr.bf16.mxu0 0
      %3048 = vmatpush1.bf16.msra.mxu0 0
      %3049 = vmatprep.subr.bf16.mxu0 0
      %3050 = vmatpush1.bf16.msra.mxu0 %v3037
      %3051 = vmatprep.subr.bf16.mxu0 0
      %3052 = vmatpush1.bf16.msra.mxu0 %v3022
      %3053 = vmatprep.subr.bf16.mxu0 0
      %3054 = vmatpush1.bf16.msra.mxu0 %v3020
      %3055 = vmatprep.subr.bf16.mxu0 0
      %3056 = vmatpush2.bf16.msra.mxu0 0
      %3057 = vmatprep.subr.bf16.mxu0 0
      %3058 = vmatpush2.bf16.msra.mxu0 0
      %3059 = vmatprep.subr.bf16.mxu0 0
      %3060 = vmatpush2.bf16.msra.mxu0 0
      %3061 = vmatprep.subr.bf16.mxu0 0
      %3062 = vmatpush2.bf16.msra.mxu0 0
      %3063 = vmatprep.subr.bf16.mxu0 0
      %3064 = vmatpush2.bf16.msra.mxu0 0
      %3065 = vmatprep.subr.bf16.mxu0 0
      %3066 = vmatpush2.bf16.msra.mxu0 0
      %3067 = vmatprep.subr.bf16.mxu0 0
      %3068 = vmatpush2.bf16.msra.mxu0 0
      %3069 = vmatprep.subr.bf16.mxu0 0
      %3070 = vmatpush2.bf16.msra.mxu0 0
      %3071 = vmatprep.mubr.bf16.mxu0 0
      %3072 = vmatmul.mubr.bf16.gmra.mxu0 %v3028
      %v3073 = vpop.f32.mrf.mxu0
      %v3074 = vadd.f32 0.0, %v3073
      %v3075 = vpop.f32.mrf.mxu0
      %v3076 = vpop.f32.mrf.mxu0
      %v3077 = vadd.f32 0.0, %v3076
      %v3078 = vpop.f32.mrf.mxu0
      %3079 = vmatprep.mubr.bf16.mxu0 0
      %3080 = vmatmul.mubr.bf16.gmra.mxu0 %v3031
      %v3081 = vpop.f32.mrf.mxu0
      %v3082 = vadd.f32 0.0, %v3081
      %v3083 = vpop.f32.mrf.mxu0
      %v3084 = vpop.f32.mrf.mxu0
      %v3085 = vadd.f32 0.0, %v3084
      %v3086 = vpop.f32.mrf.mxu0
      %3087 = vmatprep.mubr.bf16.mxu0 0
      %3088 = vmatmul.mubr.bf16.gmra.mxu0 %v3034
      %v3089 = vpop.f32.mrf.mxu0
      %v3090 = vadd.f32 0.0, %v3089
      %v3091 = vpop.f32.mrf.mxu0
      %v3092 = vpop.f32.mrf.mxu0
      %v3093 = vpop.f32.mrf.mxu0
      %3094 = vdwg.mxu0
      %v3095 = vpack.c.bf16 %v3077, %v3074
      %v3096 = vpack.c.bf16 %v3085, %v3082
      %v3097 = vpack.c.bf16 %v3090, %v3090
      %v3099 = vsel %vm1125, %v3095, 0
      %v3102 = vsel %vm1125, %v3096, 0
      %v3105 = vsel %vm1125, %v3097, 0
      %3107 = vmatprep.subr.bf16.mxu0 0
      %3108 = vmatpush1.bf16.msra.mxu0 0
      %3109 = vmatprep.subr.bf16.mxu0 0
      %3110 = vmatpush1.bf16.msra.mxu0 0
      %3111 = vmatprep.subr.bf16.mxu0 0
      %3112 = vmatpush1.bf16.msra.mxu0 0
      %3113 = vmatprep.subr.bf16.mxu0 0
      %3114 = vmatpush1.bf16.msra.mxu0 0
      %3115 = vmatprep.subr.bf16.mxu0 0
      %3116 = vmatpush1.bf16.msra.mxu0 0
      %3117 = vmatprep.subr.bf16.mxu0 0
      %3118 = vmatpush1.bf16.msra.mxu0 0
      %3119 = vmatprep.subr.bf16.mxu0 0
      %3120 = vmatpush1.bf16.msra.mxu0 0
      %3121 = vmatprep.subr.bf16.mxu0 0
      %3122 = vmatpush1.bf16.msra.mxu0 %v1936
      %3123 = vmatprep.subr.bf16.mxu0 0
      %3124 = vmatpush2.bf16.msra.mxu0 0
      %3125 = vmatprep.subr.bf16.mxu0 0
      %3126 = vmatpush2.bf16.msra.mxu0 0
      %3127 = vmatprep.subr.bf16.mxu0 0
      %3128 = vmatpush2.bf16.msra.mxu0 0
      %3129 = vmatprep.subr.bf16.mxu0 0
      %3130 = vmatpush2.bf16.msra.mxu0 0
      %3131 = vmatprep.subr.bf16.mxu0 0
      %3132 = vmatpush2.bf16.msra.mxu0 0
      %3133 = vmatprep.subr.bf16.mxu0 0
      %3134 = vmatpush2.bf16.msra.mxu0 0
      %3135 = vmatprep.subr.bf16.mxu0 0
      %3136 = vmatpush2.bf16.msra.mxu0 0
      %3137 = vmatprep.subr.bf16.mxu0 0
      %3138 = vmatpush2.bf16.msra.mxu0 0
      %3139 = vmatprep.mubr.bf16.mxu0 0
      %3140 = vmatmul.mubr.bf16.gmra.mxu0 %v3099
      %v3141 = vpop.f32.mrf.mxu0
      %v3142 = vadd.f32 0.0, %v3141
      %v3143 = vpop.f32.mrf.mxu0
      %v3144 = vpop.f32.mrf.mxu0
      %v3145 = vadd.f32 0.0, %v3144
      %v3146 = vpop.f32.mrf.mxu0
      %3147 = vmatprep.mubr.bf16.mxu0 0
      %3148 = vmatmul.mubr.bf16.gmra.mxu0 %v3102
      %v3149 = vpop.f32.mrf.mxu0
      %v3150 = vadd.f32 0.0, %v3149
      %v3151 = vpop.f32.mrf.mxu0
      %v3152 = vpop.f32.mrf.mxu0
      %v3153 = vadd.f32 0.0, %v3152
      %v3154 = vpop.f32.mrf.mxu0
      %3155 = vmatprep.mubr.bf16.mxu0 0
      %3156 = vmatmul.mubr.bf16.gmra.mxu0 %v3105
      %v3157 = vpop.f32.mrf.mxu0
      %v3158 = vadd.f32 0.0, %v3157
      %v3159 = vpop.f32.mrf.mxu0
      %v3160 = vpop.f32.mrf.mxu0
      %v3161 = vpop.f32.mrf.mxu0
      %3162 = vdwg.mxu0
      %v3163 = vadd.f32 %v2854, %v3142
      %v3164 = vadd.f32 %v2857, %v3145
      %v3165 = vadd.f32 %v2862, %v3150
      %v3166 = vadd.f32 %v2865, %v3153
      %v3167 = vadd.f32 %v2870, %v3158
      %3168 = vrot.lane.b32.xlu0 %v2302, 104
      %v3169 = vpop.permute.xlu0 %3168
      %3170 = vrot.lane.b32.xlu0 %v2304, 104
      %v3171 = vpop.permute.xlu0 %3170
      %3172 = vrot.lane.b32.xlu0 %v2303, 104
      %v3173 = vpop.permute.xlu0 %3172
      %3174 = vrot.lane.b32.xlu0 %v2302, 72
      %v3175 = vpop.permute.xlu0 %3174
      %3176 = vrot.lane.b32.xlu0 %v2304, 72
      %v3177 = vpop.permute.xlu0 %3176
      %3178 = vrot.lane.b32.xlu0 %v2303, 72
      %v3179 = vpop.permute.xlu0 %3178
      %v3181 = vsel %vm1125, %v3169, 0
      %v3184 = vsel %vm1125, %v3171, 0
      %v3187 = vsel %vm1125, %v3173, 0
      %v3190 = vsel %vm1125, %v3175, 0
      %v3193 = vsel %vm1125, %v3177, 0
      %v3196 = vsel %vm1125, %v3179, 0
      %3198 = vmatprep.subr.bf16.mxu0 0
      %3199 = vmatpush1.bf16.xpose.msra.mxu0 0
      %3200 = vmatprep.subr.bf16.mxu0 0
      %3201 = vmatpush1.bf16.xpose.msra.mxu0 0
      %3202 = vmatprep.subr.bf16.mxu0 0
      %3203 = vmatpush1.bf16.xpose.msra.mxu0 0
      %3204 = vmatprep.subr.bf16.mxu0 0
      %3205 = vmatpush1.bf16.xpose.msra.mxu0 0
      %3206 = vmatprep.subr.bf16.mxu0 0
      %3207 = vmatpush1.bf16.xpose.msra.mxu0 0
      %3208 = vmatprep.subr.bf16.mxu0 0
      %3209 = vmatpush1.bf16.xpose.msra.mxu0 %v3196
      %3210 = vmatprep.subr.bf16.mxu0 0
      %3211 = vmatpush1.bf16.xpose.msra.mxu0 %v3193
      %3212 = vmatprep.subr.bf16.mxu0 0
      %3213 = vmatpush1.bf16.xpose.msra.mxu0 %v3190
      %3214 = vmatprep.subr.bf16.mxu0 0
      %3215 = vmatpush2.bf16.xpose.msra.mxu0 0
      %3216 = vmatprep.subr.bf16.mxu0 0
      %3217 = vmatpush2.bf16.xpose.msra.mxu0 0
      %3218 = vmatprep.subr.bf16.mxu0 0
      %3219 = vmatpush2.bf16.xpose.msra.mxu0 0
      %3220 = vmatprep.subr.bf16.mxu0 0
      %3221 = vmatpush2.bf16.xpose.msra.mxu0 0
      %3222 = vmatprep.subr.bf16.mxu0 0
      %3223 = vmatpush2.bf16.xpose.msra.mxu0 0
      %3224 = vmatprep.subr.bf16.mxu0 0
      %3225 = vmatpush2.bf16.xpose.msra.mxu0 0
      %3226 = vmatprep.subr.bf16.mxu0 0
      %3227 = vmatpush2.bf16.xpose.msra.mxu0 0
      %3228 = vmatprep.subr.bf16.mxu0 0
      %3229 = vmatpush2.bf16.xpose.msra.mxu0 0
      %3230 = vmatprep.mubr.bf16.mxu0 0
      %3231 = vmatmul.mubr.bf16.gmra.mxu0 %v3181
      %v3232 = vpop.f32.mrf.mxu0
      %v3233 = vadd.f32 %v798, %v3232
      %v3234 = vpop.f32.mrf.mxu0
      %v3235 = vpop.f32.mrf.mxu0
      %v3236 = vadd.f32 %v798, %v3235
      %v3237 = vpop.f32.mrf.mxu0
      %3238 = vmatprep.mubr.bf16.mxu0 0
      %3239 = vmatmul.mubr.bf16.gmra.mxu0 %v3184
      %v3240 = vpop.f32.mrf.mxu0
      %v3241 = vadd.f32 %v798, %v3240
      %v3242 = vpop.f32.mrf.mxu0
      %v3243 = vpop.f32.mrf.mxu0
      %v3244 = vadd.f32 %v798, %v3243
      %v3245 = vpop.f32.mrf.mxu0
      %3246 = vmatprep.mubr.bf16.mxu0 0
      %3247 = vmatmul.mubr.bf16.gmra.mxu0 %v3187
      %v3248 = vpop.f32.mrf.mxu0
      %v3249 = vadd.f32 %v798, %v3248
      %v3250 = vpop.f32.mrf.mxu0
      %v3251 = vpop.f32.mrf.mxu0
      %v3252 = vpop.f32.mrf.mxu0
      %3253 = vdwg.mxu0
      %v3254 = vsel %vm1200, %v3233, -inf
      %3255 = vmax.xlane.f32.xlu0 %v3254
      %v3256 = vpop.xlane.xlu0 %3255
      %v3257 = vsel %vm1200, %v3236, -inf
      %3258 = vmax.xlane.f32.xlu0 %v3257
      %v3259 = vpop.xlane.xlu0 %3258
      %v3260 = vsel %vm1200, %v3241, -inf
      %3261 = vmax.xlane.f32.xlu0 %v3260
      %v3262 = vpop.xlane.xlu0 %3261
      %v3263 = vsel %vm1200, %v3244, -inf
      %3264 = vmax.xlane.f32.xlu0 %v3263
      %v3265 = vpop.xlane.xlu0 %3264
      %v3266 = vsel %vm1200, %v3249, -inf
      %3267 = vmax.xlane.f32.xlu0 %v3266
      %v3268 = vpop.xlane.xlu0 %3267
      %v3269 = vsub.f32 %v3233, %v3256
      %v3270 = vsub.f32 %v3236, %v3259
      %v3271 = vsub.f32 %v3241, %v3262
      %v3272 = vsub.f32 %v3244, %v3265
      %v3273 = vsub.f32 %v3249, %v3268
      %v3274 = vmul.f32 %v3269, 1.442695
      %v3275 = vpow.pop %v3274
      %v3276 = vmul.f32 %v3270, 1.442695
      %v3277 = vpow.pop %v3276
      %v3278 = vmul.f32 %v3271, 1.442695
      %v3279 = vpow.pop %v3278
      %v3280 = vmul.f32 %v3272, 1.442695
      %v3281 = vpow.pop %v3280
      %v3282 = vmul.f32 %v3273, 1.442695
      %v3283 = vpow.pop %v3282
      %v3284 = vsel %vm1200, %v3275, 0.0
      %3285 = vadd.xlane.f32.xlu0 %v3284
      %v3286 = vpop.xlane.xlu0 %3285
      %v3287 = vsel %vm1200, %v3277, 0.0
      %3288 = vadd.xlane.f32.xlu0 %v3287
      %v3289 = vpop.xlane.xlu0 %3288
      %v3290 = vsel %vm1200, %v3279, 0.0
      %3291 = vadd.xlane.f32.xlu0 %v3290
      %v3292 = vpop.xlane.xlu0 %3291
      %v3293 = vsel %vm1200, %v3281, 0.0
      %3294 = vadd.xlane.f32.xlu0 %v3293
      %v3295 = vpop.xlane.xlu0 %3294
      %v3296 = vsel %vm1200, %v3283, 0.0
      %3297 = vadd.xlane.f32.xlu0 %v3296
      %v3298 = vpop.xlane.xlu0 %3297
      %v3299 = vrcp.pop %v3286
      %v3300 = vrcp.pop %v3289
      %v3301 = vrcp.pop %v3292
      %v3302 = vrcp.pop %v3295
      %v3303 = vrcp.pop %v3298
      %v3304 = vmul.f32 %v3275, %v3299
      %v3305 = vmul.f32 %v3277, %v3300
      %v3306 = vmul.f32 %v3279, %v3301
      %v3307 = vmul.f32 %v3281, %v3302
      %v3308 = vmul.f32 %v3283, %v3303
      %v3309 = vpack.c.bf16 %v3305, %v3304
      %v3310 = vpack.c.bf16 %v3307, %v3306
      %v3311 = vpack.c.bf16 %v3308, %v3308
      %3312 = vrot.lane.b32.xlu0 %v2302, 40
      %v3313 = vpop.permute.xlu0 %3312
      %3314 = vrot.lane.b32.xlu0 %v2304, 40
      %v3315 = vpop.permute.xlu0 %3314
      %3316 = vrot.lane.b32.xlu0 %v2303, 40
      %v3317 = vpop.permute.xlu0 %3316
      %v3321 = vsel %vm1200, %v3309, 0
      %v3324 = vsel %vm1200, %v3310, 0
      %v3327 = vsel %vm1200, %v3311, 0
      %v3330 = vsel %vm1276, %v3317, 0
      %3332 = vmatprep.subr.bf16.mxu0 0
      %3333 = vmatpush1.bf16.msra.mxu0 0
      %3334 = vmatprep.subr.bf16.mxu0 0
      %3335 = vmatpush1.bf16.msra.mxu0 0
      %3336 = vmatprep.subr.bf16.mxu0 0
      %3337 = vmatpush1.bf16.msra.mxu0 0
      %3338 = vmatprep.subr.bf16.mxu0 0
      %3339 = vmatpush1.bf16.msra.mxu0 0
      %3340 = vmatprep.subr.bf16.mxu0 0
      %3341 = vmatpush1.bf16.msra.mxu0 0
      %3342 = vmatprep.subr.bf16.mxu0 0
      %3343 = vmatpush1.bf16.msra.mxu0 %v3330
      %3344 = vmatprep.subr.bf16.mxu0 0
      %3345 = vmatpush1.bf16.msra.mxu0 %v3315
      %3346 = vmatprep.subr.bf16.mxu0 0
      %3347 = vmatpush1.bf16.msra.mxu0 %v3313
      %3348 = vmatprep.subr.bf16.mxu0 0
      %3349 = vmatpush2.bf16.msra.mxu0 0
      %3350 = vmatprep.subr.bf16.mxu0 0
      %3351 = vmatpush2.bf16.msra.mxu0 0
      %3352 = vmatprep.subr.bf16.mxu0 0
      %3353 = vmatpush2.bf16.msra.mxu0 0
      %3354 = vmatprep.subr.bf16.mxu0 0
      %3355 = vmatpush2.bf16.msra.mxu0 0
      %3356 = vmatprep.subr.bf16.mxu0 0
      %3357 = vmatpush2.bf16.msra.mxu0 0
      %3358 = vmatprep.subr.bf16.mxu0 0
      %3359 = vmatpush2.bf16.msra.mxu0 0
      %3360 = vmatprep.subr.bf16.mxu0 0
      %3361 = vmatpush2.bf16.msra.mxu0 0
      %3362 = vmatprep.subr.bf16.mxu0 0
      %3363 = vmatpush2.bf16.msra.mxu0 0
      %3364 = vmatprep.mubr.bf16.mxu0 0
      %3365 = vmatmul.mubr.bf16.gmra.mxu0 %v3321
      %v3366 = vpop.f32.mrf.mxu0
      %v3367 = vadd.f32 0.0, %v3366
      %v3368 = vpop.f32.mrf.mxu0
      %v3369 = vpop.f32.mrf.mxu0
      %v3370 = vadd.f32 0.0, %v3369
      %v3371 = vpop.f32.mrf.mxu0
      %3372 = vmatprep.mubr.bf16.mxu0 0
      %3373 = vmatmul.mubr.bf16.gmra.mxu0 %v3324
      %v3374 = vpop.f32.mrf.mxu0
      %v3375 = vadd.f32 0.0, %v3374
      %v3376 = vpop.f32.mrf.mxu0
      %v3377 = vpop.f32.mrf.mxu0
      %v3378 = vadd.f32 0.0, %v3377
      %v3379 = vpop.f32.mrf.mxu0
      %3380 = vmatprep.mubr.bf16.mxu0 0
      %3381 = vmatmul.mubr.bf16.gmra.mxu0 %v3327
      %v3382 = vpop.f32.mrf.mxu0
      %v3383 = vadd.f32 0.0, %v3382
      %v3384 = vpop.f32.mrf.mxu0
      %v3385 = vpop.f32.mrf.mxu0
      %v3386 = vpop.f32.mrf.mxu0
      %3387 = vdwg.mxu0
      %v3388 = vpack.c.bf16 %v3370, %v3367
      %v3389 = vpack.c.bf16 %v3378, %v3375
      %v3390 = vpack.c.bf16 %v3383, %v3383
      %v3392 = vsel %vm1125, %v3388, 0
      %v3395 = vsel %vm1125, %v3389, 0
      %v3398 = vsel %vm1125, %v3390, 0
      %3400 = vmatprep.subr.bf16.mxu0 0
      %3401 = vmatpush1.bf16.msra.mxu0 0
      %3402 = vmatprep.subr.bf16.mxu0 0
      %3403 = vmatpush1.bf16.msra.mxu0 0
      %3404 = vmatprep.subr.bf16.mxu0 0
      %3405 = vmatpush1.bf16.msra.mxu0 0
      %3406 = vmatprep.subr.bf16.mxu0 0
      %3407 = vmatpush1.bf16.msra.mxu0 0
      %3408 = vmatprep.subr.bf16.mxu0 0
      %3409 = vmatpush1.bf16.msra.mxu0 0
      %3410 = vmatprep.subr.bf16.mxu0 0
      %3411 = vmatpush1.bf16.msra.mxu0 0
      %3412 = vmatprep.subr.bf16.mxu0 0
      %3413 = vmatpush1.bf16.msra.mxu0 0
      %3414 = vmatprep.subr.bf16.mxu0 0
      %3415 = vmatpush1.bf16.msra.mxu0 %v2234
      %3416 = vmatprep.subr.bf16.mxu0 0
      %3417 = vmatpush2.bf16.msra.mxu0 0
      %3418 = vmatprep.subr.bf16.mxu0 0
      %3419 = vmatpush2.bf16.msra.mxu0 0
      %3420 = vmatprep.subr.bf16.mxu0 0
      %3421 = vmatpush2.bf16.msra.mxu0 0
      %3422 = vmatprep.subr.bf16.mxu0 0
      %3423 = vmatpush2.bf16.msra.mxu0 0
      %3424 = vmatprep.subr.bf16.mxu0 0
      %3425 = vmatpush2.bf16.msra.mxu0 0
      %3426 = vmatprep.subr.bf16.mxu0 0
      %3427 = vmatpush2.bf16.msra.mxu0 0
      %3428 = vmatprep.subr.bf16.mxu0 0
      %3429 = vmatpush2.bf16.msra.mxu0 0
      %3430 = vmatprep.subr.bf16.mxu0 0
      %3431 = vmatpush2.bf16.msra.mxu0 0
      %3432 = vmatprep.mubr.bf16.mxu0 0
      %3433 = vmatmul.mubr.bf16.gmra.mxu0 %v3392
      %v3434 = vpop.f32.mrf.mxu0
      %v3435 = vadd.f32 0.0, %v3434
      %v3436 = vpop.f32.mrf.mxu0
      %v3437 = vpop.f32.mrf.mxu0
      %v3438 = vadd.f32 0.0, %v3437
      %v3439 = vpop.f32.mrf.mxu0
      %3440 = vmatprep.mubr.bf16.mxu0 0
      %3441 = vmatmul.mubr.bf16.gmra.mxu0 %v3395
      %v3442 = vpop.f32.mrf.mxu0
      %v3443 = vadd.f32 0.0, %v3442
      %v3444 = vpop.f32.mrf.mxu0
      %v3445 = vpop.f32.mrf.mxu0
      %v3446 = vadd.f32 0.0, %v3445
      %v3447 = vpop.f32.mrf.mxu0
      %3448 = vmatprep.mubr.bf16.mxu0 0
      %3449 = vmatmul.mubr.bf16.gmra.mxu0 %v3398
      %v3450 = vpop.f32.mrf.mxu0
      %v3451 = vadd.f32 0.0, %v3450
      %v3452 = vpop.f32.mrf.mxu0
      %v3453 = vpop.f32.mrf.mxu0
      %v3454 = vpop.f32.mrf.mxu0
      %3455 = vdwg.mxu0
      %v3456 = vadd.f32 %v3163, %v3435
      %v3457 = vadd.f32 %v3164, %v3438
      %v3458 = vadd.f32 %v3165, %v3443
      %v3459 = vadd.f32 %v3166, %v3446
      %v3460 = vadd.f32 %v3167, %v3451
      %v3461 = vadd.f32 %v785, %v2292
      %v3462 = vadd.f32 %v786, %v2293
      %v3463 = vadd.f32 %v787, %v2294
      %v3464 = vadd.f32 %v788, %v2295
      %v3465 = vadd.f32 %v789, %v2296
      %v3466 = vadd.f32 %v790, %v3456
      %v3467 = vadd.f32 %v791, %v3457
      %v3468 = vadd.f32 %v792, %v3458
      %v3469 = vadd.f32 %v793, %v3459
      %v3470 = vadd.f32 %v794, %v3460
      %v3471 = vld [vmem:[%s730] sm:$0x1]
      %v3473 = vlaneseq
      %v3474 = vshrl.u32 %v3473, 7
      %v3475 = vsub.s32 0, %v3474
      %v3476 = vrot.slane %v3471, %v3475
      %v3478 = vadd.f32 %v3461, %v3476
      %v3479 = vadd.f32 %v3462, %v3476
      %v3480 = vadd.f32 %v3463, %v3476
      %v3481 = vadd.f32 %v3464, %v3476
      %v3482 = vadd.f32 %v3465, %v3476
      %v3483 = vadd.f32 %v3466, %v3476
      %v3484 = vadd.f32 %v3467, %v3476
      %v3485 = vadd.f32 %v3468, %v3476
      %v3486 = vadd.f32 %v3469, %v3476
      %v3487 = vadd.f32 %v3470, %v3476
      %v3488 = vld [vmem:[%s733] sm:$0x1]
      %v3489 = vld [vmem:[%s736] sm:$0x1]
      %v3490 = vsel %vm801, %v3478, 0.0
      %3491 = vadd.xlane.f32.xlu0 %v3490
      %v3492 = vpop.xlane.xlu0 %3491
      %v3493 = vsel %vm801, %v3479, 0.0
      %3494 = vadd.xlane.f32.xlu0 %v3493
      %v3495 = vpop.xlane.xlu0 %3494
      %v3496 = vsel %vm801, %v3480, 0.0
      %3497 = vadd.xlane.f32.xlu0 %v3496
      %v3498 = vpop.xlane.xlu0 %3497
      %v3499 = vsel %vm801, %v3481, 0.0
      %3500 = vadd.xlane.f32.xlu0 %v3499
      %v3501 = vpop.xlane.xlu0 %3500
      %v3502 = vsel %vm801, %v3482, 0.0
      %3503 = vadd.xlane.f32.xlu0 %v3502
      %v3504 = vpop.xlane.xlu0 %3503
      %v3505 = vsel %vm801, %v3483, 0.0
      %3506 = vadd.xlane.f32.xlu0 %v3505
      %v3507 = vpop.xlane.xlu0 %3506
      %v3508 = vsel %vm801, %v3484, 0.0
      %3509 = vadd.xlane.f32.xlu0 %v3508
      %v3510 = vpop.xlane.xlu0 %3509
      %v3511 = vsel %vm801, %v3485, 0.0
      %3512 = vadd.xlane.f32.xlu0 %v3511
      %v3513 = vpop.xlane.xlu0 %3512
      %v3514 = vsel %vm801, %v3486, 0.0
      %3515 = vadd.xlane.f32.xlu0 %v3514
      %v3516 = vpop.xlane.xlu0 %3515
      %v3517 = vsel %vm801, %v3487, 0.0
      %3518 = vadd.xlane.f32.xlu0 %v3517
      %v3519 = vpop.xlane.xlu0 %3518
      %v3520 = vmul.f32 %v3492, %v832
      %v3521 = vmul.f32 %v3495, %v832
      %v3522 = vmul.f32 %v3498, %v832
      %v3523 = vmul.f32 %v3501, %v832
      %v3524 = vmul.f32 %v3504, %v832
      %v3525 = vmul.f32 %v3507, %v832
      %v3526 = vmul.f32 %v3510, %v832
      %v3527 = vmul.f32 %v3513, %v832
      %v3528 = vmul.f32 %v3516, %v832
      %v3529 = vmul.f32 %v3519, %v832
      %v3530 = vmul.f32 %v3478, %v3478
      %v3531 = vmul.f32 %v3479, %v3479
      %v3532 = vmul.f32 %v3480, %v3480
      %v3533 = vmul.f32 %v3481, %v3481
      %v3534 = vmul.f32 %v3482, %v3482
      %v3535 = vmul.f32 %v3483, %v3483
      %v3536 = vmul.f32 %v3484, %v3484
      %v3537 = vmul.f32 %v3485, %v3485
      %v3538 = vmul.f32 %v3486, %v3486
      %v3539 = vmul.f32 %v3487, %v3487
      %v3540 = vsel %vm801, %v3530, 0.0
      %3541 = vadd.xlane.f32.xlu0 %v3540
      %v3542 = vpop.xlane.xlu0 %3541
      %v3543 = vsel %vm801, %v3531, 0.0
      %3544 = vadd.xlane.f32.xlu0 %v3543
      %v3545 = vpop.xlane.xlu0 %3544
      %v3546 = vsel %vm801, %v3532, 0.0
      %3547 = vadd.xlane.f32.xlu0 %v3546
      %v3548 = vpop.xlane.xlu0 %3547
      %v3549 = vsel %vm801, %v3533, 0.0
      %3550 = vadd.xlane.f32.xlu0 %v3549
      %v3551 = vpop.xlane.xlu0 %3550
      %v3552 = vsel %vm801, %v3534, 0.0
      %3553 = vadd.xlane.f32.xlu0 %v3552
      %v3554 = vpop.xlane.xlu0 %3553
      %v3555 = vsel %vm801, %v3535, 0.0
      %3556 = vadd.xlane.f32.xlu0 %v3555
      %v3557 = vpop.xlane.xlu0 %3556
      %v3558 = vsel %vm801, %v3536, 0.0
      %3559 = vadd.xlane.f32.xlu0 %v3558
      %v3560 = vpop.xlane.xlu0 %3559
      %v3561 = vsel %vm801, %v3537, 0.0
      %3562 = vadd.xlane.f32.xlu0 %v3561
      %v3563 = vpop.xlane.xlu0 %3562
      %v3564 = vsel %vm801, %v3538, 0.0
      %3565 = vadd.xlane.f32.xlu0 %v3564
      %v3566 = vpop.xlane.xlu0 %3565
      %v3567 = vsel %vm801, %v3539, 0.0
      %3568 = vadd.xlane.f32.xlu0 %v3567
      %v3569 = vpop.xlane.xlu0 %3568
      %v3570 = vmul.f32 %v3542, %v832
      %v3571 = vmul.f32 %v3545, %v832
      %v3572 = vmul.f32 %v3548, %v832
      %v3573 = vmul.f32 %v3551, %v832
      %v3574 = vmul.f32 %v3554, %v832
      %v3575 = vmul.f32 %v3557, %v832
      %v3576 = vmul.f32 %v3560, %v832
      %v3577 = vmul.f32 %v3563, %v832
      %v3578 = vmul.f32 %v3566, %v832
      %v3579 = vmul.f32 %v3569, %v832
      %v3580 = vmul.f32 %v3520, %v3520
      %v3581 = vmul.f32 %v3521, %v3521
      %v3582 = vmul.f32 %v3522, %v3522
      %v3583 = vmul.f32 %v3523, %v3523
      %v3584 = vmul.f32 %v3524, %v3524
      %v3585 = vmul.f32 %v3525, %v3525
      %v3586 = vmul.f32 %v3526, %v3526
      %v3587 = vmul.f32 %v3527, %v3527
      %v3588 = vmul.f32 %v3528, %v3528
      %v3589 = vmul.f32 %v3529, %v3529
      %v3590 = vsub.f32 %v3570, %v3580
      %v3591 = vsub.f32 %v3571, %v3581
      %v3592 = vsub.f32 %v3572, %v3582
      %v3593 = vsub.f32 %v3573, %v3583
      %v3594 = vsub.f32 %v3574, %v3584
      %v3595 = vsub.f32 %v3575, %v3585
      %v3596 = vsub.f32 %v3576, %v3586
      %v3597 = vsub.f32 %v3577, %v3587
      %v3598 = vsub.f32 %v3578, %v3588
      %v3599 = vsub.f32 %v3579, %v3589
      %v3600 = vmax.f32 %v3590, 0.0
      %v3601 = vmax.f32 %v3591, 0.0
      %v3602 = vmax.f32 %v3592, 0.0
      %v3603 = vmax.f32 %v3593, 0.0
      %v3604 = vmax.f32 %v3594, 0.0
      %v3605 = vmax.f32 %v3595, 0.0
      %v3606 = vmax.f32 %v3596, 0.0
      %v3607 = vmax.f32 %v3597, 0.0
      %v3608 = vmax.f32 %v3598, 0.0
      %v3609 = vmax.f32 %v3599, 0.0
      %v3610 = vsub.f32 %v3478, %v3520
      %v3611 = vsub.f32 %v3479, %v3521
      %v3612 = vsub.f32 %v3480, %v3522
      %v3613 = vsub.f32 %v3481, %v3523
      %v3614 = vsub.f32 %v3482, %v3524
      %v3615 = vsub.f32 %v3483, %v3525
      %v3616 = vsub.f32 %v3484, %v3526
      %v3617 = vsub.f32 %v3485, %v3527
      %v3618 = vsub.f32 %v3486, %v3528
      %v3619 = vsub.f32 %v3487, %v3529
      %v3620 = vadd.f32 %v3600, 1e-06
      %v3621 = vadd.f32 %v3601, 1e-06
      %v3622 = vadd.f32 %v3602, 1e-06
      %v3623 = vadd.f32 %v3603, 1e-06
      %v3624 = vadd.f32 %v3604, 1e-06
      %v3625 = vadd.f32 %v3605, 1e-06
      %v3626 = vadd.f32 %v3606, 1e-06
      %v3627 = vadd.f32 %v3607, 1e-06
      %v3628 = vadd.f32 %v3608, 1e-06
      %v3629 = vadd.f32 %v3609, 1e-06
      %v3630 = vrsqrt.pop %v3620
      %v3631 = vrsqrt.pop %v3621
      %v3632 = vrsqrt.pop %v3622
      %v3633 = vrsqrt.pop %v3623
      %v3634 = vrsqrt.pop %v3624
      %v3635 = vrsqrt.pop %v3625
      %v3636 = vrsqrt.pop %v3626
      %v3637 = vrsqrt.pop %v3627
      %v3638 = vrsqrt.pop %v3628
      %v3639 = vrsqrt.pop %v3629
      %v3640 = vmul.f32 %v3610, %v3630
      %v3641 = vmul.f32 %v3611, %v3631
      %v3642 = vmul.f32 %v3612, %v3632
      %v3643 = vmul.f32 %v3613, %v3633
      %v3644 = vmul.f32 %v3614, %v3634
      %v3645 = vmul.f32 %v3615, %v3635
      %v3646 = vmul.f32 %v3616, %v3636
      %v3647 = vmul.f32 %v3617, %v3637
      %v3648 = vmul.f32 %v3618, %v3638
      %v3649 = vmul.f32 %v3619, %v3639
      %v3651 = vlaneseq
      %v3652 = vshrl.u32 %v3651, 7
      %v3653 = vsub.s32 0, %v3652
      %v3654 = vrot.slane %v3488, %v3653
      %v3656 = vmul.f32 %v3640, %v3654
      %v3657 = vmul.f32 %v3641, %v3654
      %v3658 = vmul.f32 %v3642, %v3654
      %v3659 = vmul.f32 %v3643, %v3654
      %v3660 = vmul.f32 %v3644, %v3654
      %v3661 = vmul.f32 %v3645, %v3654
      %v3662 = vmul.f32 %v3646, %v3654
      %v3663 = vmul.f32 %v3647, %v3654
      %v3664 = vmul.f32 %v3648, %v3654
      %v3665 = vmul.f32 %v3649, %v3654
      %v3667 = vlaneseq
      %v3668 = vshrl.u32 %v3667, 7
      %v3669 = vsub.s32 0, %v3668
      %v3670 = vrot.slane %v3489, %v3669
      %v3672 = vadd.f32 %v3656, %v3670
      %v3673 = vadd.f32 %v3657, %v3670
      %v3674 = vadd.f32 %v3658, %v3670
      %v3675 = vadd.f32 %v3659, %v3670
      %v3676 = vadd.f32 %v3660, %v3670
      %v3677 = vadd.f32 %v3661, %v3670
      %v3678 = vadd.f32 %v3662, %v3670
      %v3679 = vadd.f32 %v3663, %v3670
      %v3680 = vadd.f32 %v3664, %v3670
      %v3681 = vadd.f32 %v3665, %v3670
      %v3682 = vpack.c.bf16 %v3673, %v3672
      %v3683 = vpack.c.bf16 %v3675, %v3674
      %v3684 = vpack.c.bf16 %v3677, %v3676
      %v3685 = vpack.c.bf16 %v3679, %v3678
      %v3686 = vpack.c.bf16 %v3681, %v3680
      %v3687 = vld [vmem:[%s741] sm:$0xf]
      %v3688 = vld [vmem:[%s741 + $0x4] sm:$0xf]
      %v3689 = vld [vmem:[%s741 + $0x8] sm:$0xf]
      %v3690 = vld [vmem:[%s741 + $0xc] sm:$0xf]
      %v3691 = vld [vmem:[%s744] sm:$0x1]
      %v3693 = vlaneseq
      %v3694 = vshrl.u32 %v3693, 7
      %v3695 = vsub.s32 0, %v3694
      %v3696 = vrot.slane %v3691, %v3695
      %v3702 = vunpack.c.l.b16 %v3687
      %v3703 = vunpack.c.l.b16 %v3688
      %v3704 = vunpack.c.l.b16 %v3689
      %v3705 = vunpack.c.l.b16 %v3690
      %v3706 = vpack.c.b16 %v3703, %v3702
      %v3707 = vpack.c.b16 %v3705, %v3704
      %v3711 = vsel %vm801, %v3682, 0
      %v3714 = vsel %vm801, %v3683, 0
      %v3717 = vsel %vm801, %v3684, 0
      %v3720 = vsel %vm801, %v3685, 0
      %v3723 = vsel %vm801, %v3686, 0
      %3725 = vmatprep.subr.bf16.mxu0 0
      %3726 = vmatpush1.bf16.msra.mxu0 0
      %3727 = vmatprep.subr.bf16.mxu0 0
      %3728 = vmatpush1.bf16.msra.mxu0 0
      %3729 = vmatprep.subr.bf16.mxu0 0
      %3730 = vmatpush1.bf16.msra.mxu0 0
      %3731 = vmatprep.subr.bf16.mxu0 0
      %3732 = vmatpush1.bf16.msra.mxu0 0
      %3733 = vmatprep.subr.bf16.mxu0 0
      %3734 = vmatpush1.bf16.msra.mxu0 0
      %3735 = vmatprep.subr.bf16.mxu0 0
      %3736 = vmatpush1.bf16.msra.mxu0 0
      %3737 = vmatprep.subr.bf16.mxu0 0
      %3738 = vmatpush1.bf16.msra.mxu0 %v3707
      %3739 = vmatprep.subr.bf16.mxu0 0
      %3740 = vmatpush1.bf16.msra.mxu0 %v3706
      %3741 = vmatprep.subr.bf16.mxu0 0
      %3742 = vmatpush2.bf16.msra.mxu0 0
      %3743 = vmatprep.subr.bf16.mxu0 0
      %3744 = vmatpush2.bf16.msra.mxu0 0
      %3745 = vmatprep.subr.bf16.mxu0 0
      %3746 = vmatpush2.bf16.msra.mxu0 0
      %3747 = vmatprep.subr.bf16.mxu0 0
      %3748 = vmatpush2.bf16.msra.mxu0 0
      %3749 = vmatprep.subr.bf16.mxu0 0
      %3750 = vmatpush2.bf16.msra.mxu0 0
      %3751 = vmatprep.subr.bf16.mxu0 0
      %3752 = vmatpush2.bf16.msra.mxu0 0
      %3753 = vmatprep.subr.bf16.mxu0 0
      %3754 = vmatpush2.bf16.msra.mxu0 0
      %3755 = vmatprep.subr.bf16.mxu0 0
      %3756 = vmatpush2.bf16.msra.mxu0 0
      %3757 = vmatprep.mubr.bf16.mxu0 0
      %3758 = vmatmul.mubr.bf16.gmra.mxu0 %v3711
      %v3759 = vpop.f32.mrf.mxu0
      %v3760 = vadd.f32 %v3696, %v3759
      %v3761 = vpop.f32.mrf.mxu0
      %v3762 = vpop.f32.mrf.mxu0
      %v3763 = vadd.f32 %v3696, %v3762
      %v3764 = vpop.f32.mrf.mxu0
      %3765 = vmatprep.mubr.bf16.mxu0 0
      %3766 = vmatmul.mubr.bf16.gmra.mxu0 %v3714
      %v3767 = vpop.f32.mrf.mxu0
      %v3768 = vadd.f32 %v3696, %v3767
      %v3769 = vpop.f32.mrf.mxu0
      %v3770 = vpop.f32.mrf.mxu0
      %v3771 = vadd.f32 %v3696, %v3770
      %v3772 = vpop.f32.mrf.mxu0
      %3773 = vmatprep.mubr.bf16.mxu0 0
      %3774 = vmatmul.mubr.bf16.gmra.mxu0 %v3717
      %v3775 = vpop.f32.mrf.mxu0
      %v3776 = vadd.f32 %v3696, %v3775
      %v3777 = vpop.f32.mrf.mxu0
      %v3778 = vpop.f32.mrf.mxu0
      %v3779 = vadd.f32 %v3696, %v3778
      %v3780 = vpop.f32.mrf.mxu0
      %3781 = vmatprep.mubr.bf16.mxu0 0
      %3782 = vmatmul.mubr.bf16.gmra.mxu0 %v3720
      %v3783 = vpop.f32.mrf.mxu0
      %v3784 = vadd.f32 %v3696, %v3783
      %v3785 = vpop.f32.mrf.mxu0
      %v3786 = vpop.f32.mrf.mxu0
      %v3787 = vadd.f32 %v3696, %v3786
      %v3788 = vpop.f32.mrf.mxu0
      %3789 = vmatprep.mubr.bf16.mxu0 0
      %3790 = vmatmul.mubr.bf16.gmra.mxu0 %v3723
      %v3791 = vpop.f32.mrf.mxu0
      %v3792 = vadd.f32 %v3696, %v3791
      %v3793 = vpop.f32.mrf.mxu0
      %v3794 = vpop.f32.mrf.mxu0
      %v3795 = vadd.f32 %v3696, %v3794
      %v3796 = vpop.f32.mrf.mxu0
      %3797 = vdwg.mxu0
      %v3798 = vmul.f32 %v3760, 0.5
      %v3799 = vmul.f32 %v3763, 0.5
      %v3800 = vmul.f32 %v3768, 0.5
      %v3801 = vmul.f32 %v3771, 0.5
      %v3802 = vmul.f32 %v3776, 0.5
      %v3803 = vmul.f32 %v3779, 0.5
      %v3804 = vmul.f32 %v3784, 0.5
      %v3805 = vmul.f32 %v3787, 0.5
      %v3806 = vmul.f32 %v3792, 0.5
      %v3807 = vmul.f32 %v3795, 0.5
      %v3808 = vmul.f32 %v3760, 0.70710677
      %v3809 = vmul.f32 %v3763, 0.70710677
      %v3810 = vmul.f32 %v3768, 0.70710677
      %v3811 = vmul.f32 %v3771, 0.70710677
      %v3812 = vmul.f32 %v3776, 0.70710677
      %v3813 = vmul.f32 %v3779, 0.70710677
      %v3814 = vmul.f32 %v3784, 0.70710677
      %v3815 = vmul.f32 %v3787, 0.70710677
      %v3816 = vmul.f32 %v3792, 0.70710677
      %v3817 = vmul.f32 %v3795, 0.70710677
      %v3818 = vand.u32 2147483647, %v3808
      %v3819 = vand.u32 2147483647, %v3809
      %v3820 = vand.u32 2147483647, %v3810
      %v3821 = vand.u32 2147483647, %v3811
      %v3822 = vand.u32 2147483647, %v3812
      %v3823 = vand.u32 2147483647, %v3813
      %v3824 = vand.u32 2147483647, %v3814
      %v3825 = vand.u32 2147483647, %v3815
      %v3826 = vand.u32 2147483647, %v3816
      %v3827 = vand.u32 2147483647, %v3817
      %v3828 = vmul.f32 %v3818, 0.3275911
      %v3829 = vmul.f32 %v3819, 0.3275911
      %v3830 = vmul.f32 %v3820, 0.3275911
      %v3831 = vmul.f32 %v3821, 0.3275911
      %v3832 = vmul.f32 %v3822, 0.3275911
      %v3833 = vmul.f32 %v3823, 0.3275911
      %v3834 = vmul.f32 %v3824, 0.3275911
      %v3835 = vmul.f32 %v3825, 0.3275911
      %v3836 = vmul.f32 %v3826, 0.3275911
      %v3837 = vmul.f32 %v3827, 0.3275911
      %v3838 = vadd.f32 %v3828, 1.0
      %v3839 = vadd.f32 %v3829, 1.0
      %v3840 = vadd.f32 %v3830, 1.0
      %v3841 = vadd.f32 %v3831, 1.0
      %v3842 = vadd.f32 %v3832, 1.0
      %v3843 = vadd.f32 %v3833, 1.0
      %v3844 = vadd.f32 %v3834, 1.0
      %v3845 = vadd.f32 %v3835, 1.0
      %v3846 = vadd.f32 %v3836, 1.0
      %v3847 = vadd.f32 %v3837, 1.0
      %v3848 = vrcp.pop %v3838
      %v3849 = vmul.f32 1.0, %v3848
      %v3850 = vrcp.pop %v3839
      %v3851 = vmul.f32 1.0, %v3850
      %v3852 = vrcp.pop %v3840
      %v3853 = vmul.f32 1.0, %v3852
      %v3854 = vrcp.pop %v3841
      %v3855 = vmul.f32 1.0, %v3854
      %v3856 = vrcp.pop %v3842
      %v3857 = vmul.f32 1.0, %v3856
      %v3858 = vrcp.pop %v3843
      %v3859 = vmul.f32 1.0, %v3858
      %v3860 = vrcp.pop %v3844
      %v3861 = vmul.f32 1.0, %v3860
      %v3862 = vrcp.pop %v3845
      %v3863 = vmul.f32 1.0, %v3862
      %v3864 = vrcp.pop %v3846
      %v3865 = vmul.f32 1.0, %v3864
      %v3866 = vrcp.pop %v3847
      %v3867 = vmul.f32 1.0, %v3866
      %v3868 = vmul.f32 %v3849, 1.0614054
      %v3869 = vmul.f32 %v3851, 1.0614054
      %v3870 = vmul.f32 %v3853, 1.0614054
      %v3871 = vmul.f32 %v3855, 1.0614054
      %v3872 = vmul.f32 %v3857, 1.0614054
      %v3873 = vmul.f32 %v3859, 1.0614054
      %v3874 = vmul.f32 %v3861, 1.0614054
      %v3875 = vmul.f32 %v3863, 1.0614054
      %v3876 = vmul.f32 %v3865, 1.0614054
      %v3877 = vmul.f32 %v3867, 1.0614054
      %v3878 = vadd.f32 %v3868, -1.4531521
      %v3879 = vadd.f32 %v3869, -1.4531521
      %v3880 = vadd.f32 %v3870, -1.4531521
      %v3881 = vadd.f32 %v3871, -1.4531521
      %v3882 = vadd.f32 %v3872, -1.4531521
      %v3883 = vadd.f32 %v3873, -1.4531521
      %v3884 = vadd.f32 %v3874, -1.4531521
      %v3885 = vadd.f32 %v3875, -1.4531521
      %v3886 = vadd.f32 %v3876, -1.4531521
      %v3887 = vadd.f32 %v3877, -1.4531521
      %v3888 = vmul.f32 %v3878, %v3849
      %v3889 = vmul.f32 %v3879, %v3851
      %v3890 = vmul.f32 %v3880, %v3853
      %v3891 = vmul.f32 %v3881, %v3855
      %v3892 = vmul.f32 %v3882, %v3857
      %v3893 = vmul.f32 %v3883, %v3859
      %v3894 = vmul.f32 %v3884, %v3861
      %v3895 = vmul.f32 %v3885, %v3863
      %v3896 = vmul.f32 %v3886, %v3865
      %v3897 = vmul.f32 %v3887, %v3867
      %v3898 = vadd.f32 %v3888, 1.4214138
      %v3899 = vadd.f32 %v3889, 1.4214138
      %v3900 = vadd.f32 %v3890, 1.4214138
      %v3901 = vadd.f32 %v3891, 1.4214138
      %v3902 = vadd.f32 %v3892, 1.4214138
      %v3903 = vadd.f32 %v3893, 1.4214138
      %v3904 = vadd.f32 %v3894, 1.4214138
      %v3905 = vadd.f32 %v3895, 1.4214138
      %v3906 = vadd.f32 %v3896, 1.4214138
      %v3907 = vadd.f32 %v3897, 1.4214138
      %v3908 = vmul.f32 %v3898, %v3849
      %v3909 = vmul.f32 %v3899, %v3851
      %v3910 = vmul.f32 %v3900, %v3853
      %v3911 = vmul.f32 %v3901, %v3855
      %v3912 = vmul.f32 %v3902, %v3857
      %v3913 = vmul.f32 %v3903, %v3859
      %v3914 = vmul.f32 %v3904, %v3861
      %v3915 = vmul.f32 %v3905, %v3863
      %v3916 = vmul.f32 %v3906, %v3865
      %v3917 = vmul.f32 %v3907, %v3867
      %v3918 = vadd.f32 %v3908, -0.28449672
      %v3919 = vadd.f32 %v3909, -0.28449672
      %v3920 = vadd.f32 %v3910, -0.28449672
      %v3921 = vadd.f32 %v3911, -0.28449672
      %v3922 = vadd.f32 %v3912, -0.28449672
      %v3923 = vadd.f32 %v3913, -0.28449672
      %v3924 = vadd.f32 %v3914, -0.28449672
      %v3925 = vadd.f32 %v3915, -0.28449672
      %v3926 = vadd.f32 %v3916, -0.28449672
      %v3927 = vadd.f32 %v3917, -0.28449672
      %v3928 = vmul.f32 %v3918, %v3849
      %v3929 = vmul.f32 %v3919, %v3851
      %v3930 = vmul.f32 %v3920, %v3853
      %v3931 = vmul.f32 %v3921, %v3855
      %v3932 = vmul.f32 %v3922, %v3857
      %v3933 = vmul.f32 %v3923, %v3859
      %v3934 = vmul.f32 %v3924, %v3861
      %v3935 = vmul.f32 %v3925, %v3863
      %v3936 = vmul.f32 %v3926, %v3865
      %v3937 = vmul.f32 %v3927, %v3867
      %v3938 = vadd.f32 %v3928, 0.2548296
      %v3939 = vadd.f32 %v3929, 0.2548296
      %v3940 = vadd.f32 %v3930, 0.2548296
      %v3941 = vadd.f32 %v3931, 0.2548296
      %v3942 = vadd.f32 %v3932, 0.2548296
      %v3943 = vadd.f32 %v3933, 0.2548296
      %v3944 = vadd.f32 %v3934, 0.2548296
      %v3945 = vadd.f32 %v3935, 0.2548296
      %v3946 = vadd.f32 %v3936, 0.2548296
      %v3947 = vadd.f32 %v3937, 0.2548296
      %v3948 = vmul.f32 %v3938, %v3849
      %v3949 = vmul.f32 %v3939, %v3851
      %v3950 = vmul.f32 %v3940, %v3853
      %v3951 = vmul.f32 %v3941, %v3855
      %v3952 = vmul.f32 %v3942, %v3857
      %v3953 = vmul.f32 %v3943, %v3859
      %v3954 = vmul.f32 %v3944, %v3861
      %v3955 = vmul.f32 %v3945, %v3863
      %v3956 = vmul.f32 %v3946, %v3865
      %v3957 = vmul.f32 %v3947, %v3867
      %v3958 = vsub.f32 0.0, %v3818
      %v3959 = vsub.f32 0.0, %v3819
      %v3960 = vsub.f32 0.0, %v3820
      %v3961 = vsub.f32 0.0, %v3821
      %v3962 = vsub.f32 0.0, %v3822
      %v3963 = vsub.f32 0.0, %v3823
      %v3964 = vsub.f32 0.0, %v3824
      %v3965 = vsub.f32 0.0, %v3825
      %v3966 = vsub.f32 0.0, %v3826
      %v3967 = vsub.f32 0.0, %v3827
      %v3968 = vmul.f32 %v3958, %v3818
      %v3969 = vmul.f32 %v3959, %v3819
      %v3970 = vmul.f32 %v3960, %v3820
      %v3971 = vmul.f32 %v3961, %v3821
      %v3972 = vmul.f32 %v3962, %v3822
      %v3973 = vmul.f32 %v3963, %v3823
      %v3974 = vmul.f32 %v3964, %v3824
      %v3975 = vmul.f32 %v3965, %v3825
      %v3976 = vmul.f32 %v3966, %v3826
      %v3977 = vmul.f32 %v3967, %v3827
      %v3978 = vmul.f32 %v3968, 1.442695
      %v3979 = vpow.pop %v3978
      %v3980 = vmul.f32 %v3969, 1.442695
      %v3981 = vpow.pop %v3980
      %v3982 = vmul.f32 %v3970, 1.442695
      %v3983 = vpow.pop %v3982
      %v3984 = vmul.f32 %v3971, 1.442695
      %v3985 = vpow.pop %v3984
      %v3986 = vmul.f32 %v3972, 1.442695
      %v3987 = vpow.pop %v3986
      %v3988 = vmul.f32 %v3973, 1.442695
      %v3989 = vpow.pop %v3988
      %v3990 = vmul.f32 %v3974, 1.442695
      %v3991 = vpow.pop %v3990
      %v3992 = vmul.f32 %v3975, 1.442695
      %v3993 = vpow.pop %v3992
      %v3994 = vmul.f32 %v3976, 1.442695
      %v3995 = vpow.pop %v3994
      %v3996 = vmul.f32 %v3977, 1.442695
      %v3997 = vpow.pop %v3996
      %v3998 = vmul.f32 %v3948, %v3979
      %v3999 = vmul.f32 %v3949, %v3981
      %v4000 = vmul.f32 %v3950, %v3983
      %v4001 = vmul.f32 %v3951, %v3985
      %v4002 = vmul.f32 %v3952, %v3987
      %v4003 = vmul.f32 %v3953, %v3989
      %v4004 = vmul.f32 %v3954, %v3991
      %v4005 = vmul.f32 %v3955, %v3993
      %v4006 = vmul.f32 %v3956, %v3995
      %v4007 = vmul.f32 %v3957, %v3997
      %v4008 = vsub.f32 1.0, %v3998
      %v4009 = vsub.f32 1.0, %v3999
      %v4010 = vsub.f32 1.0, %v4000
      %v4011 = vsub.f32 1.0, %v4001
      %v4012 = vsub.f32 1.0, %v4002
      %v4013 = vsub.f32 1.0, %v4003
      %v4014 = vsub.f32 1.0, %v4004
      %v4015 = vsub.f32 1.0, %v4005
      %v4016 = vsub.f32 1.0, %v4006
      %v4017 = vsub.f32 1.0, %v4007
      %vm4018 = vcmp.lt.f32.partialorder %v3808, 0.0
      %vm4019 = vcmp.lt.f32.partialorder %v3809, 0.0
      %vm4020 = vcmp.lt.f32.partialorder %v3810, 0.0
      %vm4021 = vcmp.lt.f32.partialorder %v3811, 0.0
      %vm4022 = vcmp.lt.f32.partialorder %v3812, 0.0
      %vm4023 = vcmp.lt.f32.partialorder %v3813, 0.0
      %vm4024 = vcmp.lt.f32.partialorder %v3814, 0.0
      %vm4025 = vcmp.lt.f32.partialorder %v3815, 0.0
      %vm4026 = vcmp.lt.f32.partialorder %v3816, 0.0
      %vm4027 = vcmp.lt.f32.partialorder %v3817, 0.0
      %v4028 = vsub.f32 0.0, %v4008
      %v4029 = vsub.f32 0.0, %v4009
      %v4030 = vsub.f32 0.0, %v4010
      %v4031 = vsub.f32 0.0, %v4011
      %v4032 = vsub.f32 0.0, %v4012
      %v4033 = vsub.f32 0.0, %v4013
      %v4034 = vsub.f32 0.0, %v4014
      %v4035 = vsub.f32 0.0, %v4015
      %v4036 = vsub.f32 0.0, %v4016
      %v4037 = vsub.f32 0.0, %v4017
      %v4038 = vsel %vm4018, %v4028, %v4008
      %v4039 = vsel %vm4019, %v4029, %v4009
      %v4040 = vsel %vm4020, %v4030, %v4010
      %v4041 = vsel %vm4021, %v4031, %v4011
      %v4042 = vsel %vm4022, %v4032, %v4012
      %v4043 = vsel %vm4023, %v4033, %v4013
      %v4044 = vsel %vm4024, %v4034, %v4014
      %v4045 = vsel %vm4025, %v4035, %v4015
      %v4046 = vsel %vm4026, %v4036, %v4016
      %v4047 = vsel %vm4027, %v4037, %v4017
      %v4048 = vadd.f32 %v4038, 1.0
      %v4049 = vadd.f32 %v4039, 1.0
      %v4050 = vadd.f32 %v4040, 1.0
      %v4051 = vadd.f32 %v4041, 1.0
      %v4052 = vadd.f32 %v4042, 1.0
      %v4053 = vadd.f32 %v4043, 1.0
      %v4054 = vadd.f32 %v4044, 1.0
      %v4055 = vadd.f32 %v4045, 1.0
      %v4056 = vadd.f32 %v4046, 1.0
      %v4057 = vadd.f32 %v4047, 1.0
      %v4058 = vmul.f32 %v3798, %v4048
      %v4059 = vmul.f32 %v3799, %v4049
      %v4060 = vmul.f32 %v3800, %v4050
      %v4061 = vmul.f32 %v3801, %v4051
      %v4062 = vmul.f32 %v3802, %v4052
      %v4063 = vmul.f32 %v3803, %v4053
      %v4064 = vmul.f32 %v3804, %v4054
      %v4065 = vmul.f32 %v3805, %v4055
      %v4066 = vmul.f32 %v3806, %v4056
      %v4067 = vmul.f32 %v3807, %v4057
      %v4068 = vpack.c.bf16 %v4059, %v4058
      %v4069 = vpack.c.bf16 %v4061, %v4060
      %v4070 = vpack.c.bf16 %v4063, %v4062
      %v4071 = vpack.c.bf16 %v4065, %v4064
      %v4072 = vpack.c.bf16 %v4067, %v4066
      %v4073 = vld [vmem:[%s749] sm:$0xf]
      %v4074 = vld [vmem:[%s749 + $0x4] sm:$0xf]
      %v4075 = vld [vmem:[%s749 + $0x8] sm:$0xf]
      %v4076 = vld [vmem:[%s749 + $0xc] sm:$0xf]
      %v4077 = vld [vmem:[%s749 + $0x10] sm:$0xf]
      %v4078 = vld [vmem:[%s749 + $0x14] sm:$0xf]
      %v4079 = vld [vmem:[%s749 + $0x18] sm:$0xf]
      %v4080 = vld [vmem:[%s749 + $0x1c] sm:$0xf]
      %v4081 = vld [vmem:[%s752] sm:$0x1]
      %v4083 = vlaneseq
      %v4084 = vshrl.u32 %v4083, 7
      %v4085 = vsub.s32 0, %v4084
      %v4086 = vrot.slane %v4081, %v4085
      %v4096 = vunpack.c.l.b16 %v4073
      %v4097 = vunpack.c.l.b16 %v4074
      %v4098 = vunpack.c.l.b16 %v4075
      %v4099 = vunpack.c.l.b16 %v4076
      %v4100 = vunpack.c.l.b16 %v4077
      %v4101 = vunpack.c.l.b16 %v4078
      %v4102 = vunpack.c.l.b16 %v4079
      %v4103 = vunpack.c.l.b16 %v4080
      %v4104 = vpack.c.b16 %v4097, %v4096
      %v4105 = vpack.c.b16 %v4099, %v4098
      %v4106 = vpack.c.b16 %v4101, %v4100
      %v4107 = vpack.c.b16 %v4103, %v4102
      %vm4112 = vcmask 523264
      %v4114 = vsel %vm4112, %v4068, 0
      %v4117 = vsel %vm4112, %v4069, 0
      %v4120 = vsel %vm4112, %v4070, 0
      %v4123 = vsel %vm4112, %v4071, 0
      %v4126 = vsel %vm4112, %v4072, 0
      %4128 = vmatprep.subr.bf16.mxu0 0
      %4129 = vmatpush1.bf16.msra.mxu0 0
      %4130 = vmatprep.subr.bf16.mxu0 0
      %4131 = vmatpush1.bf16.msra.mxu0 0
      %4132 = vmatprep.subr.bf16.mxu0 0
      %4133 = vmatpush1.bf16.msra.mxu0 0
      %4134 = vmatprep.subr.bf16.mxu0 0
      %4135 = vmatpush1.bf16.msra.mxu0 0
      %4136 = vmatprep.subr.bf16.mxu0 0
      %4137 = vmatpush1.bf16.msra.mxu0 %v4107
      %4138 = vmatprep.subr.bf16.mxu0 0
      %4139 = vmatpush1.bf16.msra.mxu0 %v4106
      %4140 = vmatprep.subr.bf16.mxu0 0
      %4141 = vmatpush1.bf16.msra.mxu0 %v4105
      %4142 = vmatprep.subr.bf16.mxu0 0
      %4143 = vmatpush1.bf16.msra.mxu0 %v4104
      %4144 = vmatprep.subr.bf16.mxu0 0
      %4145 = vmatpush2.bf16.msra.mxu0 0
      %4146 = vmatprep.subr.bf16.mxu0 0
      %4147 = vmatpush2.bf16.msra.mxu0 0
      %4148 = vmatprep.subr.bf16.mxu0 0
      %4149 = vmatpush2.bf16.msra.mxu0 0
      %4150 = vmatprep.subr.bf16.mxu0 0
      %4151 = vmatpush2.bf16.msra.mxu0 0
      %4152 = vmatprep.subr.bf16.mxu0 0
      %4153 = vmatpush2.bf16.msra.mxu0 0
      %4154 = vmatprep.subr.bf16.mxu0 0
      %4155 = vmatpush2.bf16.msra.mxu0 0
      %4156 = vmatprep.subr.bf16.mxu0 0
      %4157 = vmatpush2.bf16.msra.mxu0 0
      %4158 = vmatprep.subr.bf16.mxu0 0
      %4159 = vmatpush2.bf16.msra.mxu0 0
      %4160 = vmatprep.mubr.bf16.mxu0 0
      %4161 = vmatmul.mubr.bf16.gmra.mxu0 %v4114
      %v4162 = vpop.f32.mrf.mxu0
      %v4163 = vadd.f32 %v4086, %v4162
      %v4164 = vpop.f32.mrf.mxu0
      %v4165 = vpop.f32.mrf.mxu0
      %v4166 = vadd.f32 %v4086, %v4165
      %v4167 = vpop.f32.mrf.mxu0
      %4168 = vmatprep.mubr.bf16.mxu0 0
      %4169 = vmatmul.mubr.bf16.gmra.mxu0 %v4117
      %v4170 = vpop.f32.mrf.mxu0
      %v4171 = vadd.f32 %v4086, %v4170
      %v4172 = vpop.f32.mrf.mxu0
      %v4173 = vpop.f32.mrf.mxu0
      %v4174 = vadd.f32 %v4086, %v4173
      %v4175 = vpop.f32.mrf.mxu0
      %4176 = vmatprep.mubr.bf16.mxu0 0
      %4177 = vmatmul.mubr.bf16.gmra.mxu0 %v4120
      %v4178 = vpop.f32.mrf.mxu0
      %v4179 = vadd.f32 %v4086, %v4178
      %v4180 = vpop.f32.mrf.mxu0
      %v4181 = vpop.f32.mrf.mxu0
      %v4182 = vadd.f32 %v4086, %v4181
      %v4183 = vpop.f32.mrf.mxu0
      %4184 = vmatprep.mubr.bf16.mxu0 0
      %4185 = vmatmul.mubr.bf16.gmra.mxu0 %v4123
      %v4186 = vpop.f32.mrf.mxu0
      %v4187 = vadd.f32 %v4086, %v4186
      %v4188 = vpop.f32.mrf.mxu0
      %v4189 = vpop.f32.mrf.mxu0
      %v4190 = vadd.f32 %v4086, %v4189
      %v4191 = vpop.f32.mrf.mxu0
      %4192 = vmatprep.mubr.bf16.mxu0 0
      %4193 = vmatmul.mubr.bf16.gmra.mxu0 %v4126
      %v4194 = vpop.f32.mrf.mxu0
      %v4195 = vadd.f32 %v4086, %v4194
      %v4196 = vpop.f32.mrf.mxu0
      %v4197 = vpop.f32.mrf.mxu0
      %v4198 = vadd.f32 %v4086, %v4197
      %v4199 = vpop.f32.mrf.mxu0
      %4200 = vdwg.mxu0
      %v4201 = vadd.f32 %v3478, %v4163
      %v4202 = vadd.f32 %v3479, %v4166
      %v4203 = vadd.f32 %v3480, %v4171
      %v4204 = vadd.f32 %v3481, %v4174
      %v4205 = vadd.f32 %v3482, %v4179
      %v4206 = vadd.f32 %v3483, %v4182
      %v4207 = vadd.f32 %v3484, %v4187
      %v4208 = vadd.f32 %v3485, %v4190
      %v4209 = vadd.f32 %v3486, %v4195
      %v4210 = vadd.f32 %v3487, %v4198
      %4211 = vst.msk [vmem:[#allocation2] sm:$0xff] %vm801, %v4201
      %4212 = vst.msk [vmem:[#allocation2 + $0x8] sm:$0xff] %vm801, %v4202
      %4213 = vst.msk [vmem:[#allocation2 + $0x10] sm:$0xff] %vm801, %v4203
      %4214 = vst.msk [vmem:[#allocation2 + $0x18] sm:$0xff] %vm801, %v4204
      %4215 = vst.msk [vmem:[#allocation2 + $0x20] sm:$0xff] %vm801, %v4205
      %4216 = vst.msk [vmem:[#allocation2 + $0x28] sm:$0xff] %vm801, %v4206
      %4217 = vst.msk [vmem:[#allocation2 + $0x30] sm:$0xff] %vm801, %v4207
      %4218 = vst.msk [vmem:[#allocation2 + $0x38] sm:$0xff] %vm801, %v4208
      %4219 = vst.msk [vmem:[#allocation2 + $0x40] sm:$0xff] %vm801, %v4209
      %4220 = vst.msk [vmem:[#allocation2 + $0x48] sm:$0xff] %vm801, %v4210
      %p4221 = scmp.eq.s32.totalorder %s33, 1
      // Predicated region
      $region93: #{vit_forward.1} parent=87 // pred_check
        %p4222 = pneg %p4221
      $region94: #{vit_forward.1} parent=87 // pred_check_branch
        %4224 = sbr.rel (%p4222) target = $region96
      $region95: #{vit_forward.1} parent=87 // pred_region
        %v4225 = vld [vmem:[%s13] sm:$0x1]
        %v4226 = vld [vmem:[%s14] sm:$0x1]
        %v4227 = vsel %vm801, %v4201, 0.0
        %4228 = vadd.xlane.f32.xlu0 %v4227
        %v4229 = vpop.xlane.xlu0 %4228
        %v4230 = vsel %vm801, %v4202, 0.0
        %4231 = vadd.xlane.f32.xlu0 %v4230
        %v4232 = vpop.xlane.xlu0 %4231
        %v4233 = vsel %vm801, %v4203, 0.0
        %4234 = vadd.xlane.f32.xlu0 %v4233
        %v4235 = vpop.xlane.xlu0 %4234
        %v4236 = vsel %vm801, %v4204, 0.0
        %4237 = vadd.xlane.f32.xlu0 %v4236
        %v4238 = vpop.xlane.xlu0 %4237
        %v4239 = vsel %vm801, %v4205, 0.0
        %4240 = vadd.xlane.f32.xlu0 %v4239
        %v4241 = vpop.xlane.xlu0 %4240
        %v4242 = vsel %vm801, %v4206, 0.0
        %4243 = vadd.xlane.f32.xlu0 %v4242
        %v4244 = vpop.xlane.xlu0 %4243
        %v4245 = vsel %vm801, %v4207, 0.0
        %4246 = vadd.xlane.f32.xlu0 %v4245
        %v4247 = vpop.xlane.xlu0 %4246
        %v4248 = vsel %vm801, %v4208, 0.0
        %4249 = vadd.xlane.f32.xlu0 %v4248
        %v4250 = vpop.xlane.xlu0 %4249
        %v4251 = vsel %vm801, %v4209, 0.0
        %4252 = vadd.xlane.f32.xlu0 %v4251
        %v4253 = vpop.xlane.xlu0 %4252
        %v4254 = vsel %vm801, %v4210, 0.0
        %4255 = vadd.xlane.f32.xlu0 %v4254
        %v4256 = vpop.xlane.xlu0 %4255
        %v4257 = vmul.f32 %v4229, %v832
        %v4258 = vmul.f32 %v4232, %v832
        %v4259 = vmul.f32 %v4235, %v832
        %v4260 = vmul.f32 %v4238, %v832
        %v4261 = vmul.f32 %v4241, %v832
        %v4262 = vmul.f32 %v4244, %v832
        %v4263 = vmul.f32 %v4247, %v832
        %v4264 = vmul.f32 %v4250, %v832
        %v4265 = vmul.f32 %v4253, %v832
        %v4266 = vmul.f32 %v4256, %v832
        %v4267 = vmul.f32 %v4201, %v4201
        %v4268 = vmul.f32 %v4202, %v4202
        %v4269 = vmul.f32 %v4203, %v4203
        %v4270 = vmul.f32 %v4204, %v4204
        %v4271 = vmul.f32 %v4205, %v4205
        %v4272 = vmul.f32 %v4206, %v4206
        %v4273 = vmul.f32 %v4207, %v4207
        %v4274 = vmul.f32 %v4208, %v4208
        %v4275 = vmul.f32 %v4209, %v4209
        %v4276 = vmul.f32 %v4210, %v4210
        %v4277 = vsel %vm801, %v4267, 0.0
        %4278 = vadd.xlane.f32.xlu0 %v4277
        %v4279 = vpop.xlane.xlu0 %4278
        %v4280 = vsel %vm801, %v4268, 0.0
        %4281 = vadd.xlane.f32.xlu0 %v4280
        %v4282 = vpop.xlane.xlu0 %4281
        %v4283 = vsel %vm801, %v4269, 0.0
        %4284 = vadd.xlane.f32.xlu0 %v4283
        %v4285 = vpop.xlane.xlu0 %4284
        %v4286 = vsel %vm801, %v4270, 0.0
        %4287 = vadd.xlane.f32.xlu0 %v4286
        %v4288 = vpop.xlane.xlu0 %4287
        %v4289 = vsel %vm801, %v4271, 0.0
        %4290 = vadd.xlane.f32.xlu0 %v4289
        %v4291 = vpop.xlane.xlu0 %4290
        %v4292 = vsel %vm801, %v4272, 0.0
        %4293 = vadd.xlane.f32.xlu0 %v4292
        %v4294 = vpop.xlane.xlu0 %4293
        %v4295 = vsel %vm801, %v4273, 0.0
        %4296 = vadd.xlane.f32.xlu0 %v4295
        %v4297 = vpop.xlane.xlu0 %4296
        %v4298 = vsel %vm801, %v4274, 0.0
        %4299 = vadd.xlane.f32.xlu0 %v4298
        %v4300 = vpop.xlane.xlu0 %4299
        %v4301 = vsel %vm801, %v4275, 0.0
        %4302 = vadd.xlane.f32.xlu0 %v4301
        %v4303 = vpop.xlane.xlu0 %4302
        %v4304 = vsel %vm801, %v4276, 0.0
        %4305 = vadd.xlane.f32.xlu0 %v4304
        %v4306 = vpop.xlane.xlu0 %4305
        %v4307 = vmul.f32 %v4279, %v832
        %v4308 = vmul.f32 %v4282, %v832
        %v4309 = vmul.f32 %v4285, %v832
        %v4310 = vmul.f32 %v4288, %v832
        %v4311 = vmul.f32 %v4291, %v832
        %v4312 = vmul.f32 %v4294, %v832
        %v4313 = vmul.f32 %v4297, %v832
        %v4314 = vmul.f32 %v4300, %v832
        %v4315 = vmul.f32 %v4303, %v832
        %v4316 = vmul.f32 %v4306, %v832
        %v4317 = vmul.f32 %v4257, %v4257
        %v4318 = vmul.f32 %v4258, %v4258
        %v4319 = vmul.f32 %v4259, %v4259
        %v4320 = vmul.f32 %v4260, %v4260
        %v4321 = vmul.f32 %v4261, %v4261
        %v4322 = vmul.f32 %v4262, %v4262
        %v4323 = vmul.f32 %v4263, %v4263
        %v4324 = vmul.f32 %v4264, %v4264
        %v4325 = vmul.f32 %v4265, %v4265
        %v4326 = vmul.f32 %v4266, %v4266
        %v4327 = vsub.f32 %v4307, %v4317
        %v4328 = vsub.f32 %v4308, %v4318
        %v4329 = vsub.f32 %v4309, %v4319
        %v4330 = vsub.f32 %v4310, %v4320
        %v4331 = vsub.f32 %v4311, %v4321
        %v4332 = vsub.f32 %v4312, %v4322
        %v4333 = vsub.f32 %v4313, %v4323
        %v4334 = vsub.f32 %v4314, %v4324
        %v4335 = vsub.f32 %v4315, %v4325
        %v4336 = vsub.f32 %v4316, %v4326
        %v4337 = vmax.f32 %v4327, 0.0
        %v4338 = vmax.f32 %v4328, 0.0
        %v4339 = vmax.f32 %v4329, 0.0
        %v4340 = vmax.f32 %v4330, 0.0
        %v4341 = vmax.f32 %v4331, 0.0
        %v4342 = vmax.f32 %v4332, 0.0
        %v4343 = vmax.f32 %v4333, 0.0
        %v4344 = vmax.f32 %v4334, 0.0
        %v4345 = vmax.f32 %v4335, 0.0
        %v4346 = vmax.f32 %v4336, 0.0
        %v4347 = vsub.f32 %v4201, %v4257
        %v4348 = vsub.f32 %v4202, %v4258
        %v4349 = vsub.f32 %v4203, %v4259
        %v4350 = vsub.f32 %v4204, %v4260
        %v4351 = vsub.f32 %v4205, %v4261
        %v4352 = vsub.f32 %v4206, %v4262
        %v4353 = vsub.f32 %v4207, %v4263
        %v4354 = vsub.f32 %v4208, %v4264
        %v4355 = vsub.f32 %v4209, %v4265
        %v4356 = vsub.f32 %v4210, %v4266
        %v4357 = vadd.f32 %v4337, 1e-06
        %v4358 = vadd.f32 %v4338, 1e-06
        %v4359 = vadd.f32 %v4339, 1e-06
        %v4360 = vadd.f32 %v4340, 1e-06
        %v4361 = vadd.f32 %v4341, 1e-06
        %v4362 = vadd.f32 %v4342, 1e-06
        %v4363 = vadd.f32 %v4343, 1e-06
        %v4364 = vadd.f32 %v4344, 1e-06
        %v4365 = vadd.f32 %v4345, 1e-06
        %v4366 = vadd.f32 %v4346, 1e-06
        %v4367 = vrsqrt.pop %v4357
        %v4368 = vrsqrt.pop %v4358
        %v4369 = vrsqrt.pop %v4359
        %v4370 = vrsqrt.pop %v4360
        %v4371 = vrsqrt.pop %v4361
        %v4372 = vrsqrt.pop %v4362
        %v4373 = vrsqrt.pop %v4363
        %v4374 = vrsqrt.pop %v4364
        %v4375 = vrsqrt.pop %v4365
        %v4376 = vrsqrt.pop %v4366
        %v4377 = vmul.f32 %v4347, %v4367
        %v4378 = vmul.f32 %v4348, %v4368
        %v4379 = vmul.f32 %v4349, %v4369
        %v4380 = vmul.f32 %v4350, %v4370
        %v4381 = vmul.f32 %v4351, %v4371
        %v4382 = vmul.f32 %v4352, %v4372
        %v4383 = vmul.f32 %v4353, %v4373
        %v4384 = vmul.f32 %v4354, %v4374
        %v4385 = vmul.f32 %v4355, %v4375
        %v4386 = vmul.f32 %v4356, %v4376
        %v4388 = vlaneseq
        %v4389 = vshrl.u32 %v4388, 7
        %v4390 = vsub.s32 0, %v4389
        %v4391 = vrot.slane %v4225, %v4390
        %v4393 = vmul.f32 %v4377, %v4391
        %v4394 = vmul.f32 %v4378, %v4391
        %v4395 = vmul.f32 %v4379, %v4391
        %v4396 = vmul.f32 %v4380, %v4391
        %v4397 = vmul.f32 %v4381, %v4391
        %v4398 = vmul.f32 %v4382, %v4391
        %v4399 = vmul.f32 %v4383, %v4391
        %v4400 = vmul.f32 %v4384, %v4391
        %v4401 = vmul.f32 %v4385, %v4391
        %v4402 = vmul.f32 %v4386, %v4391
        %v4404 = vlaneseq
        %v4405 = vshrl.u32 %v4404, 7
        %v4406 = vsub.s32 0, %v4405
        %v4407 = vrot.slane %v4226, %v4406
        %v4409 = vadd.f32 %v4393, %v4407
        %v4410 = vadd.f32 %v4394, %v4407
        %v4411 = vadd.f32 %v4395, %v4407
        %v4412 = vadd.f32 %v4396, %v4407
        %v4413 = vadd.f32 %v4397, %v4407
        %v4414 = vadd.f32 %v4398, %v4407
        %v4415 = vadd.f32 %v4399, %v4407
        %v4416 = vadd.f32 %v4400, %v4407
        %v4417 = vadd.f32 %v4401, %v4407
        %v4418 = vadd.f32 %v4402, %v4407
        %v4419 = vlaneseq
        %v4420 = vshrl.u32 %v4419, 7
        %v4421 = vadd.s32 %v4420, 8
        %v4422 = vadd.s32 %v4420, 16
        %v4423 = vadd.s32 %v4420, 24
        %v4424 = vadd.s32 %v4420, 32
        %vm4425 = vcmp.ge.s32.totalorder %v4420, 25
        %vm4426 = vcmp.ge.s32.totalorder %v4421, 25
        %vm4427 = vcmp.ge.s32.totalorder %v4422, 25
        %vm4428 = vcmp.ge.s32.totalorder %v4423, 25
        %vm4429 = vcmp.ge.s32.totalorder %v4424, 25
        %vm4430 = vcmp.lt.s32.totalorder %v4420, 33
        %vm4431 = vcmp.lt.s32.totalorder %v4421, 33
        %vm4432 = vcmp.lt.s32.totalorder %v4422, 33
        %vm4433 = vcmp.lt.s32.totalorder %v4423, 33
        %vm4434 = vcmp.lt.s32.totalorder %v4424, 33
        %vm4435 = vmand %vm4425, %vm4430
        %vm4436 = vmand %vm4426, %vm4431
        %vm4437 = vmand %vm4427, %vm4432
        %vm4438 = vmand %vm4428, %vm4433
        %vm4439 = vmand %vm4429, %vm4434
        %v4440 = vsel %vm4435, 1, 0
        %v4441 = vsel %vm4436, 1, 0
        %v4442 = vsel %vm4437, 1, 0
        %v4443 = vsel %vm4438, 1, 0
        %v4444 = vsel %vm4439, 1, 0
        %vm4445 = vcmp.eq.s32.totalorder %v4440, 1
        %vm4446 = vcmp.eq.s32.totalorder %v4441, 1
        %vm4447 = vcmp.eq.s32.totalorder %v4442, 1
        %vm4448 = vcmp.eq.s32.totalorder %v4443, 1
        %vm4449 = vcmp.eq.s32.totalorder %v4444, 1
        %v4450 = vsel %vm4445, %v4409, 0.0
        %v4451 = vsel %vm4446, %v4410, 0.0
        %v4452 = vsel %vm4447, %v4411, 0.0
        %v4453 = vsel %vm4448, %v4412, 0.0
        %v4454 = vsel %vm4449, %v4413, 0.0
        %v4455 = vsel %vm801, %v4450, 0.0
        %v4456 = vsel %vm801, %v4451, 0.0
        %v4457 = vadd.f32 %v4455, %v4456
        %v4458 = vsel %vm801, %v4452, 0.0
        %v4459 = vadd.f32 %v4457, %v4458
        %v4460 = vsel %vm801, %v4453, 0.0
        %v4461 = vadd.f32 %v4459, %v4460
        %v4462 = vsel %vm801, %v4454, 0.0
        %v4463 = vadd.f32 %v4461, %v4462
        %v4464 = vrot.slane %v4463, 4
        %v4465 = vadd.f32 %v4463, %v4464
        %v4466 = vrot.slane %v4465, 2
        %v4467 = vadd.f32 %v4465, %v4466
        %v4468 = vrot.slane %v4467, 1
        %v4469 = vadd.f32 %v4467, %v4468
        %v4470 = vpack.c.bf16 %v4469, %v4469
        %v4471 = vld [vmem:[%s15] sm:$0xff]
        %v4472 = vld [vmem:[%s15 + $0x8] sm:$0xff]
        %v4473 = vld [vmem:[%s15 + $0x10] sm:$0xff]
        %v4474 = vld [vmem:[%s15 + $0x18] sm:$0xff]
        %v4475 = vld [vmem:[%s15 + $0x20] sm:$0xff]
        %v4476 = vld [vmem:[%s15 + $0x28] sm:$0xff]
        %v4477 = vld [vmem:[%s15 + $0x30] sm:$0xff]
        %v4478 = vld [vmem:[%s15 + $0x38] sm:$0xff]
        %v4479 = vld [vmem:[%s15 + $0x40] sm:$0xff]
        %v4480 = vld [vmem:[%s15 + $0x48] sm:$0xff]
        %v4481 = vld [vmem:[%s15 + $0x50] sm:$0xf]
        %v4482 = vld [vmem:[%s15 + $0x54] sm:$0xff]
        %v4483 = vld [vmem:[%s15 + $0x5c] sm:$0xff]
        %v4484 = vld [vmem:[%s15 + $0x64] sm:$0xff]
        %v4485 = vld [vmem:[%s15 + $0x6c] sm:$0xff]
        %v4486 = vld [vmem:[%s15 + $0x74] sm:$0xff]
        %v4487 = vld [vmem:[%s15 + $0x7c] sm:$0xff]
        %v4488 = vld [vmem:[%s15 + $0x84] sm:$0xff]
        %v4489 = vld [vmem:[%s15 + $0x8c] sm:$0xff]
        %v4490 = vld [vmem:[%s15 + $0x94] sm:$0xff]
        %v4491 = vld [vmem:[%s15 + $0x9c] sm:$0xff]
        %v4492 = vld [vmem:[%s15 + $0xa4] sm:$0xf]
        %v4493 = vld [vmem:[%s15 + $0xa8] sm:$0xff]
        %v4494 = vld [vmem:[%s15 + $0xb0] sm:$0xff]
        %v4495 = vld [vmem:[%s15 + $0xb8] sm:$0xff]
        %v4496 = vld [vmem:[%s15 + $0xc0] sm:$0xff]
        %v4497 = vld [vmem:[%s15 + $0xc8] sm:$0xff]
        %v4498 = vld [vmem:[%s15 + $0xd0] sm:$0xff]
        %v4499 = vld [vmem:[%s15 + $0xd8] sm:$0xff]
        %v4500 = vld [vmem:[%s15 + $0xe0] sm:$0xff]
        %v4501 = vld [vmem:[%s15 + $0xe8] sm:$0xff]
        %v4502 = vld [vmem:[%s15 + $0xf0] sm:$0xff]
        %v4503 = vld [vmem:[%s15 + $0xf8] sm:$0xf]
        %v4504 = vld [vmem:[%s15 + $0xfc] sm:$0xff]
        %v4505 = vld [vmem:[%s15 + $0x104] sm:$0xff]
        %v4506 = vld [vmem:[%s15 + $0x10c] sm:$0xff]
        %v4507 = vld [vmem:[%s15 + $0x114] sm:$0xff]
        %v4508 = vld [vmem:[%s15 + $0x11c] sm:$0xff]
        %v4509 = vld [vmem:[%s15 + $0x124] sm:$0xff]
        %v4510 = vld [vmem:[%s15 + $0x12c] sm:$0xff]
        %v4511 = vld [vmem:[%s15 + $0x134] sm:$0xff]
        %v4512 = vld [vmem:[%s15 + $0x13c] sm:$0xff]
        %v4513 = vld [vmem:[%s15 + $0x144] sm:$0xff]
        %v4514 = vld [vmem:[%s15 + $0x14c] sm:$0xf]
        %v4515 = vld [vmem:[%s16] sm:$0xff]
        %v4516 = vld [vmem:[%s16 + $0x8] sm:$0xff]
        %v4517 = vld [vmem:[%s16 + $0x10] sm:$0x1f]
        %v4518 = vmul.f32 %v4515, 8.0
        %v4519 = vmul.f32 %v4516, 8.0
        %v4520 = vmul.f32 %v4517, 8.0
        %v4565 = vunpack.c.l.b16 %v4471
        %v4566 = vunpack.c.h.b16 %v4471
        %v4567 = vunpack.c.l.b16 %v4472
        %v4568 = vunpack.c.h.b16 %v4472
        %v4569 = vunpack.c.l.b16 %v4473
        %v4570 = vunpack.c.h.b16 %v4473
        %v4571 = vunpack.c.l.b16 %v4474
        %v4572 = vunpack.c.h.b16 %v4474
        %v4573 = vunpack.c.l.b16 %v4475
        %v4574 = vunpack.c.h.b16 %v4475
        %v4575 = vunpack.c.l.b16 %v4476
        %v4576 = vunpack.c.h.b16 %v4476
        %v4577 = vunpack.c.l.b16 %v4477
        %v4578 = vunpack.c.h.b16 %v4477
        %v4579 = vunpack.c.l.b16 %v4478
        %v4580 = vunpack.c.h.b16 %v4478
        %v4581 = vunpack.c.l.b16 %v4479
        %v4582 = vunpack.c.h.b16 %v4479
        %v4583 = vunpack.c.l.b16 %v4480
        %v4584 = vunpack.c.h.b16 %v4480
        %v4585 = vunpack.c.l.b16 %v4481
        %v4586 = vunpack.c.l.b16 %v4482
        %v4587 = vunpack.c.h.b16 %v4482
        %v4588 = vunpack.c.l.b16 %v4483
        %v4589 = vunpack.c.h.b16 %v4483
        %v4590 = vunpack.c.l.b16 %v4484
        %v4591 = vunpack.c.h.b16 %v4484
        %v4592 = vunpack.c.l.b16 %v4485
        %v4593 = vunpack.c.h.b16 %v4485
        %v4594 = vunpack.c.l.b16 %v4486
        %v4595 = vunpack.c.h.b16 %v4486
        %v4596 = vunpack.c.l.b16 %v4487
        %v4597 = vunpack.c.h.b16 %v4487
        %v4598 = vunpack.c.l.b16 %v4488
        %v4599 = vunpack.c.h.b16 %v4488
        %v4600 = vunpack.c.l.b16 %v4489
        %v4601 = vunpack.c.h.b16 %v4489
        %v4602 = vunpack.c.l.b16 %v4490
        %v4603 = vunpack.c.h.b16 %v4490
        %v4604 = vunpack.c.l.b16 %v4491
        %v4605 = vunpack.c.h.b16 %v4491
        %v4606 = vunpack.c.l.b16 %v4492
        %v4607 = vunpack.c.l.b16 %v4493
        %v4608 = vunpack.c.h.b16 %v4493
        %v4609 = vunpack.c.l.b16 %v4494
        %v4610 = vunpack.c.h.b16 %v4494
        %v4611 = vunpack.c.l.b16 %v4495
        %v4612 = vunpack.c.h.b16 %v4495
        %v4613 = vunpack.c.l.b16 %v4496
        %v4614 = vunpack.c.h.b16 %v4496
        %v4615 = vunpack.c.l.b16 %v4497
        %v4616 = vunpack.c.h.b16 %v4497
        %v4617 = vunpack.c.l.b16 %v4498
        %v4618 = vunpack.c.h.b16 %v4498
        %v4619 = vunpack.c.l.b16 %v4499
        %v4620 = vunpack.c.h.b16 %v4499
        %v4621 = vunpack.c.l.b16 %v4500
        %v4622 = vunpack.c.h.b16 %v4500
        %v4623 = vunpack.c.l.b16 %v4501
        %v4624 = vunpack.c.h.b16 %v4501
        %v4625 = vunpack.c.l.b16 %v4502
        %v4626 = vunpack.c.h.b16 %v4502
        %v4627 = vunpack.c.l.b16 %v4503
        %v4628 = vunpack.c.l.b16 %v4504
        %v4629 = vunpack.c.h.b16 %v4504
        %v4630 = vunpack.c.l.b16 %v4505
        %v4631 = vunpack.c.h.b16 %v4505
        %v4632 = vunpack.c.l.b16 %v4506
        %v4633 = vunpack.c.h.b16 %v4506
        %v4634 = vunpack.c.l.b16 %v4507
        %v4635 = vunpack.c.h.b16 %v4507
        %v4636 = vunpack.c.l.b16 %v4508
        %v4637 = vunpack.c.h.b16 %v4508
        %v4638 = vunpack.c.l.b16 %v4509
        %v4639 = vunpack.c.h.b16 %v4509
        %v4640 = vunpack.c.l.b16 %v4510
        %v4641 = vunpack.c.h.b16 %v4510
        %v4642 = vunpack.c.l.b16 %v4511
        %v4643 = vunpack.c.h.b16 %v4511
        %v4644 = vunpack.c.l.b16 %v4512
        %v4645 = vunpack.c.h.b16 %v4512
        %v4646 = vunpack.c.l.b16 %v4513
        %v4647 = vunpack.c.h.b16 %v4513
        %v4648 = vunpack.c.l.b16 %v4514
        %v4649 = vpack.c.b16 %v4586, %v4565
        %v4650 = vpack.c.b16 %v4587, %v4566
        %v4651 = vpack.c.b16 %v4588, %v4567
        %v4652 = vpack.c.b16 %v4589, %v4568
        %v4653 = vpack.c.b16 %v4590, %v4569
        %v4654 = vpack.c.b16 %v4591, %v4570
        %v4655 = vpack.c.b16 %v4592, %v4571
        %v4656 = vpack.c.b16 %v4593, %v4572
        %v4657 = vpack.c.b16 %v4594, %v4573
        %v4658 = vpack.c.b16 %v4595, %v4574
        %v4659 = vpack.c.b16 %v4596, %v4575
        %v4660 = vpack.c.b16 %v4597, %v4576
        %v4661 = vpack.c.b16 %v4598, %v4577
        %v4662 = vpack.c.b16 %v4599, %v4578
        %v4663 = vpack.c.b16 %v4600, %v4579
        %v4664 = vpack.c.b16 %v4601, %v4580
        %v4665 = vpack.c.b16 %v4602, %v4581
        %v4666 = vpack.c.b16 %v4603, %v4582
        %v4667 = vpack.c.b16 %v4604, %v4583
        %v4668 = vpack.c.b16 %v4605, %v4584
        %v4669 = vpack.c.b16 %v4606, %v4585
        %v4670 = vpack.c.b16 %v4628, %v4607
        %v4671 = vpack.c.b16 %v4629, %v4608
        %v4672 = vpack.c.b16 %v4630, %v4609
        %v4673 = vpack.c.b16 %v4631, %v4610
        %v4674 = vpack.c.b16 %v4632, %v4611
        %v4675 = vpack.c.b16 %v4633, %v4612
        %v4676 = vpack.c.b16 %v4634, %v4613
        %v4677 = vpack.c.b16 %v4635, %v4614
        %v4678 = vpack.c.b16 %v4636, %v4615
        %v4679 = vpack.c.b16 %v4637, %v4616
        %v4680 = vpack.c.b16 %v4638, %v4617
        %v4681 = vpack.c.b16 %v4639, %v4618
        %v4682 = vpack.c.b16 %v4640, %v4619
        %v4683 = vpack.c.b16 %v4641, %v4620
        %v4684 = vpack.c.b16 %v4642, %v4621
        %v4685 = vpack.c.b16 %v4643, %v4622
        %v4686 = vpack.c.b16 %v4644, %v4623
        %v4687 = vpack.c.b16 %v4645, %v4624
        %v4688 = vpack.c.b16 %v4646, %v4625
        %v4689 = vpack.c.b16 %v4647, %v4626
        %v4690 = vpack.c.b16 %v4648, %v4627
        %v4736 = vlaneseq
        %v4737 = vshrl.u32 %v4736, 7
        %v4738 = vsub.s32 0, %v4737
        %v4739 = vrot.slane %v4518, %v4738
        %v4740 = vlaneseq
        %v4741 = vshrl.u32 %v4740, 7
        %v4742 = vsub.s32 1, %v4741
        %v4743 = vrot.slane %v4518, %v4742
        %v4744 = vlaneseq
        %v4745 = vshrl.u32 %v4744, 7
        %v4746 = vsub.s32 2, %v4745
        %v4747 = vrot.slane %v4518, %v4746
        %v4748 = vlaneseq
        %v4749 = vshrl.u32 %v4748, 7
        %v4750 = vsub.s32 3, %v4749
        %v4751 = vrot.slane %v4518, %v4750
        %v4752 = vlaneseq
        %v4753 = vshrl.u32 %v4752, 7
        %v4754 = vsub.s32 4, %v4753
        %v4755 = vrot.slane %v4518, %v4754
        %v4756 = vlaneseq
        %v4757 = vshrl.u32 %v4756, 7
        %v4758 = vsub.s32 5, %v4757
        %v4759 = vrot.slane %v4518, %v4758
        %v4760 = vlaneseq
        %v4761 = vshrl.u32 %v4760, 7
        %v4762 = vsub.s32 6, %v4761
        %v4763 = vrot.slane %v4518, %v4762
        %v4764 = vlaneseq
        %v4765 = vshrl.u32 %v4764, 7
        %v4766 = vsub.s32 7, %v4765
        %v4767 = vrot.slane %v4518, %v4766
        %v4768 = vlaneseq
        %v4769 = vshrl.u32 %v4768, 7
        %v4770 = vsub.s32 0, %v4769
        %v4771 = vrot.slane %v4519, %v4770
        %v4772 = vlaneseq
        %v4773 = vshrl.u32 %v4772, 7
        %v4774 = vsub.s32 1, %v4773
        %v4775 = vrot.slane %v4519, %v4774
        %v4776 = vlaneseq
        %v4777 = vshrl.u32 %v4776, 7
        %v4778 = vsub.s32 2, %v4777
        %v4779 = vrot.slane %v4519, %v4778
        %v4780 = vlaneseq
        %v4781 = vshrl.u32 %v4780, 7
        %v4782 = vsub.s32 3, %v4781
        %v4783 = vrot.slane %v4519, %v4782
        %v4784 = vlaneseq
        %v4785 = vshrl.u32 %v4784, 7
        %v4786 = vsub.s32 4, %v4785
        %v4787 = vrot.slane %v4519, %v4786
        %v4788 = vlaneseq
        %v4789 = vshrl.u32 %v4788, 7
        %v4790 = vsub.s32 5, %v4789
        %v4791 = vrot.slane %v4519, %v4790
        %v4792 = vlaneseq
        %v4793 = vshrl.u32 %v4792, 7
        %v4794 = vsub.s32 6, %v4793
        %v4795 = vrot.slane %v4519, %v4794
        %v4796 = vlaneseq
        %v4797 = vshrl.u32 %v4796, 7
        %v4798 = vsub.s32 7, %v4797
        %v4799 = vrot.slane %v4519, %v4798
        %v4800 = vlaneseq
        %v4801 = vshrl.u32 %v4800, 7
        %v4802 = vsub.s32 0, %v4801
        %v4803 = vrot.slane %v4520, %v4802
        %v4804 = vlaneseq
        %v4805 = vshrl.u32 %v4804, 7
        %v4806 = vsub.s32 1, %v4805
        %v4807 = vrot.slane %v4520, %v4806
        %v4808 = vlaneseq
        %v4809 = vshrl.u32 %v4808, 7
        %v4810 = vsub.s32 2, %v4809
        %v4811 = vrot.slane %v4520, %v4810
        %v4812 = vlaneseq
        %v4813 = vshrl.u32 %v4812, 7
        %v4814 = vsub.s32 3, %v4813
        %v4815 = vrot.slane %v4520, %v4814
        %v4816 = vlaneseq
        %v4817 = vshrl.u32 %v4816, 7
        %v4818 = vsub.s32 4, %v4817
        %v4819 = vrot.slane %v4520, %v4818
        %v4842 = vsel %vm801, %v4470, 0
        %4844 = vmatprep.subr.bf16.mxu0 0
        %4845 = vmatpush1.bf16.msra.mxu0 0
        %4846 = vmatprep.subr.bf16.mxu0 0
        %4847 = vmatpush1.bf16.msra.mxu0 0
        %4848 = vmatprep.subr.bf16.mxu0 0
        %4849 = vmatpush1.bf16.msra.mxu0 0
        %4850 = vmatprep.subr.bf16.mxu0 0
        %4851 = vmatpush1.bf16.msra.mxu0 0
        %4852 = vmatprep.subr.bf16.mxu0 0
        %4853 = vmatpush1.bf16.msra.mxu0 0
        %4854 = vmatprep.subr.bf16.mxu0 0
        %4855 = vmatpush1.bf16.msra.mxu0 0
        %4856 = vmatprep.subr.bf16.mxu0 %v4671
        %4857 = vmatpush1.bf16.msra.mxu0 %v4670
        %4858 = vmatprep.subr.bf16.mxu0 %v4650
        %4859 = vmatpush1.bf16.msra.mxu0 %v4649
        %4860 = vmatprep.subr.bf16.mxu0 0
        %4861 = vmatpush2.bf16.msra.mxu0 0
        %4862 = vmatprep.subr.bf16.mxu0 0
        %4863 = vmatpush2.bf16.msra.mxu0 0
        %4864 = vmatprep.subr.bf16.mxu0 0
        %4865 = vmatpush2.bf16.msra.mxu0 0
        %4866 = vmatprep.subr.bf16.mxu0 0
        %4867 = vmatpush2.bf16.msra.mxu0 0
        %4868 = vmatprep.subr.bf16.mxu0 0
        %4869 = vmatpush2.bf16.msra.mxu0 0
        %4870 = vmatprep.subr.bf16.mxu0 0
        %4871 = vmatpush2.bf16.msra.mxu0 0
        %4872 = vmatprep.subr.bf16.mxu0 0
        %4873 = vmatpush2.bf16.msra.mxu0 0
        %4874 = vmatprep.subr.bf16.mxu0 0
        %4875 = vmatpush2.bf16.msra.mxu0 0
        %4876 = vmatprep.mubr.bf16.mxu0 0
        %4877 = vmatmul.mubr.bf16.gmra.mxu0 %v4842
        %v4878 = vpop.f32.mrf.mxu0
        %v4879 = vadd.f32 %v4739, %v4878
        %v4880 = vpop.f32.mrf.mxu0
        %v4881 = vadd.f32 %v4743, %v4880
        %v4882 = vpop.f32.mrf.mxu0
        %v4883 = vpop.f32.mrf.mxu0
        %4884 = vdwg.mxu0
        %4885 = vmatprep.subr.bf16.mxu0 0
        %4886 = vmatpush1.bf16.msra.mxu0 0
        %4887 = vmatprep.subr.bf16.mxu0 0
        %4888 = vmatpush1.bf16.msra.mxu0 0
        %4889 = vmatprep.subr.bf16.mxu0 0
        %4890 = vmatpush1.bf16.msra.mxu0 0
        %4891 = vmatprep.subr.bf16.mxu0 0
        %4892 = vmatpush1.bf16.msra.mxu0 0
        %4893 = vmatprep.subr.bf16.mxu0 0
        %4894 = vmatpush1.bf16.msra.mxu0 0
        %4895 = vmatprep.subr.bf16.mxu0 0
        %4896 = vmatpush1.bf16.msra.mxu0 0
        %4897 = vmatprep.subr.bf16.mxu0 %v4673
        %4898 = vmatpush1.bf16.msra.mxu0 %v4672
        %4899 = vmatprep.subr.bf16.mxu0 %v4652
        %4900 = vmatpush1.bf16.msra.mxu0 %v4651
        %4901 = vmatprep.subr.bf16.mxu0 0
        %4902 = vmatpush2.bf16.msra.mxu0 0
        %4903 = vmatprep.subr.bf16.mxu0 0
        %4904 = vmatpush2.bf16.msra.mxu0 0
        %4905 = vmatprep.subr.bf16.mxu0 0
        %4906 = vmatpush2.bf16.msra.mxu0 0
        %4907 = vmatprep.subr.bf16.mxu0 0
        %4908 = vmatpush2.bf16.msra.mxu0 0
        %4909 = vmatprep.subr.bf16.mxu0 0
        %4910 = vmatpush2.bf16.msra.mxu0 0
        %4911 = vmatprep.subr.bf16.mxu0 0
        %4912 = vmatpush2.bf16.msra.mxu0 0
        %4913 = vmatprep.subr.bf16.mxu0 0
        %4914 = vmatpush2.bf16.msra.mxu0 0
        %4915 = vmatprep.subr.bf16.mxu0 0
        %4916 = vmatpush2.bf16.msra.mxu0 0
        %4917 = vmatprep.mubr.bf16.mxu0 0
        %4918 = vmatmul.mubr.bf16.gmra.mxu0 %v4842
        %v4919 = vpop.f32.mrf.mxu0
        %v4920 = vadd.f32 %v4747, %v4919
        %v4921 = vpop.f32.mrf.mxu0
        %v4922 = vadd.f32 %v4751, %v4921
        %v4923 = vpop.f32.mrf.mxu0
        %v4924 = vpop.f32.mrf.mxu0
        %4925 = vdwg.mxu0
        %4926 = vmatprep.subr.bf16.mxu0 0
        %4927 = vmatpush1.bf16.msra.mxu0 0
        %4928 = vmatprep.subr.bf16.mxu0 0
        %4929 = vmatpush1.bf16.msra.mxu0 0
        %4930 = vmatprep.subr.bf16.mxu0 0
        %4931 = vmatpush1.bf16.msra.mxu0 0
        %4932 = vmatprep.subr.bf16.mxu0 0
        %4933 = vmatpush1.bf16.msra.mxu0 0
        %4934 = vmatprep.subr.bf16.mxu0 0
        %4935 = vmatpush1.bf16.msra.mxu0 0
        %4936 = vmatprep.subr.bf16.mxu0 0
        %4937 = vmatpush1.bf16.msra.mxu0 0
        %4938 = vmatprep.subr.bf16.mxu0 %v4675
        %4939 = vmatpush1.bf16.msra.mxu0 %v4674
        %4940 = vmatprep.subr.bf16.mxu0 %v4654
        %4941 = vmatpush1.bf16.msra.mxu0 %v4653
        %4942 = vmatprep.subr.bf16.mxu0 0
        %4943 = vmatpush2.bf16.msra.mxu0 0
        %4944 = vmatprep.subr.bf16.mxu0 0
        %4945 = vmatpush2.bf16.msra.mxu0 0
        %4946 = vmatprep.subr.bf16.mxu0 0
        %4947 = vmatpush2.bf16.msra.mxu0 0
        %4948 = vmatprep.subr.bf16.mxu0 0
        %4949 = vmatpush2.bf16.msra.mxu0 0
        %4950 = vmatprep.subr.bf16.mxu0 0
        %4951 = vmatpush2.bf16.msra.mxu0 0
        %4952 = vmatprep.subr.bf16.mxu0 0
        %4953 = vmatpush2.bf16.msra.mxu0 0
        %4954 = vmatprep.subr.bf16.mxu0 0
        %4955 = vmatpush2.bf16.msra.mxu0 0
        %4956 = vmatprep.subr.bf16.mxu0 0
        %4957 = vmatpush2.bf16.msra.mxu0 0
        %4958 = vmatprep.mubr.bf16.mxu0 0
        %4959 = vmatmul.mubr.bf16.gmra.mxu0 %v4842
        %v4960 = vpop.f32.mrf.mxu0
        %v4961 = vadd.f32 %v4755, %v4960
        %v4962 = vpop.f32.mrf.mxu0
        %v4963 = vadd.f32 %v4759, %v4962
        %v4964 = vpop.f32.mrf.mxu0
        %v4965 = vpop.f32.mrf.mxu0
        %4966 = vdwg.mxu0
        %4967 = vmatprep.subr.bf16.mxu0 0
        %4968 = vmatpush1.bf16.msra.mxu0 0
        %4969 = vmatprep.subr.bf16.mxu0 0
        %4970 = vmatpush1.bf16.msra.mxu0 0
        %4971 = vmatprep.subr.bf16.mxu0 0
        %4972 = vmatpush1.bf16.msra.mxu0 0
        %4973 = vmatprep.subr.bf16.mxu0 0
        %4974 = vmatpush1.bf16.msra.mxu0 0
        %4975 = vmatprep.subr.bf16.mxu0 0
        %4976 = vmatpush1.bf16.msra.mxu0 0
        %4977 = vmatprep.subr.bf16.mxu0 0
        %4978 = vmatpush1.bf16.msra.mxu0 0
        %4979 = vmatprep.subr.bf16.mxu0 %v4677
        %4980 = vmatpush1.bf16.msra.mxu0 %v4676
        %4981 = vmatprep.subr.bf16.mxu0 %v4656
        %4982 = vmatpush1.bf16.msra.mxu0 %v4655
        %4983 = vmatprep.subr.bf16.mxu0 0
        %4984 = vmatpush2.bf16.msra.mxu0 0
        %4985 = vmatprep.subr.bf16.mxu0 0
        %4986 = vmatpush2.bf16.msra.mxu0 0
        %4987 = vmatprep.subr.bf16.mxu0 0
        %4988 = vmatpush2.bf16.msra.mxu0 0
        %4989 = vmatprep.subr.bf16.mxu0 0
        %4990 = vmatpush2.bf16.msra.mxu0 0
        %4991 = vmatprep.subr.bf16.mxu0 0
        %4992 = vmatpush2.bf16.msra.mxu0 0
        %4993 = vmatprep.subr.bf16.mxu0 0
        %4994 = vmatpush2.bf16.msra.mxu0 0
        %4995 = vmatprep.subr.bf16.mxu0 0
        %4996 = vmatpush2.bf16.msra.mxu0 0
        %4997 = vmatprep.subr.bf16.mxu0 0
        %4998 = vmatpush2.bf16.msra.mxu0 0
        %4999 = vmatprep.mubr.bf16.mxu0 0
        %5000 = vmatmul.mubr.bf16.gmra.mxu0 %v4842
        %v5001 = vpop.f32.mrf.mxu0
        %v5002 = vadd.f32 %v4763, %v5001
        %v5003 = vpop.f32.mrf.mxu0
        %v5004 = vadd.f32 %v4767, %v5003
        %v5005 = vpop.f32.mrf.mxu0
        %v5006 = vpop.f32.mrf.mxu0
        %5007 = vdwg.mxu0
        %5008 = vmatprep.subr.bf16.mxu0 0
        %5009 = vmatpush1.bf16.msra.mxu0 0
        %5010 = vmatprep.subr.bf16.mxu0 0
        %5011 = vmatpush1.bf16.msra.mxu0 0
        %5012 = vmatprep.subr.bf16.mxu0 0
        %5013 = vmatpush1.bf16.msra.mxu0 0
        %5014 = vmatprep.subr.bf16.mxu0 0
        %5015 = vmatpush1.bf16.msra.mxu0 0
        %5016 = vmatprep.subr.bf16.mxu0 0
        %5017 = vmatpush1.bf16.msra.mxu0 0
        %5018 = vmatprep.subr.bf16.mxu0 0
        %5019 = vmatpush1.bf16.msra.mxu0 0
        %5020 = vmatprep.subr.bf16.mxu0 %v4679
        %5021 = vmatpush1.bf16.msra.mxu0 %v4678
        %5022 = vmatprep.subr.bf16.mxu0 %v4658
        %5023 = vmatpush1.bf16.msra.mxu0 %v4657
        %5024 = vmatprep.subr.bf16.mxu0 0
        %5025 = vmatpush2.bf16.msra.mxu0 0
        %5026 = vmatprep.subr.bf16.mxu0 0
        %5027 = vmatpush2.bf16.msra.mxu0 0
        %5028 = vmatprep.subr.bf16.mxu0 0
        %5029 = vmatpush2.bf16.msra.mxu0 0
        %5030 = vmatprep.subr.bf16.mxu0 0
        %5031 = vmatpush2.bf16.msra.mxu0 0
        %5032 = vmatprep.subr.bf16.mxu0 0
        %5033 = vmatpush2.bf16.msra.mxu0 0
        %5034 = vmatprep.subr.bf16.mxu0 0
        %5035 = vmatpush2.bf16.msra.mxu0 0
        %5036 = vmatprep.subr.bf16.mxu0 0
        %5037 = vmatpush2.bf16.msra.mxu0 0
        %5038 = vmatprep.subr.bf16.mxu0 0
        %5039 = vmatpush2.bf16.msra.mxu0 0
        %5040 = vmatprep.mubr.bf16.mxu0 0
        %5041 = vmatmul.mubr.bf16.gmra.mxu0 %v4842
        %v5042 = vpop.f32.mrf.mxu0
        %v5043 = vadd.f32 %v4771, %v5042
        %v5044 = vpop.f32.mrf.mxu0
        %v5045 = vadd.f32 %v4775, %v5044
        %v5046 = vpop.f32.mrf.mxu0
        %v5047 = vpop.f32.mrf.mxu0
        %5048 = vdwg.mxu0
        %5049 = vmatprep.subr.bf16.mxu0 0
        %5050 = vmatpush1.bf16.msra.mxu0 0
        %5051 = vmatprep.subr.bf16.mxu0 0
        %5052 = vmatpush1.bf16.msra.mxu0 0
        %5053 = vmatprep.subr.bf16.mxu0 0
        %5054 = vmatpush1.bf16.msra.mxu0 0
        %5055 = vmatprep.subr.bf16.mxu0 0
        %5056 = vmatpush1.bf16.msra.mxu0 0
        %5057 = vmatprep.subr.bf16.mxu0 0
        %5058 = vmatpush1.bf16.msra.mxu0 0
        %5059 = vmatprep.subr.bf16.mxu0 0
        %5060 = vmatpush1.bf16.msra.mxu0 0
        %5061 = vmatprep.subr.bf16.mxu0 %v4681
        %5062 = vmatpush1.bf16.msra.mxu0 %v4680
        %5063 = vmatprep.subr.bf16.mxu0 %v4660
        %5064 = vmatpush1.bf16.msra.mxu0 %v4659
        %5065 = vmatprep.subr.bf16.mxu0 0
        %5066 = vmatpush2.bf16.msra.mxu0 0
        %5067 = vmatprep.subr.bf16.mxu0 0
        %5068 = vmatpush2.bf16.msra.mxu0 0
        %5069 = vmatprep.subr.bf16.mxu0 0
        %5070 = vmatpush2.bf16.msra.mxu0 0
        %5071 = vmatprep.subr.bf16.mxu0 0
        %5072 = vmatpush2.bf16.msra.mxu0 0
        %5073 = vmatprep.subr.bf16.mxu0 0
        %5074 = vmatpush2.bf16.msra.mxu0 0
        %5075 = vmatprep.subr.bf16.mxu0 0
        %5076 = vmatpush2.bf16.msra.mxu0 0
        %5077 = vmatprep.subr.bf16.mxu0 0
        %5078 = vmatpush2.bf16.msra.mxu0 0
        %5079 = vmatprep.subr.bf16.mxu0 0
        %5080 = vmatpush2.bf16.msra.mxu0 0
        %5081 = vmatprep.mubr.bf16.mxu0 0
        %5082 = vmatmul.mubr.bf16.gmra.mxu0 %v4842
        %v5083 = vpop.f32.mrf.mxu0
        %v5084 = vadd.f32 %v4779, %v5083
        %v5085 = vpop.f32.mrf.mxu0
        %v5086 = vadd.f32 %v4783, %v5085
        %v5087 = vpop.f32.mrf.mxu0
        %v5088 = vpop.f32.mrf.mxu0
        %5089 = vdwg.mxu0
        %5090 = vmatprep.subr.bf16.mxu0 0
        %5091 = vmatpush1.bf16.msra.mxu0 0
        %5092 = vmatprep.subr.bf16.mxu0 0
        %5093 = vmatpush1.bf16.msra.mxu0 0
        %5094 = vmatprep.subr.bf16.mxu0 0
        %5095 = vmatpush1.bf16.msra.mxu0 0
        %5096 = vmatprep.subr.bf16.mxu0 0
        %5097 = vmatpush1.bf16.msra.mxu0 0
        %5098 = vmatprep.subr.bf16.mxu0 0
        %5099 = vmatpush1.bf16.msra.mxu0 0
        %5100 = vmatprep.subr.bf16.mxu0 0
        %5101 = vmatpush1.bf16.msra.mxu0 0
        %5102 = vmatprep.subr.bf16.mxu0 %v4683
        %5103 = vmatpush1.bf16.msra.mxu0 %v4682
        %5104 = vmatprep.subr.bf16.mxu0 %v4662
        %5105 = vmatpush1.bf16.msra.mxu0 %v4661
        %5106 = vmatprep.subr.bf16.mxu0 0
        %5107 = vmatpush2.bf16.msra.mxu0 0
        %5108 = vmatprep.subr.bf16.mxu0 0
        %5109 = vmatpush2.bf16.msra.mxu0 0
        %5110 = vmatprep.subr.bf16.mxu0 0
        %5111 = vmatpush2.bf16.msra.mxu0 0
        %5112 = vmatprep.subr.bf16.mxu0 0
        %5113 = vmatpush2.bf16.msra.mxu0 0
        %5114 = vmatprep.subr.bf16.mxu0 0
        %5115 = vmatpush2.bf16.msra.mxu0 0
        %5116 = vmatprep.subr.bf16.mxu0 0
        %5117 = vmatpush2.bf16.msra.mxu0 0
        %5118 = vmatprep.subr.bf16.mxu0 0
        %5119 = vmatpush2.bf16.msra.mxu0 0
        %5120 = vmatprep.subr.bf16.mxu0 0
        %5121 = vmatpush2.bf16.msra.mxu0 0
        %5122 = vmatprep.mubr.bf16.mxu0 0
        %5123 = vmatmul.mubr.bf16.gmra.mxu0 %v4842
        %v5124 = vpop.f32.mrf.mxu0
        %v5125 = vadd.f32 %v4787, %v5124
        %v5126 = vpop.f32.mrf.mxu0
        %v5127 = vadd.f32 %v4791, %v5126
        %v5128 = vpop.f32.mrf.mxu0
        %v5129 = vpop.f32.mrf.mxu0
        %5130 = vdwg.mxu0
        %5131 = vmatprep.subr.bf16.mxu0 0
        %5132 = vmatpush1.bf16.msra.mxu0 0
        %5133 = vmatprep.subr.bf16.mxu0 0
        %5134 = vmatpush1.bf16.msra.mxu0 0
        %5135 = vmatprep.subr.bf16.mxu0 0
        %5136 = vmatpush1.bf16.msra.mxu0 0
        %5137 = vmatprep.subr.bf16.mxu0 0
        %5138 = vmatpush1.bf16.msra.mxu0 0
        %5139 = vmatprep.subr.bf16.mxu0 0
        %5140 = vmatpush1.bf16.msra.mxu0 0
        %5141 = vmatprep.subr.bf16.mxu0 0
        %5142 = vmatpush1.bf16.msra.mxu0 0
        %5143 = vmatprep.subr.bf16.mxu0 %v4685
        %5144 = vmatpush1.bf16.msra.mxu0 %v4684
        %5145 = vmatprep.subr.bf16.mxu0 %v4664
        %5146 = vmatpush1.bf16.msra.mxu0 %v4663
        %5147 = vmatprep.subr.bf16.mxu0 0
        %5148 = vmatpush2.bf16.msra.mxu0 0
        %5149 = vmatprep.subr.bf16.mxu0 0
        %5150 = vmatpush2.bf16.msra.mxu0 0
        %5151 = vmatprep.subr.bf16.mxu0 0
        %5152 = vmatpush2.bf16.msra.mxu0 0
        %5153 = vmatprep.subr.bf16.mxu0 0
        %5154 = vmatpush2.bf16.msra.mxu0 0
        %5155 = vmatprep.subr.bf16.mxu0 0
        %5156 = vmatpush2.bf16.msra.mxu0 0
        %5157 = vmatprep.subr.bf16.mxu0 0
        %5158 = vmatpush2.bf16.msra.mxu0 0
        %5159 = vmatprep.subr.bf16.mxu0 0
        %5160 = vmatpush2.bf16.msra.mxu0 0
        %5161 = vmatprep.subr.bf16.mxu0 0
        %5162 = vmatpush2.bf16.msra.mxu0 0
        %5163 = vmatprep.mubr.bf16.mxu0 0
        %5164 = vmatmul.mubr.bf16.gmra.mxu0 %v4842
        %v5165 = vpop.f32.mrf.mxu0
        %v5166 = vadd.f32 %v4795, %v5165
        %v5167 = vpop.f32.mrf.mxu0
        %v5168 = vadd.f32 %v4799, %v5167
        %v5169 = vpop.f32.mrf.mxu0
        %v5170 = vpop.f32.mrf.mxu0
        %5171 = vdwg.mxu0
        %5172 = vmatprep.subr.bf16.mxu0 0
        %5173 = vmatpush1.bf16.msra.mxu0 0
        %5174 = vmatprep.subr.bf16.mxu0 0
        %5175 = vmatpush1.bf16.msra.mxu0 0
        %5176 = vmatprep.subr.bf16.mxu0 0
        %5177 = vmatpush1.bf16.msra.mxu0 0
        %5178 = vmatprep.subr.bf16.mxu0 0
        %5179 = vmatpush1.bf16.msra.mxu0 0
        %5180 = vmatprep.subr.bf16.mxu0 0
        %5181 = vmatpush1.bf16.msra.mxu0 0
        %5182 = vmatprep.subr.bf16.mxu0 0
        %5183 = vmatpush1.bf16.msra.mxu0 0
        %5184 = vmatprep.subr.bf16.mxu0 %v4687
        %5185 = vmatpush1.bf16.msra.mxu0 %v4686
        %5186 = vmatprep.subr.bf16.mxu0 %v4666
        %5187 = vmatpush1.bf16.msra.mxu0 %v4665
        %5188 = vmatprep.subr.bf16.mxu0 0
        %5189 = vmatpush2.bf16.msra.mxu0 0
        %5190 = vmatprep.subr.bf16.mxu0 0
        %5191 = vmatpush2.bf16.msra.mxu0 0
        %5192 = vmatprep.subr.bf16.mxu0 0
        %5193 = vmatpush2.bf16.msra.mxu0 0
        %5194 = vmatprep.subr.bf16.mxu0 0
        %5195 = vmatpush2.bf16.msra.mxu0 0
        %5196 = vmatprep.subr.bf16.mxu0 0
        %5197 = vmatpush2.bf16.msra.mxu0 0
        %5198 = vmatprep.subr.bf16.mxu0 0
        %5199 = vmatpush2.bf16.msra.mxu0 0
        %5200 = vmatprep.subr.bf16.mxu0 0
        %5201 = vmatpush2.bf16.msra.mxu0 0
        %5202 = vmatprep.subr.bf16.mxu0 0
        %5203 = vmatpush2.bf16.msra.mxu0 0
        %5204 = vmatprep.mubr.bf16.mxu0 0
        %5205 = vmatmul.mubr.bf16.gmra.mxu0 %v4842
        %v5206 = vpop.f32.mrf.mxu0
        %v5207 = vadd.f32 %v4803, %v5206
        %v5208 = vpop.f32.mrf.mxu0
        %v5209 = vadd.f32 %v4807, %v5208
        %v5210 = vpop.f32.mrf.mxu0
        %v5211 = vpop.f32.mrf.mxu0
        %5212 = vdwg.mxu0
        %5213 = vmatprep.subr.bf16.mxu0 0
        %5214 = vmatpush1.bf16.msra.mxu0 0
        %5215 = vmatprep.subr.bf16.mxu0 0
        %5216 = vmatpush1.bf16.msra.mxu0 0
        %5217 = vmatprep.subr.bf16.mxu0 0
        %5218 = vmatpush1.bf16.msra.mxu0 0
        %5219 = vmatprep.subr.bf16.mxu0 0
        %5220 = vmatpush1.bf16.msra.mxu0 0
        %5221 = vmatprep.subr.bf16.mxu0 0
        %5222 = vmatpush1.bf16.msra.mxu0 0
        %5223 = vmatprep.subr.bf16.mxu0 0
        %5224 = vmatpush1.bf16.msra.mxu0 0
        %5225 = vmatprep.subr.bf16.mxu0 %v4689
        %5226 = vmatpush1.bf16.msra.mxu0 %v4688
        %5227 = vmatprep.subr.bf16.mxu0 %v4668
        %5228 = vmatpush1.bf16.msra.mxu0 %v4667
        %5229 = vmatprep.subr.bf16.mxu0 0
        %5230 = vmatpush2.bf16.msra.mxu0 0
        %5231 = vmatprep.subr.bf16.mxu0 0
        %5232 = vmatpush2.bf16.msra.mxu0 0
        %5233 = vmatprep.subr.bf16.mxu0 0
        %5234 = vmatpush2.bf16.msra.mxu0 0
        %5235 = vmatprep.subr.bf16.mxu0 0
        %5236 = vmatpush2.bf16.msra.mxu0 0
        %5237 = vmatprep.subr.bf16.mxu0 0
        %5238 = vmatpush2.bf16.msra.mxu0 0
        %5239 = vmatprep.subr.bf16.mxu0 0
        %5240 = vmatpush2.bf16.msra.mxu0 0
        %5241 = vmatprep.subr.bf16.mxu0 0
        %5242 = vmatpush2.bf16.msra.mxu0 0
        %5243 = vmatprep.subr.bf16.mxu0 0
        %5244 = vmatpush2.bf16.msra.mxu0 0
        %5245 = vmatprep.mubr.bf16.mxu0 0
        %5246 = vmatmul.mubr.bf16.gmra.mxu0 %v4842
        %v5247 = vpop.f32.mrf.mxu0
        %v5248 = vadd.f32 %v4811, %v5247
        %v5249 = vpop.f32.mrf.mxu0
        %v5250 = vadd.f32 %v4815, %v5249
        %v5251 = vpop.f32.mrf.mxu0
        %v5252 = vpop.f32.mrf.mxu0
        %5253 = vdwg.mxu0
        %5254 = vmatprep.subr.bf16.mxu0 0
        %5255 = vmatpush1.bf16.msra.mxu0 0
        %5256 = vmatprep.subr.bf16.mxu0 0
        %5257 = vmatpush1.bf16.msra.mxu0 0
        %5258 = vmatprep.subr.bf16.mxu0 0
        %5259 = vmatpush1.bf16.msra.mxu0 0
        %5260 = vmatprep.subr.bf16.mxu0 0
        %5261 = vmatpush1.bf16.msra.mxu0 0
        %5262 = vmatprep.subr.bf16.mxu0 0
        %5263 = vmatpush1.bf16.msra.mxu0 0
        %5264 = vmatprep.subr.bf16.mxu0 0
        %5265 = vmatpush1.bf16.msra.mxu0 0
        %5266 = vmatprep.subr.bf16.mxu0 0
        %5267 = vmatpush1.bf16.msra.mxu0 %v4690
        %5268 = vmatprep.subr.bf16.mxu0 0
        %5269 = vmatpush1.bf16.msra.mxu0 %v4669
        %5270 = vmatprep.subr.bf16.mxu0 0
        %5271 = vmatpush2.bf16.msra.mxu0 0
        %5272 = vmatprep.subr.bf16.mxu0 0
        %5273 = vmatpush2.bf16.msra.mxu0 0
        %5274 = vmatprep.subr.bf16.mxu0 0
        %5275 = vmatpush2.bf16.msra.mxu0 0
        %5276 = vmatprep.subr.bf16.mxu0 0
        %5277 = vmatpush2.bf16.msra.mxu0 0
        %5278 = vmatprep.subr.bf16.mxu0 0
        %5279 = vmatpush2.bf16.msra.mxu0 0
        %5280 = vmatprep.subr.bf16.mxu0 0
        %5281 = vmatpush2.bf16.msra.mxu0 0
        %5282 = vmatprep.subr.bf16.mxu0 0
        %5283 = vmatpush2.bf16.msra.mxu0 0
        %5284 = vmatprep.subr.bf16.mxu0 0
        %5285 = vmatpush2.bf16.msra.mxu0 0
        %5286 = vmatprep.mubr.bf16.mxu0 0
        %5287 = vmatmul.mubr.bf16.gmra.mxu0 %v4842
        %v5288 = vpop.f32.mrf.mxu0
        %v5289 = vadd.f32 %v4819, %v5288
        %v5290 = vpop.f32.mrf.mxu0
        %v5291 = vpop.f32.mrf.mxu0
        %v5292 = vpop.f32.mrf.mxu0
        %5293 = vdwg.mxu0
        %v5315 = vcombine.low %v4879, %v4881
        %v5316 = vcombine.low %v4920, %v4922
        %v5317 = vcombine.low %v4961, %v4963
        %v5318 = vcombine.low %v5002, %v5004
        %v5320 = vunpack.c.l.s4 1966171168
        %v5321 = vunpack.c.0.s8 %v5320
        %v5322 = vlaneseq
        %v5323 = vshrl.u32 %v5322, 7
        %v5324 = vsub.s32 %v5321, %v5323
        %v5325 = vrot.slane %v5315, %v5324
        %v5327 = vunpack.c.l.s4 1966171168
        %v5328 = vunpack.c.0.s8 %v5327
        %v5329 = vlaneseq
        %v5330 = vshrl.u32 %v5329, 7
        %v5331 = vsub.s32 %v5328, %v5330
        %v5332 = vrot.slane %v5316, %v5331
        %v5334 = vunpack.c.l.s4 1966171168
        %v5335 = vunpack.c.0.s8 %v5334
        %v5336 = vlaneseq
        %v5337 = vshrl.u32 %v5336, 7
        %v5338 = vsub.s32 %v5335, %v5337
        %v5339 = vrot.slane %v5317, %v5338
        %v5341 = vunpack.c.l.s4 1966171168
        %v5342 = vunpack.c.0.s8 %v5341
        %v5343 = vlaneseq
        %v5344 = vshrl.u32 %v5343, 7
        %v5345 = vsub.s32 %v5342, %v5344
        %v5346 = vrot.slane %v5318, %v5345
        %v5347 = vcombine.low %v5325, %v5332
        %v5348 = vcombine.low %v5339, %v5346
        %v5350 = vunpack.c.l.s4 1966171168
        %v5351 = vunpack.c.0.s8 %v5350
        %v5352 = vlaneseq
        %v5353 = vshrl.u32 %v5352, 7
        %v5354 = vsub.s32 %v5351, %v5353
        %v5355 = vrot.slane %v5347, %v5354
        %v5357 = vunpack.c.l.s4 1966171168
        %v5358 = vunpack.c.0.s8 %v5357
        %v5359 = vlaneseq
        %v5360 = vshrl.u32 %v5359, 7
        %v5361 = vsub.s32 %v5358, %v5360
        %v5362 = vrot.slane %v5348, %v5361
        %v5363 = vcombine.low %v5355, %v5362
        %v5364 = vcombine.low %v5043, %v5045
        %v5365 = vcombine.low %v5084, %v5086
        %v5366 = vcombine.low %v5125, %v5127
        %v5367 = vcombine.low %v5166, %v5168
        %v5369 = vunpack.c.l.s4 1966171168
        %v5370 = vunpack.c.0.s8 %v5369
        %v5371 = vlaneseq
        %v5372 = vshrl.u32 %v5371, 7
        %v5373 = vsub.s32 %v5370, %v5372
        %v5374 = vrot.slane %v5364, %v5373
        %v5376 = vunpack.c.l.s4 1966171168
        %v5377 = vunpack.c.0.s8 %v5376
        %v5378 = vlaneseq
        %v5379 = vshrl.u32 %v5378, 7
        %v5380 = vsub.s32 %v5377, %v5379
        %v5381 = vrot.slane %v5365, %v5380
        %v5383 = vunpack.c.l.s4 1966171168
        %v5384 = vunpack.c.0.s8 %v5383
        %v5385 = vlaneseq
        %v5386 = vshrl.u32 %v5385, 7
        %v5387 = vsub.s32 %v5384, %v5386
        %v5388 = vrot.slane %v5366, %v5387
        %v5390 = vunpack.c.l.s4 1966171168
        %v5391 = vunpack.c.0.s8 %v5390
        %v5392 = vlaneseq
        %v5393 = vshrl.u32 %v5392, 7
        %v5394 = vsub.s32 %v5391, %v5393
        %v5395 = vrot.slane %v5367, %v5394
        %v5396 = vcombine.low %v5374, %v5381
        %v5397 = vcombine.low %v5388, %v5395
        %v5399 = vunpack.c.l.s4 1966171168
        %v5400 = vunpack.c.0.s8 %v5399
        %v5401 = vlaneseq
        %v5402 = vshrl.u32 %v5401, 7
        %v5403 = vsub.s32 %v5400, %v5402
        %v5404 = vrot.slane %v5396, %v5403
        %v5406 = vunpack.c.l.s4 1966171168
        %v5407 = vunpack.c.0.s8 %v5406
        %v5408 = vlaneseq
        %v5409 = vshrl.u32 %v5408, 7
        %v5410 = vsub.s32 %v5407, %v5409
        %v5411 = vrot.slane %v5397, %v5410
        %v5412 = vcombine.low %v5404, %v5411
        %v5413 = vcombine.low %v5207, %v5209
        %v5414 = vcombine.low %v5248, %v5250
        %v5416 = vunpack.c.l.s4 1966171168
        %v5417 = vunpack.c.0.s8 %v5416
        %v5418 = vlaneseq
        %v5419 = vshrl.u32 %v5418, 7
        %v5420 = vsub.s32 %v5417, %v5419
        %v5421 = vrot.slane %v5413, %v5420
        %v5423 = vunpack.c.l.s4 1966171168
        %v5424 = vunpack.c.0.s8 %v5423
        %v5425 = vlaneseq
        %v5426 = vshrl.u32 %v5425, 7
        %v5427 = vsub.s32 %v5424, %v5426
        %v5428 = vrot.slane %v5414, %v5427
        %v5430 = vunpack.c.l.s4 1966171168
        %v5431 = vunpack.c.0.s8 %v5430
        %v5432 = vlaneseq
        %v5433 = vshrl.u32 %v5432, 7
        %v5434 = vsub.s32 %v5431, %v5433
        %v5435 = vrot.slane %v5289, %v5434
        %v5436 = vcombine.low %v5421, %v5428
        %v5438 = vunpack.c.l.s4 1966171168
        %v5439 = vunpack.c.0.s8 %v5438
        %v5440 = vlaneseq
        %v5441 = vshrl.u32 %v5440, 7
        %v5442 = vsub.s32 %v5439, %v5441
        %v5443 = vrot.slane %v5436, %v5442
        %v5445 = vunpack.c.l.s4 1966171168
        %v5446 = vunpack.c.0.s8 %v5445
        %v5447 = vlaneseq
        %v5448 = vshrl.u32 %v5447, 7
        %v5449 = vsub.s32 %v5446, %v5448
        %v5450 = vrot.slane %v5435, %v5449
        %v5451 = vcombine.low %v5443, %v5450
        %5455 = vst [vmem:[%s757] sm:$0xff] %v5363
        %5456 = vst [vmem:[%s757 + $0x8] sm:$0xff] %v5412
        %v5457 = vlaneseq
        %vm5458 = vcmp.ge.s32.totalorder %v5457, 0
        %vm5459 = vcmp.lt.s32.totalorder %v5457, 640
        %vm5460 = vmand %vm5458, %vm5459
        %5461 = vst.msk [vmem:[%s757 + $0x10] sm:$0x1f] %vm5460, %v5451
        %v5462 = vsel %vm4445, %v4414, 0.0
        %v5463 = vsel %vm4446, %v4415, 0.0
        %v5464 = vsel %vm4447, %v4416, 0.0
        %v5465 = vsel %vm4448, %v4417, 0.0
        %v5466 = vsel %vm4449, %v4418, 0.0
        %v5467 = vsel %vm801, %v5462, 0.0
        %v5468 = vsel %vm801, %v5463, 0.0
        %v5469 = vadd.f32 %v5467, %v5468
        %v5470 = vsel %vm801, %v5464, 0.0
        %v5471 = vadd.f32 %v5469, %v5470
        %v5472 = vsel %vm801, %v5465, 0.0
        %v5473 = vadd.f32 %v5471, %v5472
        %v5474 = vsel %vm801, %v5466, 0.0
        %v5475 = vadd.f32 %v5473, %v5474
        %v5476 = vrot.slane %v5475, 4
        %v5477 = vadd.f32 %v5475, %v5476
        %v5478 = vrot.slane %v5477, 2
        %v5479 = vadd.f32 %v5477, %v5478
        %v5480 = vrot.slane %v5479, 1
        %v5481 = vadd.f32 %v5479, %v5480
        %v5482 = vpack.c.bf16 %v5481, %v5481
        %v5483 = vld [vmem:[%s15] sm:$0xff]
        %v5484 = vld [vmem:[%s15 + $0x8] sm:$0xff]
        %v5485 = vld [vmem:[%s15 + $0x10] sm:$0xff]
        %v5486 = vld [vmem:[%s15 + $0x18] sm:$0xff]
        %v5487 = vld [vmem:[%s15 + $0x20] sm:$0xff]
        %v5488 = vld [vmem:[%s15 + $0x28] sm:$0xff]
        %v5489 = vld [vmem:[%s15 + $0x30] sm:$0xff]
        %v5490 = vld [vmem:[%s15 + $0x38] sm:$0xff]
        %v5491 = vld [vmem:[%s15 + $0x40] sm:$0xff]
        %v5492 = vld [vmem:[%s15 + $0x48] sm:$0xff]
        %v5493 = vld [vmem:[%s15 + $0x50] sm:$0xf]
        %v5494 = vld [vmem:[%s15 + $0x54] sm:$0xff]
        %v5495 = vld [vmem:[%s15 + $0x5c] sm:$0xff]
        %v5496 = vld [vmem:[%s15 + $0x64] sm:$0xff]
        %v5497 = vld [vmem:[%s15 + $0x6c] sm:$0xff]
        %v5498 = vld [vmem:[%s15 + $0x74] sm:$0xff]
        %v5499 = vld [vmem:[%s15 + $0x7c] sm:$0xff]
        %v5500 = vld [vmem:[%s15 + $0x84] sm:$0xff]
        %v5501 = vld [vmem:[%s15 + $0x8c] sm:$0xff]
        %v5502 = vld [vmem:[%s15 + $0x94] sm:$0xff]
        %v5503 = vld [vmem:[%s15 + $0x9c] sm:$0xff]
        %v5504 = vld [vmem:[%s15 + $0xa4] sm:$0xf]
        %v5505 = vld [vmem:[%s15 + $0xa8] sm:$0xff]
        %v5506 = vld [vmem:[%s15 + $0xb0] sm:$0xff]
        %v5507 = vld [vmem:[%s15 + $0xb8] sm:$0xff]
        %v5508 = vld [vmem:[%s15 + $0xc0] sm:$0xff]
        %v5509 = vld [vmem:[%s15 + $0xc8] sm:$0xff]
        %v5510 = vld [vmem:[%s15 + $0xd0] sm:$0xff]
        %v5511 = vld [vmem:[%s15 + $0xd8] sm:$0xff]
        %v5512 = vld [vmem:[%s15 + $0xe0] sm:$0xff]
        %v5513 = vld [vmem:[%s15 + $0xe8] sm:$0xff]
        %v5514 = vld [vmem:[%s15 + $0xf0] sm:$0xff]
        %v5515 = vld [vmem:[%s15 + $0xf8] sm:$0xf]
        %v5516 = vld [vmem:[%s15 + $0xfc] sm:$0xff]
        %v5517 = vld [vmem:[%s15 + $0x104] sm:$0xff]
        %v5518 = vld [vmem:[%s15 + $0x10c] sm:$0xff]
        %v5519 = vld [vmem:[%s15 + $0x114] sm:$0xff]
        %v5520 = vld [vmem:[%s15 + $0x11c] sm:$0xff]
        %v5521 = vld [vmem:[%s15 + $0x124] sm:$0xff]
        %v5522 = vld [vmem:[%s15 + $0x12c] sm:$0xff]
        %v5523 = vld [vmem:[%s15 + $0x134] sm:$0xff]
        %v5524 = vld [vmem:[%s15 + $0x13c] sm:$0xff]
        %v5525 = vld [vmem:[%s15 + $0x144] sm:$0xff]
        %v5526 = vld [vmem:[%s15 + $0x14c] sm:$0xf]
        %v5527 = vld [vmem:[%s16] sm:$0xff]
        %v5528 = vld [vmem:[%s16 + $0x8] sm:$0xff]
        %v5529 = vld [vmem:[%s16 + $0x10] sm:$0x1f]
        %v5530 = vmul.f32 %v5527, 8.0
        %v5531 = vmul.f32 %v5528, 8.0
        %v5532 = vmul.f32 %v5529, 8.0
        %v5577 = vunpack.c.l.b16 %v5483
        %v5578 = vunpack.c.h.b16 %v5483
        %v5579 = vunpack.c.l.b16 %v5484
        %v5580 = vunpack.c.h.b16 %v5484
        %v5581 = vunpack.c.l.b16 %v5485
        %v5582 = vunpack.c.h.b16 %v5485
        %v5583 = vunpack.c.l.b16 %v5486
        %v5584 = vunpack.c.h.b16 %v5486
        %v5585 = vunpack.c.l.b16 %v5487
        %v5586 = vunpack.c.h.b16 %v5487
        %v5587 = vunpack.c.l.b16 %v5488
        %v5588 = vunpack.c.h.b16 %v5488
        %v5589 = vunpack.c.l.b16 %v5489
        %v5590 = vunpack.c.h.b16 %v5489
        %v5591 = vunpack.c.l.b16 %v5490
        %v5592 = vunpack.c.h.b16 %v5490
        %v5593 = vunpack.c.l.b16 %v5491
        %v5594 = vunpack.c.h.b16 %v5491
        %v5595 = vunpack.c.l.b16 %v5492
        %v5596 = vunpack.c.h.b16 %v5492
        %v5597 = vunpack.c.l.b16 %v5493
        %v5598 = vunpack.c.l.b16 %v5494
        %v5599 = vunpack.c.h.b16 %v5494
        %v5600 = vunpack.c.l.b16 %v5495
        %v5601 = vunpack.c.h.b16 %v5495
        %v5602 = vunpack.c.l.b16 %v5496
        %v5603 = vunpack.c.h.b16 %v5496
        %v5604 = vunpack.c.l.b16 %v5497
        %v5605 = vunpack.c.h.b16 %v5497
        %v5606 = vunpack.c.l.b16 %v5498
        %v5607 = vunpack.c.h.b16 %v5498
        %v5608 = vunpack.c.l.b16 %v5499
        %v5609 = vunpack.c.h.b16 %v5499
        %v5610 = vunpack.c.l.b16 %v5500
        %v5611 = vunpack.c.h.b16 %v5500
        %v5612 = vunpack.c.l.b16 %v5501
        %v5613 = vunpack.c.h.b16 %v5501
        %v5614 = vunpack.c.l.b16 %v5502
        %v5615 = vunpack.c.h.b16 %v5502
        %v5616 = vunpack.c.l.b16 %v5503
        %v5617 = vunpack.c.h.b16 %v5503
        %v5618 = vunpack.c.l.b16 %v5504
        %v5619 = vunpack.c.l.b16 %v5505
        %v5620 = vunpack.c.h.b16 %v5505
        %v5621 = vunpack.c.l.b16 %v5506
        %v5622 = vunpack.c.h.b16 %v5506
        %v5623 = vunpack.c.l.b16 %v5507
        %v5624 = vunpack.c.h.b16 %v5507
        %v5625 = vunpack.c.l.b16 %v5508
        %v5626 = vunpack.c.h.b16 %v5508
        %v5627 = vunpack.c.l.b16 %v5509
        %v5628 = vunpack.c.h.b16 %v5509
        %v5629 = vunpack.c.l.b16 %v5510
        %v5630 = vunpack.c.h.b16 %v5510
        %v5631 = vunpack.c.l.b16 %v5511
        %v5632 = vunpack.c.h.b16 %v5511
        %v5633 = vunpack.c.l.b16 %v5512
        %v5634 = vunpack.c.h.b16 %v5512
        %v5635 = vunpack.c.l.b16 %v5513
        %v5636 = vunpack.c.h.b16 %v5513
        %v5637 = vunpack.c.l.b16 %v5514
        %v5638 = vunpack.c.h.b16 %v5514
        %v5639 = vunpack.c.l.b16 %v5515
        %v5640 = vunpack.c.l.b16 %v5516
        %v5641 = vunpack.c.h.b16 %v5516
        %v5642 = vunpack.c.l.b16 %v5517
        %v5643 = vunpack.c.h.b16 %v5517
        %v5644 = vunpack.c.l.b16 %v5518
        %v5645 = vunpack.c.h.b16 %v5518
        %v5646 = vunpack.c.l.b16 %v5519
        %v5647 = vunpack.c.h.b16 %v5519
        %v5648 = vunpack.c.l.b16 %v5520
        %v5649 = vunpack.c.h.b16 %v5520
        %v5650 = vunpack.c.l.b16 %v5521
        %v5651 = vunpack.c.h.b16 %v5521
        %v5652 = vunpack.c.l.b16 %v5522
        %v5653 = vunpack.c.h.b16 %v5522
        %v5654 = vunpack.c.l.b16 %v5523
        %v5655 = vunpack.c.h.b16 %v5523
        %v5656 = vunpack.c.l.b16 %v5524
        %v5657 = vunpack.c.h.b16 %v5524
        %v5658 = vunpack.c.l.b16 %v5525
        %v5659 = vunpack.c.h.b16 %v5525
        %v5660 = vunpack.c.l.b16 %v5526
        %v5661 = vpack.c.b16 %v5598, %v5577
        %v5662 = vpack.c.b16 %v5599, %v5578
        %v5663 = vpack.c.b16 %v5600, %v5579
        %v5664 = vpack.c.b16 %v5601, %v5580
        %v5665 = vpack.c.b16 %v5602, %v5581
        %v5666 = vpack.c.b16 %v5603, %v5582
        %v5667 = vpack.c.b16 %v5604, %v5583
        %v5668 = vpack.c.b16 %v5605, %v5584
        %v5669 = vpack.c.b16 %v5606, %v5585
        %v5670 = vpack.c.b16 %v5607, %v5586
        %v5671 = vpack.c.b16 %v5608, %v5587
        %v5672 = vpack.c.b16 %v5609, %v5588
        %v5673 = vpack.c.b16 %v5610, %v5589
        %v5674 = vpack.c.b16 %v5611, %v5590
        %v5675 = vpack.c.b16 %v5612, %v5591
        %v5676 = vpack.c.b16 %v5613, %v5592
        %v5677 = vpack.c.b16 %v5614, %v5593
        %v5678 = vpack.c.b16 %v5615, %v5594
        %v5679 = vpack.c.b16 %v5616, %v5595
        %v5680 = vpack.c.b16 %v5617, %v5596
        %v5681 = vpack.c.b16 %v5618, %v5597
        %v5682 = vpack.c.b16 %v5640, %v5619
        %v5683 = vpack.c.b16 %v5641, %v5620
        %v5684 = vpack.c.b16 %v5642, %v5621
        %v5685 = vpack.c.b16 %v5643, %v5622
        %v5686 = vpack.c.b16 %v5644, %v5623
        %v5687 = vpack.c.b16 %v5645, %v5624
        %v5688 = vpack.c.b16 %v5646, %v5625
        %v5689 = vpack.c.b16 %v5647, %v5626
        %v5690 = vpack.c.b16 %v5648, %v5627
        %v5691 = vpack.c.b16 %v5649, %v5628
        %v5692 = vpack.c.b16 %v5650, %v5629
        %v5693 = vpack.c.b16 %v5651, %v5630
        %v5694 = vpack.c.b16 %v5652, %v5631
        %v5695 = vpack.c.b16 %v5653, %v5632
        %v5696 = vpack.c.b16 %v5654, %v5633
        %v5697 = vpack.c.b16 %v5655, %v5634
        %v5698 = vpack.c.b16 %v5656, %v5635
        %v5699 = vpack.c.b16 %v5657, %v5636
        %v5700 = vpack.c.b16 %v5658, %v5637
        %v5701 = vpack.c.b16 %v5659, %v5638
        %v5702 = vpack.c.b16 %v5660, %v5639
        %v5748 = vlaneseq
        %v5749 = vshrl.u32 %v5748, 7
        %v5750 = vsub.s32 0, %v5749
        %v5751 = vrot.slane %v5530, %v5750
        %v5752 = vlaneseq
        %v5753 = vshrl.u32 %v5752, 7
        %v5754 = vsub.s32 1, %v5753
        %v5755 = vrot.slane %v5530, %v5754
        %v5756 = vlaneseq
        %v5757 = vshrl.u32 %v5756, 7
        %v5758 = vsub.s32 2, %v5757
        %v5759 = vrot.slane %v5530, %v5758
        %v5760 = vlaneseq
        %v5761 = vshrl.u32 %v5760, 7
        %v5762 = vsub.s32 3, %v5761
        %v5763 = vrot.slane %v5530, %v5762
        %v5764 = vlaneseq
        %v5765 = vshrl.u32 %v5764, 7
        %v5766 = vsub.s32 4, %v5765
        %v5767 = vrot.slane %v5530, %v5766
        %v5768 = vlaneseq
        %v5769 = vshrl.u32 %v5768, 7
        %v5770 = vsub.s32 5, %v5769
        %v5771 = vrot.slane %v5530, %v5770
        %v5772 = vlaneseq
        %v5773 = vshrl.u32 %v5772, 7
        %v5774 = vsub.s32 6, %v5773
        %v5775 = vrot.slane %v5530, %v5774
        %v5776 = vlaneseq
        %v5777 = vshrl.u32 %v5776, 7
        %v5778 = vsub.s32 7, %v5777
        %v5779 = vrot.slane %v5530, %v5778
        %v5780 = vlaneseq
        %v5781 = vshrl.u32 %v5780, 7
        %v5782 = vsub.s32 0, %v5781
        %v5783 = vrot.slane %v5531, %v5782
        %v5784 = vlaneseq
        %v5785 = vshrl.u32 %v5784, 7
        %v5786 = vsub.s32 1, %v5785
        %v5787 = vrot.slane %v5531, %v5786
        %v5788 = vlaneseq
        %v5789 = vshrl.u32 %v5788, 7
        %v5790 = vsub.s32 2, %v5789
        %v5791 = vrot.slane %v5531, %v5790
        %v5792 = vlaneseq
        %v5793 = vshrl.u32 %v5792, 7
        %v5794 = vsub.s32 3, %v5793
        %v5795 = vrot.slane %v5531, %v5794
        %v5796 = vlaneseq
        %v5797 = vshrl.u32 %v5796, 7
        %v5798 = vsub.s32 4, %v5797
        %v5799 = vrot.slane %v5531, %v5798
        %v5800 = vlaneseq
        %v5801 = vshrl.u32 %v5800, 7
        %v5802 = vsub.s32 5, %v5801
        %v5803 = vrot.slane %v5531, %v5802
        %v5804 = vlaneseq
        %v5805 = vshrl.u32 %v5804, 7
        %v5806 = vsub.s32 6, %v5805
        %v5807 = vrot.slane %v5531, %v5806
        %v5808 = vlaneseq
        %v5809 = vshrl.u32 %v5808, 7
        %v5810 = vsub.s32 7, %v5809
        %v5811 = vrot.slane %v5531, %v5810
        %v5812 = vlaneseq
        %v5813 = vshrl.u32 %v5812, 7
        %v5814 = vsub.s32 0, %v5813
        %v5815 = vrot.slane %v5532, %v5814
        %v5816 = vlaneseq
        %v5817 = vshrl.u32 %v5816, 7
        %v5818 = vsub.s32 1, %v5817
        %v5819 = vrot.slane %v5532, %v5818
        %v5820 = vlaneseq
        %v5821 = vshrl.u32 %v5820, 7
        %v5822 = vsub.s32 2, %v5821
        %v5823 = vrot.slane %v5532, %v5822
        %v5824 = vlaneseq
        %v5825 = vshrl.u32 %v5824, 7
        %v5826 = vsub.s32 3, %v5825
        %v5827 = vrot.slane %v5532, %v5826
        %v5828 = vlaneseq
        %v5829 = vshrl.u32 %v5828, 7
        %v5830 = vsub.s32 4, %v5829
        %v5831 = vrot.slane %v5532, %v5830
        %v5854 = vsel %vm801, %v5482, 0
        %5856 = vmatprep.subr.bf16.mxu0 0
        %5857 = vmatpush1.bf16.msra.mxu0 0
        %5858 = vmatprep.subr.bf16.mxu0 0
        %5859 = vmatpush1.bf16.msra.mxu0 0
        %5860 = vmatprep.subr.bf16.mxu0 0
        %5861 = vmatpush1.bf16.msra.mxu0 0
        %5862 = vmatprep.subr.bf16.mxu0 0
        %5863 = vmatpush1.bf16.msra.mxu0 0
        %5864 = vmatprep.subr.bf16.mxu0 0
        %5865 = vmatpush1.bf16.msra.mxu0 0
        %5866 = vmatprep.subr.bf16.mxu0 0
        %5867 = vmatpush1.bf16.msra.mxu0 0
        %5868 = vmatprep.subr.bf16.mxu0 %v5683
        %5869 = vmatpush1.bf16.msra.mxu0 %v5682
        %5870 = vmatprep.subr.bf16.mxu0 %v5662
        %5871 = vmatpush1.bf16.msra.mxu0 %v5661
        %5872 = vmatprep.subr.bf16.mxu0 0
        %5873 = vmatpush2.bf16.msra.mxu0 0
        %5874 = vmatprep.subr.bf16.mxu0 0
        %5875 = vmatpush2.bf16.msra.mxu0 0
        %5876 = vmatprep.subr.bf16.mxu0 0
        %5877 = vmatpush2.bf16.msra.mxu0 0
        %5878 = vmatprep.subr.bf16.mxu0 0
        %5879 = vmatpush2.bf16.msra.mxu0 0
        %5880 = vmatprep.subr.bf16.mxu0 0
        %5881 = vmatpush2.bf16.msra.mxu0 0
        %5882 = vmatprep.subr.bf16.mxu0 0
        %5883 = vmatpush2.bf16.msra.mxu0 0
        %5884 = vmatprep.subr.bf16.mxu0 0
        %5885 = vmatpush2.bf16.msra.mxu0 0
        %5886 = vmatprep.subr.bf16.mxu0 0
        %5887 = vmatpush2.bf16.msra.mxu0 0
        %5888 = vmatprep.mubr.bf16.mxu0 0
        %5889 = vmatmul.mubr.bf16.gmra.mxu0 %v5854
        %v5890 = vpop.f32.mrf.mxu0
        %v5891 = vadd.f32 %v5751, %v5890
        %v5892 = vpop.f32.mrf.mxu0
        %v5893 = vadd.f32 %v5755, %v5892
        %v5894 = vpop.f32.mrf.mxu0
        %v5895 = vpop.f32.mrf.mxu0
        %5896 = vdwg.mxu0
        %5897 = vmatprep.subr.bf16.mxu0 0
        %5898 = vmatpush1.bf16.msra.mxu0 0
        %5899 = vmatprep.subr.bf16.mxu0 0
        %5900 = vmatpush1.bf16.msra.mxu0 0
        %5901 = vmatprep.subr.bf16.mxu0 0
        %5902 = vmatpush1.bf16.msra.mxu0 0
        %5903 = vmatprep.subr.bf16.mxu0 0
        %5904 = vmatpush1.bf16.msra.mxu0 0
        %5905 = vmatprep.subr.bf16.mxu0 0
        %5906 = vmatpush1.bf16.msra.mxu0 0
        %5907 = vmatprep.subr.bf16.mxu0 0
        %5908 = vmatpush1.bf16.msra.mxu0 0
        %5909 = vmatprep.subr.bf16.mxu0 %v5685
        %5910 = vmatpush1.bf16.msra.mxu0 %v5684
        %5911 = vmatprep.subr.bf16.mxu0 %v5664
        %5912 = vmatpush1.bf16.msra.mxu0 %v5663
        %5913 = vmatprep.subr.bf16.mxu0 0
        %5914 = vmatpush2.bf16.msra.mxu0 0
        %5915 = vmatprep.subr.bf16.mxu0 0
        %5916 = vmatpush2.bf16.msra.mxu0 0
        %5917 = vmatprep.subr.bf16.mxu0 0
        %5918 = vmatpush2.bf16.msra.mxu0 0
        %5919 = vmatprep.subr.bf16.mxu0 0
        %5920 = vmatpush2.bf16.msra.mxu0 0
        %5921 = vmatprep.subr.bf16.mxu0 0
        %5922 = vmatpush2.bf16.msra.mxu0 0
        %5923 = vmatprep.subr.bf16.mxu0 0
        %5924 = vmatpush2.bf16.msra.mxu0 0
        %5925 = vmatprep.subr.bf16.mxu0 0
        %5926 = vmatpush2.bf16.msra.mxu0 0
        %5927 = vmatprep.subr.bf16.mxu0 0
        %5928 = vmatpush2.bf16.msra.mxu0 0
        %5929 = vmatprep.mubr.bf16.mxu0 0
        %5930 = vmatmul.mubr.bf16.gmra.mxu0 %v5854
        %v5931 = vpop.f32.mrf.mxu0
        %v5932 = vadd.f32 %v5759, %v5931
        %v5933 = vpop.f32.mrf.mxu0
        %v5934 = vadd.f32 %v5763, %v5933
        %v5935 = vpop.f32.mrf.mxu0
        %v5936 = vpop.f32.mrf.mxu0
        %5937 = vdwg.mxu0
        %5938 = vmatprep.subr.bf16.mxu0 0
        %5939 = vmatpush1.bf16.msra.mxu0 0
        %5940 = vmatprep.subr.bf16.mxu0 0
        %5941 = vmatpush1.bf16.msra.mxu0 0
        %5942 = vmatprep.subr.bf16.mxu0 0
        %5943 = vmatpush1.bf16.msra.mxu0 0
        %5944 = vmatprep.subr.bf16.mxu0 0
        %5945 = vmatpush1.bf16.msra.mxu0 0
        %5946 = vmatprep.subr.bf16.mxu0 0
        %5947 = vmatpush1.bf16.msra.mxu0 0
        %5948 = vmatprep.subr.bf16.mxu0 0
        %5949 = vmatpush1.bf16.msra.mxu0 0
        %5950 = vmatprep.subr.bf16.mxu0 %v5687
        %5951 = vmatpush1.bf16.msra.mxu0 %v5686
        %5952 = vmatprep.subr.bf16.mxu0 %v5666
        %5953 = vmatpush1.bf16.msra.mxu0 %v5665
        %5954 = vmatprep.subr.bf16.mxu0 0
        %5955 = vmatpush2.bf16.msra.mxu0 0
        %5956 = vmatprep.subr.bf16.mxu0 0
        %5957 = vmatpush2.bf16.msra.mxu0 0
        %5958 = vmatprep.subr.bf16.mxu0 0
        %5959 = vmatpush2.bf16.msra.mxu0 0
        %5960 = vmatprep.subr.bf16.mxu0 0
        %5961 = vmatpush2.bf16.msra.mxu0 0
        %5962 = vmatprep.subr.bf16.mxu0 0
        %5963 = vmatpush2.bf16.msra.mxu0 0
        %5964 = vmatprep.subr.bf16.mxu0 0
        %5965 = vmatpush2.bf16.msra.mxu0 0
        %5966 = vmatprep.subr.bf16.mxu0 0
        %5967 = vmatpush2.bf16.msra.mxu0 0
        %5968 = vmatprep.subr.bf16.mxu0 0
        %5969 = vmatpush2.bf16.msra.mxu0 0
        %5970 = vmatprep.mubr.bf16.mxu0 0
        %5971 = vmatmul.mubr.bf16.gmra.mxu0 %v5854
        %v5972 = vpop.f32.mrf.mxu0
        %v5973 = vadd.f32 %v5767, %v5972
        %v5974 = vpop.f32.mrf.mxu0
        %v5975 = vadd.f32 %v5771, %v5974
        %v5976 = vpop.f32.mrf.mxu0
        %v5977 = vpop.f32.mrf.mxu0
        %5978 = vdwg.mxu0
        %5979 = vmatprep.subr.bf16.mxu0 0
        %5980 = vmatpush1.bf16.msra.mxu0 0
        %5981 = vmatprep.subr.bf16.mxu0 0
        %5982 = vmatpush1.bf16.msra.mxu0 0
        %5983 = vmatprep.subr.bf16.mxu0 0
        %5984 = vmatpush1.bf16.msra.mxu0 0
        %5985 = vmatprep.subr.bf16.mxu0 0
        %5986 = vmatpush1.bf16.msra.mxu0 0
        %5987 = vmatprep.subr.bf16.mxu0 0
        %5988 = vmatpush1.bf16.msra.mxu0 0
        %5989 = vmatprep.subr.bf16.mxu0 0
        %5990 = vmatpush1.bf16.msra.mxu0 0
        %5991 = vmatprep.subr.bf16.mxu0 %v5689
        %5992 = vmatpush1.bf16.msra.mxu0 %v5688
        %5993 = vmatprep.subr.bf16.mxu0 %v5668
        %5994 = vmatpush1.bf16.msra.mxu0 %v5667
        %5995 = vmatprep.subr.bf16.mxu0 0
        %5996 = vmatpush2.bf16.msra.mxu0 0
        %5997 = vmatprep.subr.bf16.mxu0 0
        %5998 = vmatpush2.bf16.msra.mxu0 0
        %5999 = vmatprep.subr.bf16.mxu0 0
        %6000 = vmatpush2.bf16.msra.mxu0 0
        %6001 = vmatprep.subr.bf16.mxu0 0
        %6002 = vmatpush2.bf16.msra.mxu0 0
        %6003 = vmatprep.subr.bf16.mxu0 0
        %6004 = vmatpush2.bf16.msra.mxu0 0
        %6005 = vmatprep.subr.bf16.mxu0 0
        %6006 = vmatpush2.bf16.msra.mxu0 0
        %6007 = vmatprep.subr.bf16.mxu0 0
        %6008 = vmatpush2.bf16.msra.mxu0 0
        %6009 = vmatprep.subr.bf16.mxu0 0
        %6010 = vmatpush2.bf16.msra.mxu0 0
        %6011 = vmatprep.mubr.bf16.mxu0 0
        %6012 = vmatmul.mubr.bf16.gmra.mxu0 %v5854
        %v6013 = vpop.f32.mrf.mxu0
        %v6014 = vadd.f32 %v5775, %v6013
        %v6015 = vpop.f32.mrf.mxu0
        %v6016 = vadd.f32 %v5779, %v6015
        %v6017 = vpop.f32.mrf.mxu0
        %v6018 = vpop.f32.mrf.mxu0
        %6019 = vdwg.mxu0
        %6020 = vmatprep.subr.bf16.mxu0 0
        %6021 = vmatpush1.bf16.msra.mxu0 0
        %6022 = vmatprep.subr.bf16.mxu0 0
        %6023 = vmatpush1.bf16.msra.mxu0 0
        %6024 = vmatprep.subr.bf16.mxu0 0
        %6025 = vmatpush1.bf16.msra.mxu0 0
        %6026 = vmatprep.subr.bf16.mxu0 0
        %6027 = vmatpush1.bf16.msra.mxu0 0
        %6028 = vmatprep.subr.bf16.mxu0 0
        %6029 = vmatpush1.bf16.msra.mxu0 0
        %6030 = vmatprep.subr.bf16.mxu0 0
        %6031 = vmatpush1.bf16.msra.mxu0 0
        %6032 = vmatprep.subr.bf16.mxu0 %v5691
        %6033 = vmatpush1.bf16.msra.mxu0 %v5690
        %6034 = vmatprep.subr.bf16.mxu0 %v5670
        %6035 = vmatpush1.bf16.msra.mxu0 %v5669
        %6036 = vmatprep.subr.bf16.mxu0 0
        %6037 = vmatpush2.bf16.msra.mxu0 0
        %6038 = vmatprep.subr.bf16.mxu0 0
        %6039 = vmatpush2.bf16.msra.mxu0 0
        %6040 = vmatprep.subr.bf16.mxu0 0
        %6041 = vmatpush2.bf16.msra.mxu0 0
        %6042 = vmatprep.subr.bf16.mxu0 0
        %6043 = vmatpush2.bf16.msra.mxu0 0
        %6044 = vmatprep.subr.bf16.mxu0 0
        %6045 = vmatpush2.bf16.msra.mxu0 0
        %6046 = vmatprep.subr.bf16.mxu0 0
        %6047 = vmatpush2.bf16.msra.mxu0 0
        %6048 = vmatprep.subr.bf16.mxu0 0
        %6049 = vmatpush2.bf16.msra.mxu0 0
        %6050 = vmatprep.subr.bf16.mxu0 0
        %6051 = vmatpush2.bf16.msra.mxu0 0
        %6052 = vmatprep.mubr.bf16.mxu0 0
        %6053 = vmatmul.mubr.bf16.gmra.mxu0 %v5854
        %v6054 = vpop.f32.mrf.mxu0
        %v6055 = vadd.f32 %v5783, %v6054
        %v6056 = vpop.f32.mrf.mxu0
        %v6057 = vadd.f32 %v5787, %v6056
        %v6058 = vpop.f32.mrf.mxu0
        %v6059 = vpop.f32.mrf.mxu0
        %6060 = vdwg.mxu0
        %6061 = vmatprep.subr.bf16.mxu0 0
        %6062 = vmatpush1.bf16.msra.mxu0 0
        %6063 = vmatprep.subr.bf16.mxu0 0
        %6064 = vmatpush1.bf16.msra.mxu0 0
        %6065 = vmatprep.subr.bf16.mxu0 0
        %6066 = vmatpush1.bf16.msra.mxu0 0
        %6067 = vmatprep.subr.bf16.mxu0 0
        %6068 = vmatpush1.bf16.msra.mxu0 0
        %6069 = vmatprep.subr.bf16.mxu0 0
        %6070 = vmatpush1.bf16.msra.mxu0 0
        %6071 = vmatprep.subr.bf16.mxu0 0
        %6072 = vmatpush1.bf16.msra.mxu0 0
        %6073 = vmatprep.subr.bf16.mxu0 %v5693
        %6074 = vmatpush1.bf16.msra.mxu0 %v5692
        %6075 = vmatprep.subr.bf16.mxu0 %v5672
        %6076 = vmatpush1.bf16.msra.mxu0 %v5671
        %6077 = vmatprep.subr.bf16.mxu0 0
        %6078 = vmatpush2.bf16.msra.mxu0 0
        %6079 = vmatprep.subr.bf16.mxu0 0
        %6080 = vmatpush2.bf16.msra.mxu0 0
        %6081 = vmatprep.subr.bf16.mxu0 0
        %6082 = vmatpush2.bf16.msra.mxu0 0
        %6083 = vmatprep.subr.bf16.mxu0 0
        %6084 = vmatpush2.bf16.msra.mxu0 0
        %6085 = vmatprep.subr.bf16.mxu0 0
        %6086 = vmatpush2.bf16.msra.mxu0 0
        %6087 = vmatprep.subr.bf16.mxu0 0
        %6088 = vmatpush2.bf16.msra.mxu0 0
        %6089 = vmatprep.subr.bf16.mxu0 0
        %6090 = vmatpush2.bf16.msra.mxu0 0
        %6091 = vmatprep.subr.bf16.mxu0 0
        %6092 = vmatpush2.bf16.msra.mxu0 0
        %6093 = vmatprep.mubr.bf16.mxu0 0
        %6094 = vmatmul.mubr.bf16.gmra.mxu0 %v5854
        %v6095 = vpop.f32.mrf.mxu0
        %v6096 = vadd.f32 %v5791, %v6095
        %v6097 = vpop.f32.mrf.mxu0
        %v6098 = vadd.f32 %v5795, %v6097
        %v6099 = vpop.f32.mrf.mxu0
        %v6100 = vpop.f32.mrf.mxu0
        %6101 = vdwg.mxu0
        %6102 = vmatprep.subr.bf16.mxu0 0
        %6103 = vmatpush1.bf16.msra.mxu0 0
        %6104 = vmatprep.subr.bf16.mxu0 0
        %6105 = vmatpush1.bf16.msra.mxu0 0
        %6106 = vmatprep.subr.bf16.mxu0 0
        %6107 = vmatpush1.bf16.msra.mxu0 0
        %6108 = vmatprep.subr.bf16.mxu0 0
        %6109 = vmatpush1.bf16.msra.mxu0 0
        %6110 = vmatprep.subr.bf16.mxu0 0
        %6111 = vmatpush1.bf16.msra.mxu0 0
        %6112 = vmatprep.subr.bf16.mxu0 0
        %6113 = vmatpush1.bf16.msra.mxu0 0
        %6114 = vmatprep.subr.bf16.mxu0 %v5695
        %6115 = vmatpush1.bf16.msra.mxu0 %v5694
        %6116 = vmatprep.subr.bf16.mxu0 %v5674
        %6117 = vmatpush1.bf16.msra.mxu0 %v5673
        %6118 = vmatprep.subr.bf16.mxu0 0
        %6119 = vmatpush2.bf16.msra.mxu0 0
        %6120 = vmatprep.subr.bf16.mxu0 0
        %6121 = vmatpush2.bf16.msra.mxu0 0
        %6122 = vmatprep.subr.bf16.mxu0 0
        %6123 = vmatpush2.bf16.msra.mxu0 0
        %6124 = vmatprep.subr.bf16.mxu0 0
        %6125 = vmatpush2.bf16.msra.mxu0 0
        %6126 = vmatprep.subr.bf16.mxu0 0
        %6127 = vmatpush2.bf16.msra.mxu0 0
        %6128 = vmatprep.subr.bf16.mxu0 0
        %6129 = vmatpush2.bf16.msra.mxu0 0
        %6130 = vmatprep.subr.bf16.mxu0 0
        %6131 = vmatpush2.bf16.msra.mxu0 0
        %6132 = vmatprep.subr.bf16.mxu0 0
        %6133 = vmatpush2.bf16.msra.mxu0 0
        %6134 = vmatprep.mubr.bf16.mxu0 0
        %6135 = vmatmul.mubr.bf16.gmra.mxu0 %v5854
        %v6136 = vpop.f32.mrf.mxu0
        %v6137 = vadd.f32 %v5799, %v6136
        %v6138 = vpop.f32.mrf.mxu0
        %v6139 = vadd.f32 %v5803, %v6138
        %v6140 = vpop.f32.mrf.mxu0
        %v6141 = vpop.f32.mrf.mxu0
        %6142 = vdwg.mxu0
        %6143 = vmatprep.subr.bf16.mxu0 0
        %6144 = vmatpush1.bf16.msra.mxu0 0
        %6145 = vmatprep.subr.bf16.mxu0 0
        %6146 = vmatpush1.bf16.msra.mxu0 0
        %6147 = vmatprep.subr.bf16.mxu0 0
        %6148 = vmatpush1.bf16.msra.mxu0 0
        %6149 = vmatprep.subr.bf16.mxu0 0
        %6150 = vmatpush1.bf16.msra.mxu0 0
        %6151 = vmatprep.subr.bf16.mxu0 0
        %6152 = vmatpush1.bf16.msra.mxu0 0
        %6153 = vmatprep.subr.bf16.mxu0 0
        %6154 = vmatpush1.bf16.msra.mxu0 0
        %6155 = vmatprep.subr.bf16.mxu0 %v5697
        %6156 = vmatpush1.bf16.msra.mxu0 %v5696
        %6157 = vmatprep.subr.bf16.mxu0 %v5676
        %6158 = vmatpush1.bf16.msra.mxu0 %v5675
        %6159 = vmatprep.subr.bf16.mxu0 0
        %6160 = vmatpush2.bf16.msra.mxu0 0
        %6161 = vmatprep.subr.bf16.mxu0 0
        %6162 = vmatpush2.bf16.msra.mxu0 0
        %6163 = vmatprep.subr.bf16.mxu0 0
        %6164 = vmatpush2.bf16.msra.mxu0 0
        %6165 = vmatprep.subr.bf16.mxu0 0
        %6166 = vmatpush2.bf16.msra.mxu0 0
        %6167 = vmatprep.subr.bf16.mxu0 0
        %6168 = vmatpush2.bf16.msra.mxu0 0
        %6169 = vmatprep.subr.bf16.mxu0 0
        %6170 = vmatpush2.bf16.msra.mxu0 0
        %6171 = vmatprep.subr.bf16.mxu0 0
        %6172 = vmatpush2.bf16.msra.mxu0 0
        %6173 = vmatprep.subr.bf16.mxu0 0
        %6174 = vmatpush2.bf16.msra.mxu0 0
        %6175 = vmatprep.mubr.bf16.mxu0 0
        %6176 = vmatmul.mubr.bf16.gmra.mxu0 %v5854
        %v6177 = vpop.f32.mrf.mxu0
        %v6178 = vadd.f32 %v5807, %v6177
        %v6179 = vpop.f32.mrf.mxu0
        %v6180 = vadd.f32 %v5811, %v6179
        %v6181 = vpop.f32.mrf.mxu0
        %v6182 = vpop.f32.mrf.mxu0
        %6183 = vdwg.mxu0
        %6184 = vmatprep.subr.bf16.mxu0 0
        %6185 = vmatpush1.bf16.msra.mxu0 0
        %6186 = vmatprep.subr.bf16.mxu0 0
        %6187 = vmatpush1.bf16.msra.mxu0 0
        %6188 = vmatprep.subr.bf16.mxu0 0
        %6189 = vmatpush1.bf16.msra.mxu0 0
        %6190 = vmatprep.subr.bf16.mxu0 0
        %6191 = vmatpush1.bf16.msra.mxu0 0
        %6192 = vmatprep.subr.bf16.mxu0 0
        %6193 = vmatpush1.bf16.msra.mxu0 0
        %6194 = vmatprep.subr.bf16.mxu0 0
        %6195 = vmatpush1.bf16.msra.mxu0 0
        %6196 = vmatprep.subr.bf16.mxu0 %v5699
        %6197 = vmatpush1.bf16.msra.mxu0 %v5698
        %6198 = vmatprep.subr.bf16.mxu0 %v5678
        %6199 = vmatpush1.bf16.msra.mxu0 %v5677
        %6200 = vmatprep.subr.bf16.mxu0 0
        %6201 = vmatpush2.bf16.msra.mxu0 0
        %6202 = vmatprep.subr.bf16.mxu0 0
        %6203 = vmatpush2.bf16.msra.mxu0 0
        %6204 = vmatprep.subr.bf16.mxu0 0
        %6205 = vmatpush2.bf16.msra.mxu0 0
        %6206 = vmatprep.subr.bf16.mxu0 0
        %6207 = vmatpush2.bf16.msra.mxu0 0
        %6208 = vmatprep.subr.bf16.mxu0 0
        %6209 = vmatpush2.bf16.msra.mxu0 0
        %6210 = vmatprep.subr.bf16.mxu0 0
        %6211 = vmatpush2.bf16.msra.mxu0 0
        %6212 = vmatprep.subr.bf16.mxu0 0
        %6213 = vmatpush2.bf16.msra.mxu0 0
        %6214 = vmatprep.subr.bf16.mxu0 0
        %6215 = vmatpush2.bf16.msra.mxu0 0
        %6216 = vmatprep.mubr.bf16.mxu0 0
        %6217 = vmatmul.mubr.bf16.gmra.mxu0 %v5854
        %v6218 = vpop.f32.mrf.mxu0
        %v6219 = vadd.f32 %v5815, %v6218
        %v6220 = vpop.f32.mrf.mxu0
        %v6221 = vadd.f32 %v5819, %v6220
        %v6222 = vpop.f32.mrf.mxu0
        %v6223 = vpop.f32.mrf.mxu0
        %6224 = vdwg.mxu0
        %6225 = vmatprep.subr.bf16.mxu0 0
        %6226 = vmatpush1.bf16.msra.mxu0 0
        %6227 = vmatprep.subr.bf16.mxu0 0
        %6228 = vmatpush1.bf16.msra.mxu0 0
        %6229 = vmatprep.subr.bf16.mxu0 0
        %6230 = vmatpush1.bf16.msra.mxu0 0
        %6231 = vmatprep.subr.bf16.mxu0 0
        %6232 = vmatpush1.bf16.msra.mxu0 0
        %6233 = vmatprep.subr.bf16.mxu0 0
        %6234 = vmatpush1.bf16.msra.mxu0 0
        %6235 = vmatprep.subr.bf16.mxu0 0
        %6236 = vmatpush1.bf16.msra.mxu0 0
        %6237 = vmatprep.subr.bf16.mxu0 %v5701
        %6238 = vmatpush1.bf16.msra.mxu0 %v5700
        %6239 = vmatprep.subr.bf16.mxu0 %v5680
        %6240 = vmatpush1.bf16.msra.mxu0 %v5679
        %6241 = vmatprep.subr.bf16.mxu0 0
        %6242 = vmatpush2.bf16.msra.mxu0 0
        %6243 = vmatprep.subr.bf16.mxu0 0
        %6244 = vmatpush2.bf16.msra.mxu0 0
        %6245 = vmatprep.subr.bf16.mxu0 0
        %6246 = vmatpush2.bf16.msra.mxu0 0
        %6247 = vmatprep.subr.bf16.mxu0 0
        %6248 = vmatpush2.bf16.msra.mxu0 0
        %6249 = vmatprep.subr.bf16.mxu0 0
        %6250 = vmatpush2.bf16.msra.mxu0 0
        %6251 = vmatprep.subr.bf16.mxu0 0
        %6252 = vmatpush2.bf16.msra.mxu0 0
        %6253 = vmatprep.subr.bf16.mxu0 0
        %6254 = vmatpush2.bf16.msra.mxu0 0
        %6255 = vmatprep.subr.bf16.mxu0 0
        %6256 = vmatpush2.bf16.msra.mxu0 0
        %6257 = vmatprep.mubr.bf16.mxu0 0
        %6258 = vmatmul.mubr.bf16.gmra.mxu0 %v5854
        %v6259 = vpop.f32.mrf.mxu0
        %v6260 = vadd.f32 %v5823, %v6259
        %v6261 = vpop.f32.mrf.mxu0
        %v6262 = vadd.f32 %v5827, %v6261
        %v6263 = vpop.f32.mrf.mxu0
        %v6264 = vpop.f32.mrf.mxu0
        %6265 = vdwg.mxu0
        %6266 = vmatprep.subr.bf16.mxu0 0
        %6267 = vmatpush1.bf16.msra.mxu0 0
        %6268 = vmatprep.subr.bf16.mxu0 0
        %6269 = vmatpush1.bf16.msra.mxu0 0
        %6270 = vmatprep.subr.bf16.mxu0 0
        %6271 = vmatpush1.bf16.msra.mxu0 0
        %6272 = vmatprep.subr.bf16.mxu0 0
        %6273 = vmatpush1.bf16.msra.mxu0 0
        %6274 = vmatprep.subr.bf16.mxu0 0
        %6275 = vmatpush1.bf16.msra.mxu0 0
        %6276 = vmatprep.subr.bf16.mxu0 0
        %6277 = vmatpush1.bf16.msra.mxu0 0
        %6278 = vmatprep.subr.bf16.mxu0 0
        %6279 = vmatpush1.bf16.msra.mxu0 %v5702
        %6280 = vmatprep.subr.bf16.mxu0 0
        %6281 = vmatpush1.bf16.msra.mxu0 %v5681
        %6282 = vmatprep.subr.bf16.mxu0 0
        %6283 = vmatpush2.bf16.msra.mxu0 0
        %6284 = vmatprep.subr.bf16.mxu0 0
        %6285 = vmatpush2.bf16.msra.mxu0 0
        %6286 = vmatprep.subr.bf16.mxu0 0
        %6287 = vmatpush2.bf16.msra.mxu0 0
        %6288 = vmatprep.subr.bf16.mxu0 0
        %6289 = vmatpush2.bf16.msra.mxu0 0
        %6290 = vmatprep.subr.bf16.mxu0 0
        %6291 = vmatpush2.bf16.msra.mxu0 0
        %6292 = vmatprep.subr.bf16.mxu0 0
        %6293 = vmatpush2.bf16.msra.mxu0 0
        %6294 = vmatprep.subr.bf16.mxu0 0
        %6295 = vmatpush2.bf16.msra.mxu0 0
        %6296 = vmatprep.subr.bf16.mxu0 0
        %6297 = vmatpush2.bf16.msra.mxu0 0
        %6298 = vmatprep.mubr.bf16.mxu0 0
        %6299 = vmatmul.mubr.bf16.gmra.mxu0 %v5854
        %v6300 = vpop.f32.mrf.mxu0
        %v6301 = vadd.f32 %v5831, %v6300
        %v6302 = vpop.f32.mrf.mxu0
        %v6303 = vpop.f32.mrf.mxu0
        %v6304 = vpop.f32.mrf.mxu0
        %6305 = vdwg.mxu0
        %v6327 = vcombine.low %v5891, %v5893
        %v6328 = vcombine.low %v5932, %v5934
        %v6329 = vcombine.low %v5973, %v5975
        %v6330 = vcombine.low %v6014, %v6016
        %v6332 = vunpack.c.l.s4 1966171168
        %v6333 = vunpack.c.0.s8 %v6332
        %v6334 = vlaneseq
        %v6335 = vshrl.u32 %v6334, 7
        %v6336 = vsub.s32 %v6333, %v6335
        %v6337 = vrot.slane %v6327, %v6336
        %v6339 = vunpack.c.l.s4 1966171168
        %v6340 = vunpack.c.0.s8 %v6339
        %v6341 = vlaneseq
        %v6342 = vshrl.u32 %v6341, 7
        %v6343 = vsub.s32 %v6340, %v6342
        %v6344 = vrot.slane %v6328, %v6343
        %v6346 = vunpack.c.l.s4 1966171168
        %v6347 = vunpack.c.0.s8 %v6346
        %v6348 = vlaneseq
        %v6349 = vshrl.u32 %v6348, 7
        %v6350 = vsub.s32 %v6347, %v6349
        %v6351 = vrot.slane %v6329, %v6350
        %v6353 = vunpack.c.l.s4 1966171168
        %v6354 = vunpack.c.0.s8 %v6353
        %v6355 = vlaneseq
        %v6356 = vshrl.u32 %v6355, 7
        %v6357 = vsub.s32 %v6354, %v6356
        %v6358 = vrot.slane %v6330, %v6357
        %v6359 = vcombine.low %v6337, %v6344
        %v6360 = vcombine.low %v6351, %v6358
        %v6362 = vunpack.c.l.s4 1966171168
        %v6363 = vunpack.c.0.s8 %v6362
        %v6364 = vlaneseq
        %v6365 = vshrl.u32 %v6364, 7
        %v6366 = vsub.s32 %v6363, %v6365
        %v6367 = vrot.slane %v6359, %v6366
        %v6369 = vunpack.c.l.s4 1966171168
        %v6370 = vunpack.c.0.s8 %v6369
        %v6371 = vlaneseq
        %v6372 = vshrl.u32 %v6371, 7
        %v6373 = vsub.s32 %v6370, %v6372
        %v6374 = vrot.slane %v6360, %v6373
        %v6375 = vcombine.low %v6367, %v6374
        %v6376 = vcombine.low %v6055, %v6057
        %v6377 = vcombine.low %v6096, %v6098
        %v6378 = vcombine.low %v6137, %v6139
        %v6379 = vcombine.low %v6178, %v6180
        %v6381 = vunpack.c.l.s4 1966171168
        %v6382 = vunpack.c.0.s8 %v6381
        %v6383 = vlaneseq
        %v6384 = vshrl.u32 %v6383, 7
        %v6385 = vsub.s32 %v6382, %v6384
        %v6386 = vrot.slane %v6376, %v6385
        %v6388 = vunpack.c.l.s4 1966171168
        %v6389 = vunpack.c.0.s8 %v6388
        %v6390 = vlaneseq
        %v6391 = vshrl.u32 %v6390, 7
        %v6392 = vsub.s32 %v6389, %v6391
        %v6393 = vrot.slane %v6377, %v6392
        %v6395 = vunpack.c.l.s4 1966171168
        %v6396 = vunpack.c.0.s8 %v6395
        %v6397 = vlaneseq
        %v6398 = vshrl.u32 %v6397, 7
        %v6399 = vsub.s32 %v6396, %v6398
        %v6400 = vrot.slane %v6378, %v6399
        %v6402 = vunpack.c.l.s4 1966171168
        %v6403 = vunpack.c.0.s8 %v6402
        %v6404 = vlaneseq
        %v6405 = vshrl.u32 %v6404, 7
        %v6406 = vsub.s32 %v6403, %v6405
        %v6407 = vrot.slane %v6379, %v6406
        %v6408 = vcombine.low %v6386, %v6393
        %v6409 = vcombine.low %v6400, %v6407
        %v6411 = vunpack.c.l.s4 1966171168
        %v6412 = vunpack.c.0.s8 %v6411
        %v6413 = vlaneseq
        %v6414 = vshrl.u32 %v6413, 7
        %v6415 = vsub.s32 %v6412, %v6414
        %v6416 = vrot.slane %v6408, %v6415
        %v6418 = vunpack.c.l.s4 1966171168
        %v6419 = vunpack.c.0.s8 %v6418
        %v6420 = vlaneseq
        %v6421 = vshrl.u32 %v6420, 7
        %v6422 = vsub.s32 %v6419, %v6421
        %v6423 = vrot.slane %v6409, %v6422
        %v6424 = vcombine.low %v6416, %v6423
        %v6425 = vcombine.low %v6219, %v6221
        %v6426 = vcombine.low %v6260, %v6262
        %v6428 = vunpack.c.l.s4 1966171168
        %v6429 = vunpack.c.0.s8 %v6428
        %v6430 = vlaneseq
        %v6431 = vshrl.u32 %v6430, 7
        %v6432 = vsub.s32 %v6429, %v6431
        %v6433 = vrot.slane %v6425, %v6432
        %v6435 = vunpack.c.l.s4 1966171168
        %v6436 = vunpack.c.0.s8 %v6435
        %v6437 = vlaneseq
        %v6438 = vshrl.u32 %v6437, 7
        %v6439 = vsub.s32 %v6436, %v6438
        %v6440 = vrot.slane %v6426, %v6439
        %v6442 = vunpack.c.l.s4 1966171168
        %v6443 = vunpack.c.0.s8 %v6442
        %v6444 = vlaneseq
        %v6445 = vshrl.u32 %v6444, 7
        %v6446 = vsub.s32 %v6443, %v6445
        %v6447 = vrot.slane %v6301, %v6446
        %v6448 = vcombine.low %v6433, %v6440
        %v6450 = vunpack.c.l.s4 1966171168
        %v6451 = vunpack.c.0.s8 %v6450
        %v6452 = vlaneseq
        %v6453 = vshrl.u32 %v6452, 7
        %v6454 = vsub.s32 %v6451, %v6453
        %v6455 = vrot.slane %v6448, %v6454
        %v6457 = vunpack.c.l.s4 1966171168
        %v6458 = vunpack.c.0.s8 %v6457
        %v6459 = vlaneseq
        %v6460 = vshrl.u32 %v6459, 7
        %v6461 = vsub.s32 %v6458, %v6460
        %v6462 = vrot.slane %v6447, %v6461
        %v6463 = vcombine.low %v6455, %v6462
        %s6467 = scalar_lea.vmem %s757, 21
        %6468 = vst [vmem:[%s6467] sm:$0xff] %v6375
        %6469 = vst [vmem:[%s6467 + $0x8] sm:$0xff] %v6424
        %6470 = vst.msk [vmem:[%s6467 + $0x10] sm:$0x1f] %vm5460, %v6463
      $region96: #{vit_forward.1} parent=87 // pred_fallthru
        _
      %s6471 = smul.u32 2, %s32
      %p6472 = scmp.lt.s32.totalorder %s6471, 3
      %s6473 = scalar_select %p6472, %s6471, 3
      %s6474 = smul.addr %s6473, 21
      %s6475 = scalar_lea.vmem %s17, %s6474
      // Predicated region
      $region97: #{vit_forward.1} parent=87 // pred_check
        %p6476 = pneg %p480
      $region98: #{vit_forward.1} parent=87 // pred_check_branch
        %6478 = sbr.rel (%p6476) target = $region100
      $region99: #{vit_forward.1} parent=87 // pred_region
        %s6479 = smul.u32 2, %s32
      $region100: #{vit_forward.1} parent=87 // pred_fallthru
        _
    $region88: #{vit_forward.1} parent=5 // pred_fallthru
      _
    %p6480 = scmp.le.s32.totalorder 2, %s23
    // Predicated region
    $region101: #{vit_forward.1} parent=5 // pred_check
      %p6481 = pneg %p6480
    $region102: #{vit_forward.1} parent=5 // pred_check_branch
      %6483 = sbr.rel (%p6481) target = $region104
    $region103: #{vit_forward.1} parent=5 // pred_region
      %s6484 = ssub.s32 %s23, 2
      // Predicated region
      $region105: #{vit_forward.1} parent=103 // pred_check
        %p6485 = pneg %p486
      $region106: #{vit_forward.1} parent=103 // pred_check_branch
        %6487 = sbr.rel (%p6485) target = $region108
      $region107: #{vit_forward.1} parent=103 // pred_region
        %s6488 = smul.u32 2, %s34
        %p6489 = scmp.lt.s32.totalorder %s6488, 3
        %s6490 = scalar_select %p6489, %s6488, 3
        %s6491 = smul.addr %s6490, 21
        %s6492 = scalar_lea.vmem %s17, %s6491
      $region108: #{vit_forward.1} parent=103 // pred_fallthru
        _
    $region104: #{vit_forward.1} parent=5 // pred_fallthru
      _
  $region6: #{vit_forward.1} parent=0 // loop_footer
    %s27 = sadd.s32 1, %s23
  $region7: #{vit_forward.1} parent=0 // loop_footer_branch
    %22 = sbr.rel target = $region3
  $region8: #{vit_forward.1} parent=0 // loop_exit
    _

</llo_original>
